<compile_context>
chip_gen: v6e
topology: v6e:2x2x1
jax: 0.10.0
libtpu: 0.0.40
codegen_flags: <defaults>
</compile_context>

<pallas_src>
import math

import jax
import jax.numpy as jnp
from jax import lax
from jax.experimental import pallas as pl
from jax.experimental.pallas import tpu as pltpu


def att_mask_kernel(x_ref, l_ref, aq_ref, ak_ref, av_ref, ao_ref,
                    out_ref, q_scr, k_scr, v_scr, s_scr):
    N, BL = out_ref.shape            # N columns per agent-row, BL lanes
    d = x_ref.shape[0]
    r = q_scr.shape[0]

    # ---- numNeighbors = count(L_row >= 1) + 1, per agent-row (lane) ---------
    lrow = l_ref[...]                                            # (N, BL)
    cnt = jnp.sum((lrow >= 1.0).astype(jnp.float32), axis=0, keepdims=True)
    inv_scale = lax.rsqrt(cnt + 1.0)                             # (1, BL), EUP

    # ---- Q/K/V projections: depth-d (=4) contraction on the VPU -------------
    # Results go straight to VMEM scratch so only the d x-tiles plus one
    # accumulator tile are ever live in vregs.
    x_tiles = [x_ref[dd] for dd in range(d)]                     # d x (N, BL)
    for i in range(r):
        for w_ref, scr in ((aq_ref, q_scr), (ak_ref, k_scr), (av_ref, v_scr)):
            acc = w_ref[i, 0] * x_tiles[0]
            for dd in range(1, d):
                acc = acc + w_ref[i, dd] * x_tiles[dd]
            scr[i] = jnp.tanh(acc)                               # (N, BL)

    # ---- attention, vectorized over all BL agent-rows -----------------------
    # For query index i:  S_i[j, b] = sum_n Q_i[n, b] * K[j, n, b]
    # softmax over j;     w[j, b]  += Ao[i] * P_i[j, b]
    # |S * inv_scale| <= N (tanh-bounded Q, K and inv_scale <= 1), so exp()
    # cannot overflow in f32 for the agent counts used here (wrapper asserts).
    w = jnp.zeros((r, BL), jnp.float32)
    for i in range(r):
        qi = q_scr[i]                                            # (N, BL)
        for j in range(r):
            sij = jnp.sum(qi * k_scr[j], axis=0, keepdims=True)  # (1, BL)
            s_scr[pl.ds(j, 1), :] = sij
        s_all = s_scr[...] * inv_scale                           # (r, BL)
        e_i = jnp.exp(s_all)
        denom = jnp.sum(e_i, axis=0, keepdims=True)              # (1, BL)
        coef = ao_ref[0, i] * pl.reciprocal(denom, approx=True)  # (1, BL)
        w = w + coef * e_i                                       # (r, BL)

    # o[n, b] = sum_j w[j, b] * V[j, n, b];  R = tanh(o) (Ao already folded in)
    ow = w[0:1, :] * v_scr[0]                                    # (N, BL)
    for j in range(1, r):
        ow = ow + w[j:j + 1, :] * v_scr[j]
    rsq = jnp.tanh(ow)
    rsq = rsq * rsq                                              # R^2, [q, b]

    # ---- Laplacian-style assembly -------------------------------------------
    # out[q, b] = sum_q' R^2[q', b]   if q == (b mod N)   (diagonal entry)
    #           = -R^2[q, b]          otherwise
    # BL % N == 0, so (lane index within the slab) mod N == (global b) mod N.
    rowsum = jnp.sum(rsq, axis=0, keepdims=True)                 # (1, BL)
    q_idx = lax.broadcasted_iota(jnp.int32, (N, BL), 0)
    lane = lax.broadcasted_iota(jnp.int32, (N, BL), 1)
    if (N & (N - 1)) == 0:
        b_mod = lane & (N - 1)
    else:
        b_mod = lane % N
    out_ref[...] = jnp.where(q_idx == b_mod,
                             jnp.broadcast_to(rowsum, (N, BL)),
                             -rsq)


def _choose_lane_block(B, N, max_lanes=512):
    """Lane-slab width BL: a multiple of lcm(N, 128) (so stores are full-width
    and b mod N is slab-invariant), at most ~max_lanes (vreg-pressure bound),
    preferring >= 2 grid steps (v7x has 2 TensorCores) when that needs no
    padding.  Returns (BL, padded B)."""
    base = N * 128 // math.gcd(N, 128)                 # lcm(N, 128)
    if base >= max_lanes:
        bl = base
    else:
        cands = list(range((max_lanes // base) * base, 0, -base))  # descending
        # 1) largest exact-fit block giving >= 2 grid steps
        bl = next((c for c in cands if B % c == 0 and B // c >= 2), None)
        if bl is None:
            # 2) largest exact-fit block (single step)
            bl = next((c for c in cands if B % c == 0), None)
        if bl is None:
            # 3) no exact fit: smallest block covering B, else the largest
            bl = next((c for c in reversed(cands) if c >= B), cands[0])
    b_pad = pl.cdiv(B, bl) * bl
    return bl, b_pad


def att_mask_lane_dense(x_t, l_t, Aq, Ak, Av, Ao):
    """Lane-dense entry point.

    x_t: (d, N, B) with the agent-row index b on the lane axis,
    l_t: (N, B) (row 0 of L), returns the (N, B) slab out[q, b].
    Keep the ODE state in this layout across calls to avoid per-call
    transposes around the kernel."""
    d, N, B = x_t.shape
    assert l_t.shape == (N, B)
    # exp() without max-subtraction is safe only while |S/sqrt(nn)| <= N << 88.
    assert N < 80, "reinstate softmax max-subtraction for large agent counts"
    r = Aq.shape[0]

    bl, b_pad = _choose_lane_block(B, N)
    if b_pad != B:
        x_t = jnp.pad(x_t, ((0, 0), (0, 0), (0, b_pad - B)))
        l_t = jnp.pad(l_t, ((0, 0), (0, b_pad - B)))
    grid = (b_pad // bl,)

    out2 = pl.pallas_call(
        att_mask_kernel,
        out_shape=jax.ShapeDtypeStruct((N, b_pad), jnp.float32),
        grid=grid,
        in_specs=[
            pl.BlockSpec((d, N, bl), lambda i: (0, 0, i)),        # x slab
            pl.BlockSpec((N, bl), lambda i: (0, i)),              # L row 0
            pl.BlockSpec(memory_space=pltpu.MemorySpace.SMEM),    # Aq
            pl.BlockSpec(memory_space=pltpu.MemorySpace.SMEM),    # Ak
            pl.BlockSpec(memory_space=pltpu.MemorySpace.SMEM),    # Av
            pl.BlockSpec(memory_space=pltpu.MemorySpace.SMEM),    # Ao
        ],
        out_specs=pl.BlockSpec((N, bl), lambda i: (0, i)),        # lane-dense
        scratch_shapes=[
            pltpu.VMEM((r, N, bl), jnp.float32),                  # Q scratch
            pltpu.VMEM((r, N, bl), jnp.float32),                  # K scratch
            pltpu.VMEM((r, N, bl), jnp.float32),                  # V scratch
            pltpu.VMEM((r, bl), jnp.float32),                     # scores
        ],
        compiler_params=pltpu.CompilerParams(
            dimension_semantics=("parallel",)),       # shard slabs across TCs
    )(x_t, l_t, Aq, Ak, Av, Ao)

    return out2[:, :B]                                            # (N, B)


def att_mask_forward(x, L, Aq, Ak, Av, Ao):
    """PyTorch-layout wrapper: x (B, d, N), L (B, LD, N) -> (M, N, N)."""
    B, d, N = x.shape
    assert B % N == 0, "batch must be a multiple of x.shape[2] (as in PyTorch)"
    assert L.shape[0] == B and L.shape[2] == N
    M = B // N

    # Layout plumbing only; in an ODE loop keep the state lane-dense and call
    # att_mask_lane_dense directly.
    x_t = jnp.transpose(x, (1, 2, 0))                 # (d, N, B)
    l_t = jnp.transpose(L[:, 0, :], (1, 0))           # (N, B)  (row 0 only)
    out2 = att_mask_lane_dense(x_t, l_t, Aq, Ak, Av, Ao)

    # (N, B) [q, b] -> (M, N, N) [group, row, q]
    return jnp.transpose(out2, (1, 0)).reshape(M, N, N)


def att_mask_reference(x, L, Aq, Ak, Av, Ao):
    """Pure-JAX reference mirroring the PyTorch forward (float32)."""
    B, d, N = x.shape
    M = B // N
    nn = jnp.sum((L[:, 0, :] >= 1.0).astype(jnp.float32),
                 axis=1).reshape(B, 1, 1) + 1.0
    Q = jnp.tanh(jnp.einsum('rd,bdn->brn', Aq, x))
    K = jnp.tanh(jnp.einsum('rd,bdn->brn', Ak, x))
    V = jnp.tanh(jnp.einsum('rd,bdn->brn', Av, x))
    S = jnp.einsum('brn,bsn->brs', Q, K) / jnp.sqrt(nn)
    P = jax.nn.softmax(S, axis=2)
    o = jnp.einsum('brs,bsn->brn', P, V)
    R = jnp.tanh(jnp.einsum('or,brn->bon', Ao, o))[:, 0, :]
    R = R.reshape(M, N, N) ** 2
    eye = jnp.eye(N, dtype=jnp.float32)
    Rdiag = R * (1.0 - eye)
    Rout = eye * R
    return Rout + eye * jnp.sum(Rdiag, axis=2, keepdims=True) - Rdiag


if __name__ == "__main__":
    # Att_mask(r=8, d=4) with na=16 agents and M groups (ODE batch),
    # B = M * N agent-rows, as in the flocking model.
    r, d, N, M = 8, 4, 16, 64
    B = M * N

    key = jax.random.PRNGKey(0)
    kx, kl, kq, kk, kv, ko = jax.random.split(key, 6)

    x = jax.random.normal(kx, (B, d, N), dtype=jnp.float32)
    L = jax.random.uniform(kl, (B, 2, N), dtype=jnp.float32,
                           minval=0.0, maxval=3.0)

    # Parameters: 0.6 * randn(...) (deterministic, as in __init__)
    Aq = 0.6 * jax.random.normal(kq, (r, d), dtype=jnp.float32)
    Ak = 0.6 * jax.random.normal(kk, (r, d), dtype=jnp.float32)
    Av = 0.6 * jax.random.normal(kv, (r, d), dtype=jnp.float32)
    Ao = 0.6 * jax.random.normal(ko, (1, r), dtype=jnp.float32)

    out = att_mask_forward(x, L, Aq, Ak, Av, Ao)
    out = jax.block_until_ready(out)

    ref = att_mask_reference(x, L, Aq, Ak, Av, Ao)
    assert out.shape == (M, N, N), out.shape
    max_err = float(jnp.max(jnp.abs(out - ref)))
    # Tolerance accounts for the approximate EUP reciprocal used in the
    # softmax denominator (pl.reciprocal(..., approx=True)); real bugs would
    # show errors orders of magnitude larger.
    assert jnp.allclose(out, ref, atol=2e-3, rtol=1e-2), max_err

    print("KERNEL_OK")
</pallas_src>

<mosaic_0001>
module attributes {stable_mosaic.version = 11 : i64} {
  func.func @att_mask_kernel(%arg0: i32, %arg1: memref<4x16x512xf32, #tpu.memory_space<vmem>>, %arg2: memref<16x512xf32, #tpu.memory_space<vmem>>, %arg3: memref<8x4xf32, #tpu.memory_space<smem>>, %arg4: memref<8x4xf32, #tpu.memory_space<smem>>, %arg5: memref<8x4xf32, #tpu.memory_space<smem>>, %arg6: memref<1x8xf32, #tpu.memory_space<smem>>, %arg7: memref<16x512xf32, #tpu.memory_space<vmem>>, %arg8: memref<8x16x512xf32, #tpu.memory_space<vmem>>, %arg9: memref<8x16x512xf32, #tpu.memory_space<vmem>>, %arg10: memref<8x16x512xf32, #tpu.memory_space<vmem>>, %arg11: memref<8x512xf32, #tpu.memory_space<vmem>>) attributes {dimension_semantics = [#tpu.dimension_semantics<parallel>], iteration_bounds = array<i64: 2>, scalar_prefetch = 0 : i64, scratch_operands = 4 : i64, tpu.core_type = #tpu.core_type<tc>, window_params = [{transform_indices = @transform_0, window_bounds = array<i64: 4, 16, 512>}, {transform_indices = @transform_1, window_bounds = array<i64: 16, 512>}, {transform_indices = @transform_2, window_bounds = array<i64: 8, 4>}, {transform_indices = @transform_3, window_bounds = array<i64: 8, 4>}, {transform_indices = @transform_4, window_bounds = array<i64: 8, 4>}, {transform_indices = @transform_5, window_bounds = array<i64: 1, 8>}, {transform_indices = @transform_6, window_bounds = array<i64: 16, 512>}]} {
    %c0 = arith.constant 0 : index
    %c0_0 = arith.constant 0 : index
    %0 = vector.load %arg2[%c0, %c0_0] : memref<16x512xf32, #tpu.memory_space<vmem>>, vector<16x512xf32>
    %cst = arith.constant 1.000000e+00 : f32
    %1 = vector.broadcast %cst : f32 to vector<16x512xf32>
    %2 = arith.cmpf oge, %0, %1 : vector<16x512xf32>
    %3 = arith.extui %2 : vector<16x512xi1> to vector<16x512xi32>
    %4 = arith.sitofp %3 : vector<16x512xi32> to vector<16x512xf32>
    %cst_1 = arith.constant dense<0.000000e+00> : vector<512xf32>
    %5 = vector.multi_reduction <add>, %4, %cst_1 [0] : vector<16x512xf32> to vector<512xf32>
    %6 = vector.shape_cast %5 : vector<512xf32> to vector<1x512xf32>
    %cst_2 = arith.constant 1.000000e+00 : f32
    %7 = vector.broadcast %cst_2 : f32 to vector<1x512xf32>
    %8 = arith.addf %6, %7 : vector<1x512xf32>
    %9 = math.rsqrt %8 : vector<1x512xf32>
    %c0_3 = arith.constant 0 : index
    %c0_4 = arith.constant 0 : index
    %c0_5 = arith.constant 0 : index
    %10 = vector.load %arg1[%c0_3, %c0_4, %c0_5] : memref<4x16x512xf32, #tpu.memory_space<vmem>>, vector<1x16x512xf32>
    %11 = vector.shape_cast %10 : vector<1x16x512xf32> to vector<16x512xf32>
    %c1 = arith.constant 1 : index
    %c0_6 = arith.constant 0 : index
    %c0_7 = arith.constant 0 : index
    %12 = vector.load %arg1[%c1, %c0_6, %c0_7] : memref<4x16x512xf32, #tpu.memory_space<vmem>>, vector<1x16x512xf32>
    %13 = vector.shape_cast %12 : vector<1x16x512xf32> to vector<16x512xf32>
    %c2 = arith.constant 2 : index
    %c0_8 = arith.constant 0 : index
    %c0_9 = arith.constant 0 : index
    %14 = vector.load %arg1[%c2, %c0_8, %c0_9] : memref<4x16x512xf32, #tpu.memory_space<vmem>>, vector<1x16x512xf32>
    %15 = vector.shape_cast %14 : vector<1x16x512xf32> to vector<16x512xf32>
    %c3 = arith.constant 3 : index
    %c0_10 = arith.constant 0 : index
    %c0_11 = arith.constant 0 : index
    %16 = vector.load %arg1[%c3, %c0_10, %c0_11] : memref<4x16x512xf32, #tpu.memory_space<vmem>>, vector<1x16x512xf32>
    %17 = vector.shape_cast %16 : vector<1x16x512xf32> to vector<16x512xf32>
    %c0_12 = arith.constant 0 : index
    %c0_13 = arith.constant 0 : index
    %18 = memref.load %arg3[%c0_12, %c0_13] : memref<8x4xf32, #tpu.memory_space<smem>>
    %19 = vector.broadcast %18 : f32 to vector<16x512xf32>
    %20 = arith.mulf %19, %11 : vector<16x512xf32>
    %c0_14 = arith.constant 0 : index
    %c1_15 = arith.constant 1 : index
    %21 = memref.load %arg3[%c0_14, %c1_15] : memref<8x4xf32, #tpu.memory_space<smem>>
    %22 = vector.broadcast %21 : f32 to vector<16x512xf32>
    %23 = arith.mulf %22, %13 : vector<16x512xf32>
    %24 = arith.addf %20, %23 : vector<16x512xf32>
    %c0_16 = arith.constant 0 : index
    %c2_17 = arith.constant 2 : index
    %25 = memref.load %arg3[%c0_16, %c2_17] : memref<8x4xf32, #tpu.memory_space<smem>>
    %26 = vector.broadcast %25 : f32 to vector<16x512xf32>
    %27 = arith.mulf %26, %15 : vector<16x512xf32>
    %28 = arith.addf %24, %27 : vector<16x512xf32>
    %c0_18 = arith.constant 0 : index
    %c3_19 = arith.constant 3 : index
    %29 = memref.load %arg3[%c0_18, %c3_19] : memref<8x4xf32, #tpu.memory_space<smem>>
    %30 = vector.broadcast %29 : f32 to vector<16x512xf32>
    %31 = arith.mulf %30, %17 : vector<16x512xf32>
    %32 = arith.addf %28, %31 : vector<16x512xf32>
    %33 = math.tanh %32 : vector<16x512xf32>
    %c0_20 = arith.constant 0 : index
    %c0_21 = arith.constant 0 : index
    %c0_22 = arith.constant 0 : index
    %34 = vector.load %arg8[%c0_20, %c0_21, %c0_22] : memref<8x16x512xf32, #tpu.memory_space<vmem>>, vector<1x16x512xf32>
    %35 = vector.shape_cast %34 : vector<1x16x512xf32> to vector<16x512xf32>
    %36 = vector.shape_cast %33 : vector<16x512xf32> to vector<1x16x512xf32>
    tpu.vector_store %arg8[%c0_20, %c0_21, %c0_22], %36 {strides = array<i32>} : memref<8x16x512xf32, #tpu.memory_space<vmem>>, vector<1x16x512xf32>,
    %c0_23 = arith.constant 0 : index
    %c0_24 = arith.constant 0 : index
    %37 = memref.load %arg4[%c0_23, %c0_24] : memref<8x4xf32, #tpu.memory_space<smem>>
    %38 = vector.broadcast %37 : f32 to vector<16x512xf32>
    %39 = arith.mulf %38, %11 : vector<16x512xf32>
    %c0_25 = arith.constant 0 : index
    %c1_26 = arith.constant 1 : index
    %40 = memref.load %arg4[%c0_25, %c1_26] : memref<8x4xf32, #tpu.memory_space<smem>>
    %41 = vector.broadcast %40 : f32 to vector<16x512xf32>
    %42 = arith.mulf %41, %13 : vector<16x512xf32>
    %43 = arith.addf %39, %42 : vector<16x512xf32>
    %c0_27 = arith.constant 0 : index
    %c2_28 = arith.constant 2 : index
    %44 = memref.load %arg4[%c0_27, %c2_28] : memref<8x4xf32, #tpu.memory_space<smem>>
    %45 = vector.broadcast %44 : f32 to vector<16x512xf32>
    %46 = arith.mulf %45, %15 : vector<16x512xf32>
    %47 = arith.addf %43, %46 : vector<16x512xf32>
    %c0_29 = arith.constant 0 : index
    %c3_30 = arith.constant 3 : index
    %48 = memref.load %arg4[%c0_29, %c3_30] : memref<8x4xf32, #tpu.memory_space<smem>>
    %49 = vector.broadcast %48 : f32 to vector<16x512xf32>
    %50 = arith.mulf %49, %17 : vector<16x512xf32>
    %51 = arith.addf %47, %50 : vector<16x512xf32>
    %52 = math.tanh %51 : vector<16x512xf32>
    %c0_31 = arith.constant 0 : index
    %c0_32 = arith.constant 0 : index
    %c0_33 = arith.constant 0 : index
    %53 = vector.load %arg9[%c0_31, %c0_32, %c0_33] : memref<8x16x512xf32, #tpu.memory_space<vmem>>, vector<1x16x512xf32>
    %54 = vector.shape_cast %53 : vector<1x16x512xf32> to vector<16x512xf32>
    %55 = vector.shape_cast %52 : vector<16x512xf32> to vector<1x16x512xf32>
    tpu.vector_store %arg9[%c0_31, %c0_32, %c0_33], %55 {strides = array<i32>} : memref<8x16x512xf32, #tpu.memory_space<vmem>>, vector<1x16x512xf32>,
    %c0_34 = arith.constant 0 : index
    %c0_35 = arith.constant 0 : index
    %56 = memref.load %arg5[%c0_34, %c0_35] : memref<8x4xf32, #tpu.memory_space<smem>>
    %57 = vector.broadcast %56 : f32 to vector<16x512xf32>
    %58 = arith.mulf %57, %11 : vector<16x512xf32>
    %c0_36 = arith.constant 0 : index
    %c1_37 = arith.constant 1 : index
    %59 = memref.load %arg5[%c0_36, %c1_37] : memref<8x4xf32, #tpu.memory_space<smem>>
    %60 = vector.broadcast %59 : f32 to vector<16x512xf32>
    %61 = arith.mulf %60, %13 : vector<16x512xf32>
    %62 = arith.addf %58, %61 : vector<16x512xf32>
    %c0_38 = arith.constant 0 : index
    %c2_39 = arith.constant 2 : index
    %63 = memref.load %arg5[%c0_38, %c2_39] : memref<8x4xf32, #tpu.memory_space<smem>>
    %64 = vector.broadcast %63 : f32 to vector<16x512xf32>
    %65 = arith.mulf %64, %15 : vector<16x512xf32>
    %66 = arith.addf %62, %65 : vector<16x512xf32>
    %c0_40 = arith.constant 0 : index
    %c3_41 = arith.constant 3 : index
    %67 = memref.load %arg5[%c0_40, %c3_41] : memref<8x4xf32, #tpu.memory_space<smem>>
    %68 = vector.broadcast %67 : f32 to vector<16x512xf32>
    %69 = arith.mulf %68, %17 : vector<16x512xf32>
    %70 = arith.addf %66, %69 : vector<16x512xf32>
    %71 = math.tanh %70 : vector<16x512xf32>
    %c0_42 = arith.constant 0 : index
    %c0_43 = arith.constant 0 : index
    %c0_44 = arith.constant 0 : index
    %72 = vector.load %arg10[%c0_42, %c0_43, %c0_44] : memref<8x16x512xf32, #tpu.memory_space<vmem>>, vector<1x16x512xf32>
    %73 = vector.shape_cast %72 : vector<1x16x512xf32> to vector<16x512xf32>
    %74 = vector.shape_cast %71 : vector<16x512xf32> to vector<1x16x512xf32>
    tpu.vector_store %arg10[%c0_42, %c0_43, %c0_44], %74 {strides = array<i32>} : memref<8x16x512xf32, #tpu.memory_space<vmem>>, vector<1x16x512xf32>,
    %c1_45 = arith.constant 1 : index
    %c0_46 = arith.constant 0 : index
    %75 = memref.load %arg3[%c1_45, %c0_46] : memref<8x4xf32, #tpu.memory_space<smem>>
    %76 = vector.broadcast %75 : f32 to vector<16x512xf32>
    %77 = arith.mulf %76, %11 : vector<16x512xf32>
    %c1_47 = arith.constant 1 : index
    %c1_48 = arith.constant 1 : index
    %78 = memref.load %arg3[%c1_47, %c1_48] : memref<8x4xf32, #tpu.memory_space<smem>>
    %79 = vector.broadcast %78 : f32 to vector<16x512xf32>
    %80 = arith.mulf %79, %13 : vector<16x512xf32>
    %81 = arith.addf %77, %80 : vector<16x512xf32>
    %c1_49 = arith.constant 1 : index
    %c2_50 = arith.constant 2 : index
    %82 = memref.load %arg3[%c1_49, %c2_50] : memref<8x4xf32, #tpu.memory_space<smem>>
    %83 = vector.broadcast %82 : f32 to vector<16x512xf32>
    %84 = arith.mulf %83, %15 : vector<16x512xf32>
    %85 = arith.addf %81, %84 : vector<16x512xf32>
    %c1_51 = arith.constant 1 : index
    %c3_52 = arith.constant 3 : index
    %86 = memref.load %arg3[%c1_51, %c3_52] : memref<8x4xf32, #tpu.memory_space<smem>>
    %87 = vector.broadcast %86 : f32 to vector<16x512xf32>
    %88 = arith.mulf %87, %17 : vector<16x512xf32>
    %89 = arith.addf %85, %88 : vector<16x512xf32>
    %90 = math.tanh %89 : vector<16x512xf32>
    %c1_53 = arith.constant 1 : index
    %c0_54 = arith.constant 0 : index
    %c0_55 = arith.constant 0 : index
    %91 = vector.load %arg8[%c1_53, %c0_54, %c0_55] : memref<8x16x512xf32, #tpu.memory_space<vmem>>, vector<1x16x512xf32>
    %92 = vector.shape_cast %91 : vector<1x16x512xf32> to vector<16x512xf32>
    %93 = vector.shape_cast %90 : vector<16x512xf32> to vector<1x16x512xf32>
    tpu.vector_store %arg8[%c1_53, %c0_54, %c0_55], %93 {strides = array<i32>} : memref<8x16x512xf32, #tpu.memory_space<vmem>>, vector<1x16x512xf32>,
    %c1_56 = arith.constant 1 : index
    %c0_57 = arith.constant 0 : index
    %94 = memref.load %arg4[%c1_56, %c0_57] : memref<8x4xf32, #tpu.memory_space<smem>>
    %95 = vector.broadcast %94 : f32 to vector<16x512xf32>
    %96 = arith.mulf %95, %11 : vector<16x512xf32>
    %c1_58 = arith.constant 1 : index
    %c1_59 = arith.constant 1 : index
    %97 = memref.load %arg4[%c1_58, %c1_59] : memref<8x4xf32, #tpu.memory_space<smem>>
    %98 = vector.broadcast %97 : f32 to vector<16x512xf32>
    %99 = arith.mulf %98, %13 : vector<16x512xf32>
    %100 = arith.addf %96, %99 : vector<16x512xf32>
    %c1_60 = arith.constant 1 : index
    %c2_61 = arith.constant 2 : index
    %101 = memref.load %arg4[%c1_60, %c2_61] : memref<8x4xf32, #tpu.memory_space<smem>>
    %102 = vector.broadcast %101 : f32 to vector<16x512xf32>
    %103 = arith.mulf %102, %15 : vector<16x512xf32>
    %104 = arith.addf %100, %103 : vector<16x512xf32>
    %c1_62 = arith.constant 1 : index
    %c3_63 = arith.constant 3 : index
    %105 = memref.load %arg4[%c1_62, %c3_63] : memref<8x4xf32, #tpu.memory_space<smem>>
    %106 = vector.broadcast %105 : f32 to vector<16x512xf32>
    %107 = arith.mulf %106, %17 : vector<16x512xf32>
    %108 = arith.addf %104, %107 : vector<16x512xf32>
    %109 = math.tanh %108 : vector<16x512xf32>
    %c1_64 = arith.constant 1 : index
    %c0_65 = arith.constant 0 : index
    %c0_66 = arith.constant 0 : index
    %110 = vector.load %arg9[%c1_64, %c0_65, %c0_66] : memref<8x16x512xf32, #tpu.memory_space<vmem>>, vector<1x16x512xf32>
    %111 = vector.shape_cast %110 : vector<1x16x512xf32> to vector<16x512xf32>
    %112 = vector.shape_cast %109 : vector<16x512xf32> to vector<1x16x512xf32>
    tpu.vector_store %arg9[%c1_64, %c0_65, %c0_66], %112 {strides = array<i32>} : memref<8x16x512xf32, #tpu.memory_space<vmem>>, vector<1x16x512xf32>,
    %c1_67 = arith.constant 1 : index
    %c0_68 = arith.constant 0 : index
    %113 = memref.load %arg5[%c1_67, %c0_68] : memref<8x4xf32, #tpu.memory_space<smem>>
    %114 = vector.broadcast %113 : f32 to vector<16x512xf32>
    %115 = arith.mulf %114, %11 : vector<16x512xf32>
    %c1_69 = arith.constant 1 : index
    %c1_70 = arith.constant 1 : index
    %116 = memref.load %arg5[%c1_69, %c1_70] : memref<8x4xf32, #tpu.memory_space<smem>>
    %117 = vector.broadcast %116 : f32 to vector<16x512xf32>
    %118 = arith.mulf %117, %13 : vector<16x512xf32>
    %119 = arith.addf %115, %118 : vector<16x512xf32>
    %c1_71 = arith.constant 1 : index
    %c2_72 = arith.constant 2 : index
    %120 = memref.load %arg5[%c1_71, %c2_72] : memref<8x4xf32, #tpu.memory_space<smem>>
    %121 = vector.broadcast %120 : f32 to vector<16x512xf32>
    %122 = arith.mulf %121, %15 : vector<16x512xf32>
    %123 = arith.addf %119, %122 : vector<16x512xf32>
    %c1_73 = arith.constant 1 : index
    %c3_74 = arith.constant 3 : index
    %124 = memref.load %arg5[%c1_73, %c3_74] : memref<8x4xf32, #tpu.memory_space<smem>>
    %125 = vector.broadcast %124 : f32 to vector<16x512xf32>
    %126 = arith.mulf %125, %17 : vector<16x512xf32>
    %127 = arith.addf %123, %126 : vector<16x512xf32>
    %128 = math.tanh %127 : vector<16x512xf32>
    %c1_75 = arith.constant 1 : index
    %c0_76 = arith.constant 0 : index
    %c0_77 = arith.constant 0 : index
    %129 = vector.load %arg10[%c1_75, %c0_76, %c0_77] : memref<8x16x512xf32, #tpu.memory_space<vmem>>, vector<1x16x512xf32>
    %130 = vector.shape_cast %129 : vector<1x16x512xf32> to vector<16x512xf32>
    %131 = vector.shape_cast %128 : vector<16x512xf32> to vector<1x16x512xf32>
    tpu.vector_store %arg10[%c1_75, %c0_76, %c0_77], %131 {strides = array<i32>} : memref<8x16x512xf32, #tpu.memory_space<vmem>>, vector<1x16x512xf32>,
    %c2_78 = arith.constant 2 : index
    %c0_79 = arith.constant 0 : index
    %132 = memref.load %arg3[%c2_78, %c0_79] : memref<8x4xf32, #tpu.memory_space<smem>>
    %133 = vector.broadcast %132 : f32 to vector<16x512xf32>
    %134 = arith.mulf %133, %11 : vector<16x512xf32>
    %c2_80 = arith.constant 2 : index
    %c1_81 = arith.constant 1 : index
    %135 = memref.load %arg3[%c2_80, %c1_81] : memref<8x4xf32, #tpu.memory_space<smem>>
    %136 = vector.broadcast %135 : f32 to vector<16x512xf32>
    %137 = arith.mulf %136, %13 : vector<16x512xf32>
    %138 = arith.addf %134, %137 : vector<16x512xf32>
    %c2_82 = arith.constant 2 : index
    %c2_83 = arith.constant 2 : index
    %139 = memref.load %arg3[%c2_82, %c2_83] : memref<8x4xf32, #tpu.memory_space<smem>>
    %140 = vector.broadcast %139 : f32 to vector<16x512xf32>
    %141 = arith.mulf %140, %15 : vector<16x512xf32>
    %142 = arith.addf %138, %141 : vector<16x512xf32>
    %c2_84 = arith.constant 2 : index
    %c3_85 = arith.constant 3 : index
    %143 = memref.load %arg3[%c2_84, %c3_85] : memref<8x4xf32, #tpu.memory_space<smem>>
    %144 = vector.broadcast %143 : f32 to vector<16x512xf32>
    %145 = arith.mulf %144, %17 : vector<16x512xf32>
    %146 = arith.addf %142, %145 : vector<16x512xf32>
    %147 = math.tanh %146 : vector<16x512xf32>
    %c2_86 = arith.constant 2 : index
    %c0_87 = arith.constant 0 : index
    %c0_88 = arith.constant 0 : index
    %148 = vector.load %arg8[%c2_86, %c0_87, %c0_88] : memref<8x16x512xf32, #tpu.memory_space<vmem>>, vector<1x16x512xf32>
    %149 = vector.shape_cast %148 : vector<1x16x512xf32> to vector<16x512xf32>
    %150 = vector.shape_cast %147 : vector<16x512xf32> to vector<1x16x512xf32>
    tpu.vector_store %arg8[%c2_86, %c0_87, %c0_88], %150 {strides = array<i32>} : memref<8x16x512xf32, #tpu.memory_space<vmem>>, vector<1x16x512xf32>,
    %c2_89 = arith.constant 2 : index
    %c0_90 = arith.constant 0 : index
    %151 = memref.load %arg4[%c2_89, %c0_90] : memref<8x4xf32, #tpu.memory_space<smem>>
    %152 = vector.broadcast %151 : f32 to vector<16x512xf32>
    %153 = arith.mulf %152, %11 : vector<16x512xf32>
    %c2_91 = arith.constant 2 : index
    %c1_92 = arith.constant 1 : index
    %154 = memref.load %arg4[%c2_91, %c1_92] : memref<8x4xf32, #tpu.memory_space<smem>>
    %155 = vector.broadcast %154 : f32 to vector<16x512xf32>
    %156 = arith.mulf %155, %13 : vector<16x512xf32>
    %157 = arith.addf %153, %156 : vector<16x512xf32>
    %c2_93 = arith.constant 2 : index
    %c2_94 = arith.constant 2 : index
    %158 = memref.load %arg4[%c2_93, %c2_94] : memref<8x4xf32, #tpu.memory_space<smem>>
    %159 = vector.broadcast %158 : f32 to vector<16x512xf32>
    %160 = arith.mulf %159, %15 : vector<16x512xf32>
    %161 = arith.addf %157, %160 : vector<16x512xf32>
    %c2_95 = arith.constant 2 : index
    %c3_96 = arith.constant 3 : index
    %162 = memref.load %arg4[%c2_95, %c3_96] : memref<8x4xf32, #tpu.memory_space<smem>>
    %163 = vector.broadcast %162 : f32 to vector<16x512xf32>
    %164 = arith.mulf %163, %17 : vector<16x512xf32>
    %165 = arith.addf %161, %164 : vector<16x512xf32>
    %166 = math.tanh %165 : vector<16x512xf32>
    %c2_97 = arith.constant 2 : index
    %c0_98 = arith.constant 0 : index
    %c0_99 = arith.constant 0 : index
    %167 = vector.load %arg9[%c2_97, %c0_98, %c0_99] : memref<8x16x512xf32, #tpu.memory_space<vmem>>, vector<1x16x512xf32>
    %168 = vector.shape_cast %167 : vector<1x16x512xf32> to vector<16x512xf32>
    %169 = vector.shape_cast %166 : vector<16x512xf32> to vector<1x16x512xf32>
    tpu.vector_store %arg9[%c2_97, %c0_98, %c0_99], %169 {strides = array<i32>} : memref<8x16x512xf32, #tpu.memory_space<vmem>>, vector<1x16x512xf32>,
    %c2_100 = arith.constant 2 : index
    %c0_101 = arith.constant 0 : index
    %170 = memref.load %arg5[%c2_100, %c0_101] : memref<8x4xf32, #tpu.memory_space<smem>>
    %171 = vector.broadcast %170 : f32 to vector<16x512xf32>
    %172 = arith.mulf %171, %11 : vector<16x512xf32>
    %c2_102 = arith.constant 2 : index
    %c1_103 = arith.constant 1 : index
    %173 = memref.load %arg5[%c2_102, %c1_103] : memref<8x4xf32, #tpu.memory_space<smem>>
    %174 = vector.broadcast %173 : f32 to vector<16x512xf32>
    %175 = arith.mulf %174, %13 : vector<16x512xf32>
    %176 = arith.addf %172, %175 : vector<16x512xf32>
    %c2_104 = arith.constant 2 : index
    %c2_105 = arith.constant 2 : index
    %177 = memref.load %arg5[%c2_104, %c2_105] : memref<8x4xf32, #tpu.memory_space<smem>>
    %178 = vector.broadcast %177 : f32 to vector<16x512xf32>
    %179 = arith.mulf %178, %15 : vector<16x512xf32>
    %180 = arith.addf %176, %179 : vector<16x512xf32>
    %c2_106 = arith.constant 2 : index
    %c3_107 = arith.constant 3 : index
    %181 = memref.load %arg5[%c2_106, %c3_107] : memref<8x4xf32, #tpu.memory_space<smem>>
    %182 = vector.broadcast %181 : f32 to vector<16x512xf32>
    %183 = arith.mulf %182, %17 : vector<16x512xf32>
    %184 = arith.addf %180, %183 : vector<16x512xf32>
    %185 = math.tanh %184 : vector<16x512xf32>
    %c2_108 = arith.constant 2 : index
    %c0_109 = arith.constant 0 : index
    %c0_110 = arith.constant 0 : index
    %186 = vector.load %arg10[%c2_108, %c0_109, %c0_110] : memref<8x16x512xf32, #tpu.memory_space<vmem>>, vector<1x16x512xf32>
    %187 = vector.shape_cast %186 : vector<1x16x512xf32> to vector<16x512xf32>
    %188 = vector.shape_cast %185 : vector<16x512xf32> to vector<1x16x512xf32>
    tpu.vector_store %arg10[%c2_108, %c0_109, %c0_110], %188 {strides = array<i32>} : memref<8x16x512xf32, #tpu.memory_space<vmem>>, vector<1x16x512xf32>,
    %c3_111 = arith.constant 3 : index
    %c0_112 = arith.constant 0 : index
    %189 = memref.load %arg3[%c3_111, %c0_112] : memref<8x4xf32, #tpu.memory_space<smem>>
    %190 = vector.broadcast %189 : f32 to vector<16x512xf32>
    %191 = arith.mulf %190, %11 : vector<16x512xf32>
    %c3_113 = arith.constant 3 : index
    %c1_114 = arith.constant 1 : index
    %192 = memref.load %arg3[%c3_113, %c1_114] : memref<8x4xf32, #tpu.memory_space<smem>>
    %193 = vector.broadcast %192 : f32 to vector<16x512xf32>
    %194 = arith.mulf %193, %13 : vector<16x512xf32>
    %195 = arith.addf %191, %194 : vector<16x512xf32>
    %c3_115 = arith.constant 3 : index
    %c2_116 = arith.constant 2 : index
    %196 = memref.load %arg3[%c3_115, %c2_116] : memref<8x4xf32, #tpu.memory_space<smem>>
    %197 = vector.broadcast %196 : f32 to vector<16x512xf32>
    %198 = arith.mulf %197, %15 : vector<16x512xf32>
    %199 = arith.addf %195, %198 : vector<16x512xf32>
    %c3_117 = arith.constant 3 : index
    %c3_118 = arith.constant 3 : index
    %200 = memref.load %arg3[%c3_117, %c3_118] : memref<8x4xf32, #tpu.memory_space<smem>>
    %201 = vector.broadcast %200 : f32 to vector<16x512xf32>
    %202 = arith.mulf %201, %17 : vector<16x512xf32>
    %203 = arith.addf %199, %202 : vector<16x512xf32>
    %204 = math.tanh %203 : vector<16x512xf32>
    %c3_119 = arith.constant 3 : index
    %c0_120 = arith.constant 0 : index
    %c0_121 = arith.constant 0 : index
    %205 = vector.load %arg8[%c3_119, %c0_120, %c0_121] : memref<8x16x512xf32, #tpu.memory_space<vmem>>, vector<1x16x512xf32>
    %206 = vector.shape_cast %205 : vector<1x16x512xf32> to vector<16x512xf32>
    %207 = vector.shape_cast %204 : vector<16x512xf32> to vector<1x16x512xf32>
    tpu.vector_store %arg8[%c3_119, %c0_120, %c0_121], %207 {strides = array<i32>} : memref<8x16x512xf32, #tpu.memory_space<vmem>>, vector<1x16x512xf32>,
    %c3_122 = arith.constant 3 : index
    %c0_123 = arith.constant 0 : index
    %208 = memref.load %arg4[%c3_122, %c0_123] : memref<8x4xf32, #tpu.memory_space<smem>>
    %209 = vector.broadcast %208 : f32 to vector<16x512xf32>
    %210 = arith.mulf %209, %11 : vector<16x512xf32>
    %c3_124 = arith.constant 3 : index
    %c1_125 = arith.constant 1 : index
    %211 = memref.load %arg4[%c3_124, %c1_125] : memref<8x4xf32, #tpu.memory_space<smem>>
    %212 = vector.broadcast %211 : f32 to vector<16x512xf32>
    %213 = arith.mulf %212, %13 : vector<16x512xf32>
    %214 = arith.addf %210, %213 : vector<16x512xf32>
    %c3_126 = arith.constant 3 : index
    %c2_127 = arith.constant 2 : index
    %215 = memref.load %arg4[%c3_126, %c2_127] : memref<8x4xf32, #tpu.memory_space<smem>>
    %216 = vector.broadcast %215 : f32 to vector<16x512xf32>
    %217 = arith.mulf %216, %15 : vector<16x512xf32>
    %218 = arith.addf %214, %217 : vector<16x512xf32>
    %c3_128 = arith.constant 3 : index
    %c3_129 = arith.constant 3 : index
    %219 = memref.load %arg4[%c3_128, %c3_129] : memref<8x4xf32, #tpu.memory_space<smem>>
    %220 = vector.broadcast %219 : f32 to vector<16x512xf32>
    %221 = arith.mulf %220, %17 : vector<16x512xf32>
    %222 = arith.addf %218, %221 : vector<16x512xf32>
    %223 = math.tanh %222 : vector<16x512xf32>
    %c3_130 = arith.constant 3 : index
    %c0_131 = arith.constant 0 : index
    %c0_132 = arith.constant 0 : index
    %224 = vector.load %arg9[%c3_130, %c0_131, %c0_132] : memref<8x16x512xf32, #tpu.memory_space<vmem>>, vector<1x16x512xf32>
    %225 = vector.shape_cast %224 : vector<1x16x512xf32> to vector<16x512xf32>
    %226 = vector.shape_cast %223 : vector<16x512xf32> to vector<1x16x512xf32>
    tpu.vector_store %arg9[%c3_130, %c0_131, %c0_132], %226 {strides = array<i32>} : memref<8x16x512xf32, #tpu.memory_space<vmem>>, vector<1x16x512xf32>,
    %c3_133 = arith.constant 3 : index
    %c0_134 = arith.constant 0 : index
    %227 = memref.load %arg5[%c3_133, %c0_134] : memref<8x4xf32, #tpu.memory_space<smem>>
    %228 = vector.broadcast %227 : f32 to vector<16x512xf32>
    %229 = arith.mulf %228, %11 : vector<16x512xf32>
    %c3_135 = arith.constant 3 : index
    %c1_136 = arith.constant 1 : index
    %230 = memref.load %arg5[%c3_135, %c1_136] : memref<8x4xf32, #tpu.memory_space<smem>>
    %231 = vector.broadcast %230 : f32 to vector<16x512xf32>
    %232 = arith.mulf %231, %13 : vector<16x512xf32>
    %233 = arith.addf %229, %232 : vector<16x512xf32>
    %c3_137 = arith.constant 3 : index
    %c2_138 = arith.constant 2 : index
    %234 = memref.load %arg5[%c3_137, %c2_138] : memref<8x4xf32, #tpu.memory_space<smem>>
    %235 = vector.broadcast %234 : f32 to vector<16x512xf32>
    %236 = arith.mulf %235, %15 : vector<16x512xf32>
    %237 = arith.addf %233, %236 : vector<16x512xf32>
    %c3_139 = arith.constant 3 : index
    %c3_140 = arith.constant 3 : index
    %238 = memref.load %arg5[%c3_139, %c3_140] : memref<8x4xf32, #tpu.memory_space<smem>>
    %239 = vector.broadcast %238 : f32 to vector<16x512xf32>
    %240 = arith.mulf %239, %17 : vector<16x512xf32>
    %241 = arith.addf %237, %240 : vector<16x512xf32>
    %242 = math.tanh %241 : vector<16x512xf32>
    %c3_141 = arith.constant 3 : index
    %c0_142 = arith.constant 0 : index
    %c0_143 = arith.constant 0 : index
    %243 = vector.load %arg10[%c3_141, %c0_142, %c0_143] : memref<8x16x512xf32, #tpu.memory_space<vmem>>, vector<1x16x512xf32>
    %244 = vector.shape_cast %243 : vector<1x16x512xf32> to vector<16x512xf32>
    %245 = vector.shape_cast %242 : vector<16x512xf32> to vector<1x16x512xf32>
    tpu.vector_store %arg10[%c3_141, %c0_142, %c0_143], %245 {strides = array<i32>} : memref<8x16x512xf32, #tpu.memory_space<vmem>>, vector<1x16x512xf32>,
    %c4 = arith.constant 4 : index
    %c0_144 = arith.constant 0 : index
    %246 = memref.load %arg3[%c4, %c0_144] : memref<8x4xf32, #tpu.memory_space<smem>>
    %247 = vector.broadcast %246 : f32 to vector<16x512xf32>
    %248 = arith.mulf %247, %11 : vector<16x512xf32>
    %c4_145 = arith.constant 4 : index
    %c1_146 = arith.constant 1 : index
    %249 = memref.load %arg3[%c4_145, %c1_146] : memref<8x4xf32, #tpu.memory_space<smem>>
    %250 = vector.broadcast %249 : f32 to vector<16x512xf32>
    %251 = arith.mulf %250, %13 : vector<16x512xf32>
    %252 = arith.addf %248, %251 : vector<16x512xf32>
    %c4_147 = arith.constant 4 : index
    %c2_148 = arith.constant 2 : index
    %253 = memref.load %arg3[%c4_147, %c2_148] : memref<8x4xf32, #tpu.memory_space<smem>>
    %254 = vector.broadcast %253 : f32 to vector<16x512xf32>
    %255 = arith.mulf %254, %15 : vector<16x512xf32>
    %256 = arith.addf %252, %255 : vector<16x512xf32>
    %c4_149 = arith.constant 4 : index
    %c3_150 = arith.constant 3 : index
    %257 = memref.load %arg3[%c4_149, %c3_150] : memref<8x4xf32, #tpu.memory_space<smem>>
    %258 = vector.broadcast %257 : f32 to vector<16x512xf32>
    %259 = arith.mulf %258, %17 : vector<16x512xf32>
    %260 = arith.addf %256, %259 : vector<16x512xf32>
    %261 = math.tanh %260 : vector<16x512xf32>
    %c4_151 = arith.constant 4 : index
    %c0_152 = arith.constant 0 : index
    %c0_153 = arith.constant 0 : index
    %262 = vector.load %arg8[%c4_151, %c0_152, %c0_153] : memref<8x16x512xf32, #tpu.memory_space<vmem>>, vector<1x16x512xf32>
    %263 = vector.shape_cast %262 : vector<1x16x512xf32> to vector<16x512xf32>
    %264 = vector.shape_cast %261 : vector<16x512xf32> to vector<1x16x512xf32>
    tpu.vector_store %arg8[%c4_151, %c0_152, %c0_153], %264 {strides = array<i32>} : memref<8x16x512xf32, #tpu.memory_space<vmem>>, vector<1x16x512xf32>,
    %c4_154 = arith.constant 4 : index
    %c0_155 = arith.constant 0 : index
    %265 = memref.load %arg4[%c4_154, %c0_155] : memref<8x4xf32, #tpu.memory_space<smem>>
    %266 = vector.broadcast %265 : f32 to vector<16x512xf32>
    %267 = arith.mulf %266, %11 : vector<16x512xf32>
    %c4_156 = arith.constant 4 : index
    %c1_157 = arith.constant 1 : index
    %268 = memref.load %arg4[%c4_156, %c1_157] : memref<8x4xf32, #tpu.memory_space<smem>>
    %269 = vector.broadcast %268 : f32 to vector<16x512xf32>
    %270 = arith.mulf %269, %13 : vector<16x512xf32>
    %271 = arith.addf %267, %270 : vector<16x512xf32>
    %c4_158 = arith.constant 4 : index
    %c2_159 = arith.constant 2 : index
    %272 = memref.load %arg4[%c4_158, %c2_159] : memref<8x4xf32, #tpu.memory_space<smem>>
    %273 = vector.broadcast %272 : f32 to vector<16x512xf32>
    %274 = arith.mulf %273, %15 : vector<16x512xf32>
    %275 = arith.addf %271, %274 : vector<16x512xf32>
    %c4_160 = arith.constant 4 : index
    %c3_161 = arith.constant 3 : index
    %276 = memref.load %arg4[%c4_160, %c3_161] : memref<8x4xf32, #tpu.memory_space<smem>>
    %277 = vector.broadcast %276 : f32 to vector<16x512xf32>
    %278 = arith.mulf %277, %17 : vector<16x512xf32>
    %279 = arith.addf %275, %278 : vector<16x512xf32>
    %280 = math.tanh %279 : vector<16x512xf32>
    %c4_162 = arith.constant 4 : index
    %c0_163 = arith.constant 0 : index
    %c0_164 = arith.constant 0 : index
    %281 = vector.load %arg9[%c4_162, %c0_163, %c0_164] : memref<8x16x512xf32, #tpu.memory_space<vmem>>, vector<1x16x512xf32>
    %282 = vector.shape_cast %281 : vector<1x16x512xf32> to vector<16x512xf32>
    %283 = vector.shape_cast %280 : vector<16x512xf32> to vector<1x16x512xf32>
    tpu.vector_store %arg9[%c4_162, %c0_163, %c0_164], %283 {strides = array<i32>} : memref<8x16x512xf32, #tpu.memory_space<vmem>>, vector<1x16x512xf32>,
    %c4_165 = arith.constant 4 : index
    %c0_166 = arith.constant 0 : index
    %284 = memref.load %arg5[%c4_165, %c0_166] : memref<8x4xf32, #tpu.memory_space<smem>>
    %285 = vector.broadcast %284 : f32 to vector<16x512xf32>
    %286 = arith.mulf %285, %11 : vector<16x512xf32>
    %c4_167 = arith.constant 4 : index
    %c1_168 = arith.constant 1 : index
    %287 = memref.load %arg5[%c4_167, %c1_168] : memref<8x4xf32, #tpu.memory_space<smem>>
    %288 = vector.broadcast %287 : f32 to vector<16x512xf32>
    %289 = arith.mulf %288, %13 : vector<16x512xf32>
    %290 = arith.addf %286, %289 : vector<16x512xf32>
    %c4_169 = arith.constant 4 : index
    %c2_170 = arith.constant 2 : index
    %291 = memref.load %arg5[%c4_169, %c2_170] : memref<8x4xf32, #tpu.memory_space<smem>>
    %292 = vector.broadcast %291 : f32 to vector<16x512xf32>
    %293 = arith.mulf %292, %15 : vector<16x512xf32>
    %294 = arith.addf %290, %293 : vector<16x512xf32>
    %c4_171 = arith.constant 4 : index
    %c3_172 = arith.constant 3 : index
    %295 = memref.load %arg5[%c4_171, %c3_172] : memref<8x4xf32, #tpu.memory_space<smem>>
    %296 = vector.broadcast %295 : f32 to vector<16x512xf32>
    %297 = arith.mulf %296, %17 : vector<16x512xf32>
    %298 = arith.addf %294, %297 : vector<16x512xf32>
    %299 = math.tanh %298 : vector<16x512xf32>
    %c4_173 = arith.constant 4 : index
    %c0_174 = arith.constant 0 : index
    %c0_175 = arith.constant 0 : index
    %300 = vector.load %arg10[%c4_173, %c0_174, %c0_175] : memref<8x16x512xf32, #tpu.memory_space<vmem>>, vector<1x16x512xf32>
    %301 = vector.shape_cast %300 : vector<1x16x512xf32> to vector<16x512xf32>
    %302 = vector.shape_cast %299 : vector<16x512xf32> to vector<1x16x512xf32>
    tpu.vector_store %arg10[%c4_173, %c0_174, %c0_175], %302 {strides = array<i32>} : memref<8x16x512xf32, #tpu.memory_space<vmem>>, vector<1x16x512xf32>,
    %c5 = arith.constant 5 : index
    %c0_176 = arith.constant 0 : index
    %303 = memref.load %arg3[%c5, %c0_176] : memref<8x4xf32, #tpu.memory_space<smem>>
    %304 = vector.broadcast %303 : f32 to vector<16x512xf32>
    %305 = arith.mulf %304, %11 : vector<16x512xf32>
    %c5_177 = arith.constant 5 : index
    %c1_178 = arith.constant 1 : index
    %306 = memref.load %arg3[%c5_177, %c1_178] : memref<8x4xf32, #tpu.memory_space<smem>>
    %307 = vector.broadcast %306 : f32 to vector<16x512xf32>
    %308 = arith.mulf %307, %13 : vector<16x512xf32>
    %309 = arith.addf %305, %308 : vector<16x512xf32>
    %c5_179 = arith.constant 5 : index
    %c2_180 = arith.constant 2 : index
    %310 = memref.load %arg3[%c5_179, %c2_180] : memref<8x4xf32, #tpu.memory_space<smem>>
    %311 = vector.broadcast %310 : f32 to vector<16x512xf32>
    %312 = arith.mulf %311, %15 : vector<16x512xf32>
    %313 = arith.addf %309, %312 : vector<16x512xf32>
    %c5_181 = arith.constant 5 : index
    %c3_182 = arith.constant 3 : index
    %314 = memref.load %arg3[%c5_181, %c3_182] : memref<8x4xf32, #tpu.memory_space<smem>>
    %315 = vector.broadcast %314 : f32 to vector<16x512xf32>
    %316 = arith.mulf %315, %17 : vector<16x512xf32>
    %317 = arith.addf %313, %316 : vector<16x512xf32>
    %318 = math.tanh %317 : vector<16x512xf32>
    %c5_183 = arith.constant 5 : index
    %c0_184 = arith.constant 0 : index
    %c0_185 = arith.constant 0 : index
    %319 = vector.load %arg8[%c5_183, %c0_184, %c0_185] : memref<8x16x512xf32, #tpu.memory_space<vmem>>, vector<1x16x512xf32>
    %320 = vector.shape_cast %319 : vector<1x16x512xf32> to vector<16x512xf32>
    %321 = vector.shape_cast %318 : vector<16x512xf32> to vector<1x16x512xf32>
    tpu.vector_store %arg8[%c5_183, %c0_184, %c0_185], %321 {strides = array<i32>} : memref<8x16x512xf32, #tpu.memory_space<vmem>>, vector<1x16x512xf32>,
    %c5_186 = arith.constant 5 : index
    %c0_187 = arith.constant 0 : index
    %322 = memref.load %arg4[%c5_186, %c0_187] : memref<8x4xf32, #tpu.memory_space<smem>>
    %323 = vector.broadcast %322 : f32 to vector<16x512xf32>
    %324 = arith.mulf %323, %11 : vector<16x512xf32>
    %c5_188 = arith.constant 5 : index
    %c1_189 = arith.constant 1 : index
    %325 = memref.load %arg4[%c5_188, %c1_189] : memref<8x4xf32, #tpu.memory_space<smem>>
    %326 = vector.broadcast %325 : f32 to vector<16x512xf32>
    %327 = arith.mulf %326, %13 : vector<16x512xf32>
    %328 = arith.addf %324, %327 : vector<16x512xf32>
    %c5_190 = arith.constant 5 : index
    %c2_191 = arith.constant 2 : index
    %329 = memref.load %arg4[%c5_190, %c2_191] : memref<8x4xf32, #tpu.memory_space<smem>>
    %330 = vector.broadcast %329 : f32 to vector<16x512xf32>
    %331 = arith.mulf %330, %15 : vector<16x512xf32>
    %332 = arith.addf %328, %331 : vector<16x512xf32>
    %c5_192 = arith.constant 5 : index
    %c3_193 = arith.constant 3 : index
    %333 = memref.load %arg4[%c5_192, %c3_193] : memref<8x4xf32, #tpu.memory_space<smem>>
    %334 = vector.broadcast %333 : f32 to vector<16x512xf32>
    %335 = arith.mulf %334, %17 : vector<16x512xf32>
    %336 = arith.addf %332, %335 : vector<16x512xf32>
    %337 = math.tanh %336 : vector<16x512xf32>
    %c5_194 = arith.constant 5 : index
    %c0_195 = arith.constant 0 : index
    %c0_196 = arith.constant 0 : index
    %338 = vector.load %arg9[%c5_194, %c0_195, %c0_196] : memref<8x16x512xf32, #tpu.memory_space<vmem>>, vector<1x16x512xf32>
    %339 = vector.shape_cast %338 : vector<1x16x512xf32> to vector<16x512xf32>
    %340 = vector.shape_cast %337 : vector<16x512xf32> to vector<1x16x512xf32>
    tpu.vector_store %arg9[%c5_194, %c0_195, %c0_196], %340 {strides = array<i32>} : memref<8x16x512xf32, #tpu.memory_space<vmem>>, vector<1x16x512xf32>,
    %c5_197 = arith.constant 5 : index
    %c0_198 = arith.constant 0 : index
    %341 = memref.load %arg5[%c5_197, %c0_198] : memref<8x4xf32, #tpu.memory_space<smem>>
    %342 = vector.broadcast %341 : f32 to vector<16x512xf32>
    %343 = arith.mulf %342, %11 : vector<16x512xf32>
    %c5_199 = arith.constant 5 : index
    %c1_200 = arith.constant 1 : index
    %344 = memref.load %arg5[%c5_199, %c1_200] : memref<8x4xf32, #tpu.memory_space<smem>>
    %345 = vector.broadcast %344 : f32 to vector<16x512xf32>
    %346 = arith.mulf %345, %13 : vector<16x512xf32>
    %347 = arith.addf %343, %346 : vector<16x512xf32>
    %c5_201 = arith.constant 5 : index
    %c2_202 = arith.constant 2 : index
    %348 = memref.load %arg5[%c5_201, %c2_202] : memref<8x4xf32, #tpu.memory_space<smem>>
    %349 = vector.broadcast %348 : f32 to vector<16x512xf32>
    %350 = arith.mulf %349, %15 : vector<16x512xf32>
    %351 = arith.addf %347, %350 : vector<16x512xf32>
    %c5_203 = arith.constant 5 : index
    %c3_204 = arith.constant 3 : index
    %352 = memref.load %arg5[%c5_203, %c3_204] : memref<8x4xf32, #tpu.memory_space<smem>>
    %353 = vector.broadcast %352 : f32 to vector<16x512xf32>
    %354 = arith.mulf %353, %17 : vector<16x512xf32>
    %355 = arith.addf %351, %354 : vector<16x512xf32>
    %356 = math.tanh %355 : vector<16x512xf32>
    %c5_205 = arith.constant 5 : index
    %c0_206 = arith.constant 0 : index
    %c0_207 = arith.constant 0 : index
    %357 = vector.load %arg10[%c5_205, %c0_206, %c0_207] : memref<8x16x512xf32, #tpu.memory_space<vmem>>, vector<1x16x512xf32>
    %358 = vector.shape_cast %357 : vector<1x16x512xf32> to vector<16x512xf32>
    %359 = vector.shape_cast %356 : vector<16x512xf32> to vector<1x16x512xf32>
    tpu.vector_store %arg10[%c5_205, %c0_206, %c0_207], %359 {strides = array<i32>} : memref<8x16x512xf32, #tpu.memory_space<vmem>>, vector<1x16x512xf32>,
    %c6 = arith.constant 6 : index
    %c0_208 = arith.constant 0 : index
    %360 = memref.load %arg3[%c6, %c0_208] : memref<8x4xf32, #tpu.memory_space<smem>>
    %361 = vector.broadcast %360 : f32 to vector<16x512xf32>
    %362 = arith.mulf %361, %11 : vector<16x512xf32>
    %c6_209 = arith.constant 6 : index
    %c1_210 = arith.constant 1 : index
    %363 = memref.load %arg3[%c6_209, %c1_210] : memref<8x4xf32, #tpu.memory_space<smem>>
    %364 = vector.broadcast %363 : f32 to vector<16x512xf32>
    %365 = arith.mulf %364, %13 : vector<16x512xf32>
    %366 = arith.addf %362, %365 : vector<16x512xf32>
    %c6_211 = arith.constant 6 : index
    %c2_212 = arith.constant 2 : index
    %367 = memref.load %arg3[%c6_211, %c2_212] : memref<8x4xf32, #tpu.memory_space<smem>>
    %368 = vector.broadcast %367 : f32 to vector<16x512xf32>
    %369 = arith.mulf %368, %15 : vector<16x512xf32>
    %370 = arith.addf %366, %369 : vector<16x512xf32>
    %c6_213 = arith.constant 6 : index
    %c3_214 = arith.constant 3 : index
    %371 = memref.load %arg3[%c6_213, %c3_214] : memref<8x4xf32, #tpu.memory_space<smem>>
    %372 = vector.broadcast %371 : f32 to vector<16x512xf32>
    %373 = arith.mulf %372, %17 : vector<16x512xf32>
    %374 = arith.addf %370, %373 : vector<16x512xf32>
    %375 = math.tanh %374 : vector<16x512xf32>
    %c6_215 = arith.constant 6 : index
    %c0_216 = arith.constant 0 : index
    %c0_217 = arith.constant 0 : index
    %376 = vector.load %arg8[%c6_215, %c0_216, %c0_217] : memref<8x16x512xf32, #tpu.memory_space<vmem>>, vector<1x16x512xf32>
    %377 = vector.shape_cast %376 : vector<1x16x512xf32> to vector<16x512xf32>
    %378 = vector.shape_cast %375 : vector<16x512xf32> to vector<1x16x512xf32>
    tpu.vector_store %arg8[%c6_215, %c0_216, %c0_217], %378 {strides = array<i32>} : memref<8x16x512xf32, #tpu.memory_space<vmem>>, vector<1x16x512xf32>,
    %c6_218 = arith.constant 6 : index
    %c0_219 = arith.constant 0 : index
    %379 = memref.load %arg4[%c6_218, %c0_219] : memref<8x4xf32, #tpu.memory_space<smem>>
    %380 = vector.broadcast %379 : f32 to vector<16x512xf32>
    %381 = arith.mulf %380, %11 : vector<16x512xf32>
    %c6_220 = arith.constant 6 : index
    %c1_221 = arith.constant 1 : index
    %382 = memref.load %arg4[%c6_220, %c1_221] : memref<8x4xf32, #tpu.memory_space<smem>>
    %383 = vector.broadcast %382 : f32 to vector<16x512xf32>
    %384 = arith.mulf %383, %13 : vector<16x512xf32>
    %385 = arith.addf %381, %384 : vector<16x512xf32>
    %c6_222 = arith.constant 6 : index
    %c2_223 = arith.constant 2 : index
    %386 = memref.load %arg4[%c6_222, %c2_223] : memref<8x4xf32, #tpu.memory_space<smem>>
    %387 = vector.broadcast %386 : f32 to vector<16x512xf32>
    %388 = arith.mulf %387, %15 : vector<16x512xf32>
    %389 = arith.addf %385, %388 : vector<16x512xf32>
    %c6_224 = arith.constant 6 : index
    %c3_225 = arith.constant 3 : index
    %390 = memref.load %arg4[%c6_224, %c3_225] : memref<8x4xf32, #tpu.memory_space<smem>>
    %391 = vector.broadcast %390 : f32 to vector<16x512xf32>
    %392 = arith.mulf %391, %17 : vector<16x512xf32>
    %393 = arith.addf %389, %392 : vector<16x512xf32>
    %394 = math.tanh %393 : vector<16x512xf32>
    %c6_226 = arith.constant 6 : index
    %c0_227 = arith.constant 0 : index
    %c0_228 = arith.constant 0 : index
    %395 = vector.load %arg9[%c6_226, %c0_227, %c0_228] : memref<8x16x512xf32, #tpu.memory_space<vmem>>, vector<1x16x512xf32>
    %396 = vector.shape_cast %395 : vector<1x16x512xf32> to vector<16x512xf32>
    %397 = vector.shape_cast %394 : vector<16x512xf32> to vector<1x16x512xf32>
    tpu.vector_store %arg9[%c6_226, %c0_227, %c0_228], %397 {strides = array<i32>} : memref<8x16x512xf32, #tpu.memory_space<vmem>>, vector<1x16x512xf32>,
    %c6_229 = arith.constant 6 : index
    %c0_230 = arith.constant 0 : index
    %398 = memref.load %arg5[%c6_229, %c0_230] : memref<8x4xf32, #tpu.memory_space<smem>>
    %399 = vector.broadcast %398 : f32 to vector<16x512xf32>
    %400 = arith.mulf %399, %11 : vector<16x512xf32>
    %c6_231 = arith.constant 6 : index
    %c1_232 = arith.constant 1 : index
    %401 = memref.load %arg5[%c6_231, %c1_232] : memref<8x4xf32, #tpu.memory_space<smem>>
    %402 = vector.broadcast %401 : f32 to vector<16x512xf32>
    %403 = arith.mulf %402, %13 : vector<16x512xf32>
    %404 = arith.addf %400, %403 : vector<16x512xf32>
    %c6_233 = arith.constant 6 : index
    %c2_234 = arith.constant 2 : index
    %405 = memref.load %arg5[%c6_233, %c2_234] : memref<8x4xf32, #tpu.memory_space<smem>>
    %406 = vector.broadcast %405 : f32 to vector<16x512xf32>
    %407 = arith.mulf %406, %15 : vector<16x512xf32>
    %408 = arith.addf %404, %407 : vector<16x512xf32>
    %c6_235 = arith.constant 6 : index
    %c3_236 = arith.constant 3 : index
    %409 = memref.load %arg5[%c6_235, %c3_236] : memref<8x4xf32, #tpu.memory_space<smem>>
    %410 = vector.broadcast %409 : f32 to vector<16x512xf32>
    %411 = arith.mulf %410, %17 : vector<16x512xf32>
    %412 = arith.addf %408, %411 : vector<16x512xf32>
    %413 = math.tanh %412 : vector<16x512xf32>
    %c6_237 = arith.constant 6 : index
    %c0_238 = arith.constant 0 : index
    %c0_239 = arith.constant 0 : index
    %414 = vector.load %arg10[%c6_237, %c0_238, %c0_239] : memref<8x16x512xf32, #tpu.memory_space<vmem>>, vector<1x16x512xf32>
    %415 = vector.shape_cast %414 : vector<1x16x512xf32> to vector<16x512xf32>
    %416 = vector.shape_cast %413 : vector<16x512xf32> to vector<1x16x512xf32>
    tpu.vector_store %arg10[%c6_237, %c0_238, %c0_239], %416 {strides = array<i32>} : memref<8x16x512xf32, #tpu.memory_space<vmem>>, vector<1x16x512xf32>,
    %c7 = arith.constant 7 : index
    %c0_240 = arith.constant 0 : index
    %417 = memref.load %arg3[%c7, %c0_240] : memref<8x4xf32, #tpu.memory_space<smem>>
    %418 = vector.broadcast %417 : f32 to vector<16x512xf32>
    %419 = arith.mulf %418, %11 : vector<16x512xf32>
    %c7_241 = arith.constant 7 : index
    %c1_242 = arith.constant 1 : index
    %420 = memref.load %arg3[%c7_241, %c1_242] : memref<8x4xf32, #tpu.memory_space<smem>>
    %421 = vector.broadcast %420 : f32 to vector<16x512xf32>
    %422 = arith.mulf %421, %13 : vector<16x512xf32>
    %423 = arith.addf %419, %422 : vector<16x512xf32>
    %c7_243 = arith.constant 7 : index
    %c2_244 = arith.constant 2 : index
    %424 = memref.load %arg3[%c7_243, %c2_244] : memref<8x4xf32, #tpu.memory_space<smem>>
    %425 = vector.broadcast %424 : f32 to vector<16x512xf32>
    %426 = arith.mulf %425, %15 : vector<16x512xf32>
    %427 = arith.addf %423, %426 : vector<16x512xf32>
    %c7_245 = arith.constant 7 : index
    %c3_246 = arith.constant 3 : index
    %428 = memref.load %arg3[%c7_245, %c3_246] : memref<8x4xf32, #tpu.memory_space<smem>>
    %429 = vector.broadcast %428 : f32 to vector<16x512xf32>
    %430 = arith.mulf %429, %17 : vector<16x512xf32>
    %431 = arith.addf %427, %430 : vector<16x512xf32>
    %432 = math.tanh %431 : vector<16x512xf32>
    %c7_247 = arith.constant 7 : index
    %c0_248 = arith.constant 0 : index
    %c0_249 = arith.constant 0 : index
    %433 = vector.load %arg8[%c7_247, %c0_248, %c0_249] : memref<8x16x512xf32, #tpu.memory_space<vmem>>, vector<1x16x512xf32>
    %434 = vector.shape_cast %433 : vector<1x16x512xf32> to vector<16x512xf32>
    %435 = vector.shape_cast %432 : vector<16x512xf32> to vector<1x16x512xf32>
    tpu.vector_store %arg8[%c7_247, %c0_248, %c0_249], %435 {strides = array<i32>} : memref<8x16x512xf32, #tpu.memory_space<vmem>>, vector<1x16x512xf32>,
    %c7_250 = arith.constant 7 : index
    %c0_251 = arith.constant 0 : index
    %436 = memref.load %arg4[%c7_250, %c0_251] : memref<8x4xf32, #tpu.memory_space<smem>>
    %437 = vector.broadcast %436 : f32 to vector<16x512xf32>
    %438 = arith.mulf %437, %11 : vector<16x512xf32>
    %c7_252 = arith.constant 7 : index
    %c1_253 = arith.constant 1 : index
    %439 = memref.load %arg4[%c7_252, %c1_253] : memref<8x4xf32, #tpu.memory_space<smem>>
    %440 = vector.broadcast %439 : f32 to vector<16x512xf32>
    %441 = arith.mulf %440, %13 : vector<16x512xf32>
    %442 = arith.addf %438, %441 : vector<16x512xf32>
    %c7_254 = arith.constant 7 : index
    %c2_255 = arith.constant 2 : index
    %443 = memref.load %arg4[%c7_254, %c2_255] : memref<8x4xf32, #tpu.memory_space<smem>>
    %444 = vector.broadcast %443 : f32 to vector<16x512xf32>
    %445 = arith.mulf %444, %15 : vector<16x512xf32>
    %446 = arith.addf %442, %445 : vector<16x512xf32>
    %c7_256 = arith.constant 7 : index
    %c3_257 = arith.constant 3 : index
    %447 = memref.load %arg4[%c7_256, %c3_257] : memref<8x4xf32, #tpu.memory_space<smem>>
    %448 = vector.broadcast %447 : f32 to vector<16x512xf32>
    %449 = arith.mulf %448, %17 : vector<16x512xf32>
    %450 = arith.addf %446, %449 : vector<16x512xf32>
    %451 = math.tanh %450 : vector<16x512xf32>
    %c7_258 = arith.constant 7 : index
    %c0_259 = arith.constant 0 : index
    %c0_260 = arith.constant 0 : index
    %452 = vector.load %arg9[%c7_258, %c0_259, %c0_260] : memref<8x16x512xf32, #tpu.memory_space<vmem>>, vector<1x16x512xf32>
    %453 = vector.shape_cast %452 : vector<1x16x512xf32> to vector<16x512xf32>
    %454 = vector.shape_cast %451 : vector<16x512xf32> to vector<1x16x512xf32>
    tpu.vector_store %arg9[%c7_258, %c0_259, %c0_260], %454 {strides = array<i32>} : memref<8x16x512xf32, #tpu.memory_space<vmem>>, vector<1x16x512xf32>,
    %c7_261 = arith.constant 7 : index
    %c0_262 = arith.constant 0 : index
    %455 = memref.load %arg5[%c7_261, %c0_262] : memref<8x4xf32, #tpu.memory_space<smem>>
    %456 = vector.broadcast %455 : f32 to vector<16x512xf32>
    %457 = arith.mulf %456, %11 : vector<16x512xf32>
    %c7_263 = arith.constant 7 : index
    %c1_264 = arith.constant 1 : index
    %458 = memref.load %arg5[%c7_263, %c1_264] : memref<8x4xf32, #tpu.memory_space<smem>>
    %459 = vector.broadcast %458 : f32 to vector<16x512xf32>
    %460 = arith.mulf %459, %13 : vector<16x512xf32>
    %461 = arith.addf %457, %460 : vector<16x512xf32>
    %c7_265 = arith.constant 7 : index
    %c2_266 = arith.constant 2 : index
    %462 = memref.load %arg5[%c7_265, %c2_266] : memref<8x4xf32, #tpu.memory_space<smem>>
    %463 = vector.broadcast %462 : f32 to vector<16x512xf32>
    %464 = arith.mulf %463, %15 : vector<16x512xf32>
    %465 = arith.addf %461, %464 : vector<16x512xf32>
    %c7_267 = arith.constant 7 : index
    %c3_268 = arith.constant 3 : index
    %466 = memref.load %arg5[%c7_267, %c3_268] : memref<8x4xf32, #tpu.memory_space<smem>>
    %467 = vector.broadcast %466 : f32 to vector<16x512xf32>
    %468 = arith.mulf %467, %17 : vector<16x512xf32>
    %469 = arith.addf %465, %468 : vector<16x512xf32>
    %470 = math.tanh %469 : vector<16x512xf32>
    %c7_269 = arith.constant 7 : index
    %c0_270 = arith.constant 0 : index
    %c0_271 = arith.constant 0 : index
    %471 = vector.load %arg10[%c7_269, %c0_270, %c0_271] : memref<8x16x512xf32, #tpu.memory_space<vmem>>, vector<1x16x512xf32>
    %472 = vector.shape_cast %471 : vector<1x16x512xf32> to vector<16x512xf32>
    %473 = vector.shape_cast %470 : vector<16x512xf32> to vector<1x16x512xf32>
    tpu.vector_store %arg10[%c7_269, %c0_270, %c0_271], %473 {strides = array<i32>} : memref<8x16x512xf32, #tpu.memory_space<vmem>>, vector<1x16x512xf32>,
    %cst_272 = arith.constant 0.000000e+00 : f32
    %474 = vector.broadcast %cst_272 : f32 to vector<8x512xf32>
    %c0_273 = arith.constant 0 : index
    %c0_274 = arith.constant 0 : index
    %c0_275 = arith.constant 0 : index
    %475 = vector.load %arg8[%c0_273, %c0_274, %c0_275] : memref<8x16x512xf32, #tpu.memory_space<vmem>>, vector<1x16x512xf32>
    %476 = vector.shape_cast %475 : vector<1x16x512xf32> to vector<16x512xf32>
    %c0_276 = arith.constant 0 : index
    %c0_277 = arith.constant 0 : index
    %c0_278 = arith.constant 0 : index
    %477 = vector.load %arg9[%c0_276, %c0_277, %c0_278] : memref<8x16x512xf32, #tpu.memory_space<vmem>>, vector<1x16x512xf32>
    %478 = vector.shape_cast %477 : vector<1x16x512xf32> to vector<16x512xf32>
    %479 = arith.mulf %476, %478 : vector<16x512xf32>
    %cst_279 = arith.constant dense<0.000000e+00> : vector<512xf32>
    %480 = vector.multi_reduction <add>, %479, %cst_279 [0] : vector<16x512xf32> to vector<512xf32>
    %481 = vector.shape_cast %480 : vector<512xf32> to vector<1x512xf32>
    %c0_280 = arith.constant 0 : index
    %c0_281 = arith.constant 0 : index
    %482 = vector.load %arg11[%c0_280, %c0_281] : memref<8x512xf32, #tpu.memory_space<vmem>>, vector<1x512xf32>
    tpu.vector_store %arg11[%c0_280, %c0_281], %481 {strides = array<i32>} : memref<8x512xf32, #tpu.memory_space<vmem>>, vector<1x512xf32>,
    %c1_282 = arith.constant 1 : index
    %c0_283 = arith.constant 0 : index
    %c0_284 = arith.constant 0 : index
    %483 = vector.load %arg9[%c1_282, %c0_283, %c0_284] : memref<8x16x512xf32, #tpu.memory_space<vmem>>, vector<1x16x512xf32>
    %484 = vector.shape_cast %483 : vector<1x16x512xf32> to vector<16x512xf32>
    %485 = arith.mulf %476, %484 : vector<16x512xf32>
    %cst_285 = arith.constant dense<0.000000e+00> : vector<512xf32>
    %486 = vector.multi_reduction <add>, %485, %cst_285 [0] : vector<16x512xf32> to vector<512xf32>
    %487 = vector.shape_cast %486 : vector<512xf32> to vector<1x512xf32>
    %c1_286 = arith.constant 1 : index
    %c0_287 = arith.constant 0 : index
    %488 = vector.load %arg11[%c1_286, %c0_287] : memref<8x512xf32, #tpu.memory_space<vmem>>, vector<1x512xf32>
    tpu.vector_store %arg11[%c1_286, %c0_287], %487 {strides = array<i32>} : memref<8x512xf32, #tpu.memory_space<vmem>>, vector<1x512xf32>,
    %c2_288 = arith.constant 2 : index
    %c0_289 = arith.constant 0 : index
    %c0_290 = arith.constant 0 : index
    %489 = vector.load %arg9[%c2_288, %c0_289, %c0_290] : memref<8x16x512xf32, #tpu.memory_space<vmem>>, vector<1x16x512xf32>
    %490 = vector.shape_cast %489 : vector<1x16x512xf32> to vector<16x512xf32>
    %491 = arith.mulf %476, %490 : vector<16x512xf32>
    %cst_291 = arith.constant dense<0.000000e+00> : vector<512xf32>
    %492 = vector.multi_reduction <add>, %491, %cst_291 [0] : vector<16x512xf32> to vector<512xf32>
    %493 = vector.shape_cast %492 : vector<512xf32> to vector<1x512xf32>
    %c2_292 = arith.constant 2 : index
    %c0_293 = arith.constant 0 : index
    %494 = vector.load %arg11[%c2_292, %c0_293] : memref<8x512xf32, #tpu.memory_space<vmem>>, vector<1x512xf32>
    tpu.vector_store %arg11[%c2_292, %c0_293], %493 {strides = array<i32>} : memref<8x512xf32, #tpu.memory_space<vmem>>, vector<1x512xf32>,
    %c3_294 = arith.constant 3 : index
    %c0_295 = arith.constant 0 : index
    %c0_296 = arith.constant 0 : index
    %495 = vector.load %arg9[%c3_294, %c0_295, %c0_296] : memref<8x16x512xf32, #tpu.memory_space<vmem>>, vector<1x16x512xf32>
    %496 = vector.shape_cast %495 : vector<1x16x512xf32> to vector<16x512xf32>
    %497 = arith.mulf %476, %496 : vector<16x512xf32>
    %cst_297 = arith.constant dense<0.000000e+00> : vector<512xf32>
    %498 = vector.multi_reduction <add>, %497, %cst_297 [0] : vector<16x512xf32> to vector<512xf32>
    %499 = vector.shape_cast %498 : vector<512xf32> to vector<1x512xf32>
    %c3_298 = arith.constant 3 : index
    %c0_299 = arith.constant 0 : index
    %500 = vector.load %arg11[%c3_298, %c0_299] : memref<8x512xf32, #tpu.memory_space<vmem>>, vector<1x512xf32>
    tpu.vector_store %arg11[%c3_298, %c0_299], %499 {strides = array<i32>} : memref<8x512xf32, #tpu.memory_space<vmem>>, vector<1x512xf32>,
    %c4_300 = arith.constant 4 : index
    %c0_301 = arith.constant 0 : index
    %c0_302 = arith.constant 0 : index
    %501 = vector.load %arg9[%c4_300, %c0_301, %c0_302] : memref<8x16x512xf32, #tpu.memory_space<vmem>>, vector<1x16x512xf32>
    %502 = vector.shape_cast %501 : vector<1x16x512xf32> to vector<16x512xf32>
    %503 = arith.mulf %476, %502 : vector<16x512xf32>
    %cst_303 = arith.constant dense<0.000000e+00> : vector<512xf32>
    %504 = vector.multi_reduction <add>, %503, %cst_303 [0] : vector<16x512xf32> to vector<512xf32>
    %505 = vector.shape_cast %504 : vector<512xf32> to vector<1x512xf32>
    %c4_304 = arith.constant 4 : index
    %c0_305 = arith.constant 0 : index
    %506 = vector.load %arg11[%c4_304, %c0_305] : memref<8x512xf32, #tpu.memory_space<vmem>>, vector<1x512xf32>
    tpu.vector_store %arg11[%c4_304, %c0_305], %505 {strides = array<i32>} : memref<8x512xf32, #tpu.memory_space<vmem>>, vector<1x512xf32>,
    %c5_306 = arith.constant 5 : index
    %c0_307 = arith.constant 0 : index
    %c0_308 = arith.constant 0 : index
    %507 = vector.load %arg9[%c5_306, %c0_307, %c0_308] : memref<8x16x512xf32, #tpu.memory_space<vmem>>, vector<1x16x512xf32>
    %508 = vector.shape_cast %507 : vector<1x16x512xf32> to vector<16x512xf32>
    %509 = arith.mulf %476, %508 : vector<16x512xf32>
    %cst_309 = arith.constant dense<0.000000e+00> : vector<512xf32>
    %510 = vector.multi_reduction <add>, %509, %cst_309 [0] : vector<16x512xf32> to vector<512xf32>
    %511 = vector.shape_cast %510 : vector<512xf32> to vector<1x512xf32>
    %c5_310 = arith.constant 5 : index
    %c0_311 = arith.constant 0 : index
    %512 = vector.load %arg11[%c5_310, %c0_311] : memref<8x512xf32, #tpu.memory_space<vmem>>, vector<1x512xf32>
    tpu.vector_store %arg11[%c5_310, %c0_311], %511 {strides = array<i32>} : memref<8x512xf32, #tpu.memory_space<vmem>>, vector<1x512xf32>,
    %c6_312 = arith.constant 6 : index
    %c0_313 = arith.constant 0 : index
    %c0_314 = arith.constant 0 : index
    %513 = vector.load %arg9[%c6_312, %c0_313, %c0_314] : memref<8x16x512xf32, #tpu.memory_space<vmem>>, vector<1x16x512xf32>
    %514 = vector.shape_cast %513 : vector<1x16x512xf32> to vector<16x512xf32>
    %515 = arith.mulf %476, %514 : vector<16x512xf32>
    %cst_315 = arith.constant dense<0.000000e+00> : vector<512xf32>
    %516 = vector.multi_reduction <add>, %515, %cst_315 [0] : vector<16x512xf32> to vector<512xf32>
    %517 = vector.shape_cast %516 : vector<512xf32> to vector<1x512xf32>
    %c6_316 = arith.constant 6 : index
    %c0_317 = arith.constant 0 : index
    %518 = vector.load %arg11[%c6_316, %c0_317] : memref<8x512xf32, #tpu.memory_space<vmem>>, vector<1x512xf32>
    tpu.vector_store %arg11[%c6_316, %c0_317], %517 {strides = array<i32>} : memref<8x512xf32, #tpu.memory_space<vmem>>, vector<1x512xf32>,
    %c7_318 = arith.constant 7 : index
    %c0_319 = arith.constant 0 : index
    %c0_320 = arith.constant 0 : index
    %519 = vector.load %arg9[%c7_318, %c0_319, %c0_320] : memref<8x16x512xf32, #tpu.memory_space<vmem>>, vector<1x16x512xf32>
    %520 = vector.shape_cast %519 : vector<1x16x512xf32> to vector<16x512xf32>
    %521 = arith.mulf %476, %520 : vector<16x512xf32>
    %cst_321 = arith.constant dense<0.000000e+00> : vector<512xf32>
    %522 = vector.multi_reduction <add>, %521, %cst_321 [0] : vector<16x512xf32> to vector<512xf32>
    %523 = vector.shape_cast %522 : vector<512xf32> to vector<1x512xf32>
    %c7_322 = arith.constant 7 : index
    %c0_323 = arith.constant 0 : index
    %524 = vector.load %arg11[%c7_322, %c0_323] : memref<8x512xf32, #tpu.memory_space<vmem>>, vector<1x512xf32>
    tpu.vector_store %arg11[%c7_322, %c0_323], %523 {strides = array<i32>} : memref<8x512xf32, #tpu.memory_space<vmem>>, vector<1x512xf32>,
    %c0_324 = arith.constant 0 : index
    %c0_325 = arith.constant 0 : index
    %525 = vector.load %arg11[%c0_324, %c0_325] : memref<8x512xf32, #tpu.memory_space<vmem>>, vector<8x512xf32>
    %526 = vector.broadcast %9 : vector<1x512xf32> to vector<8x512xf32>
    %527 = arith.mulf %525, %526 : vector<8x512xf32>
    %528 = math.exp %527 : vector<8x512xf32>
    %cst_326 = arith.constant dense<0.000000e+00> : vector<512xf32>
    %529 = vector.multi_reduction <add>, %528, %cst_326 [0] : vector<8x512xf32> to vector<512xf32>
    %530 = vector.shape_cast %529 : vector<512xf32> to vector<1x512xf32>
    %c0_327 = arith.constant 0 : index
    %c0_328 = arith.constant 0 : index
    %531 = memref.load %arg6[%c0_327, %c0_328] : memref<1x8xf32, #tpu.memory_space<smem>>
    %532 = tpu.reciprocal %530 {approx = true} : vector<1x512xf32> -> vector<1x512xf32>
    %533 = vector.broadcast %531 : f32 to vector<1x512xf32>
    %534 = arith.mulf %533, %532 : vector<1x512xf32>
    %535 = vector.broadcast %534 : vector<1x512xf32> to vector<8x512xf32>
    %536 = arith.mulf %535, %528 : vector<8x512xf32>
    %537 = arith.addf %474, %536 : vector<8x512xf32>
    %c1_329 = arith.constant 1 : index
    %c0_330 = arith.constant 0 : index
    %c0_331 = arith.constant 0 : index
    %538 = vector.load %arg8[%c1_329, %c0_330, %c0_331] : memref<8x16x512xf32, #tpu.memory_space<vmem>>, vector<1x16x512xf32>
    %539 = vector.shape_cast %538 : vector<1x16x512xf32> to vector<16x512xf32>
    %c0_332 = arith.constant 0 : index
    %c0_333 = arith.constant 0 : index
    %c0_334 = arith.constant 0 : index
    %540 = vector.load %arg9[%c0_332, %c0_333, %c0_334] : memref<8x16x512xf32, #tpu.memory_space<vmem>>, vector<1x16x512xf32>
    %541 = vector.shape_cast %540 : vector<1x16x512xf32> to vector<16x512xf32>
    %542 = arith.mulf %539, %541 : vector<16x512xf32>
    %cst_335 = arith.constant dense<0.000000e+00> : vector<512xf32>
    %543 = vector.multi_reduction <add>, %542, %cst_335 [0] : vector<16x512xf32> to vector<512xf32>
    %544 = vector.shape_cast %543 : vector<512xf32> to vector<1x512xf32>
    %c0_336 = arith.constant 0 : index
    %c0_337 = arith.constant 0 : index
    %545 = vector.load %arg11[%c0_336, %c0_337] : memref<8x512xf32, #tpu.memory_space<vmem>>, vector<1x512xf32>
    tpu.vector_store %arg11[%c0_336, %c0_337], %544 {strides = array<i32>} : memref<8x512xf32, #tpu.memory_space<vmem>>, vector<1x512xf32>,
    %c1_338 = arith.constant 1 : index
    %c0_339 = arith.constant 0 : index
    %c0_340 = arith.constant 0 : index
    %546 = vector.load %arg9[%c1_338, %c0_339, %c0_340] : memref<8x16x512xf32, #tpu.memory_space<vmem>>, vector<1x16x512xf32>
    %547 = vector.shape_cast %546 : vector<1x16x512xf32> to vector<16x512xf32>
    %548 = arith.mulf %539, %547 : vector<16x512xf32>
    %cst_341 = arith.constant dense<0.000000e+00> : vector<512xf32>
    %549 = vector.multi_reduction <add>, %548, %cst_341 [0] : vector<16x512xf32> to vector<512xf32>
    %550 = vector.shape_cast %549 : vector<512xf32> to vector<1x512xf32>
    %c1_342 = arith.constant 1 : index
    %c0_343 = arith.constant 0 : index
    %551 = vector.load %arg11[%c1_342, %c0_343] : memref<8x512xf32, #tpu.memory_space<vmem>>, vector<1x512xf32>
    tpu.vector_store %arg11[%c1_342, %c0_343], %550 {strides = array<i32>} : memref<8x512xf32, #tpu.memory_space<vmem>>, vector<1x512xf32>,
    %c2_344 = arith.constant 2 : index
    %c0_345 = arith.constant 0 : index
    %c0_346 = arith.constant 0 : index
    %552 = vector.load %arg9[%c2_344, %c0_345, %c0_346] : memref<8x16x512xf32, #tpu.memory_space<vmem>>, vector<1x16x512xf32>
    %553 = vector.shape_cast %552 : vector<1x16x512xf32> to vector<16x512xf32>
    %554 = arith.mulf %539, %553 : vector<16x512xf32>
    %cst_347 = arith.constant dense<0.000000e+00> : vector<512xf32>
    %555 = vector.multi_reduction <add>, %554, %cst_347 [0] : vector<16x512xf32> to vector<512xf32>
    %556 = vector.shape_cast %555 : vector<512xf32> to vector<1x512xf32>
    %c2_348 = arith.constant 2 : index
    %c0_349 = arith.constant 0 : index
    %557 = vector.load %arg11[%c2_348, %c0_349] : memref<8x512xf32, #tpu.memory_space<vmem>>, vector<1x512xf32>
    tpu.vector_store %arg11[%c2_348, %c0_349], %556 {strides = array<i32>} : memref<8x512xf32, #tpu.memory_space<vmem>>, vector<1x512xf32>,
    %c3_350 = arith.constant 3 : index
    %c0_351 = arith.constant 0 : index
    %c0_352 = arith.constant 0 : index
    %558 = vector.load %arg9[%c3_350, %c0_351, %c0_352] : memref<8x16x512xf32, #tpu.memory_space<vmem>>, vector<1x16x512xf32>
    %559 = vector.shape_cast %558 : vector<1x16x512xf32> to vector<16x512xf32>
    %560 = arith.mulf %539, %559 : vector<16x512xf32>
    %cst_353 = arith.constant dense<0.000000e+00> : vector<512xf32>
    %561 = vector.multi_reduction <add>, %560, %cst_353 [0] : vector<16x512xf32> to vector<512xf32>
    %562 = vector.shape_cast %561 : vector<512xf32> to vector<1x512xf32>
    %c3_354 = arith.constant 3 : index
    %c0_355 = arith.constant 0 : index
    %563 = vector.load %arg11[%c3_354, %c0_355] : memref<8x512xf32, #tpu.memory_space<vmem>>, vector<1x512xf32>
    tpu.vector_store %arg11[%c3_354, %c0_355], %562 {strides = array<i32>} : memref<8x512xf32, #tpu.memory_space<vmem>>, vector<1x512xf32>,
    %c4_356 = arith.constant 4 : index
    %c0_357 = arith.constant 0 : index
    %c0_358 = arith.constant 0 : index
    %564 = vector.load %arg9[%c4_356, %c0_357, %c0_358] : memref<8x16x512xf32, #tpu.memory_space<vmem>>, vector<1x16x512xf32>
    %565 = vector.shape_cast %564 : vector<1x16x512xf32> to vector<16x512xf32>
    %566 = arith.mulf %539, %565 : vector<16x512xf32>
    %cst_359 = arith.constant dense<0.000000e+00> : vector<512xf32>
    %567 = vector.multi_reduction <add>, %566, %cst_359 [0] : vector<16x512xf32> to vector<512xf32>
    %568 = vector.shape_cast %567 : vector<512xf32> to vector<1x512xf32>
    %c4_360 = arith.constant 4 : index
    %c0_361 = arith.constant 0 : index
    %569 = vector.load %arg11[%c4_360, %c0_361] : memref<8x512xf32, #tpu.memory_space<vmem>>, vector<1x512xf32>
    tpu.vector_store %arg11[%c4_360, %c0_361], %568 {strides = array<i32>} : memref<8x512xf32, #tpu.memory_space<vmem>>, vector<1x512xf32>,
    %c5_362 = arith.constant 5 : index
    %c0_363 = arith.constant 0 : index
    %c0_364 = arith.constant 0 : index
    %570 = vector.load %arg9[%c5_362, %c0_363, %c0_364] : memref<8x16x512xf32, #tpu.memory_space<vmem>>, vector<1x16x512xf32>
    %571 = vector.shape_cast %570 : vector<1x16x512xf32> to vector<16x512xf32>
    %572 = arith.mulf %539, %571 : vector<16x512xf32>
    %cst_365 = arith.constant dense<0.000000e+00> : vector<512xf32>
    %573 = vector.multi_reduction <add>, %572, %cst_365 [0] : vector<16x512xf32> to vector<512xf32>
    %574 = vector.shape_cast %573 : vector<512xf32> to vector<1x512xf32>
    %c5_366 = arith.constant 5 : index
    %c0_367 = arith.constant 0 : index
    %575 = vector.load %arg11[%c5_366, %c0_367] : memref<8x512xf32, #tpu.memory_space<vmem>>, vector<1x512xf32>
    tpu.vector_store %arg11[%c5_366, %c0_367], %574 {strides = array<i32>} : memref<8x512xf32, #tpu.memory_space<vmem>>, vector<1x512xf32>,
    %c6_368 = arith.constant 6 : index
    %c0_369 = arith.constant 0 : index
    %c0_370 = arith.constant 0 : index
    %576 = vector.load %arg9[%c6_368, %c0_369, %c0_370] : memref<8x16x512xf32, #tpu.memory_space<vmem>>, vector<1x16x512xf32>
    %577 = vector.shape_cast %576 : vector<1x16x512xf32> to vector<16x512xf32>
    %578 = arith.mulf %539, %577 : vector<16x512xf32>
    %cst_371 = arith.constant dense<0.000000e+00> : vector<512xf32>
    %579 = vector.multi_reduction <add>, %578, %cst_371 [0] : vector<16x512xf32> to vector<512xf32>
    %580 = vector.shape_cast %579 : vector<512xf32> to vector<1x512xf32>
    %c6_372 = arith.constant 6 : index
    %c0_373 = arith.constant 0 : index
    %581 = vector.load %arg11[%c6_372, %c0_373] : memref<8x512xf32, #tpu.memory_space<vmem>>, vector<1x512xf32>
    tpu.vector_store %arg11[%c6_372, %c0_373], %580 {strides = array<i32>} : memref<8x512xf32, #tpu.memory_space<vmem>>, vector<1x512xf32>,
    %c7_374 = arith.constant 7 : index
    %c0_375 = arith.constant 0 : index
    %c0_376 = arith.constant 0 : index
    %582 = vector.load %arg9[%c7_374, %c0_375, %c0_376] : memref<8x16x512xf32, #tpu.memory_space<vmem>>, vector<1x16x512xf32>
    %583 = vector.shape_cast %582 : vector<1x16x512xf32> to vector<16x512xf32>
    %584 = arith.mulf %539, %583 : vector<16x512xf32>
    %cst_377 = arith.constant dense<0.000000e+00> : vector<512xf32>
    %585 = vector.multi_reduction <add>, %584, %cst_377 [0] : vector<16x512xf32> to vector<512xf32>
    %586 = vector.shape_cast %585 : vector<512xf32> to vector<1x512xf32>
    %c7_378 = arith.constant 7 : index
    %c0_379 = arith.constant 0 : index
    %587 = vector.load %arg11[%c7_378, %c0_379] : memref<8x512xf32, #tpu.memory_space<vmem>>, vector<1x512xf32>
    tpu.vector_store %arg11[%c7_378, %c0_379], %586 {strides = array<i32>} : memref<8x512xf32, #tpu.memory_space<vmem>>, vector<1x512xf32>,
    %c0_380 = arith.constant 0 : index
    %c0_381 = arith.constant 0 : index
    %588 = vector.load %arg11[%c0_380, %c0_381] : memref<8x512xf32, #tpu.memory_space<vmem>>, vector<8x512xf32>
    %589 = vector.broadcast %9 : vector<1x512xf32> to vector<8x512xf32>
    %590 = arith.mulf %588, %589 : vector<8x512xf32>
    %591 = math.exp %590 : vector<8x512xf32>
    %cst_382 = arith.constant dense<0.000000e+00> : vector<512xf32>
    %592 = vector.multi_reduction <add>, %591, %cst_382 [0] : vector<8x512xf32> to vector<512xf32>
    %593 = vector.shape_cast %592 : vector<512xf32> to vector<1x512xf32>
    %c0_383 = arith.constant 0 : index
    %c1_384 = arith.constant 1 : index
    %594 = memref.load %arg6[%c0_383, %c1_384] : memref<1x8xf32, #tpu.memory_space<smem>>
    %595 = tpu.reciprocal %593 {approx = true} : vector<1x512xf32> -> vector<1x512xf32>
    %596 = vector.broadcast %594 : f32 to vector<1x512xf32>
    %597 = arith.mulf %596, %595 : vector<1x512xf32>
    %598 = vector.broadcast %597 : vector<1x512xf32> to vector<8x512xf32>
    %599 = arith.mulf %598, %591 : vector<8x512xf32>
    %600 = arith.addf %537, %599 : vector<8x512xf32>
    %c2_385 = arith.constant 2 : index
    %c0_386 = arith.constant 0 : index
    %c0_387 = arith.constant 0 : index
    %601 = vector.load %arg8[%c2_385, %c0_386, %c0_387] : memref<8x16x512xf32, #tpu.memory_space<vmem>>, vector<1x16x512xf32>
    %602 = vector.shape_cast %601 : vector<1x16x512xf32> to vector<16x512xf32>
    %c0_388 = arith.constant 0 : index
    %c0_389 = arith.constant 0 : index
    %c0_390 = arith.constant 0 : index
    %603 = vector.load %arg9[%c0_388, %c0_389, %c0_390] : memref<8x16x512xf32, #tpu.memory_space<vmem>>, vector<1x16x512xf32>
    %604 = vector.shape_cast %603 : vector<1x16x512xf32> to vector<16x512xf32>
    %605 = arith.mulf %602, %604 : vector<16x512xf32>
    %cst_391 = arith.constant dense<0.000000e+00> : vector<512xf32>
    %606 = vector.multi_reduction <add>, %605, %cst_391 [0] : vector<16x512xf32> to vector<512xf32>
    %607 = vector.shape_cast %606 : vector<512xf32> to vector<1x512xf32>
    %c0_392 = arith.constant 0 : index
    %c0_393 = arith.constant 0 : index
    %608 = vector.load %arg11[%c0_392, %c0_393] : memref<8x512xf32, #tpu.memory_space<vmem>>, vector<1x512xf32>
    tpu.vector_store %arg11[%c0_392, %c0_393], %607 {strides = array<i32>} : memref<8x512xf32, #tpu.memory_space<vmem>>, vector<1x512xf32>,
    %c1_394 = arith.constant 1 : index
    %c0_395 = arith.constant 0 : index
    %c0_396 = arith.constant 0 : index
    %609 = vector.load %arg9[%c1_394, %c0_395, %c0_396] : memref<8x16x512xf32, #tpu.memory_space<vmem>>, vector<1x16x512xf32>
    %610 = vector.shape_cast %609 : vector<1x16x512xf32> to vector<16x512xf32>
    %611 = arith.mulf %602, %610 : vector<16x512xf32>
    %cst_397 = arith.constant dense<0.000000e+00> : vector<512xf32>
    %612 = vector.multi_reduction <add>, %611, %cst_397 [0] : vector<16x512xf32> to vector<512xf32>
    %613 = vector.shape_cast %612 : vector<512xf32> to vector<1x512xf32>
    %c1_398 = arith.constant 1 : index
    %c0_399 = arith.constant 0 : index
    %614 = vector.load %arg11[%c1_398, %c0_399] : memref<8x512xf32, #tpu.memory_space<vmem>>, vector<1x512xf32>
    tpu.vector_store %arg11[%c1_398, %c0_399], %613 {strides = array<i32>} : memref<8x512xf32, #tpu.memory_space<vmem>>, vector<1x512xf32>,
    %c2_400 = arith.constant 2 : index
    %c0_401 = arith.constant 0 : index
    %c0_402 = arith.constant 0 : index
    %615 = vector.load %arg9[%c2_400, %c0_401, %c0_402] : memref<8x16x512xf32, #tpu.memory_space<vmem>>, vector<1x16x512xf32>
    %616 = vector.shape_cast %615 : vector<1x16x512xf32> to vector<16x512xf32>
    %617 = arith.mulf %602, %616 : vector<16x512xf32>
    %cst_403 = arith.constant dense<0.000000e+00> : vector<512xf32>
    %618 = vector.multi_reduction <add>, %617, %cst_403 [0] : vector<16x512xf32> to vector<512xf32>
    %619 = vector.shape_cast %618 : vector<512xf32> to vector<1x512xf32>
    %c2_404 = arith.constant 2 : index
    %c0_405 = arith.constant 0 : index
    %620 = vector.load %arg11[%c2_404, %c0_405] : memref<8x512xf32, #tpu.memory_space<vmem>>, vector<1x512xf32>
    tpu.vector_store %arg11[%c2_404, %c0_405], %619 {strides = array<i32>} : memref<8x512xf32, #tpu.memory_space<vmem>>, vector<1x512xf32>,
    %c3_406 = arith.constant 3 : index
    %c0_407 = arith.constant 0 : index
    %c0_408 = arith.constant 0 : index
    %621 = vector.load %arg9[%c3_406, %c0_407, %c0_408] : memref<8x16x512xf32, #tpu.memory_space<vmem>>, vector<1x16x512xf32>
    %622 = vector.shape_cast %621 : vector<1x16x512xf32> to vector<16x512xf32>
    %623 = arith.mulf %602, %622 : vector<16x512xf32>
    %cst_409 = arith.constant dense<0.000000e+00> : vector<512xf32>
    %624 = vector.multi_reduction <add>, %623, %cst_409 [0] : vector<16x512xf32> to vector<512xf32>
    %625 = vector.shape_cast %624 : vector<512xf32> to vector<1x512xf32>
    %c3_410 = arith.constant 3 : index
    %c0_411 = arith.constant 0 : index
    %626 = vector.load %arg11[%c3_410, %c0_411] : memref<8x512xf32, #tpu.memory_space<vmem>>, vector<1x512xf32>
    tpu.vector_store %arg11[%c3_410, %c0_411], %625 {strides = array<i32>} : memref<8x512xf32, #tpu.memory_space<vmem>>, vector<1x512xf32>,
    %c4_412 = arith.constant 4 : index
    %c0_413 = arith.constant 0 : index
    %c0_414 = arith.constant 0 : index
    %627 = vector.load %arg9[%c4_412, %c0_413, %c0_414] : memref<8x16x512xf32, #tpu.memory_space<vmem>>, vector<1x16x512xf32>
    %628 = vector.shape_cast %627 : vector<1x16x512xf32> to vector<16x512xf32>
    %629 = arith.mulf %602, %628 : vector<16x512xf32>
    %cst_415 = arith.constant dense<0.000000e+00> : vector<512xf32>
    %630 = vector.multi_reduction <add>, %629, %cst_415 [0] : vector<16x512xf32> to vector<512xf32>
    %631 = vector.shape_cast %630 : vector<512xf32> to vector<1x512xf32>
    %c4_416 = arith.constant 4 : index
    %c0_417 = arith.constant 0 : index
    %632 = vector.load %arg11[%c4_416, %c0_417] : memref<8x512xf32, #tpu.memory_space<vmem>>, vector<1x512xf32>
    tpu.vector_store %arg11[%c4_416, %c0_417], %631 {strides = array<i32>} : memref<8x512xf32, #tpu.memory_space<vmem>>, vector<1x512xf32>,
    %c5_418 = arith.constant 5 : index
    %c0_419 = arith.constant 0 : index
    %c0_420 = arith.constant 0 : index
    %633 = vector.load %arg9[%c5_418, %c0_419, %c0_420] : memref<8x16x512xf32, #tpu.memory_space<vmem>>, vector<1x16x512xf32>
    %634 = vector.shape_cast %633 : vector<1x16x512xf32> to vector<16x512xf32>
    %635 = arith.mulf %602, %634 : vector<16x512xf32>
    %cst_421 = arith.constant dense<0.000000e+00> : vector<512xf32>
    %636 = vector.multi_reduction <add>, %635, %cst_421 [0] : vector<16x512xf32> to vector<512xf32>
    %637 = vector.shape_cast %636 : vector<512xf32> to vector<1x512xf32>
    %c5_422 = arith.constant 5 : index
    %c0_423 = arith.constant 0 : index
    %638 = vector.load %arg11[%c5_422, %c0_423] : memref<8x512xf32, #tpu.memory_space<vmem>>, vector<1x512xf32>
    tpu.vector_store %arg11[%c5_422, %c0_423], %637 {strides = array<i32>} : memref<8x512xf32, #tpu.memory_space<vmem>>, vector<1x512xf32>,
    %c6_424 = arith.constant 6 : index
    %c0_425 = arith.constant 0 : index
    %c0_426 = arith.constant 0 : index
    %639 = vector.load %arg9[%c6_424, %c0_425, %c0_426] : memref<8x16x512xf32, #tpu.memory_space<vmem>>, vector<1x16x512xf32>
    %640 = vector.shape_cast %639 : vector<1x16x512xf32> to vector<16x512xf32>
    %641 = arith.mulf %602, %640 : vector<16x512xf32>
    %cst_427 = arith.constant dense<0.000000e+00> : vector<512xf32>
    %642 = vector.multi_reduction <add>, %641, %cst_427 [0] : vector<16x512xf32> to vector<512xf32>
    %643 = vector.shape_cast %642 : vector<512xf32> to vector<1x512xf32>
    %c6_428 = arith.constant 6 : index
    %c0_429 = arith.constant 0 : index
    %644 = vector.load %arg11[%c6_428, %c0_429] : memref<8x512xf32, #tpu.memory_space<vmem>>, vector<1x512xf32>
    tpu.vector_store %arg11[%c6_428, %c0_429], %643 {strides = array<i32>} : memref<8x512xf32, #tpu.memory_space<vmem>>, vector<1x512xf32>,
    %c7_430 = arith.constant 7 : index
    %c0_431 = arith.constant 0 : index
    %c0_432 = arith.constant 0 : index
    %645 = vector.load %arg9[%c7_430, %c0_431, %c0_432] : memref<8x16x512xf32, #tpu.memory_space<vmem>>, vector<1x16x512xf32>
    %646 = vector.shape_cast %645 : vector<1x16x512xf32> to vector<16x512xf32>
    %647 = arith.mulf %602, %646 : vector<16x512xf32>
    %cst_433 = arith.constant dense<0.000000e+00> : vector<512xf32>
    %648 = vector.multi_reduction <add>, %647, %cst_433 [0] : vector<16x512xf32> to vector<512xf32>
    %649 = vector.shape_cast %648 : vector<512xf32> to vector<1x512xf32>
    %c7_434 = arith.constant 7 : index
    %c0_435 = arith.constant 0 : index
    %650 = vector.load %arg11[%c7_434, %c0_435] : memref<8x512xf32, #tpu.memory_space<vmem>>, vector<1x512xf32>
    tpu.vector_store %arg11[%c7_434, %c0_435], %649 {strides = array<i32>} : memref<8x512xf32, #tpu.memory_space<vmem>>, vector<1x512xf32>,
    %c0_436 = arith.constant 0 : index
    %c0_437 = arith.constant 0 : index
    %651 = vector.load %arg11[%c0_436, %c0_437] : memref<8x512xf32, #tpu.memory_space<vmem>>, vector<8x512xf32>
    %652 = vector.broadcast %9 : vector<1x512xf32> to vector<8x512xf32>
    %653 = arith.mulf %651, %652 : vector<8x512xf32>
    %654 = math.exp %653 : vector<8x512xf32>
    %cst_438 = arith.constant dense<0.000000e+00> : vector<512xf32>
    %655 = vector.multi_reduction <add>, %654, %cst_438 [0] : vector<8x512xf32> to vector<512xf32>
    %656 = vector.shape_cast %655 : vector<512xf32> to vector<1x512xf32>
    %c0_439 = arith.constant 0 : index
    %c2_440 = arith.constant 2 : index
    %657 = memref.load %arg6[%c0_439, %c2_440] : memref<1x8xf32, #tpu.memory_space<smem>>
    %658 = tpu.reciprocal %656 {approx = true} : vector<1x512xf32> -> vector<1x512xf32>
    %659 = vector.broadcast %657 : f32 to vector<1x512xf32>
    %660 = arith.mulf %659, %658 : vector<1x512xf32>
    %661 = vector.broadcast %660 : vector<1x512xf32> to vector<8x512xf32>
    %662 = arith.mulf %661, %654 : vector<8x512xf32>
    %663 = arith.addf %600, %662 : vector<8x512xf32>
    %c3_441 = arith.constant 3 : index
    %c0_442 = arith.constant 0 : index
    %c0_443 = arith.constant 0 : index
    %664 = vector.load %arg8[%c3_441, %c0_442, %c0_443] : memref<8x16x512xf32, #tpu.memory_space<vmem>>, vector<1x16x512xf32>
    %665 = vector.shape_cast %664 : vector<1x16x512xf32> to vector<16x512xf32>
    %c0_444 = arith.constant 0 : index
    %c0_445 = arith.constant 0 : index
    %c0_446 = arith.constant 0 : index
    %666 = vector.load %arg9[%c0_444, %c0_445, %c0_446] : memref<8x16x512xf32, #tpu.memory_space<vmem>>, vector<1x16x512xf32>
    %667 = vector.shape_cast %666 : vector<1x16x512xf32> to vector<16x512xf32>
    %668 = arith.mulf %665, %667 : vector<16x512xf32>
    %cst_447 = arith.constant dense<0.000000e+00> : vector<512xf32>
    %669 = vector.multi_reduction <add>, %668, %cst_447 [0] : vector<16x512xf32> to vector<512xf32>
    %670 = vector.shape_cast %669 : vector<512xf32> to vector<1x512xf32>
    %c0_448 = arith.constant 0 : index
    %c0_449 = arith.constant 0 : index
    %671 = vector.load %arg11[%c0_448, %c0_449] : memref<8x512xf32, #tpu.memory_space<vmem>>, vector<1x512xf32>
    tpu.vector_store %arg11[%c0_448, %c0_449], %670 {strides = array<i32>} : memref<8x512xf32, #tpu.memory_space<vmem>>, vector<1x512xf32>,
    %c1_450 = arith.constant 1 : index
    %c0_451 = arith.constant 0 : index
    %c0_452 = arith.constant 0 : index
    %672 = vector.load %arg9[%c1_450, %c0_451, %c0_452] : memref<8x16x512xf32, #tpu.memory_space<vmem>>, vector<1x16x512xf32>
    %673 = vector.shape_cast %672 : vector<1x16x512xf32> to vector<16x512xf32>
    %674 = arith.mulf %665, %673 : vector<16x512xf32>
    %cst_453 = arith.constant dense<0.000000e+00> : vector<512xf32>
    %675 = vector.multi_reduction <add>, %674, %cst_453 [0] : vector<16x512xf32> to vector<512xf32>
    %676 = vector.shape_cast %675 : vector<512xf32> to vector<1x512xf32>
    %c1_454 = arith.constant 1 : index
    %c0_455 = arith.constant 0 : index
    %677 = vector.load %arg11[%c1_454, %c0_455] : memref<8x512xf32, #tpu.memory_space<vmem>>, vector<1x512xf32>
    tpu.vector_store %arg11[%c1_454, %c0_455], %676 {strides = array<i32>} : memref<8x512xf32, #tpu.memory_space<vmem>>, vector<1x512xf32>,
    %c2_456 = arith.constant 2 : index
    %c0_457 = arith.constant 0 : index
    %c0_458 = arith.constant 0 : index
    %678 = vector.load %arg9[%c2_456, %c0_457, %c0_458] : memref<8x16x512xf32, #tpu.memory_space<vmem>>, vector<1x16x512xf32>
    %679 = vector.shape_cast %678 : vector<1x16x512xf32> to vector<16x512xf32>
    %680 = arith.mulf %665, %679 : vector<16x512xf32>
    %cst_459 = arith.constant dense<0.000000e+00> : vector<512xf32>
    %681 = vector.multi_reduction <add>, %680, %cst_459 [0] : vector<16x512xf32> to vector<512xf32>
    %682 = vector.shape_cast %681 : vector<512xf32> to vector<1x512xf32>
    %c2_460 = arith.constant 2 : index
    %c0_461 = arith.constant 0 : index
    %683 = vector.load %arg11[%c2_460, %c0_461] : memref<8x512xf32, #tpu.memory_space<vmem>>, vector<1x512xf32>
    tpu.vector_store %arg11[%c2_460, %c0_461], %682 {strides = array<i32>} : memref<8x512xf32, #tpu.memory_space<vmem>>, vector<1x512xf32>,
    %c3_462 = arith.constant 3 : index
    %c0_463 = arith.constant 0 : index
    %c0_464 = arith.constant 0 : index
    %684 = vector.load %arg9[%c3_462, %c0_463, %c0_464] : memref<8x16x512xf32, #tpu.memory_space<vmem>>, vector<1x16x512xf32>
    %685 = vector.shape_cast %684 : vector<1x16x512xf32> to vector<16x512xf32>
    %686 = arith.mulf %665, %685 : vector<16x512xf32>
    %cst_465 = arith.constant dense<0.000000e+00> : vector<512xf32>
    %687 = vector.multi_reduction <add>, %686, %cst_465 [0] : vector<16x512xf32> to vector<512xf32>
    %688 = vector.shape_cast %687 : vector<512xf32> to vector<1x512xf32>
    %c3_466 = arith.constant 3 : index
    %c0_467 = arith.constant 0 : index
    %689 = vector.load %arg11[%c3_466, %c0_467] : memref<8x512xf32, #tpu.memory_space<vmem>>, vector<1x512xf32>
    tpu.vector_store %arg11[%c3_466, %c0_467], %688 {strides = array<i32>} : memref<8x512xf32, #tpu.memory_space<vmem>>, vector<1x512xf32>,
    %c4_468 = arith.constant 4 : index
    %c0_469 = arith.constant 0 : index
    %c0_470 = arith.constant 0 : index
    %690 = vector.load %arg9[%c4_468, %c0_469, %c0_470] : memref<8x16x512xf32, #tpu.memory_space<vmem>>, vector<1x16x512xf32>
    %691 = vector.shape_cast %690 : vector<1x16x512xf32> to vector<16x512xf32>
    %692 = arith.mulf %665, %691 : vector<16x512xf32>
    %cst_471 = arith.constant dense<0.000000e+00> : vector<512xf32>
    %693 = vector.multi_reduction <add>, %692, %cst_471 [0] : vector<16x512xf32> to vector<512xf32>
    %694 = vector.shape_cast %693 : vector<512xf32> to vector<1x512xf32>
    %c4_472 = arith.constant 4 : index
    %c0_473 = arith.constant 0 : index
    %695 = vector.load %arg11[%c4_472, %c0_473] : memref<8x512xf32, #tpu.memory_space<vmem>>, vector<1x512xf32>
    tpu.vector_store %arg11[%c4_472, %c0_473], %694 {strides = array<i32>} : memref<8x512xf32, #tpu.memory_space<vmem>>, vector<1x512xf32>,
    %c5_474 = arith.constant 5 : index
    %c0_475 = arith.constant 0 : index
    %c0_476 = arith.constant 0 : index
    %696 = vector.load %arg9[%c5_474, %c0_475, %c0_476] : memref<8x16x512xf32, #tpu.memory_space<vmem>>, vector<1x16x512xf32>
    %697 = vector.shape_cast %696 : vector<1x16x512xf32> to vector<16x512xf32>
    %698 = arith.mulf %665, %697 : vector<16x512xf32>
    %cst_477 = arith.constant dense<0.000000e+00> : vector<512xf32>
    %699 = vector.multi_reduction <add>, %698, %cst_477 [0] : vector<16x512xf32> to vector<512xf32>
    %700 = vector.shape_cast %699 : vector<512xf32> to vector<1x512xf32>
    %c5_478 = arith.constant 5 : index
    %c0_479 = arith.constant 0 : index
    %701 = vector.load %arg11[%c5_478, %c0_479] : memref<8x512xf32, #tpu.memory_space<vmem>>, vector<1x512xf32>
    tpu.vector_store %arg11[%c5_478, %c0_479], %700 {strides = array<i32>} : memref<8x512xf32, #tpu.memory_space<vmem>>, vector<1x512xf32>,
    %c6_480 = arith.constant 6 : index
    %c0_481 = arith.constant 0 : index
    %c0_482 = arith.constant 0 : index
    %702 = vector.load %arg9[%c6_480, %c0_481, %c0_482] : memref<8x16x512xf32, #tpu.memory_space<vmem>>, vector<1x16x512xf32>
    %703 = vector.shape_cast %702 : vector<1x16x512xf32> to vector<16x512xf32>
    %704 = arith.mulf %665, %703 : vector<16x512xf32>
    %cst_483 = arith.constant dense<0.000000e+00> : vector<512xf32>
    %705 = vector.multi_reduction <add>, %704, %cst_483 [0] : vector<16x512xf32> to vector<512xf32>
    %706 = vector.shape_cast %705 : vector<512xf32> to vector<1x512xf32>
    %c6_484 = arith.constant 6 : index
    %c0_485 = arith.constant 0 : index
    %707 = vector.load %arg11[%c6_484, %c0_485] : memref<8x512xf32, #tpu.memory_space<vmem>>, vector<1x512xf32>
    tpu.vector_store %arg11[%c6_484, %c0_485], %706 {strides = array<i32>} : memref<8x512xf32, #tpu.memory_space<vmem>>, vector<1x512xf32>,
    %c7_486 = arith.constant 7 : index
    %c0_487 = arith.constant 0 : index
    %c0_488 = arith.constant 0 : index
    %708 = vector.load %arg9[%c7_486, %c0_487, %c0_488] : memref<8x16x512xf32, #tpu.memory_space<vmem>>, vector<1x16x512xf32>
    %709 = vector.shape_cast %708 : vector<1x16x512xf32> to vector<16x512xf32>
    %710 = arith.mulf %665, %709 : vector<16x512xf32>
    %cst_489 = arith.constant dense<0.000000e+00> : vector<512xf32>
    %711 = vector.multi_reduction <add>, %710, %cst_489 [0] : vector<16x512xf32> to vector<512xf32>
    %712 = vector.shape_cast %711 : vector<512xf32> to vector<1x512xf32>
    %c7_490 = arith.constant 7 : index
    %c0_491 = arith.constant 0 : index
    %713 = vector.load %arg11[%c7_490, %c0_491] : memref<8x512xf32, #tpu.memory_space<vmem>>, vector<1x512xf32>
    tpu.vector_store %arg11[%c7_490, %c0_491], %712 {strides = array<i32>} : memref<8x512xf32, #tpu.memory_space<vmem>>, vector<1x512xf32>,
    %c0_492 = arith.constant 0 : index
    %c0_493 = arith.constant 0 : index
    %714 = vector.load %arg11[%c0_492, %c0_493] : memref<8x512xf32, #tpu.memory_space<vmem>>, vector<8x512xf32>
    %715 = vector.broadcast %9 : vector<1x512xf32> to vector<8x512xf32>
    %716 = arith.mulf %714, %715 : vector<8x512xf32>
    %717 = math.exp %716 : vector<8x512xf32>
    %cst_494 = arith.constant dense<0.000000e+00> : vector<512xf32>
    %718 = vector.multi_reduction <add>, %717, %cst_494 [0] : vector<8x512xf32> to vector<512xf32>
    %719 = vector.shape_cast %718 : vector<512xf32> to vector<1x512xf32>
    %c0_495 = arith.constant 0 : index
    %c3_496 = arith.constant 3 : index
    %720 = memref.load %arg6[%c0_495, %c3_496] : memref<1x8xf32, #tpu.memory_space<smem>>
    %721 = tpu.reciprocal %719 {approx = true} : vector<1x512xf32> -> vector<1x512xf32>
    %722 = vector.broadcast %720 : f32 to vector<1x512xf32>
    %723 = arith.mulf %722, %721 : vector<1x512xf32>
    %724 = vector.broadcast %723 : vector<1x512xf32> to vector<8x512xf32>
    %725 = arith.mulf %724, %717 : vector<8x512xf32>
    %726 = arith.addf %663, %725 : vector<8x512xf32>
    %c4_497 = arith.constant 4 : index
    %c0_498 = arith.constant 0 : index
    %c0_499 = arith.constant 0 : index
    %727 = vector.load %arg8[%c4_497, %c0_498, %c0_499] : memref<8x16x512xf32, #tpu.memory_space<vmem>>, vector<1x16x512xf32>
    %728 = vector.shape_cast %727 : vector<1x16x512xf32> to vector<16x512xf32>
    %c0_500 = arith.constant 0 : index
    %c0_501 = arith.constant 0 : index
    %c0_502 = arith.constant 0 : index
    %729 = vector.load %arg9[%c0_500, %c0_501, %c0_502] : memref<8x16x512xf32, #tpu.memory_space<vmem>>, vector<1x16x512xf32>
    %730 = vector.shape_cast %729 : vector<1x16x512xf32> to vector<16x512xf32>
    %731 = arith.mulf %728, %730 : vector<16x512xf32>
    %cst_503 = arith.constant dense<0.000000e+00> : vector<512xf32>
    %732 = vector.multi_reduction <add>, %731, %cst_503 [0] : vector<16x512xf32> to vector<512xf32>
    %733 = vector.shape_cast %732 : vector<512xf32> to vector<1x512xf32>
    %c0_504 = arith.constant 0 : index
    %c0_505 = arith.constant 0 : index
    %734 = vector.load %arg11[%c0_504, %c0_505] : memref<8x512xf32, #tpu.memory_space<vmem>>, vector<1x512xf32>
    tpu.vector_store %arg11[%c0_504, %c0_505], %733 {strides = array<i32>} : memref<8x512xf32, #tpu.memory_space<vmem>>, vector<1x512xf32>,
    %c1_506 = arith.constant 1 : index
    %c0_507 = arith.constant 0 : index
    %c0_508 = arith.constant 0 : index
    %735 = vector.load %arg9[%c1_506, %c0_507, %c0_508] : memref<8x16x512xf32, #tpu.memory_space<vmem>>, vector<1x16x512xf32>
    %736 = vector.shape_cast %735 : vector<1x16x512xf32> to vector<16x512xf32>
    %737 = arith.mulf %728, %736 : vector<16x512xf32>
    %cst_509 = arith.constant dense<0.000000e+00> : vector<512xf32>
    %738 = vector.multi_reduction <add>, %737, %cst_509 [0] : vector<16x512xf32> to vector<512xf32>
    %739 = vector.shape_cast %738 : vector<512xf32> to vector<1x512xf32>
    %c1_510 = arith.constant 1 : index
    %c0_511 = arith.constant 0 : index
    %740 = vector.load %arg11[%c1_510, %c0_511] : memref<8x512xf32, #tpu.memory_space<vmem>>, vector<1x512xf32>
    tpu.vector_store %arg11[%c1_510, %c0_511], %739 {strides = array<i32>} : memref<8x512xf32, #tpu.memory_space<vmem>>, vector<1x512xf32>,
    %c2_512 = arith.constant 2 : index
    %c0_513 = arith.constant 0 : index
    %c0_514 = arith.constant 0 : index
    %741 = vector.load %arg9[%c2_512, %c0_513, %c0_514] : memref<8x16x512xf32, #tpu.memory_space<vmem>>, vector<1x16x512xf32>
    %742 = vector.shape_cast %741 : vector<1x16x512xf32> to vector<16x512xf32>
    %743 = arith.mulf %728, %742 : vector<16x512xf32>
    %cst_515 = arith.constant dense<0.000000e+00> : vector<512xf32>
    %744 = vector.multi_reduction <add>, %743, %cst_515 [0] : vector<16x512xf32> to vector<512xf32>
    %745 = vector.shape_cast %744 : vector<512xf32> to vector<1x512xf32>
    %c2_516 = arith.constant 2 : index
    %c0_517 = arith.constant 0 : index
    %746 = vector.load %arg11[%c2_516, %c0_517] : memref<8x512xf32, #tpu.memory_space<vmem>>, vector<1x512xf32>
    tpu.vector_store %arg11[%c2_516, %c0_517], %745 {strides = array<i32>} : memref<8x512xf32, #tpu.memory_space<vmem>>, vector<1x512xf32>,
    %c3_518 = arith.constant 3 : index
    %c0_519 = arith.constant 0 : index
    %c0_520 = arith.constant 0 : index
    %747 = vector.load %arg9[%c3_518, %c0_519, %c0_520] : memref<8x16x512xf32, #tpu.memory_space<vmem>>, vector<1x16x512xf32>
    %748 = vector.shape_cast %747 : vector<1x16x512xf32> to vector<16x512xf32>
    %749 = arith.mulf %728, %748 : vector<16x512xf32>
    %cst_521 = arith.constant dense<0.000000e+00> : vector<512xf32>
    %750 = vector.multi_reduction <add>, %749, %cst_521 [0] : vector<16x512xf32> to vector<512xf32>
    %751 = vector.shape_cast %750 : vector<512xf32> to vector<1x512xf32>
    %c3_522 = arith.constant 3 : index
    %c0_523 = arith.constant 0 : index
    %752 = vector.load %arg11[%c3_522, %c0_523] : memref<8x512xf32, #tpu.memory_space<vmem>>, vector<1x512xf32>
    tpu.vector_store %arg11[%c3_522, %c0_523], %751 {strides = array<i32>} : memref<8x512xf32, #tpu.memory_space<vmem>>, vector<1x512xf32>,
    %c4_524 = arith.constant 4 : index
    %c0_525 = arith.constant 0 : index
    %c0_526 = arith.constant 0 : index
    %753 = vector.load %arg9[%c4_524, %c0_525, %c0_526] : memref<8x16x512xf32, #tpu.memory_space<vmem>>, vector<1x16x512xf32>
    %754 = vector.shape_cast %753 : vector<1x16x512xf32> to vector<16x512xf32>
    %755 = arith.mulf %728, %754 : vector<16x512xf32>
    %cst_527 = arith.constant dense<0.000000e+00> : vector<512xf32>
    %756 = vector.multi_reduction <add>, %755, %cst_527 [0] : vector<16x512xf32> to vector<512xf32>
    %757 = vector.shape_cast %756 : vector<512xf32> to vector<1x512xf32>
    %c4_528 = arith.constant 4 : index
    %c0_529 = arith.constant 0 : index
    %758 = vector.load %arg11[%c4_528, %c0_529] : memref<8x512xf32, #tpu.memory_space<vmem>>, vector<1x512xf32>
    tpu.vector_store %arg11[%c4_528, %c0_529], %757 {strides = array<i32>} : memref<8x512xf32, #tpu.memory_space<vmem>>, vector<1x512xf32>,
    %c5_530 = arith.constant 5 : index
    %c0_531 = arith.constant 0 : index
    %c0_532 = arith.constant 0 : index
    %759 = vector.load %arg9[%c5_530, %c0_531, %c0_532] : memref<8x16x512xf32, #tpu.memory_space<vmem>>, vector<1x16x512xf32>
    %760 = vector.shape_cast %759 : vector<1x16x512xf32> to vector<16x512xf32>
    %761 = arith.mulf %728, %760 : vector<16x512xf32>
    %cst_533 = arith.constant dense<0.000000e+00> : vector<512xf32>
    %762 = vector.multi_reduction <add>, %761, %cst_533 [0] : vector<16x512xf32> to vector<512xf32>
    %763 = vector.shape_cast %762 : vector<512xf32> to vector<1x512xf32>
    %c5_534 = arith.constant 5 : index
    %c0_535 = arith.constant 0 : index
    %764 = vector.load %arg11[%c5_534, %c0_535] : memref<8x512xf32, #tpu.memory_space<vmem>>, vector<1x512xf32>
    tpu.vector_store %arg11[%c5_534, %c0_535], %763 {strides = array<i32>} : memref<8x512xf32, #tpu.memory_space<vmem>>, vector<1x512xf32>,
    %c6_536 = arith.constant 6 : index
    %c0_537 = arith.constant 0 : index
    %c0_538 = arith.constant 0 : index
    %765 = vector.load %arg9[%c6_536, %c0_537, %c0_538] : memref<8x16x512xf32, #tpu.memory_space<vmem>>, vector<1x16x512xf32>
    %766 = vector.shape_cast %765 : vector<1x16x512xf32> to vector<16x512xf32>
    %767 = arith.mulf %728, %766 : vector<16x512xf32>
    %cst_539 = arith.constant dense<0.000000e+00> : vector<512xf32>
    %768 = vector.multi_reduction <add>, %767, %cst_539 [0] : vector<16x512xf32> to vector<512xf32>
    %769 = vector.shape_cast %768 : vector<512xf32> to vector<1x512xf32>
    %c6_540 = arith.constant 6 : index
    %c0_541 = arith.constant 0 : index
    %770 = vector.load %arg11[%c6_540, %c0_541] : memref<8x512xf32, #tpu.memory_space<vmem>>, vector<1x512xf32>
    tpu.vector_store %arg11[%c6_540, %c0_541], %769 {strides = array<i32>} : memref<8x512xf32, #tpu.memory_space<vmem>>, vector<1x512xf32>,
    %c7_542 = arith.constant 7 : index
    %c0_543 = arith.constant 0 : index
    %c0_544 = arith.constant 0 : index
    %771 = vector.load %arg9[%c7_542, %c0_543, %c0_544] : memref<8x16x512xf32, #tpu.memory_space<vmem>>, vector<1x16x512xf32>
    %772 = vector.shape_cast %771 : vector<1x16x512xf32> to vector<16x512xf32>
    %773 = arith.mulf %728, %772 : vector<16x512xf32>
    %cst_545 = arith.constant dense<0.000000e+00> : vector<512xf32>
    %774 = vector.multi_reduction <add>, %773, %cst_545 [0] : vector<16x512xf32> to vector<512xf32>
    %775 = vector.shape_cast %774 : vector<512xf32> to vector<1x512xf32>
    %c7_546 = arith.constant 7 : index
    %c0_547 = arith.constant 0 : index
    %776 = vector.load %arg11[%c7_546, %c0_547] : memref<8x512xf32, #tpu.memory_space<vmem>>, vector<1x512xf32>
    tpu.vector_store %arg11[%c7_546, %c0_547], %775 {strides = array<i32>} : memref<8x512xf32, #tpu.memory_space<vmem>>, vector<1x512xf32>,
    %c0_548 = arith.constant 0 : index
    %c0_549 = arith.constant 0 : index
    %777 = vector.load %arg11[%c0_548, %c0_549] : memref<8x512xf32, #tpu.memory_space<vmem>>, vector<8x512xf32>
    %778 = vector.broadcast %9 : vector<1x512xf32> to vector<8x512xf32>
    %779 = arith.mulf %777, %778 : vector<8x512xf32>
    %780 = math.exp %779 : vector<8x512xf32>
    %cst_550 = arith.constant dense<0.000000e+00> : vector<512xf32>
    %781 = vector.multi_reduction <add>, %780, %cst_550 [0] : vector<8x512xf32> to vector<512xf32>
    %782 = vector.shape_cast %781 : vector<512xf32> to vector<1x512xf32>
    %c0_551 = arith.constant 0 : index
    %c4_552 = arith.constant 4 : index
    %783 = memref.load %arg6[%c0_551, %c4_552] : memref<1x8xf32, #tpu.memory_space<smem>>
    %784 = tpu.reciprocal %782 {approx = true} : vector<1x512xf32> -> vector<1x512xf32>
    %785 = vector.broadcast %783 : f32 to vector<1x512xf32>
    %786 = arith.mulf %785, %784 : vector<1x512xf32>
    %787 = vector.broadcast %786 : vector<1x512xf32> to vector<8x512xf32>
    %788 = arith.mulf %787, %780 : vector<8x512xf32>
    %789 = arith.addf %726, %788 : vector<8x512xf32>
    %c5_553 = arith.constant 5 : index
    %c0_554 = arith.constant 0 : index
    %c0_555 = arith.constant 0 : index
    %790 = vector.load %arg8[%c5_553, %c0_554, %c0_555] : memref<8x16x512xf32, #tpu.memory_space<vmem>>, vector<1x16x512xf32>
    %791 = vector.shape_cast %790 : vector<1x16x512xf32> to vector<16x512xf32>
    %c0_556 = arith.constant 0 : index
    %c0_557 = arith.constant 0 : index
    %c0_558 = arith.constant 0 : index
    %792 = vector.load %arg9[%c0_556, %c0_557, %c0_558] : memref<8x16x512xf32, #tpu.memory_space<vmem>>, vector<1x16x512xf32>
    %793 = vector.shape_cast %792 : vector<1x16x512xf32> to vector<16x512xf32>
    %794 = arith.mulf %791, %793 : vector<16x512xf32>
    %cst_559 = arith.constant dense<0.000000e+00> : vector<512xf32>
    %795 = vector.multi_reduction <add>, %794, %cst_559 [0] : vector<16x512xf32> to vector<512xf32>
    %796 = vector.shape_cast %795 : vector<512xf32> to vector<1x512xf32>
    %c0_560 = arith.constant 0 : index
    %c0_561 = arith.constant 0 : index
    %797 = vector.load %arg11[%c0_560, %c0_561] : memref<8x512xf32, #tpu.memory_space<vmem>>, vector<1x512xf32>
    tpu.vector_store %arg11[%c0_560, %c0_561], %796 {strides = array<i32>} : memref<8x512xf32, #tpu.memory_space<vmem>>, vector<1x512xf32>,
    %c1_562 = arith.constant 1 : index
    %c0_563 = arith.constant 0 : index
    %c0_564 = arith.constant 0 : index
    %798 = vector.load %arg9[%c1_562, %c0_563, %c0_564] : memref<8x16x512xf32, #tpu.memory_space<vmem>>, vector<1x16x512xf32>
    %799 = vector.shape_cast %798 : vector<1x16x512xf32> to vector<16x512xf32>
    %800 = arith.mulf %791, %799 : vector<16x512xf32>
    %cst_565 = arith.constant dense<0.000000e+00> : vector<512xf32>
    %801 = vector.multi_reduction <add>, %800, %cst_565 [0] : vector<16x512xf32> to vector<512xf32>
    %802 = vector.shape_cast %801 : vector<512xf32> to vector<1x512xf32>
    %c1_566 = arith.constant 1 : index
    %c0_567 = arith.constant 0 : index
    %803 = vector.load %arg11[%c1_566, %c0_567] : memref<8x512xf32, #tpu.memory_space<vmem>>, vector<1x512xf32>
    tpu.vector_store %arg11[%c1_566, %c0_567], %802 {strides = array<i32>} : memref<8x512xf32, #tpu.memory_space<vmem>>, vector<1x512xf32>,
    %c2_568 = arith.constant 2 : index
    %c0_569 = arith.constant 0 : index
    %c0_570 = arith.constant 0 : index
    %804 = vector.load %arg9[%c2_568, %c0_569, %c0_570] : memref<8x16x512xf32, #tpu.memory_space<vmem>>, vector<1x16x512xf32>
    %805 = vector.shape_cast %804 : vector<1x16x512xf32> to vector<16x512xf32>
    %806 = arith.mulf %791, %805 : vector<16x512xf32>
    %cst_571 = arith.constant dense<0.000000e+00> : vector<512xf32>
    %807 = vector.multi_reduction <add>, %806, %cst_571 [0] : vector<16x512xf32> to vector<512xf32>
    %808 = vector.shape_cast %807 : vector<512xf32> to vector<1x512xf32>
    %c2_572 = arith.constant 2 : index
    %c0_573 = arith.constant 0 : index
    %809 = vector.load %arg11[%c2_572, %c0_573] : memref<8x512xf32, #tpu.memory_space<vmem>>, vector<1x512xf32>
    tpu.vector_store %arg11[%c2_572, %c0_573], %808 {strides = array<i32>} : memref<8x512xf32, #tpu.memory_space<vmem>>, vector<1x512xf32>,
    %c3_574 = arith.constant 3 : index
    %c0_575 = arith.constant 0 : index
    %c0_576 = arith.constant 0 : index
    %810 = vector.load %arg9[%c3_574, %c0_575, %c0_576] : memref<8x16x512xf32, #tpu.memory_space<vmem>>, vector<1x16x512xf32>
    %811 = vector.shape_cast %810 : vector<1x16x512xf32> to vector<16x512xf32>
    %812 = arith.mulf %791, %811 : vector<16x512xf32>
    %cst_577 = arith.constant dense<0.000000e+00> : vector<512xf32>
    %813 = vector.multi_reduction <add>, %812, %cst_577 [0] : vector<16x512xf32> to vector<512xf32>
    %814 = vector.shape_cast %813 : vector<512xf32> to vector<1x512xf32>
    %c3_578 = arith.constant 3 : index
    %c0_579 = arith.constant 0 : index
    %815 = vector.load %arg11[%c3_578, %c0_579] : memref<8x512xf32, #tpu.memory_space<vmem>>, vector<1x512xf32>
    tpu.vector_store %arg11[%c3_578, %c0_579], %814 {strides = array<i32>} : memref<8x512xf32, #tpu.memory_space<vmem>>, vector<1x512xf32>,
    %c4_580 = arith.constant 4 : index
    %c0_581 = arith.constant 0 : index
    %c0_582 = arith.constant 0 : index
    %816 = vector.load %arg9[%c4_580, %c0_581, %c0_582] : memref<8x16x512xf32, #tpu.memory_space<vmem>>, vector<1x16x512xf32>
    %817 = vector.shape_cast %816 : vector<1x16x512xf32> to vector<16x512xf32>
    %818 = arith.mulf %791, %817 : vector<16x512xf32>
    %cst_583 = arith.constant dense<0.000000e+00> : vector<512xf32>
    %819 = vector.multi_reduction <add>, %818, %cst_583 [0] : vector<16x512xf32> to vector<512xf32>
    %820 = vector.shape_cast %819 : vector<512xf32> to vector<1x512xf32>
    %c4_584 = arith.constant 4 : index
    %c0_585 = arith.constant 0 : index
    %821 = vector.load %arg11[%c4_584, %c0_585] : memref<8x512xf32, #tpu.memory_space<vmem>>, vector<1x512xf32>
    tpu.vector_store %arg11[%c4_584, %c0_585], %820 {strides = array<i32>} : memref<8x512xf32, #tpu.memory_space<vmem>>, vector<1x512xf32>,
    %c5_586 = arith.constant 5 : index
    %c0_587 = arith.constant 0 : index
    %c0_588 = arith.constant 0 : index
    %822 = vector.load %arg9[%c5_586, %c0_587, %c0_588] : memref<8x16x512xf32, #tpu.memory_space<vmem>>, vector<1x16x512xf32>
    %823 = vector.shape_cast %822 : vector<1x16x512xf32> to vector<16x512xf32>
    %824 = arith.mulf %791, %823 : vector<16x512xf32>
    %cst_589 = arith.constant dense<0.000000e+00> : vector<512xf32>
    %825 = vector.multi_reduction <add>, %824, %cst_589 [0] : vector<16x512xf32> to vector<512xf32>
    %826 = vector.shape_cast %825 : vector<512xf32> to vector<1x512xf32>
    %c5_590 = arith.constant 5 : index
    %c0_591 = arith.constant 0 : index
    %827 = vector.load %arg11[%c5_590, %c0_591] : memref<8x512xf32, #tpu.memory_space<vmem>>, vector<1x512xf32>
    tpu.vector_store %arg11[%c5_590, %c0_591], %826 {strides = array<i32>} : memref<8x512xf32, #tpu.memory_space<vmem>>, vector<1x512xf32>,
    %c6_592 = arith.constant 6 : index
    %c0_593 = arith.constant 0 : index
    %c0_594 = arith.constant 0 : index
    %828 = vector.load %arg9[%c6_592, %c0_593, %c0_594] : memref<8x16x512xf32, #tpu.memory_space<vmem>>, vector<1x16x512xf32>
    %829 = vector.shape_cast %828 : vector<1x16x512xf32> to vector<16x512xf32>
    %830 = arith.mulf %791, %829 : vector<16x512xf32>
    %cst_595 = arith.constant dense<0.000000e+00> : vector<512xf32>
    %831 = vector.multi_reduction <add>, %830, %cst_595 [0] : vector<16x512xf32> to vector<512xf32>
    %832 = vector.shape_cast %831 : vector<512xf32> to vector<1x512xf32>
    %c6_596 = arith.constant 6 : index
    %c0_597 = arith.constant 0 : index
    %833 = vector.load %arg11[%c6_596, %c0_597] : memref<8x512xf32, #tpu.memory_space<vmem>>, vector<1x512xf32>
    tpu.vector_store %arg11[%c6_596, %c0_597], %832 {strides = array<i32>} : memref<8x512xf32, #tpu.memory_space<vmem>>, vector<1x512xf32>,
    %c7_598 = arith.constant 7 : index
    %c0_599 = arith.constant 0 : index
    %c0_600 = arith.constant 0 : index
    %834 = vector.load %arg9[%c7_598, %c0_599, %c0_600] : memref<8x16x512xf32, #tpu.memory_space<vmem>>, vector<1x16x512xf32>
    %835 = vector.shape_cast %834 : vector<1x16x512xf32> to vector<16x512xf32>
    %836 = arith.mulf %791, %835 : vector<16x512xf32>
    %cst_601 = arith.constant dense<0.000000e+00> : vector<512xf32>
    %837 = vector.multi_reduction <add>, %836, %cst_601 [0] : vector<16x512xf32> to vector<512xf32>
    %838 = vector.shape_cast %837 : vector<512xf32> to vector<1x512xf32>
    %c7_602 = arith.constant 7 : index
    %c0_603 = arith.constant 0 : index
    %839 = vector.load %arg11[%c7_602, %c0_603] : memref<8x512xf32, #tpu.memory_space<vmem>>, vector<1x512xf32>
    tpu.vector_store %arg11[%c7_602, %c0_603], %838 {strides = array<i32>} : memref<8x512xf32, #tpu.memory_space<vmem>>, vector<1x512xf32>,
    %c0_604 = arith.constant 0 : index
    %c0_605 = arith.constant 0 : index
    %840 = vector.load %arg11[%c0_604, %c0_605] : memref<8x512xf32, #tpu.memory_space<vmem>>, vector<8x512xf32>
    %841 = vector.broadcast %9 : vector<1x512xf32> to vector<8x512xf32>
    %842 = arith.mulf %840, %841 : vector<8x512xf32>
    %843 = math.exp %842 : vector<8x512xf32>
    %cst_606 = arith.constant dense<0.000000e+00> : vector<512xf32>
    %844 = vector.multi_reduction <add>, %843, %cst_606 [0] : vector<8x512xf32> to vector<512xf32>
    %845 = vector.shape_cast %844 : vector<512xf32> to vector<1x512xf32>
    %c0_607 = arith.constant 0 : index
    %c5_608 = arith.constant 5 : index
    %846 = memref.load %arg6[%c0_607, %c5_608] : memref<1x8xf32, #tpu.memory_space<smem>>
    %847 = tpu.reciprocal %845 {approx = true} : vector<1x512xf32> -> vector<1x512xf32>
    %848 = vector.broadcast %846 : f32 to vector<1x512xf32>
    %849 = arith.mulf %848, %847 : vector<1x512xf32>
    %850 = vector.broadcast %849 : vector<1x512xf32> to vector<8x512xf32>
    %851 = arith.mulf %850, %843 : vector<8x512xf32>
    %852 = arith.addf %789, %851 : vector<8x512xf32>
    %c6_609 = arith.constant 6 : index
    %c0_610 = arith.constant 0 : index
    %c0_611 = arith.constant 0 : index
    %853 = vector.load %arg8[%c6_609, %c0_610, %c0_611] : memref<8x16x512xf32, #tpu.memory_space<vmem>>, vector<1x16x512xf32>
    %854 = vector.shape_cast %853 : vector<1x16x512xf32> to vector<16x512xf32>
    %c0_612 = arith.constant 0 : index
    %c0_613 = arith.constant 0 : index
    %c0_614 = arith.constant 0 : index
    %855 = vector.load %arg9[%c0_612, %c0_613, %c0_614] : memref<8x16x512xf32, #tpu.memory_space<vmem>>, vector<1x16x512xf32>
    %856 = vector.shape_cast %855 : vector<1x16x512xf32> to vector<16x512xf32>
    %857 = arith.mulf %854, %856 : vector<16x512xf32>
    %cst_615 = arith.constant dense<0.000000e+00> : vector<512xf32>
    %858 = vector.multi_reduction <add>, %857, %cst_615 [0] : vector<16x512xf32> to vector<512xf32>
    %859 = vector.shape_cast %858 : vector<512xf32> to vector<1x512xf32>
    %c0_616 = arith.constant 0 : index
    %c0_617 = arith.constant 0 : index
    %860 = vector.load %arg11[%c0_616, %c0_617] : memref<8x512xf32, #tpu.memory_space<vmem>>, vector<1x512xf32>
    tpu.vector_store %arg11[%c0_616, %c0_617], %859 {strides = array<i32>} : memref<8x512xf32, #tpu.memory_space<vmem>>, vector<1x512xf32>,
    %c1_618 = arith.constant 1 : index
    %c0_619 = arith.constant 0 : index
    %c0_620 = arith.constant 0 : index
    %861 = vector.load %arg9[%c1_618, %c0_619, %c0_620] : memref<8x16x512xf32, #tpu.memory_space<vmem>>, vector<1x16x512xf32>
    %862 = vector.shape_cast %861 : vector<1x16x512xf32> to vector<16x512xf32>
    %863 = arith.mulf %854, %862 : vector<16x512xf32>
    %cst_621 = arith.constant dense<0.000000e+00> : vector<512xf32>
    %864 = vector.multi_reduction <add>, %863, %cst_621 [0] : vector<16x512xf32> to vector<512xf32>
    %865 = vector.shape_cast %864 : vector<512xf32> to vector<1x512xf32>
    %c1_622 = arith.constant 1 : index
    %c0_623 = arith.constant 0 : index
    %866 = vector.load %arg11[%c1_622, %c0_623] : memref<8x512xf32, #tpu.memory_space<vmem>>, vector<1x512xf32>
    tpu.vector_store %arg11[%c1_622, %c0_623], %865 {strides = array<i32>} : memref<8x512xf32, #tpu.memory_space<vmem>>, vector<1x512xf32>,
    %c2_624 = arith.constant 2 : index
    %c0_625 = arith.constant 0 : index
    %c0_626 = arith.constant 0 : index
    %867 = vector.load %arg9[%c2_624, %c0_625, %c0_626] : memref<8x16x512xf32, #tpu.memory_space<vmem>>, vector<1x16x512xf32>
    %868 = vector.shape_cast %867 : vector<1x16x512xf32> to vector<16x512xf32>
    %869 = arith.mulf %854, %868 : vector<16x512xf32>
    %cst_627 = arith.constant dense<0.000000e+00> : vector<512xf32>
    %870 = vector.multi_reduction <add>, %869, %cst_627 [0] : vector<16x512xf32> to vector<512xf32>
    %871 = vector.shape_cast %870 : vector<512xf32> to vector<1x512xf32>
    %c2_628 = arith.constant 2 : index
    %c0_629 = arith.constant 0 : index
    %872 = vector.load %arg11[%c2_628, %c0_629] : memref<8x512xf32, #tpu.memory_space<vmem>>, vector<1x512xf32>
    tpu.vector_store %arg11[%c2_628, %c0_629], %871 {strides = array<i32>} : memref<8x512xf32, #tpu.memory_space<vmem>>, vector<1x512xf32>,
    %c3_630 = arith.constant 3 : index
    %c0_631 = arith.constant 0 : index
    %c0_632 = arith.constant 0 : index
    %873 = vector.load %arg9[%c3_630, %c0_631, %c0_632] : memref<8x16x512xf32, #tpu.memory_space<vmem>>, vector<1x16x512xf32>
    %874 = vector.shape_cast %873 : vector<1x16x512xf32> to vector<16x512xf32>
    %875 = arith.mulf %854, %874 : vector<16x512xf32>
    %cst_633 = arith.constant dense<0.000000e+00> : vector<512xf32>
    %876 = vector.multi_reduction <add>, %875, %cst_633 [0] : vector<16x512xf32> to vector<512xf32>
    %877 = vector.shape_cast %876 : vector<512xf32> to vector<1x512xf32>
    %c3_634 = arith.constant 3 : index
    %c0_635 = arith.constant 0 : index
    %878 = vector.load %arg11[%c3_634, %c0_635] : memref<8x512xf32, #tpu.memory_space<vmem>>, vector<1x512xf32>
    tpu.vector_store %arg11[%c3_634, %c0_635], %877 {strides = array<i32>} : memref<8x512xf32, #tpu.memory_space<vmem>>, vector<1x512xf32>,
    %c4_636 = arith.constant 4 : index
    %c0_637 = arith.constant 0 : index
    %c0_638 = arith.constant 0 : index
    %879 = vector.load %arg9[%c4_636, %c0_637, %c0_638] : memref<8x16x512xf32, #tpu.memory_space<vmem>>, vector<1x16x512xf32>
    %880 = vector.shape_cast %879 : vector<1x16x512xf32> to vector<16x512xf32>
    %881 = arith.mulf %854, %880 : vector<16x512xf32>
    %cst_639 = arith.constant dense<0.000000e+00> : vector<512xf32>
    %882 = vector.multi_reduction <add>, %881, %cst_639 [0] : vector<16x512xf32> to vector<512xf32>
    %883 = vector.shape_cast %882 : vector<512xf32> to vector<1x512xf32>
    %c4_640 = arith.constant 4 : index
    %c0_641 = arith.constant 0 : index
    %884 = vector.load %arg11[%c4_640, %c0_641] : memref<8x512xf32, #tpu.memory_space<vmem>>, vector<1x512xf32>
    tpu.vector_store %arg11[%c4_640, %c0_641], %883 {strides = array<i32>} : memref<8x512xf32, #tpu.memory_space<vmem>>, vector<1x512xf32>,
    %c5_642 = arith.constant 5 : index
    %c0_643 = arith.constant 0 : index
    %c0_644 = arith.constant 0 : index
    %885 = vector.load %arg9[%c5_642, %c0_643, %c0_644] : memref<8x16x512xf32, #tpu.memory_space<vmem>>, vector<1x16x512xf32>
    %886 = vector.shape_cast %885 : vector<1x16x512xf32> to vector<16x512xf32>
    %887 = arith.mulf %854, %886 : vector<16x512xf32>
    %cst_645 = arith.constant dense<0.000000e+00> : vector<512xf32>
    %888 = vector.multi_reduction <add>, %887, %cst_645 [0] : vector<16x512xf32> to vector<512xf32>
    %889 = vector.shape_cast %888 : vector<512xf32> to vector<1x512xf32>
    %c5_646 = arith.constant 5 : index
    %c0_647 = arith.constant 0 : index
    %890 = vector.load %arg11[%c5_646, %c0_647] : memref<8x512xf32, #tpu.memory_space<vmem>>, vector<1x512xf32>
    tpu.vector_store %arg11[%c5_646, %c0_647], %889 {strides = array<i32>} : memref<8x512xf32, #tpu.memory_space<vmem>>, vector<1x512xf32>,
    %c6_648 = arith.constant 6 : index
    %c0_649 = arith.constant 0 : index
    %c0_650 = arith.constant 0 : index
    %891 = vector.load %arg9[%c6_648, %c0_649, %c0_650] : memref<8x16x512xf32, #tpu.memory_space<vmem>>, vector<1x16x512xf32>
    %892 = vector.shape_cast %891 : vector<1x16x512xf32> to vector<16x512xf32>
    %893 = arith.mulf %854, %892 : vector<16x512xf32>
    %cst_651 = arith.constant dense<0.000000e+00> : vector<512xf32>
    %894 = vector.multi_reduction <add>, %893, %cst_651 [0] : vector<16x512xf32> to vector<512xf32>
    %895 = vector.shape_cast %894 : vector<512xf32> to vector<1x512xf32>
    %c6_652 = arith.constant 6 : index
    %c0_653 = arith.constant 0 : index
    %896 = vector.load %arg11[%c6_652, %c0_653] : memref<8x512xf32, #tpu.memory_space<vmem>>, vector<1x512xf32>
    tpu.vector_store %arg11[%c6_652, %c0_653], %895 {strides = array<i32>} : memref<8x512xf32, #tpu.memory_space<vmem>>, vector<1x512xf32>,
    %c7_654 = arith.constant 7 : index
    %c0_655 = arith.constant 0 : index
    %c0_656 = arith.constant 0 : index
    %897 = vector.load %arg9[%c7_654, %c0_655, %c0_656] : memref<8x16x512xf32, #tpu.memory_space<vmem>>, vector<1x16x512xf32>
    %898 = vector.shape_cast %897 : vector<1x16x512xf32> to vector<16x512xf32>
    %899 = arith.mulf %854, %898 : vector<16x512xf32>
    %cst_657 = arith.constant dense<0.000000e+00> : vector<512xf32>
    %900 = vector.multi_reduction <add>, %899, %cst_657 [0] : vector<16x512xf32> to vector<512xf32>
    %901 = vector.shape_cast %900 : vector<512xf32> to vector<1x512xf32>
    %c7_658 = arith.constant 7 : index
    %c0_659 = arith.constant 0 : index
    %902 = vector.load %arg11[%c7_658, %c0_659] : memref<8x512xf32, #tpu.memory_space<vmem>>, vector<1x512xf32>
    tpu.vector_store %arg11[%c7_658, %c0_659], %901 {strides = array<i32>} : memref<8x512xf32, #tpu.memory_space<vmem>>, vector<1x512xf32>,
    %c0_660 = arith.constant 0 : index
    %c0_661 = arith.constant 0 : index
    %903 = vector.load %arg11[%c0_660, %c0_661] : memref<8x512xf32, #tpu.memory_space<vmem>>, vector<8x512xf32>
    %904 = vector.broadcast %9 : vector<1x512xf32> to vector<8x512xf32>
    %905 = arith.mulf %903, %904 : vector<8x512xf32>
    %906 = math.exp %905 : vector<8x512xf32>
    %cst_662 = arith.constant dense<0.000000e+00> : vector<512xf32>
    %907 = vector.multi_reduction <add>, %906, %cst_662 [0] : vector<8x512xf32> to vector<512xf32>
    %908 = vector.shape_cast %907 : vector<512xf32> to vector<1x512xf32>
    %c0_663 = arith.constant 0 : index
    %c6_664 = arith.constant 6 : index
    %909 = memref.load %arg6[%c0_663, %c6_664] : memref<1x8xf32, #tpu.memory_space<smem>>
    %910 = tpu.reciprocal %908 {approx = true} : vector<1x512xf32> -> vector<1x512xf32>
    %911 = vector.broadcast %909 : f32 to vector<1x512xf32>
    %912 = arith.mulf %911, %910 : vector<1x512xf32>
    %913 = vector.broadcast %912 : vector<1x512xf32> to vector<8x512xf32>
    %914 = arith.mulf %913, %906 : vector<8x512xf32>
    %915 = arith.addf %852, %914 : vector<8x512xf32>
    %c7_665 = arith.constant 7 : index
    %c0_666 = arith.constant 0 : index
    %c0_667 = arith.constant 0 : index
    %916 = vector.load %arg8[%c7_665, %c0_666, %c0_667] : memref<8x16x512xf32, #tpu.memory_space<vmem>>, vector<1x16x512xf32>
    %917 = vector.shape_cast %916 : vector<1x16x512xf32> to vector<16x512xf32>
    %c0_668 = arith.constant 0 : index
    %c0_669 = arith.constant 0 : index
    %c0_670 = arith.constant 0 : index
    %918 = vector.load %arg9[%c0_668, %c0_669, %c0_670] : memref<8x16x512xf32, #tpu.memory_space<vmem>>, vector<1x16x512xf32>
    %919 = vector.shape_cast %918 : vector<1x16x512xf32> to vector<16x512xf32>
    %920 = arith.mulf %917, %919 : vector<16x512xf32>
    %cst_671 = arith.constant dense<0.000000e+00> : vector<512xf32>
    %921 = vector.multi_reduction <add>, %920, %cst_671 [0] : vector<16x512xf32> to vector<512xf32>
    %922 = vector.shape_cast %921 : vector<512xf32> to vector<1x512xf32>
    %c0_672 = arith.constant 0 : index
    %c0_673 = arith.constant 0 : index
    %923 = vector.load %arg11[%c0_672, %c0_673] : memref<8x512xf32, #tpu.memory_space<vmem>>, vector<1x512xf32>
    tpu.vector_store %arg11[%c0_672, %c0_673], %922 {strides = array<i32>} : memref<8x512xf32, #tpu.memory_space<vmem>>, vector<1x512xf32>,
    %c1_674 = arith.constant 1 : index
    %c0_675 = arith.constant 0 : index
    %c0_676 = arith.constant 0 : index
    %924 = vector.load %arg9[%c1_674, %c0_675, %c0_676] : memref<8x16x512xf32, #tpu.memory_space<vmem>>, vector<1x16x512xf32>
    %925 = vector.shape_cast %924 : vector<1x16x512xf32> to vector<16x512xf32>
    %926 = arith.mulf %917, %925 : vector<16x512xf32>
    %cst_677 = arith.constant dense<0.000000e+00> : vector<512xf32>
    %927 = vector.multi_reduction <add>, %926, %cst_677 [0] : vector<16x512xf32> to vector<512xf32>
    %928 = vector.shape_cast %927 : vector<512xf32> to vector<1x512xf32>
    %c1_678 = arith.constant 1 : index
    %c0_679 = arith.constant 0 : index
    %929 = vector.load %arg11[%c1_678, %c0_679] : memref<8x512xf32, #tpu.memory_space<vmem>>, vector<1x512xf32>
    tpu.vector_store %arg11[%c1_678, %c0_679], %928 {strides = array<i32>} : memref<8x512xf32, #tpu.memory_space<vmem>>, vector<1x512xf32>,
    %c2_680 = arith.constant 2 : index
    %c0_681 = arith.constant 0 : index
    %c0_682 = arith.constant 0 : index
    %930 = vector.load %arg9[%c2_680, %c0_681, %c0_682] : memref<8x16x512xf32, #tpu.memory_space<vmem>>, vector<1x16x512xf32>
    %931 = vector.shape_cast %930 : vector<1x16x512xf32> to vector<16x512xf32>
    %932 = arith.mulf %917, %931 : vector<16x512xf32>
    %cst_683 = arith.constant dense<0.000000e+00> : vector<512xf32>
    %933 = vector.multi_reduction <add>, %932, %cst_683 [0] : vector<16x512xf32> to vector<512xf32>
    %934 = vector.shape_cast %933 : vector<512xf32> to vector<1x512xf32>
    %c2_684 = arith.constant 2 : index
    %c0_685 = arith.constant 0 : index
    %935 = vector.load %arg11[%c2_684, %c0_685] : memref<8x512xf32, #tpu.memory_space<vmem>>, vector<1x512xf32>
    tpu.vector_store %arg11[%c2_684, %c0_685], %934 {strides = array<i32>} : memref<8x512xf32, #tpu.memory_space<vmem>>, vector<1x512xf32>,
    %c3_686 = arith.constant 3 : index
    %c0_687 = arith.constant 0 : index
    %c0_688 = arith.constant 0 : index
    %936 = vector.load %arg9[%c3_686, %c0_687, %c0_688] : memref<8x16x512xf32, #tpu.memory_space<vmem>>, vector<1x16x512xf32>
    %937 = vector.shape_cast %936 : vector<1x16x512xf32> to vector<16x512xf32>
    %938 = arith.mulf %917, %937 : vector<16x512xf32>
    %cst_689 = arith.constant dense<0.000000e+00> : vector<512xf32>
    %939 = vector.multi_reduction <add>, %938, %cst_689 [0] : vector<16x512xf32> to vector<512xf32>
    %940 = vector.shape_cast %939 : vector<512xf32> to vector<1x512xf32>
    %c3_690 = arith.constant 3 : index
    %c0_691 = arith.constant 0 : index
    %941 = vector.load %arg11[%c3_690, %c0_691] : memref<8x512xf32, #tpu.memory_space<vmem>>, vector<1x512xf32>
    tpu.vector_store %arg11[%c3_690, %c0_691], %940 {strides = array<i32>} : memref<8x512xf32, #tpu.memory_space<vmem>>, vector<1x512xf32>,
    %c4_692 = arith.constant 4 : index
    %c0_693 = arith.constant 0 : index
    %c0_694 = arith.constant 0 : index
    %942 = vector.load %arg9[%c4_692, %c0_693, %c0_694] : memref<8x16x512xf32, #tpu.memory_space<vmem>>, vector<1x16x512xf32>
    %943 = vector.shape_cast %942 : vector<1x16x512xf32> to vector<16x512xf32>
    %944 = arith.mulf %917, %943 : vector<16x512xf32>
    %cst_695 = arith.constant dense<0.000000e+00> : vector<512xf32>
    %945 = vector.multi_reduction <add>, %944, %cst_695 [0] : vector<16x512xf32> to vector<512xf32>
    %946 = vector.shape_cast %945 : vector<512xf32> to vector<1x512xf32>
    %c4_696 = arith.constant 4 : index
    %c0_697 = arith.constant 0 : index
    %947 = vector.load %arg11[%c4_696, %c0_697] : memref<8x512xf32, #tpu.memory_space<vmem>>, vector<1x512xf32>
    tpu.vector_store %arg11[%c4_696, %c0_697], %946 {strides = array<i32>} : memref<8x512xf32, #tpu.memory_space<vmem>>, vector<1x512xf32>,
    %c5_698 = arith.constant 5 : index
    %c0_699 = arith.constant 0 : index
    %c0_700 = arith.constant 0 : index
    %948 = vector.load %arg9[%c5_698, %c0_699, %c0_700] : memref<8x16x512xf32, #tpu.memory_space<vmem>>, vector<1x16x512xf32>
    %949 = vector.shape_cast %948 : vector<1x16x512xf32> to vector<16x512xf32>
    %950 = arith.mulf %917, %949 : vector<16x512xf32>
    %cst_701 = arith.constant dense<0.000000e+00> : vector<512xf32>
    %951 = vector.multi_reduction <add>, %950, %cst_701 [0] : vector<16x512xf32> to vector<512xf32>
    %952 = vector.shape_cast %951 : vector<512xf32> to vector<1x512xf32>
    %c5_702 = arith.constant 5 : index
    %c0_703 = arith.constant 0 : index
    %953 = vector.load %arg11[%c5_702, %c0_703] : memref<8x512xf32, #tpu.memory_space<vmem>>, vector<1x512xf32>
    tpu.vector_store %arg11[%c5_702, %c0_703], %952 {strides = array<i32>} : memref<8x512xf32, #tpu.memory_space<vmem>>, vector<1x512xf32>,
    %c6_704 = arith.constant 6 : index
    %c0_705 = arith.constant 0 : index
    %c0_706 = arith.constant 0 : index
    %954 = vector.load %arg9[%c6_704, %c0_705, %c0_706] : memref<8x16x512xf32, #tpu.memory_space<vmem>>, vector<1x16x512xf32>
    %955 = vector.shape_cast %954 : vector<1x16x512xf32> to vector<16x512xf32>
    %956 = arith.mulf %917, %955 : vector<16x512xf32>
    %cst_707 = arith.constant dense<0.000000e+00> : vector<512xf32>
    %957 = vector.multi_reduction <add>, %956, %cst_707 [0] : vector<16x512xf32> to vector<512xf32>
    %958 = vector.shape_cast %957 : vector<512xf32> to vector<1x512xf32>
    %c6_708 = arith.constant 6 : index
    %c0_709 = arith.constant 0 : index
    %959 = vector.load %arg11[%c6_708, %c0_709] : memref<8x512xf32, #tpu.memory_space<vmem>>, vector<1x512xf32>
    tpu.vector_store %arg11[%c6_708, %c0_709], %958 {strides = array<i32>} : memref<8x512xf32, #tpu.memory_space<vmem>>, vector<1x512xf32>,
    %c7_710 = arith.constant 7 : index
    %c0_711 = arith.constant 0 : index
    %c0_712 = arith.constant 0 : index
    %960 = vector.load %arg9[%c7_710, %c0_711, %c0_712] : memref<8x16x512xf32, #tpu.memory_space<vmem>>, vector<1x16x512xf32>
    %961 = vector.shape_cast %960 : vector<1x16x512xf32> to vector<16x512xf32>
    %962 = arith.mulf %917, %961 : vector<16x512xf32>
    %cst_713 = arith.constant dense<0.000000e+00> : vector<512xf32>
    %963 = vector.multi_reduction <add>, %962, %cst_713 [0] : vector<16x512xf32> to vector<512xf32>
    %964 = vector.shape_cast %963 : vector<512xf32> to vector<1x512xf32>
    %c7_714 = arith.constant 7 : index
    %c0_715 = arith.constant 0 : index
    %965 = vector.load %arg11[%c7_714, %c0_715] : memref<8x512xf32, #tpu.memory_space<vmem>>, vector<1x512xf32>
    tpu.vector_store %arg11[%c7_714, %c0_715], %964 {strides = array<i32>} : memref<8x512xf32, #tpu.memory_space<vmem>>, vector<1x512xf32>,
    %c0_716 = arith.constant 0 : index
    %c0_717 = arith.constant 0 : index
    %966 = vector.load %arg11[%c0_716, %c0_717] : memref<8x512xf32, #tpu.memory_space<vmem>>, vector<8x512xf32>
    %967 = vector.broadcast %9 : vector<1x512xf32> to vector<8x512xf32>
    %968 = arith.mulf %966, %967 : vector<8x512xf32>
    %969 = math.exp %968 : vector<8x512xf32>
    %cst_718 = arith.constant dense<0.000000e+00> : vector<512xf32>
    %970 = vector.multi_reduction <add>, %969, %cst_718 [0] : vector<8x512xf32> to vector<512xf32>
    %971 = vector.shape_cast %970 : vector<512xf32> to vector<1x512xf32>
    %c0_719 = arith.constant 0 : index
    %c7_720 = arith.constant 7 : index
    %972 = memref.load %arg6[%c0_719, %c7_720] : memref<1x8xf32, #tpu.memory_space<smem>>
    %973 = tpu.reciprocal %971 {approx = true} : vector<1x512xf32> -> vector<1x512xf32>
    %974 = vector.broadcast %972 : f32 to vector<1x512xf32>
    %975 = arith.mulf %974, %973 : vector<1x512xf32>
    %976 = vector.broadcast %975 : vector<1x512xf32> to vector<8x512xf32>
    %977 = arith.mulf %976, %969 : vector<8x512xf32>
    %978 = arith.addf %915, %977 : vector<8x512xf32>
    %979 = vector.extract_strided_slice %978 {offsets = [0, 0], sizes = [1, 512], strides = [1, 1]} : vector<8x512xf32> to vector<1x512xf32>
    %c0_721 = arith.constant 0 : index
    %c0_722 = arith.constant 0 : index
    %c0_723 = arith.constant 0 : index
    %980 = vector.load %arg10[%c0_721, %c0_722, %c0_723] : memref<8x16x512xf32, #tpu.memory_space<vmem>>, vector<1x16x512xf32>
    %981 = vector.shape_cast %980 : vector<1x16x512xf32> to vector<16x512xf32>
    %982 = vector.broadcast %979 : vector<1x512xf32> to vector<16x512xf32>
    %983 = arith.mulf %982, %981 : vector<16x512xf32>
    %984 = vector.extract_strided_slice %978 {offsets = [1, 0], sizes = [1, 512], strides = [1, 1]} : vector<8x512xf32> to vector<1x512xf32>
    %c1_724 = arith.constant 1 : index
    %c0_725 = arith.constant 0 : index
    %c0_726 = arith.constant 0 : index
    %985 = vector.load %arg10[%c1_724, %c0_725, %c0_726] : memref<8x16x512xf32, #tpu.memory_space<vmem>>, vector<1x16x512xf32>
    %986 = vector.shape_cast %985 : vector<1x16x512xf32> to vector<16x512xf32>
    %987 = vector.broadcast %984 : vector<1x512xf32> to vector<16x512xf32>
    %988 = arith.mulf %987, %986 : vector<16x512xf32>
    %989 = arith.addf %983, %988 : vector<16x512xf32>
    %990 = vector.extract_strided_slice %978 {offsets = [2, 0], sizes = [1, 512], strides = [1, 1]} : vector<8x512xf32> to vector<1x512xf32>
    %c2_727 = arith.constant 2 : index
    %c0_728 = arith.constant 0 : index
    %c0_729 = arith.constant 0 : index
    %991 = vector.load %arg10[%c2_727, %c0_728, %c0_729] : memref<8x16x512xf32, #tpu.memory_space<vmem>>, vector<1x16x512xf32>
    %992 = vector.shape_cast %991 : vector<1x16x512xf32> to vector<16x512xf32>
    %993 = vector.broadcast %990 : vector<1x512xf32> to vector<16x512xf32>
    %994 = arith.mulf %993, %992 : vector<16x512xf32>
    %995 = arith.addf %989, %994 : vector<16x512xf32>
    %996 = vector.extract_strided_slice %978 {offsets = [3, 0], sizes = [1, 512], strides = [1, 1]} : vector<8x512xf32> to vector<1x512xf32>
    %c3_730 = arith.constant 3 : index
    %c0_731 = arith.constant 0 : index
    %c0_732 = arith.constant 0 : index
    %997 = vector.load %arg10[%c3_730, %c0_731, %c0_732] : memref<8x16x512xf32, #tpu.memory_space<vmem>>, vector<1x16x512xf32>
    %998 = vector.shape_cast %997 : vector<1x16x512xf32> to vector<16x512xf32>
    %999 = vector.broadcast %996 : vector<1x512xf32> to vector<16x512xf32>
    %1000 = arith.mulf %999, %998 : vector<16x512xf32>
    %1001 = arith.addf %995, %1000 : vector<16x512xf32>
    %1002 = vector.extract_strided_slice %978 {offsets = [4, 0], sizes = [1, 512], strides = [1, 1]} : vector<8x512xf32> to vector<1x512xf32>
    %c4_733 = arith.constant 4 : index
    %c0_734 = arith.constant 0 : index
    %c0_735 = arith.constant 0 : index
    %1003 = vector.load %arg10[%c4_733, %c0_734, %c0_735] : memref<8x16x512xf32, #tpu.memory_space<vmem>>, vector<1x16x512xf32>
    %1004 = vector.shape_cast %1003 : vector<1x16x512xf32> to vector<16x512xf32>
    %1005 = vector.broadcast %1002 : vector<1x512xf32> to vector<16x512xf32>
    %1006 = arith.mulf %1005, %1004 : vector<16x512xf32>
    %1007 = arith.addf %1001, %1006 : vector<16x512xf32>
    %1008 = vector.extract_strided_slice %978 {offsets = [5, 0], sizes = [1, 512], strides = [1, 1]} : vector<8x512xf32> to vector<1x512xf32>
    %c5_736 = arith.constant 5 : index
    %c0_737 = arith.constant 0 : index
    %c0_738 = arith.constant 0 : index
    %1009 = vector.load %arg10[%c5_736, %c0_737, %c0_738] : memref<8x16x512xf32, #tpu.memory_space<vmem>>, vector<1x16x512xf32>
    %1010 = vector.shape_cast %1009 : vector<1x16x512xf32> to vector<16x512xf32>
    %1011 = vector.broadcast %1008 : vector<1x512xf32> to vector<16x512xf32>
    %1012 = arith.mulf %1011, %1010 : vector<16x512xf32>
    %1013 = arith.addf %1007, %1012 : vector<16x512xf32>
    %1014 = vector.extract_strided_slice %978 {offsets = [6, 0], sizes = [1, 512], strides = [1, 1]} : vector<8x512xf32> to vector<1x512xf32>
    %c6_739 = arith.constant 6 : index
    %c0_740 = arith.constant 0 : index
    %c0_741 = arith.constant 0 : index
    %1015 = vector.load %arg10[%c6_739, %c0_740, %c0_741] : memref<8x16x512xf32, #tpu.memory_space<vmem>>, vector<1x16x512xf32>
    %1016 = vector.shape_cast %1015 : vector<1x16x512xf32> to vector<16x512xf32>
    %1017 = vector.broadcast %1014 : vector<1x512xf32> to vector<16x512xf32>
    %1018 = arith.mulf %1017, %1016 : vector<16x512xf32>
    %1019 = arith.addf %1013, %1018 : vector<16x512xf32>
    %1020 = vector.extract_strided_slice %978 {offsets = [7, 0], sizes = [1, 512], strides = [1, 1]} : vector<8x512xf32> to vector<1x512xf32>
    %c7_742 = arith.constant 7 : index
    %c0_743 = arith.constant 0 : index
    %c0_744 = arith.constant 0 : index
    %1021 = vector.load %arg10[%c7_742, %c0_743, %c0_744] : memref<8x16x512xf32, #tpu.memory_space<vmem>>, vector<1x16x512xf32>
    %1022 = vector.shape_cast %1021 : vector<1x16x512xf32> to vector<16x512xf32>
    %1023 = vector.broadcast %1020 : vector<1x512xf32> to vector<16x512xf32>
    %1024 = arith.mulf %1023, %1022 : vector<16x512xf32>
    %1025 = arith.addf %1019, %1024 : vector<16x512xf32>
    %1026 = math.tanh %1025 : vector<16x512xf32>
    %1027 = arith.mulf %1026, %1026 : vector<16x512xf32>
    %cst_745 = arith.constant dense<0.000000e+00> : vector<512xf32>
    %1028 = vector.multi_reduction <add>, %1027, %cst_745 [0] : vector<16x512xf32> to vector<512xf32>
    %1029 = vector.shape_cast %1028 : vector<512xf32> to vector<1x512xf32>
    %1030 = tpu.iota {dimensions = array<i32: 0>} : vector<16x512xi32>
    %1031 = tpu.iota {dimensions = array<i32: 1>} : vector<16x512xi32>
    %c15_i32 = arith.constant 15 : i32
    %1032 = vector.broadcast %c15_i32 : i32 to vector<16x512xi32>
    %1033 = arith.andi %1031, %1032 : vector<16x512xi32>
    %1034 = arith.cmpi eq, %1030, %1033 : vector<16x512xi32>
    %1035 = vector.shape_cast %1029 : vector<1x512xf32> to vector<1x512xf32>
    %1036 = vector.broadcast %1035 : vector<1x512xf32> to vector<16x512xf32>
    %cst_746 = arith.constant 0.000000e+00 : f32
    %1037 = vector.broadcast %cst_746 : f32 to vector<16x512xf32>
    %1038 = arith.subf %1037, %1027 : vector<16x512xf32>
    %1039 = arith.select %1034, %1036, %1038 : vector<16x512xi1>, vector<16x512xf32>
    %c0_747 = arith.constant 0 : index
    %c0_748 = arith.constant 0 : index
    %1040 = vector.load %arg7[%c0_747, %c0_748] : memref<16x512xf32, #tpu.memory_space<vmem>>, vector<16x512xf32>
    tpu.vector_store %arg7[%c0_747, %c0_748], %1039 {strides = array<i32>} : memref<16x512xf32, #tpu.memory_space<vmem>>, vector<16x512xf32>,
    return
  }
  func.func @transform_0(%arg0: i32) -> (i32, i32, i32) {
    %c0_i32 = arith.constant 0 : i32
    %c0_i32_0 = arith.constant 0 : i32
    %c0_i32_1 = arith.constant 0 : i32
    return %c0_i32, %c0_i32_0, %arg0 : i32, i32, i32
  }
  func.func @transform_1(%arg0: i32) -> (i32, i32) {
    %c0_i32 = arith.constant 0 : i32
    %c0_i32_0 = arith.constant 0 : i32
    return %c0_i32, %arg0 : i32, i32
  }
  func.func @transform_2(%arg0: i32) -> (i32, i32) {
    %c0_i32 = arith.constant 0 : i32
    %c0_i32_0 = arith.constant 0 : i32
    %c0_i32_1 = arith.constant 0 : i32
    return %c0_i32, %c0_i32_0 : i32, i32
  }
  func.func @transform_3(%arg0: i32) -> (i32, i32) {
    %c0_i32 = arith.constant 0 : i32
    %c0_i32_0 = arith.constant 0 : i32
    %c0_i32_1 = arith.constant 0 : i32
    return %c0_i32, %c0_i32_0 : i32, i32
  }
  func.func @transform_4(%arg0: i32) -> (i32, i32) {
    %c0_i32 = arith.constant 0 : i32
    %c0_i32_0 = arith.constant 0 : i32
    %c0_i32_1 = arith.constant 0 : i32
    return %c0_i32, %c0_i32_0 : i32, i32
  }
  func.func @transform_5(%arg0: i32) -> (i32, i32) {
    %c0_i32 = arith.constant 0 : i32
    %c0_i32_0 = arith.constant 0 : i32
    %c0_i32_1 = arith.constant 0 : i32
    return %c0_i32, %c0_i32_0 : i32, i32
  }
  func.func @transform_6(%arg0: i32) -> (i32, i32) {
    %c0_i32 = arith.constant 0 : i32
    %c0_i32_0 = arith.constant 0 : i32
    return %c0_i32, %arg0 : i32, i32
  }
}

</mosaic_0001>

<llo_original>
// kernel: tpu_custom_call.1
$region0: #{tpu_custom_call.1}
  #allocation0 [shape = 'u32[]', space=smem, size = 0x4, offset = 0x4, fixed_abs, tag = 'smem constant byte address 0x4 - core index']
  #allocation1 [shape = 'u32[144,128]{1,0:T(1,128)}', space=vmem, size = 0x12000, scoped, tag = 'internal scratch']
  #allocation2 [shape = 'f32[8,16,512]{2,1,0:T(8,128)}', space=vmem, size = 0x40000, scoped, tag = 'scratch operand']
  #allocation3 [shape = 'f32[8,16,512]{2,1,0:T(8,128)}', space=vmem, size = 0x40000, scoped, tag = 'scratch operand']
  #allocation4 [shape = 'f32[8,16,512]{2,1,0:T(8,128)}', space=vmem, size = 0x40000, scoped, tag = 'scratch operand']
  #allocation5 [shape = 'f32[8,512]{1,0:T(8,128)}', space=vmem, size = 0x4000, scoped, tag = 'scratch operand']
  %s0 = inlined_call_operand.hbm [shape: f32[4,16,1024], index: 0, kind: input, shape index: {}]
  %s1 = inlined_call_operand.hbm [shape: f32[16,1024], index: 1, kind: input, shape index: {}]
  %s2 = inlined_call_operand.vmem [shape: f32[8,4], index: 2, kind: input, shape index: {}]
  %s3 = inlined_call_operand.vmem [shape: f32[8,4], index: 3, kind: input, shape index: {}]
  %s4 = inlined_call_operand.vmem [shape: f32[8,4], index: 4, kind: input, shape index: {}]
  %s5 = inlined_call_operand.vmem [shape: f32[1,8], index: 5, kind: input, shape index: {}]
  %s6 = inlined_call_operand.hbm [shape: f32[16,1024], index: 6, kind: output, shape index: {}]
  %s7 = sld [smem:[#allocation0]]
  $region81: #{tpu_custom_call.1} parent=0
    _
  %s9 = ssub.s32 1, %s7
  %s10 = scalar_select 0, %s9, %s7
  $region1: #{tpu_custom_call.1} parent=0
    #allocation6 [shape = 'u8[262144]{0}', space=vmem, size = 0x40000, scoped, tag = 'input window, operand 0']
    #allocation7 [shape = 's32[2]{0}', space=sflag, size = 0x8, scoped, tag = 'scoped memory for tpu_custom_call.1']
    #allocation8 [shape = 's32[2]{0}', space=sflag, size = 0x8, scoped, tag = 'scoped memory for tpu_custom_call.1']
    #allocation9 [shape = 's32[2]{0}', space=sflag, size = 0x8, scoped, tag = 'scoped memory for tpu_custom_call.1']
    #allocation10 [shape = 'u8[65536]{0}', space=vmem, size = 0x10000, scoped, tag = 'input window, operand 1']
    #allocation11 [shape = 's32[2]{0}', space=sflag, size = 0x8, scoped, tag = 'scoped memory for tpu_custom_call.1']
    #allocation12 [shape = 'u8[4096]{0}', space=smem, size = 0x1000, scoped, tag = 'input window, operand 2, single buffered']
    #allocation13 [shape = 'u8[4096]{0}', space=smem, size = 0x1000, scoped, tag = 'input window, operand 3, single buffered']
    #allocation14 [shape = 's32[1]{0}', space=sflag, size = 0x4, scoped, tag = 'scoped memory for tpu_custom_call.1']
    #allocation15 [shape = 'u8[4096]{0}', space=smem, size = 0x1000, scoped, tag = 'input window, operand 4, single buffered']
    #allocation16 [shape = 'u8[512]{0}', space=smem, size = 0x200, scoped, tag = 'input window, operand 5, single buffered']
    #allocation17 [shape = 's32[1]{0}', space=sflag, size = 0x4, scoped, tag = 'scoped memory for tpu_custom_call.1']
    #allocation18 [shape = 'u8[65536]{0}', space=vmem, size = 0x10000, scoped, tag = 'output window, operand 0']
    %11 = vsyncpa [#allocation7], 0
    %s12 = scalar_lea.sflag [#allocation7], 1
    %13 = vsyncpa %s12, 0
    %14 = vsyncpa [#allocation11], 0
    %s15 = scalar_lea.sflag [#allocation11], 1
    %16 = vsyncpa %s15, 0
    %17 = vsyncpa [#allocation9], 0
    %18 = vsyncpa [#allocation14], 0
    %19 = vsyncpa [#allocation17], 0
    %20 = vsyncpa [#allocation8], 0
    %s21 = scalar_lea.sflag [#allocation8], 1
    %22 = vsyncpa %s21, 0
    loop: start=0, step=1, limit=4
    $region2: #{tpu_custom_call.1} parent=1 // loop_pre_header
      _
    $region3: #{tpu_custom_call.1} parent=1 // loop_header
      %s24 = sphi 0, %s28
      %p25 = scmp.ge.s32.totalorder %s24, 4
      %s34 = sphi 0, %s36
      %s37 = sphi 0, %s34
      %s38 = sphi 0, %s37
      %s54 = sphi 0, %s38
      %s60 = sphi 0, %s62
      %s63 = sphi 0, %s60
      %s64 = sphi 0, %s63
      %s80 = sphi 0, %s64
      %s84 = sphi 0, %s84
      %s86 = sphi 0, %s84
      %s87 = sphi 0, %s86
      %s101 = sphi 0, %s87
      %s105 = sphi 0, %s105
      %s107 = sphi 0, %s105
      %s108 = sphi 0, %s107
      %s122 = sphi 0, %s108
      %s126 = sphi 0, %s126
      %s128 = sphi 0, %s126
      %s129 = sphi 0, %s128
      %s143 = sphi 0, %s129
      %s147 = sphi 0, %s147
      %s149 = sphi 0, %s147
      %s150 = sphi 0, %s149
      %s164 = sphi 0, %s150
      %s170 = sphi 0, %s172
      %s173 = sphi 0, %s170
      %s174 = sphi 0, %s173
      %s190 = sphi 0, %s174
    $region4: #{tpu_custom_call.1} parent=1 // loop_header_branch
      %27 = sbr.rel (%p25) target = $region8
    $region5: #{tpu_custom_call.1} parent=1 // loop_body
      %s29 = ssub.s32 %s24, 1
      %s30 = ssub.s32 %s24, 2
      %s31 = sadd.s32 %s24, 1
      %s32 = ssub.s32 %s24, %s31
      %p33 = scmp.eq.s32.totalorder %s32, 0
      %s35 = sadd.s32 %s34, 1
      %s36 = scalar_select %p33, %s34, %s35
      %p39 = pneg %p33
      %p40 = scmp.eq.s32.totalorder %s24, 1
      %p41 = por %p39, %p40
      %p42 = scmp.ne.s32.totalorder %s34, %s37
      %p43 = scmp.eq.s32.totalorder %s24, 0
      %p44 = por %p42, %p43
      %p45 = scmp.ne.s32.totalorder %s34, %s37
      %p46 = scmp.eq.s32.totalorder %s29, 1
      %p47 = por %p45, %p46
      %p48 = scmp.ne.s32.totalorder %s37, %s38
      %p49 = scmp.eq.s32.totalorder %s29, 0
      %p50 = por %p48, %p49
      %p51 = scmp.ne.s32.totalorder %s37, %s38
      %p52 = scmp.eq.s32.totalorder %s30, 1
      %p53 = por %p51, %p52
      %p55 = scmp.ne.s32.totalorder %s38, %s54
      %p56 = scmp.eq.s32.totalorder %s30, 0
      %p57 = por %p55, %p56
      %s58 = ssub.s32 %s24, %s31
      %p59 = scmp.eq.s32.totalorder %s58, 0
      %s61 = sadd.s32 %s60, 1
      %s62 = scalar_select %p59, %s60, %s61
      %p65 = pneg %p59
      %p66 = scmp.eq.s32.totalorder %s24, 1
      %p67 = por %p65, %p66
      %p68 = scmp.ne.s32.totalorder %s60, %s63
      %p69 = scmp.eq.s32.totalorder %s24, 0
      %p70 = por %p68, %p69
      %p71 = scmp.ne.s32.totalorder %s60, %s63
      %p72 = scmp.eq.s32.totalorder %s29, 1
      %p73 = por %p71, %p72
      %p74 = scmp.ne.s32.totalorder %s63, %s64
      %p75 = scmp.eq.s32.totalorder %s29, 0
      %p76 = por %p74, %p75
      %p77 = scmp.ne.s32.totalorder %s63, %s64
      %p78 = scmp.eq.s32.totalorder %s30, 1
      %p79 = por %p77, %p78
      %p81 = scmp.ne.s32.totalorder %s64, %s80
      %p82 = scmp.eq.s32.totalorder %s30, 0
      %p83 = por %p81, %p82
      %s85 = sadd.s32 %s84, 1
      %p88 = scmp.eq.s32.totalorder %s24, 1
      %p89 = scmp.ne.s32.totalorder %s84, %s86
      %p90 = scmp.eq.s32.totalorder %s24, 0
      %p91 = por %p89, %p90
      %p92 = scmp.ne.s32.totalorder %s84, %s86
      %p93 = scmp.eq.s32.totalorder %s29, 1
      %p94 = por %p92, %p93
      %p95 = scmp.ne.s32.totalorder %s86, %s87
      %p96 = scmp.eq.s32.totalorder %s29, 0
      %p97 = por %p95, %p96
      %p98 = scmp.ne.s32.totalorder %s86, %s87
      %p99 = scmp.eq.s32.totalorder %s30, 1
      %p100 = por %p98, %p99
      %p102 = scmp.ne.s32.totalorder %s87, %s101
      %p103 = scmp.eq.s32.totalorder %s30, 0
      %p104 = por %p102, %p103
      %s106 = sadd.s32 %s105, 1
      %p109 = scmp.eq.s32.totalorder %s24, 1
      %p110 = scmp.ne.s32.totalorder %s105, %s107
      %p111 = scmp.eq.s32.totalorder %s24, 0
      %p112 = por %p110, %p111
      %p113 = scmp.ne.s32.totalorder %s105, %s107
      %p114 = scmp.eq.s32.totalorder %s29, 1
      %p115 = por %p113, %p114
      %p116 = scmp.ne.s32.totalorder %s107, %s108
      %p117 = scmp.eq.s32.totalorder %s29, 0
      %p118 = por %p116, %p117
      %p119 = scmp.ne.s32.totalorder %s107, %s108
      %p120 = scmp.eq.s32.totalorder %s30, 1
      %p121 = por %p119, %p120
      %p123 = scmp.ne.s32.totalorder %s108, %s122
      %p124 = scmp.eq.s32.totalorder %s30, 0
      %p125 = por %p123, %p124
      %s127 = sadd.s32 %s126, 1
      %p130 = scmp.eq.s32.totalorder %s24, 1
      %p131 = scmp.ne.s32.totalorder %s126, %s128
      %p132 = scmp.eq.s32.totalorder %s24, 0
      %p133 = por %p131, %p132
      %p134 = scmp.ne.s32.totalorder %s126, %s128
      %p135 = scmp.eq.s32.totalorder %s29, 1
      %p136 = por %p134, %p135
      %p137 = scmp.ne.s32.totalorder %s128, %s129
      %p138 = scmp.eq.s32.totalorder %s29, 0
      %p139 = por %p137, %p138
      %p140 = scmp.ne.s32.totalorder %s128, %s129
      %p141 = scmp.eq.s32.totalorder %s30, 1
      %p142 = por %p140, %p141
      %p144 = scmp.ne.s32.totalorder %s129, %s143
      %p145 = scmp.eq.s32.totalorder %s30, 0
      %p146 = por %p144, %p145
      %s148 = sadd.s32 %s147, 1
      %p151 = scmp.eq.s32.totalorder %s24, 1
      %p152 = scmp.ne.s32.totalorder %s147, %s149
      %p153 = scmp.eq.s32.totalorder %s24, 0
      %p154 = por %p152, %p153
      %p155 = scmp.ne.s32.totalorder %s147, %s149
      %p156 = scmp.eq.s32.totalorder %s29, 1
      %p157 = por %p155, %p156
      %p158 = scmp.ne.s32.totalorder %s149, %s150
      %p159 = scmp.eq.s32.totalorder %s29, 0
      %p160 = por %p158, %p159
      %p161 = scmp.ne.s32.totalorder %s149, %s150
      %p162 = scmp.eq.s32.totalorder %s30, 1
      %p163 = por %p161, %p162
      %p165 = scmp.ne.s32.totalorder %s150, %s164
      %p166 = scmp.eq.s32.totalorder %s30, 0
      %p167 = por %p165, %p166
      %s168 = ssub.s32 %s24, %s31
      %p169 = scmp.eq.s32.totalorder %s168, 0
      %s171 = sadd.s32 %s170, 1
      %s172 = scalar_select %p169, %s170, %s171
      %p175 = pneg %p169
      %p176 = scmp.eq.s32.totalorder %s24, 1
      %p177 = por %p175, %p176
      %p178 = scmp.ne.s32.totalorder %s170, %s173
      %p179 = scmp.eq.s32.totalorder %s24, 0
      %p180 = por %p178, %p179
      %p181 = scmp.ne.s32.totalorder %s170, %s173
      %p182 = scmp.eq.s32.totalorder %s29, 1
      %p183 = por %p181, %p182
      %p184 = scmp.ne.s32.totalorder %s173, %s174
      %p185 = scmp.eq.s32.totalorder %s29, 0
      %p186 = por %p184, %p185
      %p187 = scmp.ne.s32.totalorder %s173, %s174
      %p188 = scmp.eq.s32.totalorder %s30, 1
      %p189 = por %p187, %p188
      %p191 = scmp.ne.s32.totalorder %s174, %s190
      %p192 = scmp.eq.s32.totalorder %s30, 0
      %p193 = por %p191, %p192
      %p194 = scmp.le.s32.totalorder 1, %s24
      %p195 = scmp.lt.s32.totalorder %s24, 3
      %p196 = pnand %p194, %p195
      %p197 = pneg %p196
      // Predicated region
      $region9: #{tpu_custom_call.1} parent=5 // pred_check
        _
      $region10: #{tpu_custom_call.1} parent=5 // pred_check_branch
        %199 = sbr.rel (%p196) target = $region12
      $region11: #{tpu_custom_call.1} parent=5 // pred_region
        %s200 = ssub.s32 %s24, 1
        // Predicated region
        $region13: #{tpu_custom_call.1} parent=11 // pred_check
          %p201 = pneg %p97
        $region14: #{tpu_custom_call.1} parent=11 // pred_check_branch
          %203 = sbr.rel (%p201) target = $region16
        $region15: #{tpu_custom_call.1} parent=11 // pred_region
          %s205 = ssub.s32 128, 128
          %206 = vsyncadd [#allocation9], %s205
          %s208 = sshll.u32 %s2, 4
          %s209 = int_to_ptr.vmem [resolvable:$true] %s208
          %211 = dma.vmem_to_smem %s209, 128, [#allocation12], [#allocation9]
        $region16: #{tpu_custom_call.1} parent=11 // pred_fallthru
          _
        // Predicated region
        $region17: #{tpu_custom_call.1} parent=11 // pred_check
          %p212 = pneg %p118
        $region18: #{tpu_custom_call.1} parent=11 // pred_check_branch
          %214 = sbr.rel (%p212) target = $region20
        $region19: #{tpu_custom_call.1} parent=11 // pred_region
          %s216 = ssub.s32 128, 128
          %217 = vsyncadd [#allocation14], %s216
          %s219 = sshll.u32 %s3, 4
          %s220 = int_to_ptr.vmem [resolvable:$true] %s219
          %222 = dma.vmem_to_smem %s220, 128, [#allocation13], [#allocation14]
        $region20: #{tpu_custom_call.1} parent=11 // pred_fallthru
          _
        // Predicated region
        $region21: #{tpu_custom_call.1} parent=11 // pred_check
          %p223 = pneg %p139
        $region22: #{tpu_custom_call.1} parent=11 // pred_check_branch
          %225 = sbr.rel (%p223) target = $region24
        $region23: #{tpu_custom_call.1} parent=11 // pred_region
          %s227 = ssub.s32 128, 128
          %228 = vsyncadd [#allocation14], %s227
          %s230 = sshll.u32 %s4, 4
          %s231 = int_to_ptr.vmem [resolvable:$true] %s230
          %233 = dma.vmem_to_smem %s231, 128, [#allocation15], [#allocation14]
        $region24: #{tpu_custom_call.1} parent=11 // pred_fallthru
          _
        // Predicated region
        $region25: #{tpu_custom_call.1} parent=11 // pred_check
          %p234 = pneg %p160
        $region26: #{tpu_custom_call.1} parent=11 // pred_check_branch
          %236 = sbr.rel (%p234) target = $region28
        $region27: #{tpu_custom_call.1} parent=11 // pred_region
          %s238 = ssub.s32 16, 16
          %239 = vsyncadd [#allocation17], %s238
          %s241 = sshll.u32 %s5, 4
          %s242 = int_to_ptr.vmem [resolvable:$true] %s241
          %244 = dma.vmem_to_smem %s242, 16, [#allocation16], [#allocation17]
        $region28: #{tpu_custom_call.1} parent=11 // pred_fallthru
          _
      $region12: #{tpu_custom_call.1} parent=5 // pred_fallthru
        _
      %p245 = scmp.lt.s32.totalorder %s24, 2
      // Predicated region
      $region29: #{tpu_custom_call.1} parent=5 // pred_check
        %p246 = pneg %p245
      $region30: #{tpu_custom_call.1} parent=5 // pred_check_branch
        %248 = sbr.rel (%p246) target = $region32
      $region31: #{tpu_custom_call.1} parent=5 // pred_region
        // Predicated region
        $region33: #{tpu_custom_call.1} parent=31 // pred_check
          %p249 = pneg %p44
        $region34: #{tpu_custom_call.1} parent=31 // pred_check_branch
          %251 = sbr.rel (%p249) target = $region36
        $region35: #{tpu_custom_call.1} parent=31 // pred_region
          %s252 = sand.u32 %s34, 1
          %s253 = scalar_lea.sflag [#allocation7], %s252
          %s254 = sand.u32 %s34, 1
          %s255 = smul.addr %s254, 256
          %s256 = scalar_lea.vmem [#allocation6], %s255
          %s257 = smul.u32 4, %s24
          %s259 = ssub.s32 4096, 4096
          %260 = vsyncadd %s253, %s259
          %s261 = smul.addr %s257, 128
          %s262 = scalar_lea.hbm %s0, %s261
          %s263 = sshll.u32 %s256, 4
          %s264 = int_to_ptr.vmem [resolvable:$true] %s263
          %269 = dma.hbm_to_vmem [thread:$0]  %s262, 4096, %s264, %s253, 1024, 512, 32
        $region36: #{tpu_custom_call.1} parent=31 // pred_fallthru
          _
        // Predicated region
        $region37: #{tpu_custom_call.1} parent=31 // pred_check
          %p270 = pneg %p70
        $region38: #{tpu_custom_call.1} parent=31 // pred_check_branch
          %272 = sbr.rel (%p270) target = $region40
        $region39: #{tpu_custom_call.1} parent=31 // pred_region
          %s273 = sand.u32 %s60, 1
          %s274 = scalar_lea.sflag [#allocation11], %s273
          %s275 = sand.u32 %s60, 1
          %s276 = smul.addr %s275, 64
          %s277 = scalar_lea.vmem [#allocation10], %s276
          %s278 = smul.u32 4, %s24
          %s280 = ssub.s32 1024, 1024
          %281 = vsyncadd %s274, %s280
          %s282 = smul.addr %s278, 128
          %s283 = scalar_lea.hbm %s1, %s282
          %s284 = sshll.u32 %s277, 4
          %s285 = int_to_ptr.vmem [resolvable:$true] %s284
          %290 = dma.hbm_to_vmem [thread:$0]  %s283, 1024, %s285, %s274, 1024, 512, 32
        $region40: #{tpu_custom_call.1} parent=31 // pred_fallthru
          _
      $region32: #{tpu_custom_call.1} parent=5 // pred_fallthru
        _
      %p291 = scmp.le.s32.totalorder 1, %s24
      %p292 = scmp.lt.s32.totalorder %s24, 3
      %p293 = pnand %p291, %p292
      %p294 = pneg %p293
      // Predicated region
      $region41: #{tpu_custom_call.1} parent=5 // pred_check
        _
      $region42: #{tpu_custom_call.1} parent=5 // pred_check_branch
        %296 = sbr.rel (%p293) target = $region44
      $region43: #{tpu_custom_call.1} parent=5 // pred_region
        %s297 = ssub.s32 %s24, 1
        %s298 = sand.u32 %s37, 1
        %s299 = scalar_lea.sflag [#allocation7], %s298
        %s300 = sand.u32 %s37, 1
        %s301 = smul.addr %s300, 256
        %s302 = scalar_lea.vmem [#allocation6], %s301
        // Predicated region
        $region45: #{tpu_custom_call.1} parent=43 // pred_check
          %p303 = pneg %p50
        $region46: #{tpu_custom_call.1} parent=43 // pred_check_branch
          %305 = sbr.rel (%p303) target = $region48
        $region47: #{tpu_custom_call.1} parent=43 // pred_region
          %306 = dma.done %s299, 4096
        $region48: #{tpu_custom_call.1} parent=43 // pred_fallthru
          _
        %s307 = sand.u32 %s63, 1
        %s308 = scalar_lea.sflag [#allocation11], %s307
        %s309 = sand.u32 %s63, 1
        %s310 = smul.addr %s309, 64
        %s311 = scalar_lea.vmem [#allocation10], %s310
        // Predicated region
        $region49: #{tpu_custom_call.1} parent=43 // pred_check
          %p312 = pneg %p76
        $region50: #{tpu_custom_call.1} parent=43 // pred_check_branch
          %314 = sbr.rel (%p312) target = $region52
        $region51: #{tpu_custom_call.1} parent=43 // pred_region
          %315 = dma.done %s308, 1024
        $region52: #{tpu_custom_call.1} parent=43 // pred_fallthru
          _
        // Predicated region
        $region53: #{tpu_custom_call.1} parent=43 // pred_check
          %p316 = pneg %p97
        $region54: #{tpu_custom_call.1} parent=43 // pred_check_branch
          %318 = sbr.rel (%p316) target = $region56
        $region55: #{tpu_custom_call.1} parent=43 // pred_region
          %319 = dma.done [#allocation9], 128
        $region56: #{tpu_custom_call.1} parent=43 // pred_fallthru
          _
        // Predicated region
        $region57: #{tpu_custom_call.1} parent=43 // pred_check
          %p320 = pneg %p118
        $region58: #{tpu_custom_call.1} parent=43 // pred_check_branch
          %322 = sbr.rel (%p320) target = $region60
        $region59: #{tpu_custom_call.1} parent=43 // pred_region
          %323 = dma.done [#allocation14], 128
        $region60: #{tpu_custom_call.1} parent=43 // pred_fallthru
          _
        // Predicated region
        $region61: #{tpu_custom_call.1} parent=43 // pred_check
          %p324 = pneg %p139
        $region62: #{tpu_custom_call.1} parent=43 // pred_check_branch
          %326 = sbr.rel (%p324) target = $region64
        $region63: #{tpu_custom_call.1} parent=43 // pred_region
          %327 = dma.done [#allocation14], 128
        $region64: #{tpu_custom_call.1} parent=43 // pred_fallthru
          _
        // Predicated region
        $region65: #{tpu_custom_call.1} parent=43 // pred_check
          %p328 = pneg %p160
        $region66: #{tpu_custom_call.1} parent=43 // pred_check_branch
          %330 = sbr.rel (%p328) target = $region68
        $region67: #{tpu_custom_call.1} parent=43 // pred_region
          %331 = dma.done [#allocation17], 16
        $region68: #{tpu_custom_call.1} parent=43 // pred_fallthru
          _
        %332 = sfence
        %s333 = sand.u32 %s37, 1
        %s334 = scalar_lea.sflag [#allocation7], %s333
        %s335 = sand.u32 %s37, 1
        %s336 = smul.addr %s335, 256
        %s337 = scalar_lea.vmem [#allocation6], %s336
        %p338 = pneg %p50
        %p339 = pneg %p47
        %s340 = sand.u32 %s63, 1
        %s341 = scalar_lea.sflag [#allocation11], %s340
        %s342 = sand.u32 %s63, 1
        %s343 = smul.addr %s342, 64
        %s344 = scalar_lea.vmem [#allocation10], %s343
        %p345 = pneg %p76
        %p346 = pneg %p73
        %p347 = pneg %p97
        %p348 = pneg %p94
        %p349 = pneg %p118
        %p350 = pneg %p115
        %p351 = pneg %p139
        %p352 = pneg %p136
        %p353 = pneg %p160
        %p354 = pneg %p157
        %p355 = pneg %p186
        %p356 = pneg %p183
        %s357 = sand.u32 %s173, 1
        %s358 = scalar_lea.sflag [#allocation8], %s357
        %s359 = sand.u32 %s173, 1
        %s360 = smul.addr %s359, 64
        %s361 = scalar_lea.vmem [#allocation18], %s360
        %s362 = smul.u32 4, %s29
        %s363 = smul.u32 4, %s29
        %s364 = smul.u32 4, %s29
        %v365 = vld [vmem:[%s311] sm:$0xff]
        %v366 = vld [vmem:[%s311 + $0x8] sm:$0xff]
        %v367 = vld [vmem:[%s311 + $0x10] sm:$0xff]
        %v368 = vld [vmem:[%s311 + $0x18] sm:$0xff]
        %v369 = vld [vmem:[%s311 + $0x20] sm:$0xff]
        %v370 = vld [vmem:[%s311 + $0x28] sm:$0xff]
        %v371 = vld [vmem:[%s311 + $0x30] sm:$0xff]
        %v372 = vld [vmem:[%s311 + $0x38] sm:$0xff]
        %vm373 = vcmp.ge.f32.partialorder %v365, 1.0
        %vm374 = vcmp.ge.f32.partialorder %v366, 1.0
        %vm375 = vcmp.ge.f32.partialorder %v367, 1.0
        %vm376 = vcmp.ge.f32.partialorder %v368, 1.0
        %vm377 = vcmp.ge.f32.partialorder %v369, 1.0
        %vm378 = vcmp.ge.f32.partialorder %v370, 1.0
        %vm379 = vcmp.ge.f32.partialorder %v371, 1.0
        %vm380 = vcmp.ge.f32.partialorder %v372, 1.0
        %v381 = vsel %vm373, 1, 0
        %v382 = vsel %vm374, 1, 0
        %v383 = vsel %vm375, 1, 0
        %v384 = vsel %vm376, 1, 0
        %v385 = vsel %vm377, 1, 0
        %v386 = vsel %vm378, 1, 0
        %v387 = vsel %vm379, 1, 0
        %v388 = vsel %vm380, 1, 0
        %v389 = vcvt.s32.f32 %v381
        %v390 = vcvt.s32.f32 %v382
        %v391 = vcvt.s32.f32 %v383
        %v392 = vcvt.s32.f32 %v384
        %v393 = vcvt.s32.f32 %v385
        %v394 = vcvt.s32.f32 %v386
        %v395 = vcvt.s32.f32 %v387
        %v396 = vcvt.s32.f32 %v388
        %v397 = vadd.f32 %v389, %v393
        %v398 = vrot.slane %v397, 4
        %v399 = vadd.f32 %v397, %v398
        %v400 = vrot.slane %v399, 2
        %v401 = vadd.f32 %v399, %v400
        %v402 = vrot.slane %v401, 1
        %v403 = vadd.f32 %v401, %v402
        %v404 = vadd.f32 %v390, %v394
        %v405 = vrot.slane %v404, 4
        %v406 = vadd.f32 %v404, %v405
        %v407 = vrot.slane %v406, 2
        %v408 = vadd.f32 %v406, %v407
        %v409 = vrot.slane %v408, 1
        %v410 = vadd.f32 %v408, %v409
        %v411 = vadd.f32 %v391, %v395
        %v412 = vrot.slane %v411, 4
        %v413 = vadd.f32 %v411, %v412
        %v414 = vrot.slane %v413, 2
        %v415 = vadd.f32 %v413, %v414
        %v416 = vrot.slane %v415, 1
        %v417 = vadd.f32 %v415, %v416
        %v418 = vadd.f32 %v392, %v396
        %v419 = vrot.slane %v418, 4
        %v420 = vadd.f32 %v418, %v419
        %v421 = vrot.slane %v420, 2
        %v422 = vadd.f32 %v420, %v421
        %v423 = vrot.slane %v422, 1
        %v424 = vadd.f32 %v422, %v423
        %v425 = vadd.f32 %v403, 1.0
        %v426 = vadd.f32 %v410, 1.0
        %v427 = vadd.f32 %v417, 1.0
        %v428 = vadd.f32 %v424, 1.0
        %v429 = vrsqrt.pop %v425
        %v430 = vrsqrt.pop %v426
        %v431 = vrsqrt.pop %v427
        %v432 = vrsqrt.pop %v428
        %v433 = vld [vmem:[%s302] sm:$0xff]
        %v434 = vld [vmem:[%s302 + $0x8] sm:$0xff]
        %v435 = vld [vmem:[%s302 + $0x10] sm:$0xff]
        %v436 = vld [vmem:[%s302 + $0x18] sm:$0xff]
        %v437 = vld [vmem:[%s302 + $0x20] sm:$0xff]
        %v438 = vld [vmem:[%s302 + $0x28] sm:$0xff]
        %v439 = vld [vmem:[%s302 + $0x30] sm:$0xff]
        %v440 = vld [vmem:[%s302 + $0x38] sm:$0xff]
        %s441 = scalar_lea.vmem %s302, 64 [#allocation6]
        %v442 = vld [vmem:[%s441] sm:$0xff]
        %v443 = vld [vmem:[%s441 + $0x8] sm:$0xff]
        %v444 = vld [vmem:[%s441 + $0x10] sm:$0xff]
        %v445 = vld [vmem:[%s441 + $0x18] sm:$0xff]
        %v446 = vld [vmem:[%s441 + $0x20] sm:$0xff]
        %v447 = vld [vmem:[%s441 + $0x28] sm:$0xff]
        %v448 = vld [vmem:[%s441 + $0x30] sm:$0xff]
        %v449 = vld [vmem:[%s441 + $0x38] sm:$0xff]
        %s450 = scalar_lea.vmem %s302, 128 [#allocation6]
        %v451 = vld [vmem:[%s450] sm:$0xff]
        %v452 = vld [vmem:[%s450 + $0x8] sm:$0xff]
        %v453 = vld [vmem:[%s450 + $0x10] sm:$0xff]
        %v454 = vld [vmem:[%s450 + $0x18] sm:$0xff]
        %v455 = vld [vmem:[%s450 + $0x20] sm:$0xff]
        %v456 = vld [vmem:[%s450 + $0x28] sm:$0xff]
        %v457 = vld [vmem:[%s450 + $0x30] sm:$0xff]
        %v458 = vld [vmem:[%s450 + $0x38] sm:$0xff]
        %s459 = scalar_lea.vmem %s302, 192 [#allocation6]
        %v460 = vld [vmem:[%s459] sm:$0xff]
        %v461 = vld [vmem:[%s459 + $0x8] sm:$0xff]
        %v462 = vld [vmem:[%s459 + $0x10] sm:$0xff]
        %v463 = vld [vmem:[%s459 + $0x18] sm:$0xff]
        %v464 = vld [vmem:[%s459 + $0x20] sm:$0xff]
        %v465 = vld [vmem:[%s459 + $0x28] sm:$0xff]
        %v466 = vld [vmem:[%s459 + $0x30] sm:$0xff]
        %v467 = vld [vmem:[%s459 + $0x38] sm:$0xff]
        %s468 = sld [smem:[#allocation12]]
        %v469 = vstv %s468
        %v470 = vmul.f32 %v469, %v433
        %v471 = vmul.f32 %v469, %v434
        %v472 = vmul.f32 %v469, %v435
        %v473 = vmul.f32 %v469, %v436
        %v474 = vmul.f32 %v469, %v437
        %v475 = vmul.f32 %v469, %v438
        %v476 = vmul.f32 %v469, %v439
        %v477 = vmul.f32 %v469, %v440
        %s478 = sld [smem:[#allocation12 + $0x1]]
        %v479 = vstv %s478
        %v480 = vmul.f32 %v479, %v442
        %v481 = vmul.f32 %v479, %v443
        %v482 = vmul.f32 %v479, %v444
        %v483 = vmul.f32 %v479, %v445
        %v484 = vmul.f32 %v479, %v446
        %v485 = vmul.f32 %v479, %v447
        %v486 = vmul.f32 %v479, %v448
        %v487 = vmul.f32 %v479, %v449
        %v488 = vadd.f32 %v470, %v480
        %v489 = vadd.f32 %v471, %v481
        %v490 = vadd.f32 %v472, %v482
        %v491 = vadd.f32 %v473, %v483
        %v492 = vadd.f32 %v474, %v484
        %v493 = vadd.f32 %v475, %v485
        %v494 = vadd.f32 %v476, %v486
        %v495 = vadd.f32 %v477, %v487
        %s496 = sld [smem:[#allocation12 + $0x2]]
        %v497 = vstv %s496
        %v498 = vmul.f32 %v497, %v451
        %v499 = vmul.f32 %v497, %v452
        %v500 = vmul.f32 %v497, %v453
        %v501 = vmul.f32 %v497, %v454
        %v502 = vmul.f32 %v497, %v455
        %v503 = vmul.f32 %v497, %v456
        %v504 = vmul.f32 %v497, %v457
        %v505 = vmul.f32 %v497, %v458
        %v506 = vadd.f32 %v488, %v498
        %v507 = vadd.f32 %v489, %v499
        %v508 = vadd.f32 %v490, %v500
        %v509 = vadd.f32 %v491, %v501
        %v510 = vadd.f32 %v492, %v502
        %v511 = vadd.f32 %v493, %v503
        %v512 = vadd.f32 %v494, %v504
        %v513 = vadd.f32 %v495, %v505
        %s514 = sld [smem:[#allocation12 + $0x3]]
        %v515 = vstv %s514
        %v516 = vmul.f32 %v515, %v460
        %v517 = vmul.f32 %v515, %v461
        %v518 = vmul.f32 %v515, %v462
        %v519 = vmul.f32 %v515, %v463
        %v520 = vmul.f32 %v515, %v464
        %v521 = vmul.f32 %v515, %v465
        %v522 = vmul.f32 %v515, %v466
        %v523 = vmul.f32 %v515, %v467
        %v524 = vadd.f32 %v506, %v516
        %v525 = vadd.f32 %v507, %v517
        %v526 = vadd.f32 %v508, %v518
        %v527 = vadd.f32 %v509, %v519
        %v528 = vadd.f32 %v510, %v520
        %v529 = vadd.f32 %v511, %v521
        %v530 = vadd.f32 %v512, %v522
        %v531 = vadd.f32 %v513, %v523
        %v532 = vtanh.pop %v524
        %v533 = vtanh.pop %v525
        %v534 = vtanh.pop %v526
        %v535 = vtanh.pop %v527
        %v536 = vtanh.pop %v528
        %v537 = vtanh.pop %v529
        %v538 = vtanh.pop %v530
        %v539 = vtanh.pop %v531
        %540 = vst [vmem:[#allocation2] sm:$0xff] %v532
        %541 = vst [vmem:[#allocation2 + $0x8] sm:$0xff] %v533
        %542 = vst [vmem:[#allocation2 + $0x10] sm:$0xff] %v534
        %543 = vst [vmem:[#allocation2 + $0x18] sm:$0xff] %v535
        %544 = vst [vmem:[#allocation2 + $0x20] sm:$0xff] %v536
        %545 = vst [vmem:[#allocation2 + $0x28] sm:$0xff] %v537
        %546 = vst [vmem:[#allocation2 + $0x30] sm:$0xff] %v538
        %547 = vst [vmem:[#allocation2 + $0x38] sm:$0xff] %v539
        %s548 = sld [smem:[#allocation13]]
        %v549 = vstv %s548
        %v550 = vmul.f32 %v549, %v433
        %v551 = vmul.f32 %v549, %v434
        %v552 = vmul.f32 %v549, %v435
        %v553 = vmul.f32 %v549, %v436
        %v554 = vmul.f32 %v549, %v437
        %v555 = vmul.f32 %v549, %v438
        %v556 = vmul.f32 %v549, %v439
        %v557 = vmul.f32 %v549, %v440
        %s558 = sld [smem:[#allocation13 + $0x1]]
        %v559 = vstv %s558
        %v560 = vmul.f32 %v559, %v442
        %v561 = vmul.f32 %v559, %v443
        %v562 = vmul.f32 %v559, %v444
        %v563 = vmul.f32 %v559, %v445
        %v564 = vmul.f32 %v559, %v446
        %v565 = vmul.f32 %v559, %v447
        %v566 = vmul.f32 %v559, %v448
        %v567 = vmul.f32 %v559, %v449
        %v568 = vadd.f32 %v550, %v560
        %v569 = vadd.f32 %v551, %v561
        %v570 = vadd.f32 %v552, %v562
        %v571 = vadd.f32 %v553, %v563
        %v572 = vadd.f32 %v554, %v564
        %v573 = vadd.f32 %v555, %v565
        %v574 = vadd.f32 %v556, %v566
        %v575 = vadd.f32 %v557, %v567
        %s576 = sld [smem:[#allocation13 + $0x2]]
        %v577 = vstv %s576
        %v578 = vmul.f32 %v577, %v451
        %v579 = vmul.f32 %v577, %v452
        %v580 = vmul.f32 %v577, %v453
        %v581 = vmul.f32 %v577, %v454
        %v582 = vmul.f32 %v577, %v455
        %v583 = vmul.f32 %v577, %v456
        %v584 = vmul.f32 %v577, %v457
        %v585 = vmul.f32 %v577, %v458
        %v586 = vadd.f32 %v568, %v578
        %v587 = vadd.f32 %v569, %v579
        %v588 = vadd.f32 %v570, %v580
        %v589 = vadd.f32 %v571, %v581
        %v590 = vadd.f32 %v572, %v582
        %v591 = vadd.f32 %v573, %v583
        %v592 = vadd.f32 %v574, %v584
        %v593 = vadd.f32 %v575, %v585
        %s594 = sld [smem:[#allocation13 + $0x3]]
        %v595 = vstv %s594
        %v596 = vmul.f32 %v595, %v460
        %v597 = vmul.f32 %v595, %v461
        %v598 = vmul.f32 %v595, %v462
        %v599 = vmul.f32 %v595, %v463
        %v600 = vmul.f32 %v595, %v464
        %v601 = vmul.f32 %v595, %v465
        %v602 = vmul.f32 %v595, %v466
        %v603 = vmul.f32 %v595, %v467
        %v604 = vadd.f32 %v586, %v596
        %v605 = vadd.f32 %v587, %v597
        %v606 = vadd.f32 %v588, %v598
        %v607 = vadd.f32 %v589, %v599
        %v608 = vadd.f32 %v590, %v600
        %v609 = vadd.f32 %v591, %v601
        %v610 = vadd.f32 %v592, %v602
        %v611 = vadd.f32 %v593, %v603
        %v612 = vtanh.pop %v604
        %v613 = vtanh.pop %v605
        %v614 = vtanh.pop %v606
        %v615 = vtanh.pop %v607
        %v616 = vtanh.pop %v608
        %v617 = vtanh.pop %v609
        %v618 = vtanh.pop %v610
        %v619 = vtanh.pop %v611
        %620 = vst [vmem:[#allocation3] sm:$0xff] %v612
        %621 = vst [vmem:[#allocation3 + $0x8] sm:$0xff] %v613
        %622 = vst [vmem:[#allocation3 + $0x10] sm:$0xff] %v614
        %623 = vst [vmem:[#allocation3 + $0x18] sm:$0xff] %v615
        %624 = vst [vmem:[#allocation3 + $0x20] sm:$0xff] %v616
        %625 = vst [vmem:[#allocation3 + $0x28] sm:$0xff] %v617
        %626 = vst [vmem:[#allocation3 + $0x30] sm:$0xff] %v618
        %627 = vst [vmem:[#allocation3 + $0x38] sm:$0xff] %v619
        %s628 = sld [smem:[#allocation15]]
        %v629 = vstv %s628
        %v630 = vmul.f32 %v629, %v433
        %v631 = vmul.f32 %v629, %v434
        %v632 = vmul.f32 %v629, %v435
        %v633 = vmul.f32 %v629, %v436
        %v634 = vmul.f32 %v629, %v437
        %v635 = vmul.f32 %v629, %v438
        %v636 = vmul.f32 %v629, %v439
        %v637 = vmul.f32 %v629, %v440
        %s638 = sld [smem:[#allocation15 + $0x1]]
        %v639 = vstv %s638
        %v640 = vmul.f32 %v639, %v442
        %v641 = vmul.f32 %v639, %v443
        %v642 = vmul.f32 %v639, %v444
        %v643 = vmul.f32 %v639, %v445
        %v644 = vmul.f32 %v639, %v446
        %v645 = vmul.f32 %v639, %v447
        %v646 = vmul.f32 %v639, %v448
        %v647 = vmul.f32 %v639, %v449
        %v648 = vadd.f32 %v630, %v640
        %v649 = vadd.f32 %v631, %v641
        %v650 = vadd.f32 %v632, %v642
        %v651 = vadd.f32 %v633, %v643
        %v652 = vadd.f32 %v634, %v644
        %v653 = vadd.f32 %v635, %v645
        %v654 = vadd.f32 %v636, %v646
        %v655 = vadd.f32 %v637, %v647
        %s656 = sld [smem:[#allocation15 + $0x2]]
        %v657 = vstv %s656
        %v658 = vmul.f32 %v657, %v451
        %v659 = vmul.f32 %v657, %v452
        %v660 = vmul.f32 %v657, %v453
        %v661 = vmul.f32 %v657, %v454
        %v662 = vmul.f32 %v657, %v455
        %v663 = vmul.f32 %v657, %v456
        %v664 = vmul.f32 %v657, %v457
        %v665 = vmul.f32 %v657, %v458
        %v666 = vadd.f32 %v648, %v658
        %v667 = vadd.f32 %v649, %v659
        %v668 = vadd.f32 %v650, %v660
        %v669 = vadd.f32 %v651, %v661
        %v670 = vadd.f32 %v652, %v662
        %v671 = vadd.f32 %v653, %v663
        %v672 = vadd.f32 %v654, %v664
        %v673 = vadd.f32 %v655, %v665
        %s674 = sld [smem:[#allocation15 + $0x3]]
        %v675 = vstv %s674
        %v676 = vmul.f32 %v675, %v460
        %v677 = vmul.f32 %v675, %v461
        %v678 = vmul.f32 %v675, %v462
        %v679 = vmul.f32 %v675, %v463
        %v680 = vmul.f32 %v675, %v464
        %v681 = vmul.f32 %v675, %v465
        %v682 = vmul.f32 %v675, %v466
        %v683 = vmul.f32 %v675, %v467
        %v684 = vadd.f32 %v666, %v676
        %v685 = vadd.f32 %v667, %v677
        %v686 = vadd.f32 %v668, %v678
        %v687 = vadd.f32 %v669, %v679
        %v688 = vadd.f32 %v670, %v680
        %v689 = vadd.f32 %v671, %v681
        %v690 = vadd.f32 %v672, %v682
        %v691 = vadd.f32 %v673, %v683
        %v692 = vtanh.pop %v684
        %v693 = vtanh.pop %v685
        %v694 = vtanh.pop %v686
        %v695 = vtanh.pop %v687
        %v696 = vtanh.pop %v688
        %v697 = vtanh.pop %v689
        %v698 = vtanh.pop %v690
        %v699 = vtanh.pop %v691
        %700 = vst [vmem:[#allocation4] sm:$0xff] %v692
        %701 = vst [vmem:[#allocation4 + $0x8] sm:$0xff] %v693
        %702 = vst [vmem:[#allocation4 + $0x10] sm:$0xff] %v694
        %703 = vst [vmem:[#allocation4 + $0x18] sm:$0xff] %v695
        %704 = vst [vmem:[#allocation4 + $0x20] sm:$0xff] %v696
        %705 = vst [vmem:[#allocation4 + $0x28] sm:$0xff] %v697
        %706 = vst [vmem:[#allocation4 + $0x30] sm:$0xff] %v698
        %707 = vst [vmem:[#allocation4 + $0x38] sm:$0xff] %v699
        %s708 = sld [smem:[#allocation12 + $0x80]]
        %v709 = vstv %s708
        %v710 = vmul.f32 %v709, %v433
        %v711 = vmul.f32 %v709, %v434
        %v712 = vmul.f32 %v709, %v435
        %v713 = vmul.f32 %v709, %v436
        %v714 = vmul.f32 %v709, %v437
        %v715 = vmul.f32 %v709, %v438
        %v716 = vmul.f32 %v709, %v439
        %v717 = vmul.f32 %v709, %v440
        %s718 = sld [smem:[#allocation12 + $0x81]]
        %v719 = vstv %s718
        %v720 = vmul.f32 %v719, %v442
        %v721 = vmul.f32 %v719, %v443
        %v722 = vmul.f32 %v719, %v444
        %v723 = vmul.f32 %v719, %v445
        %v724 = vmul.f32 %v719, %v446
        %v725 = vmul.f32 %v719, %v447
        %v726 = vmul.f32 %v719, %v448
        %v727 = vmul.f32 %v719, %v449
        %v728 = vadd.f32 %v710, %v720
        %v729 = vadd.f32 %v711, %v721
        %v730 = vadd.f32 %v712, %v722
        %v731 = vadd.f32 %v713, %v723
        %v732 = vadd.f32 %v714, %v724
        %v733 = vadd.f32 %v715, %v725
        %v734 = vadd.f32 %v716, %v726
        %v735 = vadd.f32 %v717, %v727
        %s736 = sld [smem:[#allocation12 + $0x82]]
        %v737 = vstv %s736
        %v738 = vmul.f32 %v737, %v451
        %v739 = vmul.f32 %v737, %v452
        %v740 = vmul.f32 %v737, %v453
        %v741 = vmul.f32 %v737, %v454
        %v742 = vmul.f32 %v737, %v455
        %v743 = vmul.f32 %v737, %v456
        %v744 = vmul.f32 %v737, %v457
        %v745 = vmul.f32 %v737, %v458
        %v746 = vadd.f32 %v728, %v738
        %v747 = vadd.f32 %v729, %v739
        %v748 = vadd.f32 %v730, %v740
        %v749 = vadd.f32 %v731, %v741
        %v750 = vadd.f32 %v732, %v742
        %v751 = vadd.f32 %v733, %v743
        %v752 = vadd.f32 %v734, %v744
        %v753 = vadd.f32 %v735, %v745
        %s754 = sld [smem:[#allocation12 + $0x83]]
        %v755 = vstv %s754
        %v756 = vmul.f32 %v755, %v460
        %v757 = vmul.f32 %v755, %v461
        %v758 = vmul.f32 %v755, %v462
        %v759 = vmul.f32 %v755, %v463
        %v760 = vmul.f32 %v755, %v464
        %v761 = vmul.f32 %v755, %v465
        %v762 = vmul.f32 %v755, %v466
        %v763 = vmul.f32 %v755, %v467
        %v764 = vadd.f32 %v746, %v756
        %v765 = vadd.f32 %v747, %v757
        %v766 = vadd.f32 %v748, %v758
        %v767 = vadd.f32 %v749, %v759
        %v768 = vadd.f32 %v750, %v760
        %v769 = vadd.f32 %v751, %v761
        %v770 = vadd.f32 %v752, %v762
        %v771 = vadd.f32 %v753, %v763
        %v772 = vtanh.pop %v764
        %v773 = vtanh.pop %v765
        %v774 = vtanh.pop %v766
        %v775 = vtanh.pop %v767
        %v776 = vtanh.pop %v768
        %v777 = vtanh.pop %v769
        %v778 = vtanh.pop %v770
        %v779 = vtanh.pop %v771
        %s780 = scalar_lea.vmem [#allocation2], 64
        %781 = vst [vmem:[%s780] sm:$0xff] %v772
        %782 = vst [vmem:[%s780 + $0x8] sm:$0xff] %v773
        %783 = vst [vmem:[%s780 + $0x10] sm:$0xff] %v774
        %784 = vst [vmem:[%s780 + $0x18] sm:$0xff] %v775
        %785 = vst [vmem:[%s780 + $0x20] sm:$0xff] %v776
        %786 = vst [vmem:[%s780 + $0x28] sm:$0xff] %v777
        %787 = vst [vmem:[%s780 + $0x30] sm:$0xff] %v778
        %788 = vst [vmem:[%s780 + $0x38] sm:$0xff] %v779
        %s789 = sld [smem:[#allocation13 + $0x80]]
        %v790 = vstv %s789
        %v791 = vmul.f32 %v790, %v433
        %v792 = vmul.f32 %v790, %v434
        %v793 = vmul.f32 %v790, %v435
        %v794 = vmul.f32 %v790, %v436
        %v795 = vmul.f32 %v790, %v437
        %v796 = vmul.f32 %v790, %v438
        %v797 = vmul.f32 %v790, %v439
        %v798 = vmul.f32 %v790, %v440
        %s799 = sld [smem:[#allocation13 + $0x81]]
        %v800 = vstv %s799
        %v801 = vmul.f32 %v800, %v442
        %v802 = vmul.f32 %v800, %v443
        %v803 = vmul.f32 %v800, %v444
        %v804 = vmul.f32 %v800, %v445
        %v805 = vmul.f32 %v800, %v446
        %v806 = vmul.f32 %v800, %v447
        %v807 = vmul.f32 %v800, %v448
        %v808 = vmul.f32 %v800, %v449
        %v809 = vadd.f32 %v791, %v801
        %v810 = vadd.f32 %v792, %v802
        %v811 = vadd.f32 %v793, %v803
        %v812 = vadd.f32 %v794, %v804
        %v813 = vadd.f32 %v795, %v805
        %v814 = vadd.f32 %v796, %v806
        %v815 = vadd.f32 %v797, %v807
        %v816 = vadd.f32 %v798, %v808
        %s817 = sld [smem:[#allocation13 + $0x82]]
        %v818 = vstv %s817
        %v819 = vmul.f32 %v818, %v451
        %v820 = vmul.f32 %v818, %v452
        %v821 = vmul.f32 %v818, %v453
        %v822 = vmul.f32 %v818, %v454
        %v823 = vmul.f32 %v818, %v455
        %v824 = vmul.f32 %v818, %v456
        %v825 = vmul.f32 %v818, %v457
        %v826 = vmul.f32 %v818, %v458
        %v827 = vadd.f32 %v809, %v819
        %v828 = vadd.f32 %v810, %v820
        %v829 = vadd.f32 %v811, %v821
        %v830 = vadd.f32 %v812, %v822
        %v831 = vadd.f32 %v813, %v823
        %v832 = vadd.f32 %v814, %v824
        %v833 = vadd.f32 %v815, %v825
        %v834 = vadd.f32 %v816, %v826
        %s835 = sld [smem:[#allocation13 + $0x83]]
        %v836 = vstv %s835
        %v837 = vmul.f32 %v836, %v460
        %v838 = vmul.f32 %v836, %v461
        %v839 = vmul.f32 %v836, %v462
        %v840 = vmul.f32 %v836, %v463
        %v841 = vmul.f32 %v836, %v464
        %v842 = vmul.f32 %v836, %v465
        %v843 = vmul.f32 %v836, %v466
        %v844 = vmul.f32 %v836, %v467
        %v845 = vadd.f32 %v827, %v837
        %v846 = vadd.f32 %v828, %v838
        %v847 = vadd.f32 %v829, %v839
        %v848 = vadd.f32 %v830, %v840
        %v849 = vadd.f32 %v831, %v841
        %v850 = vadd.f32 %v832, %v842
        %v851 = vadd.f32 %v833, %v843
        %v852 = vadd.f32 %v834, %v844
        %v853 = vtanh.pop %v845
        %v854 = vtanh.pop %v846
        %v855 = vtanh.pop %v847
        %v856 = vtanh.pop %v848
        %v857 = vtanh.pop %v849
        %v858 = vtanh.pop %v850
        %v859 = vtanh.pop %v851
        %v860 = vtanh.pop %v852
        %s861 = scalar_lea.vmem [#allocation3], 64
        %862 = vst [vmem:[%s861] sm:$0xff] %v853
        %863 = vst [vmem:[%s861 + $0x8] sm:$0xff] %v854
        %864 = vst [vmem:[%s861 + $0x10] sm:$0xff] %v855
        %865 = vst [vmem:[%s861 + $0x18] sm:$0xff] %v856
        %866 = vst [vmem:[%s861 + $0x20] sm:$0xff] %v857
        %867 = vst [vmem:[%s861 + $0x28] sm:$0xff] %v858
        %868 = vst [vmem:[%s861 + $0x30] sm:$0xff] %v859
        %869 = vst [vmem:[%s861 + $0x38] sm:$0xff] %v860
        %s870 = sld [smem:[#allocation15 + $0x80]]
        %v871 = vstv %s870
        %v872 = vmul.f32 %v871, %v433
        %v873 = vmul.f32 %v871, %v434
        %v874 = vmul.f32 %v871, %v435
        %v875 = vmul.f32 %v871, %v436
        %v876 = vmul.f32 %v871, %v437
        %v877 = vmul.f32 %v871, %v438
        %v878 = vmul.f32 %v871, %v439
        %v879 = vmul.f32 %v871, %v440
        %s880 = sld [smem:[#allocation15 + $0x81]]
        %v881 = vstv %s880
        %v882 = vmul.f32 %v881, %v442
        %v883 = vmul.f32 %v881, %v443
        %v884 = vmul.f32 %v881, %v444
        %v885 = vmul.f32 %v881, %v445
        %v886 = vmul.f32 %v881, %v446
        %v887 = vmul.f32 %v881, %v447
        %v888 = vmul.f32 %v881, %v448
        %v889 = vmul.f32 %v881, %v449
        %v890 = vadd.f32 %v872, %v882
        %v891 = vadd.f32 %v873, %v883
        %v892 = vadd.f32 %v874, %v884
        %v893 = vadd.f32 %v875, %v885
        %v894 = vadd.f32 %v876, %v886
        %v895 = vadd.f32 %v877, %v887
        %v896 = vadd.f32 %v878, %v888
        %v897 = vadd.f32 %v879, %v889
        %s898 = sld [smem:[#allocation15 + $0x82]]
        %v899 = vstv %s898
        %v900 = vmul.f32 %v899, %v451
        %v901 = vmul.f32 %v899, %v452
        %v902 = vmul.f32 %v899, %v453
        %v903 = vmul.f32 %v899, %v454
        %v904 = vmul.f32 %v899, %v455
        %v905 = vmul.f32 %v899, %v456
        %v906 = vmul.f32 %v899, %v457
        %v907 = vmul.f32 %v899, %v458
        %v908 = vadd.f32 %v890, %v900
        %v909 = vadd.f32 %v891, %v901
        %v910 = vadd.f32 %v892, %v902
        %v911 = vadd.f32 %v893, %v903
        %v912 = vadd.f32 %v894, %v904
        %v913 = vadd.f32 %v895, %v905
        %v914 = vadd.f32 %v896, %v906
        %v915 = vadd.f32 %v897, %v907
        %s916 = sld [smem:[#allocation15 + $0x83]]
        %v917 = vstv %s916
        %v918 = vmul.f32 %v917, %v460
        %v919 = vmul.f32 %v917, %v461
        %v920 = vmul.f32 %v917, %v462
        %v921 = vmul.f32 %v917, %v463
        %v922 = vmul.f32 %v917, %v464
        %v923 = vmul.f32 %v917, %v465
        %v924 = vmul.f32 %v917, %v466
        %v925 = vmul.f32 %v917, %v467
        %v926 = vadd.f32 %v908, %v918
        %v927 = vadd.f32 %v909, %v919
        %v928 = vadd.f32 %v910, %v920
        %v929 = vadd.f32 %v911, %v921
        %v930 = vadd.f32 %v912, %v922
        %v931 = vadd.f32 %v913, %v923
        %v932 = vadd.f32 %v914, %v924
        %v933 = vadd.f32 %v915, %v925
        %v934 = vtanh.pop %v926
        %v935 = vtanh.pop %v927
        %v936 = vtanh.pop %v928
        %v937 = vtanh.pop %v929
        %v938 = vtanh.pop %v930
        %v939 = vtanh.pop %v931
        %v940 = vtanh.pop %v932
        %v941 = vtanh.pop %v933
        %s942 = scalar_lea.vmem [#allocation4], 64
        %943 = vst [vmem:[%s942] sm:$0xff] %v934
        %944 = vst [vmem:[%s942 + $0x8] sm:$0xff] %v935
        %945 = vst [vmem:[%s942 + $0x10] sm:$0xff] %v936
        %946 = vst [vmem:[%s942 + $0x18] sm:$0xff] %v937
        %947 = vst [vmem:[%s942 + $0x20] sm:$0xff] %v938
        %948 = vst [vmem:[%s942 + $0x28] sm:$0xff] %v939
        %949 = vst [vmem:[%s942 + $0x30] sm:$0xff] %v940
        %950 = vst [vmem:[%s942 + $0x38] sm:$0xff] %v941
        %s951 = sld [smem:[#allocation12 + $0x100]]
        %v952 = vstv %s951
        %v953 = vmul.f32 %v952, %v433
        %v954 = vmul.f32 %v952, %v434
        %v955 = vmul.f32 %v952, %v435
        %v956 = vmul.f32 %v952, %v436
        %v957 = vmul.f32 %v952, %v437
        %v958 = vmul.f32 %v952, %v438
        %v959 = vmul.f32 %v952, %v439
        %v960 = vmul.f32 %v952, %v440
        %s961 = sld [smem:[#allocation12 + $0x101]]
        %v962 = vstv %s961
        %v963 = vmul.f32 %v962, %v442
        %v964 = vmul.f32 %v962, %v443
        %v965 = vmul.f32 %v962, %v444
        %v966 = vmul.f32 %v962, %v445
        %v967 = vmul.f32 %v962, %v446
        %v968 = vmul.f32 %v962, %v447
        %v969 = vmul.f32 %v962, %v448
        %v970 = vmul.f32 %v962, %v449
        %v971 = vadd.f32 %v953, %v963
        %v972 = vadd.f32 %v954, %v964
        %v973 = vadd.f32 %v955, %v965
        %v974 = vadd.f32 %v956, %v966
        %v975 = vadd.f32 %v957, %v967
        %v976 = vadd.f32 %v958, %v968
        %v977 = vadd.f32 %v959, %v969
        %v978 = vadd.f32 %v960, %v970
        %s979 = sld [smem:[#allocation12 + $0x102]]
        %v980 = vstv %s979
        %v981 = vmul.f32 %v980, %v451
        %v982 = vmul.f32 %v980, %v452
        %v983 = vmul.f32 %v980, %v453
        %v984 = vmul.f32 %v980, %v454
        %v985 = vmul.f32 %v980, %v455
        %v986 = vmul.f32 %v980, %v456
        %v987 = vmul.f32 %v980, %v457
        %v988 = vmul.f32 %v980, %v458
        %v989 = vadd.f32 %v971, %v981
        %v990 = vadd.f32 %v972, %v982
        %v991 = vadd.f32 %v973, %v983
        %v992 = vadd.f32 %v974, %v984
        %v993 = vadd.f32 %v975, %v985
        %v994 = vadd.f32 %v976, %v986
        %v995 = vadd.f32 %v977, %v987
        %v996 = vadd.f32 %v978, %v988
        %s997 = sld [smem:[#allocation12 + $0x103]]
        %v998 = vstv %s997
        %v999 = vmul.f32 %v998, %v460
        %v1000 = vmul.f32 %v998, %v461
        %v1001 = vmul.f32 %v998, %v462
        %v1002 = vmul.f32 %v998, %v463
        %v1003 = vmul.f32 %v998, %v464
        %v1004 = vmul.f32 %v998, %v465
        %v1005 = vmul.f32 %v998, %v466
        %v1006 = vmul.f32 %v998, %v467
        %v1007 = vadd.f32 %v989, %v999
        %v1008 = vadd.f32 %v990, %v1000
        %v1009 = vadd.f32 %v991, %v1001
        %v1010 = vadd.f32 %v992, %v1002
        %v1011 = vadd.f32 %v993, %v1003
        %v1012 = vadd.f32 %v994, %v1004
        %v1013 = vadd.f32 %v995, %v1005
        %v1014 = vadd.f32 %v996, %v1006
        %v1015 = vtanh.pop %v1007
        %v1016 = vtanh.pop %v1008
        %v1017 = vtanh.pop %v1009
        %v1018 = vtanh.pop %v1010
        %v1019 = vtanh.pop %v1011
        %v1020 = vtanh.pop %v1012
        %v1021 = vtanh.pop %v1013
        %v1022 = vtanh.pop %v1014
        %s1023 = scalar_lea.vmem [#allocation2], 128
        %1024 = vst [vmem:[%s1023] sm:$0xff] %v1015
        %1025 = vst [vmem:[%s1023 + $0x8] sm:$0xff] %v1016
        %1026 = vst [vmem:[%s1023 + $0x10] sm:$0xff] %v1017
        %1027 = vst [vmem:[%s1023 + $0x18] sm:$0xff] %v1018
        %1028 = vst [vmem:[%s1023 + $0x20] sm:$0xff] %v1019
        %1029 = vst [vmem:[%s1023 + $0x28] sm:$0xff] %v1020
        %1030 = vst [vmem:[%s1023 + $0x30] sm:$0xff] %v1021
        %1031 = vst [vmem:[%s1023 + $0x38] sm:$0xff] %v1022
        %s1032 = sld [smem:[#allocation13 + $0x100]]
        %v1033 = vstv %s1032
        %v1034 = vmul.f32 %v1033, %v433
        %v1035 = vmul.f32 %v1033, %v434
        %v1036 = vmul.f32 %v1033, %v435
        %v1037 = vmul.f32 %v1033, %v436
        %v1038 = vmul.f32 %v1033, %v437
        %v1039 = vmul.f32 %v1033, %v438
        %v1040 = vmul.f32 %v1033, %v439
        %v1041 = vmul.f32 %v1033, %v440
        %s1042 = sld [smem:[#allocation13 + $0x101]]
        %v1043 = vstv %s1042
        %v1044 = vmul.f32 %v1043, %v442
        %v1045 = vmul.f32 %v1043, %v443
        %v1046 = vmul.f32 %v1043, %v444
        %v1047 = vmul.f32 %v1043, %v445
        %v1048 = vmul.f32 %v1043, %v446
        %v1049 = vmul.f32 %v1043, %v447
        %v1050 = vmul.f32 %v1043, %v448
        %v1051 = vmul.f32 %v1043, %v449
        %v1052 = vadd.f32 %v1034, %v1044
        %v1053 = vadd.f32 %v1035, %v1045
        %v1054 = vadd.f32 %v1036, %v1046
        %v1055 = vadd.f32 %v1037, %v1047
        %v1056 = vadd.f32 %v1038, %v1048
        %v1057 = vadd.f32 %v1039, %v1049
        %v1058 = vadd.f32 %v1040, %v1050
        %v1059 = vadd.f32 %v1041, %v1051
        %s1060 = sld [smem:[#allocation13 + $0x102]]
        %v1061 = vstv %s1060
        %v1062 = vmul.f32 %v1061, %v451
        %v1063 = vmul.f32 %v1061, %v452
        %v1064 = vmul.f32 %v1061, %v453
        %v1065 = vmul.f32 %v1061, %v454
        %v1066 = vmul.f32 %v1061, %v455
        %v1067 = vmul.f32 %v1061, %v456
        %v1068 = vmul.f32 %v1061, %v457
        %v1069 = vmul.f32 %v1061, %v458
        %v1070 = vadd.f32 %v1052, %v1062
        %v1071 = vadd.f32 %v1053, %v1063
        %v1072 = vadd.f32 %v1054, %v1064
        %v1073 = vadd.f32 %v1055, %v1065
        %v1074 = vadd.f32 %v1056, %v1066
        %v1075 = vadd.f32 %v1057, %v1067
        %v1076 = vadd.f32 %v1058, %v1068
        %v1077 = vadd.f32 %v1059, %v1069
        %s1078 = sld [smem:[#allocation13 + $0x103]]
        %v1079 = vstv %s1078
        %v1080 = vmul.f32 %v1079, %v460
        %v1081 = vmul.f32 %v1079, %v461
        %v1082 = vmul.f32 %v1079, %v462
        %v1083 = vmul.f32 %v1079, %v463
        %v1084 = vmul.f32 %v1079, %v464
        %v1085 = vmul.f32 %v1079, %v465
        %v1086 = vmul.f32 %v1079, %v466
        %v1087 = vmul.f32 %v1079, %v467
        %v1088 = vadd.f32 %v1070, %v1080
        %v1089 = vadd.f32 %v1071, %v1081
        %v1090 = vadd.f32 %v1072, %v1082
        %v1091 = vadd.f32 %v1073, %v1083
        %v1092 = vadd.f32 %v1074, %v1084
        %v1093 = vadd.f32 %v1075, %v1085
        %v1094 = vadd.f32 %v1076, %v1086
        %v1095 = vadd.f32 %v1077, %v1087
        %v1096 = vtanh.pop %v1088
        %v1097 = vtanh.pop %v1089
        %v1098 = vtanh.pop %v1090
        %v1099 = vtanh.pop %v1091
        %v1100 = vtanh.pop %v1092
        %v1101 = vtanh.pop %v1093
        %v1102 = vtanh.pop %v1094
        %v1103 = vtanh.pop %v1095
        %s1104 = scalar_lea.vmem [#allocation3], 128
        %1105 = vst [vmem:[%s1104] sm:$0xff] %v1096
        %1106 = vst [vmem:[%s1104 + $0x8] sm:$0xff] %v1097
        %1107 = vst [vmem:[%s1104 + $0x10] sm:$0xff] %v1098
        %1108 = vst [vmem:[%s1104 + $0x18] sm:$0xff] %v1099
        %1109 = vst [vmem:[%s1104 + $0x20] sm:$0xff] %v1100
        %1110 = vst [vmem:[%s1104 + $0x28] sm:$0xff] %v1101
        %1111 = vst [vmem:[%s1104 + $0x30] sm:$0xff] %v1102
        %1112 = vst [vmem:[%s1104 + $0x38] sm:$0xff] %v1103
        %s1113 = sld [smem:[#allocation15 + $0x100]]
        %v1114 = vstv %s1113
        %v1115 = vmul.f32 %v1114, %v433
        %v1116 = vmul.f32 %v1114, %v434
        %v1117 = vmul.f32 %v1114, %v435
        %v1118 = vmul.f32 %v1114, %v436
        %v1119 = vmul.f32 %v1114, %v437
        %v1120 = vmul.f32 %v1114, %v438
        %v1121 = vmul.f32 %v1114, %v439
        %v1122 = vmul.f32 %v1114, %v440
        %s1123 = sld [smem:[#allocation15 + $0x101]]
        %v1124 = vstv %s1123
        %v1125 = vmul.f32 %v1124, %v442
        %v1126 = vmul.f32 %v1124, %v443
        %v1127 = vmul.f32 %v1124, %v444
        %v1128 = vmul.f32 %v1124, %v445
        %v1129 = vmul.f32 %v1124, %v446
        %v1130 = vmul.f32 %v1124, %v447
        %v1131 = vmul.f32 %v1124, %v448
        %v1132 = vmul.f32 %v1124, %v449
        %v1133 = vadd.f32 %v1115, %v1125
        %v1134 = vadd.f32 %v1116, %v1126
        %v1135 = vadd.f32 %v1117, %v1127
        %v1136 = vadd.f32 %v1118, %v1128
        %v1137 = vadd.f32 %v1119, %v1129
        %v1138 = vadd.f32 %v1120, %v1130
        %v1139 = vadd.f32 %v1121, %v1131
        %v1140 = vadd.f32 %v1122, %v1132
        %s1141 = sld [smem:[#allocation15 + $0x102]]
        %v1142 = vstv %s1141
        %v1143 = vmul.f32 %v1142, %v451
        %v1144 = vmul.f32 %v1142, %v452
        %v1145 = vmul.f32 %v1142, %v453
        %v1146 = vmul.f32 %v1142, %v454
        %v1147 = vmul.f32 %v1142, %v455
        %v1148 = vmul.f32 %v1142, %v456
        %v1149 = vmul.f32 %v1142, %v457
        %v1150 = vmul.f32 %v1142, %v458
        %v1151 = vadd.f32 %v1133, %v1143
        %v1152 = vadd.f32 %v1134, %v1144
        %v1153 = vadd.f32 %v1135, %v1145
        %v1154 = vadd.f32 %v1136, %v1146
        %v1155 = vadd.f32 %v1137, %v1147
        %v1156 = vadd.f32 %v1138, %v1148
        %v1157 = vadd.f32 %v1139, %v1149
        %v1158 = vadd.f32 %v1140, %v1150
        %s1159 = sld [smem:[#allocation15 + $0x103]]
        %v1160 = vstv %s1159
        %v1161 = vmul.f32 %v1160, %v460
        %v1162 = vmul.f32 %v1160, %v461
        %v1163 = vmul.f32 %v1160, %v462
        %v1164 = vmul.f32 %v1160, %v463
        %v1165 = vmul.f32 %v1160, %v464
        %v1166 = vmul.f32 %v1160, %v465
        %v1167 = vmul.f32 %v1160, %v466
        %v1168 = vmul.f32 %v1160, %v467
        %v1169 = vadd.f32 %v1151, %v1161
        %v1170 = vadd.f32 %v1152, %v1162
        %v1171 = vadd.f32 %v1153, %v1163
        %v1172 = vadd.f32 %v1154, %v1164
        %v1173 = vadd.f32 %v1155, %v1165
        %v1174 = vadd.f32 %v1156, %v1166
        %v1175 = vadd.f32 %v1157, %v1167
        %v1176 = vadd.f32 %v1158, %v1168
        %v1177 = vtanh.pop %v1169
        %v1178 = vtanh.pop %v1170
        %v1179 = vtanh.pop %v1171
        %v1180 = vtanh.pop %v1172
        %v1181 = vtanh.pop %v1173
        %v1182 = vtanh.pop %v1174
        %v1183 = vtanh.pop %v1175
        %v1184 = vtanh.pop %v1176
        %s1185 = scalar_lea.vmem [#allocation4], 128
        %1186 = vst [vmem:[%s1185] sm:$0xff] %v1177
        %1187 = vst [vmem:[%s1185 + $0x8] sm:$0xff] %v1178
        %1188 = vst [vmem:[%s1185 + $0x10] sm:$0xff] %v1179
        %1189 = vst [vmem:[%s1185 + $0x18] sm:$0xff] %v1180
        %1190 = vst [vmem:[%s1185 + $0x20] sm:$0xff] %v1181
        %1191 = vst [vmem:[%s1185 + $0x28] sm:$0xff] %v1182
        %1192 = vst [vmem:[%s1185 + $0x30] sm:$0xff] %v1183
        %1193 = vst [vmem:[%s1185 + $0x38] sm:$0xff] %v1184
        %s1194 = sld [smem:[#allocation12 + $0x180]]
        %v1195 = vstv %s1194
        %v1196 = vmul.f32 %v1195, %v433
        %v1197 = vmul.f32 %v1195, %v434
        %v1198 = vmul.f32 %v1195, %v435
        %v1199 = vmul.f32 %v1195, %v436
        %v1200 = vmul.f32 %v1195, %v437
        %v1201 = vmul.f32 %v1195, %v438
        %v1202 = vmul.f32 %v1195, %v439
        %v1203 = vmul.f32 %v1195, %v440
        %s1204 = sld [smem:[#allocation12 + $0x181]]
        %v1205 = vstv %s1204
        %v1206 = vmul.f32 %v1205, %v442
        %v1207 = vmul.f32 %v1205, %v443
        %v1208 = vmul.f32 %v1205, %v444
        %v1209 = vmul.f32 %v1205, %v445
        %v1210 = vmul.f32 %v1205, %v446
        %v1211 = vmul.f32 %v1205, %v447
        %v1212 = vmul.f32 %v1205, %v448
        %v1213 = vmul.f32 %v1205, %v449
        %v1214 = vadd.f32 %v1196, %v1206
        %v1215 = vadd.f32 %v1197, %v1207
        %v1216 = vadd.f32 %v1198, %v1208
        %v1217 = vadd.f32 %v1199, %v1209
        %v1218 = vadd.f32 %v1200, %v1210
        %v1219 = vadd.f32 %v1201, %v1211
        %v1220 = vadd.f32 %v1202, %v1212
        %v1221 = vadd.f32 %v1203, %v1213
        %s1222 = sld [smem:[#allocation12 + $0x182]]
        %v1223 = vstv %s1222
        %v1224 = vmul.f32 %v1223, %v451
        %v1225 = vmul.f32 %v1223, %v452
        %v1226 = vmul.f32 %v1223, %v453
        %v1227 = vmul.f32 %v1223, %v454
        %v1228 = vmul.f32 %v1223, %v455
        %v1229 = vmul.f32 %v1223, %v456
        %v1230 = vmul.f32 %v1223, %v457
        %v1231 = vmul.f32 %v1223, %v458
        %v1232 = vadd.f32 %v1214, %v1224
        %v1233 = vadd.f32 %v1215, %v1225
        %v1234 = vadd.f32 %v1216, %v1226
        %v1235 = vadd.f32 %v1217, %v1227
        %v1236 = vadd.f32 %v1218, %v1228
        %v1237 = vadd.f32 %v1219, %v1229
        %v1238 = vadd.f32 %v1220, %v1230
        %v1239 = vadd.f32 %v1221, %v1231
        %s1240 = sld [smem:[#allocation12 + $0x183]]
        %v1241 = vstv %s1240
        %v1242 = vmul.f32 %v1241, %v460
        %v1243 = vmul.f32 %v1241, %v461
        %v1244 = vmul.f32 %v1241, %v462
        %v1245 = vmul.f32 %v1241, %v463
        %v1246 = vmul.f32 %v1241, %v464
        %v1247 = vmul.f32 %v1241, %v465
        %v1248 = vmul.f32 %v1241, %v466
        %v1249 = vmul.f32 %v1241, %v467
        %v1250 = vadd.f32 %v1232, %v1242
        %v1251 = vadd.f32 %v1233, %v1243
        %v1252 = vadd.f32 %v1234, %v1244
        %v1253 = vadd.f32 %v1235, %v1245
        %v1254 = vadd.f32 %v1236, %v1246
        %v1255 = vadd.f32 %v1237, %v1247
        %v1256 = vadd.f32 %v1238, %v1248
        %v1257 = vadd.f32 %v1239, %v1249
        %v1258 = vtanh.pop %v1250
        %v1259 = vtanh.pop %v1251
        %v1260 = vtanh.pop %v1252
        %v1261 = vtanh.pop %v1253
        %v1262 = vtanh.pop %v1254
        %v1263 = vtanh.pop %v1255
        %v1264 = vtanh.pop %v1256
        %v1265 = vtanh.pop %v1257
        %s1266 = scalar_lea.vmem [#allocation2], 192
        %1267 = vst [vmem:[%s1266] sm:$0xff] %v1258
        %1268 = vst [vmem:[%s1266 + $0x8] sm:$0xff] %v1259
        %1269 = vst [vmem:[%s1266 + $0x10] sm:$0xff] %v1260
        %1270 = vst [vmem:[%s1266 + $0x18] sm:$0xff] %v1261
        %1271 = vst [vmem:[%s1266 + $0x20] sm:$0xff] %v1262
        %1272 = vst [vmem:[%s1266 + $0x28] sm:$0xff] %v1263
        %1273 = vst [vmem:[%s1266 + $0x30] sm:$0xff] %v1264
        %1274 = vst [vmem:[%s1266 + $0x38] sm:$0xff] %v1265
        %s1275 = sld [smem:[#allocation13 + $0x180]]
        %v1276 = vstv %s1275
        %v1277 = vmul.f32 %v1276, %v433
        %v1278 = vmul.f32 %v1276, %v434
        %v1279 = vmul.f32 %v1276, %v435
        %v1280 = vmul.f32 %v1276, %v436
        %v1281 = vmul.f32 %v1276, %v437
        %v1282 = vmul.f32 %v1276, %v438
        %v1283 = vmul.f32 %v1276, %v439
        %v1284 = vmul.f32 %v1276, %v440
        %s1285 = sld [smem:[#allocation13 + $0x181]]
        %v1286 = vstv %s1285
        %v1287 = vmul.f32 %v1286, %v442
        %v1288 = vmul.f32 %v1286, %v443
        %v1289 = vmul.f32 %v1286, %v444
        %v1290 = vmul.f32 %v1286, %v445
        %v1291 = vmul.f32 %v1286, %v446
        %v1292 = vmul.f32 %v1286, %v447
        %v1293 = vmul.f32 %v1286, %v448
        %v1294 = vmul.f32 %v1286, %v449
        %v1295 = vadd.f32 %v1277, %v1287
        %v1296 = vadd.f32 %v1278, %v1288
        %v1297 = vadd.f32 %v1279, %v1289
        %v1298 = vadd.f32 %v1280, %v1290
        %v1299 = vadd.f32 %v1281, %v1291
        %v1300 = vadd.f32 %v1282, %v1292
        %v1301 = vadd.f32 %v1283, %v1293
        %v1302 = vadd.f32 %v1284, %v1294
        %s1303 = sld [smem:[#allocation13 + $0x182]]
        %v1304 = vstv %s1303
        %v1305 = vmul.f32 %v1304, %v451
        %v1306 = vmul.f32 %v1304, %v452
        %v1307 = vmul.f32 %v1304, %v453
        %v1308 = vmul.f32 %v1304, %v454
        %v1309 = vmul.f32 %v1304, %v455
        %v1310 = vmul.f32 %v1304, %v456
        %v1311 = vmul.f32 %v1304, %v457
        %v1312 = vmul.f32 %v1304, %v458
        %v1313 = vadd.f32 %v1295, %v1305
        %v1314 = vadd.f32 %v1296, %v1306
        %v1315 = vadd.f32 %v1297, %v1307
        %v1316 = vadd.f32 %v1298, %v1308
        %v1317 = vadd.f32 %v1299, %v1309
        %v1318 = vadd.f32 %v1300, %v1310
        %v1319 = vadd.f32 %v1301, %v1311
        %v1320 = vadd.f32 %v1302, %v1312
        %s1321 = sld [smem:[#allocation13 + $0x183]]
        %v1322 = vstv %s1321
        %v1323 = vmul.f32 %v1322, %v460
        %v1324 = vmul.f32 %v1322, %v461
        %v1325 = vmul.f32 %v1322, %v462
        %v1326 = vmul.f32 %v1322, %v463
        %v1327 = vmul.f32 %v1322, %v464
        %v1328 = vmul.f32 %v1322, %v465
        %v1329 = vmul.f32 %v1322, %v466
        %v1330 = vmul.f32 %v1322, %v467
        %v1331 = vadd.f32 %v1313, %v1323
        %v1332 = vadd.f32 %v1314, %v1324
        %v1333 = vadd.f32 %v1315, %v1325
        %v1334 = vadd.f32 %v1316, %v1326
        %v1335 = vadd.f32 %v1317, %v1327
        %v1336 = vadd.f32 %v1318, %v1328
        %v1337 = vadd.f32 %v1319, %v1329
        %v1338 = vadd.f32 %v1320, %v1330
        %v1339 = vtanh.pop %v1331
        %v1340 = vtanh.pop %v1332
        %v1341 = vtanh.pop %v1333
        %v1342 = vtanh.pop %v1334
        %v1343 = vtanh.pop %v1335
        %v1344 = vtanh.pop %v1336
        %v1345 = vtanh.pop %v1337
        %v1346 = vtanh.pop %v1338
        %s1347 = scalar_lea.vmem [#allocation3], 192
        %1348 = vst [vmem:[%s1347] sm:$0xff] %v1339
        %1349 = vst [vmem:[%s1347 + $0x8] sm:$0xff] %v1340
        %1350 = vst [vmem:[%s1347 + $0x10] sm:$0xff] %v1341
        %1351 = vst [vmem:[%s1347 + $0x18] sm:$0xff] %v1342
        %1352 = vst [vmem:[%s1347 + $0x20] sm:$0xff] %v1343
        %1353 = vst [vmem:[%s1347 + $0x28] sm:$0xff] %v1344
        %1354 = vst [vmem:[%s1347 + $0x30] sm:$0xff] %v1345
        %1355 = vst [vmem:[%s1347 + $0x38] sm:$0xff] %v1346
        %s1356 = sld [smem:[#allocation15 + $0x180]]
        %v1357 = vstv %s1356
        %v1358 = vmul.f32 %v1357, %v433
        %v1359 = vmul.f32 %v1357, %v434
        %v1360 = vmul.f32 %v1357, %v435
        %v1361 = vmul.f32 %v1357, %v436
        %v1362 = vmul.f32 %v1357, %v437
        %v1363 = vmul.f32 %v1357, %v438
        %v1364 = vmul.f32 %v1357, %v439
        %v1365 = vmul.f32 %v1357, %v440
        %s1366 = sld [smem:[#allocation15 + $0x181]]
        %v1367 = vstv %s1366
        %v1368 = vmul.f32 %v1367, %v442
        %v1369 = vmul.f32 %v1367, %v443
        %v1370 = vmul.f32 %v1367, %v444
        %v1371 = vmul.f32 %v1367, %v445
        %v1372 = vmul.f32 %v1367, %v446
        %v1373 = vmul.f32 %v1367, %v447
        %v1374 = vmul.f32 %v1367, %v448
        %v1375 = vmul.f32 %v1367, %v449
        %v1376 = vadd.f32 %v1358, %v1368
        %v1377 = vadd.f32 %v1359, %v1369
        %v1378 = vadd.f32 %v1360, %v1370
        %v1379 = vadd.f32 %v1361, %v1371
        %v1380 = vadd.f32 %v1362, %v1372
        %v1381 = vadd.f32 %v1363, %v1373
        %v1382 = vadd.f32 %v1364, %v1374
        %v1383 = vadd.f32 %v1365, %v1375
        %s1384 = sld [smem:[#allocation15 + $0x182]]
        %v1385 = vstv %s1384
        %v1386 = vmul.f32 %v1385, %v451
        %v1387 = vmul.f32 %v1385, %v452
        %v1388 = vmul.f32 %v1385, %v453
        %v1389 = vmul.f32 %v1385, %v454
        %v1390 = vmul.f32 %v1385, %v455
        %v1391 = vmul.f32 %v1385, %v456
        %v1392 = vmul.f32 %v1385, %v457
        %v1393 = vmul.f32 %v1385, %v458
        %v1394 = vadd.f32 %v1376, %v1386
        %v1395 = vadd.f32 %v1377, %v1387
        %v1396 = vadd.f32 %v1378, %v1388
        %v1397 = vadd.f32 %v1379, %v1389
        %v1398 = vadd.f32 %v1380, %v1390
        %v1399 = vadd.f32 %v1381, %v1391
        %v1400 = vadd.f32 %v1382, %v1392
        %v1401 = vadd.f32 %v1383, %v1393
        %s1402 = sld [smem:[#allocation15 + $0x183]]
        %v1403 = vstv %s1402
        %v1404 = vmul.f32 %v1403, %v460
        %v1405 = vmul.f32 %v1403, %v461
        %v1406 = vmul.f32 %v1403, %v462
        %v1407 = vmul.f32 %v1403, %v463
        %v1408 = vmul.f32 %v1403, %v464
        %v1409 = vmul.f32 %v1403, %v465
        %v1410 = vmul.f32 %v1403, %v466
        %v1411 = vmul.f32 %v1403, %v467
        %v1412 = vadd.f32 %v1394, %v1404
        %v1413 = vadd.f32 %v1395, %v1405
        %v1414 = vadd.f32 %v1396, %v1406
        %v1415 = vadd.f32 %v1397, %v1407
        %v1416 = vadd.f32 %v1398, %v1408
        %v1417 = vadd.f32 %v1399, %v1409
        %v1418 = vadd.f32 %v1400, %v1410
        %v1419 = vadd.f32 %v1401, %v1411
        %v1420 = vtanh.pop %v1412
        %v1421 = vtanh.pop %v1413
        %v1422 = vtanh.pop %v1414
        %v1423 = vtanh.pop %v1415
        %v1424 = vtanh.pop %v1416
        %v1425 = vtanh.pop %v1417
        %v1426 = vtanh.pop %v1418
        %v1427 = vtanh.pop %v1419
        %s1428 = scalar_lea.vmem [#allocation4], 192
        %1429 = vst [vmem:[%s1428] sm:$0xff] %v1420
        %1430 = vst [vmem:[%s1428 + $0x8] sm:$0xff] %v1421
        %1431 = vst [vmem:[%s1428 + $0x10] sm:$0xff] %v1422
        %1432 = vst [vmem:[%s1428 + $0x18] sm:$0xff] %v1423
        %1433 = vst [vmem:[%s1428 + $0x20] sm:$0xff] %v1424
        %1434 = vst [vmem:[%s1428 + $0x28] sm:$0xff] %v1425
        %1435 = vst [vmem:[%s1428 + $0x30] sm:$0xff] %v1426
        %1436 = vst [vmem:[%s1428 + $0x38] sm:$0xff] %v1427
        %s1437 = sld [smem:[#allocation12 + $0x200]]
        %v1438 = vstv %s1437
        %v1439 = vmul.f32 %v1438, %v433
        %v1440 = vmul.f32 %v1438, %v434
        %v1441 = vmul.f32 %v1438, %v435
        %v1442 = vmul.f32 %v1438, %v436
        %v1443 = vmul.f32 %v1438, %v437
        %v1444 = vmul.f32 %v1438, %v438
        %v1445 = vmul.f32 %v1438, %v439
        %v1446 = vmul.f32 %v1438, %v440
        %s1447 = sld [smem:[#allocation12 + $0x201]]
        %v1448 = vstv %s1447
        %v1449 = vmul.f32 %v1448, %v442
        %v1450 = vmul.f32 %v1448, %v443
        %v1451 = vmul.f32 %v1448, %v444
        %v1452 = vmul.f32 %v1448, %v445
        %v1453 = vmul.f32 %v1448, %v446
        %v1454 = vmul.f32 %v1448, %v447
        %v1455 = vmul.f32 %v1448, %v448
        %v1456 = vmul.f32 %v1448, %v449
        %v1457 = vadd.f32 %v1439, %v1449
        %v1458 = vadd.f32 %v1440, %v1450
        %v1459 = vadd.f32 %v1441, %v1451
        %v1460 = vadd.f32 %v1442, %v1452
        %v1461 = vadd.f32 %v1443, %v1453
        %v1462 = vadd.f32 %v1444, %v1454
        %v1463 = vadd.f32 %v1445, %v1455
        %v1464 = vadd.f32 %v1446, %v1456
        %s1465 = sld [smem:[#allocation12 + $0x202]]
        %v1466 = vstv %s1465
        %v1467 = vmul.f32 %v1466, %v451
        %v1468 = vmul.f32 %v1466, %v452
        %v1469 = vmul.f32 %v1466, %v453
        %v1470 = vmul.f32 %v1466, %v454
        %v1471 = vmul.f32 %v1466, %v455
        %v1472 = vmul.f32 %v1466, %v456
        %v1473 = vmul.f32 %v1466, %v457
        %v1474 = vmul.f32 %v1466, %v458
        %v1475 = vadd.f32 %v1457, %v1467
        %v1476 = vadd.f32 %v1458, %v1468
        %v1477 = vadd.f32 %v1459, %v1469
        %v1478 = vadd.f32 %v1460, %v1470
        %v1479 = vadd.f32 %v1461, %v1471
        %v1480 = vadd.f32 %v1462, %v1472
        %v1481 = vadd.f32 %v1463, %v1473
        %v1482 = vadd.f32 %v1464, %v1474
        %s1483 = sld [smem:[#allocation12 + $0x203]]
        %v1484 = vstv %s1483
        %v1485 = vmul.f32 %v1484, %v460
        %v1486 = vmul.f32 %v1484, %v461
        %v1487 = vmul.f32 %v1484, %v462
        %v1488 = vmul.f32 %v1484, %v463
        %v1489 = vmul.f32 %v1484, %v464
        %v1490 = vmul.f32 %v1484, %v465
        %v1491 = vmul.f32 %v1484, %v466
        %v1492 = vmul.f32 %v1484, %v467
        %v1493 = vadd.f32 %v1475, %v1485
        %v1494 = vadd.f32 %v1476, %v1486
        %v1495 = vadd.f32 %v1477, %v1487
        %v1496 = vadd.f32 %v1478, %v1488
        %v1497 = vadd.f32 %v1479, %v1489
        %v1498 = vadd.f32 %v1480, %v1490
        %v1499 = vadd.f32 %v1481, %v1491
        %v1500 = vadd.f32 %v1482, %v1492
        %v1501 = vtanh.pop %v1493
        %v1502 = vtanh.pop %v1494
        %v1503 = vtanh.pop %v1495
        %v1504 = vtanh.pop %v1496
        %v1505 = vtanh.pop %v1497
        %v1506 = vtanh.pop %v1498
        %v1507 = vtanh.pop %v1499
        %v1508 = vtanh.pop %v1500
        %s1509 = scalar_lea.vmem [#allocation2], 256
        %1510 = vst [vmem:[%s1509] sm:$0xff] %v1501
        %1511 = vst [vmem:[%s1509 + $0x8] sm:$0xff] %v1502
        %1512 = vst [vmem:[%s1509 + $0x10] sm:$0xff] %v1503
        %1513 = vst [vmem:[%s1509 + $0x18] sm:$0xff] %v1504
        %1514 = vst [vmem:[%s1509 + $0x20] sm:$0xff] %v1505
        %1515 = vst [vmem:[%s1509 + $0x28] sm:$0xff] %v1506
        %1516 = vst [vmem:[%s1509 + $0x30] sm:$0xff] %v1507
        %1517 = vst [vmem:[%s1509 + $0x38] sm:$0xff] %v1508
        %s1518 = sld [smem:[#allocation13 + $0x200]]
        %v1519 = vstv %s1518
        %v1520 = vmul.f32 %v1519, %v433
        %v1521 = vmul.f32 %v1519, %v434
        %v1522 = vmul.f32 %v1519, %v435
        %v1523 = vmul.f32 %v1519, %v436
        %v1524 = vmul.f32 %v1519, %v437
        %v1525 = vmul.f32 %v1519, %v438
        %v1526 = vmul.f32 %v1519, %v439
        %v1527 = vmul.f32 %v1519, %v440
        %s1528 = sld [smem:[#allocation13 + $0x201]]
        %v1529 = vstv %s1528
        %v1530 = vmul.f32 %v1529, %v442
        %v1531 = vmul.f32 %v1529, %v443
        %v1532 = vmul.f32 %v1529, %v444
        %v1533 = vmul.f32 %v1529, %v445
        %v1534 = vmul.f32 %v1529, %v446
        %v1535 = vmul.f32 %v1529, %v447
        %v1536 = vmul.f32 %v1529, %v448
        %v1537 = vmul.f32 %v1529, %v449
        %v1538 = vadd.f32 %v1520, %v1530
        %v1539 = vadd.f32 %v1521, %v1531
        %v1540 = vadd.f32 %v1522, %v1532
        %v1541 = vadd.f32 %v1523, %v1533
        %v1542 = vadd.f32 %v1524, %v1534
        %v1543 = vadd.f32 %v1525, %v1535
        %v1544 = vadd.f32 %v1526, %v1536
        %v1545 = vadd.f32 %v1527, %v1537
        %s1546 = sld [smem:[#allocation13 + $0x202]]
        %v1547 = vstv %s1546
        %v1548 = vmul.f32 %v1547, %v451
        %v1549 = vmul.f32 %v1547, %v452
        %v1550 = vmul.f32 %v1547, %v453
        %v1551 = vmul.f32 %v1547, %v454
        %v1552 = vmul.f32 %v1547, %v455
        %v1553 = vmul.f32 %v1547, %v456
        %v1554 = vmul.f32 %v1547, %v457
        %v1555 = vmul.f32 %v1547, %v458
        %v1556 = vadd.f32 %v1538, %v1548
        %v1557 = vadd.f32 %v1539, %v1549
        %v1558 = vadd.f32 %v1540, %v1550
        %v1559 = vadd.f32 %v1541, %v1551
        %v1560 = vadd.f32 %v1542, %v1552
        %v1561 = vadd.f32 %v1543, %v1553
        %v1562 = vadd.f32 %v1544, %v1554
        %v1563 = vadd.f32 %v1545, %v1555
        %s1564 = sld [smem:[#allocation13 + $0x203]]
        %v1565 = vstv %s1564
        %v1566 = vmul.f32 %v1565, %v460
        %v1567 = vmul.f32 %v1565, %v461
        %v1568 = vmul.f32 %v1565, %v462
        %v1569 = vmul.f32 %v1565, %v463
        %v1570 = vmul.f32 %v1565, %v464
        %v1571 = vmul.f32 %v1565, %v465
        %v1572 = vmul.f32 %v1565, %v466
        %v1573 = vmul.f32 %v1565, %v467
        %v1574 = vadd.f32 %v1556, %v1566
        %v1575 = vadd.f32 %v1557, %v1567
        %v1576 = vadd.f32 %v1558, %v1568
        %v1577 = vadd.f32 %v1559, %v1569
        %v1578 = vadd.f32 %v1560, %v1570
        %v1579 = vadd.f32 %v1561, %v1571
        %v1580 = vadd.f32 %v1562, %v1572
        %v1581 = vadd.f32 %v1563, %v1573
        %v1582 = vtanh.pop %v1574
        %v1583 = vtanh.pop %v1575
        %v1584 = vtanh.pop %v1576
        %v1585 = vtanh.pop %v1577
        %v1586 = vtanh.pop %v1578
        %v1587 = vtanh.pop %v1579
        %v1588 = vtanh.pop %v1580
        %v1589 = vtanh.pop %v1581
        %s1590 = scalar_lea.vmem [#allocation3], 256
        %1591 = vst [vmem:[%s1590] sm:$0xff] %v1582
        %1592 = vst [vmem:[%s1590 + $0x8] sm:$0xff] %v1583
        %1593 = vst [vmem:[%s1590 + $0x10] sm:$0xff] %v1584
        %1594 = vst [vmem:[%s1590 + $0x18] sm:$0xff] %v1585
        %1595 = vst [vmem:[%s1590 + $0x20] sm:$0xff] %v1586
        %1596 = vst [vmem:[%s1590 + $0x28] sm:$0xff] %v1587
        %1597 = vst [vmem:[%s1590 + $0x30] sm:$0xff] %v1588
        %1598 = vst [vmem:[%s1590 + $0x38] sm:$0xff] %v1589
        %s1599 = sld [smem:[#allocation15 + $0x200]]
        %v1600 = vstv %s1599
        %v1601 = vmul.f32 %v1600, %v433
        %v1602 = vmul.f32 %v1600, %v434
        %v1603 = vmul.f32 %v1600, %v435
        %v1604 = vmul.f32 %v1600, %v436
        %v1605 = vmul.f32 %v1600, %v437
        %v1606 = vmul.f32 %v1600, %v438
        %v1607 = vmul.f32 %v1600, %v439
        %v1608 = vmul.f32 %v1600, %v440
        %s1609 = sld [smem:[#allocation15 + $0x201]]
        %v1610 = vstv %s1609
        %v1611 = vmul.f32 %v1610, %v442
        %v1612 = vmul.f32 %v1610, %v443
        %v1613 = vmul.f32 %v1610, %v444
        %v1614 = vmul.f32 %v1610, %v445
        %v1615 = vmul.f32 %v1610, %v446
        %v1616 = vmul.f32 %v1610, %v447
        %v1617 = vmul.f32 %v1610, %v448
        %v1618 = vmul.f32 %v1610, %v449
        %v1619 = vadd.f32 %v1601, %v1611
        %v1620 = vadd.f32 %v1602, %v1612
        %v1621 = vadd.f32 %v1603, %v1613
        %v1622 = vadd.f32 %v1604, %v1614
        %v1623 = vadd.f32 %v1605, %v1615
        %v1624 = vadd.f32 %v1606, %v1616
        %v1625 = vadd.f32 %v1607, %v1617
        %v1626 = vadd.f32 %v1608, %v1618
        %s1627 = sld [smem:[#allocation15 + $0x202]]
        %v1628 = vstv %s1627
        %v1629 = vmul.f32 %v1628, %v451
        %v1630 = vmul.f32 %v1628, %v452
        %v1631 = vmul.f32 %v1628, %v453
        %v1632 = vmul.f32 %v1628, %v454
        %v1633 = vmul.f32 %v1628, %v455
        %v1634 = vmul.f32 %v1628, %v456
        %v1635 = vmul.f32 %v1628, %v457
        %v1636 = vmul.f32 %v1628, %v458
        %v1637 = vadd.f32 %v1619, %v1629
        %v1638 = vadd.f32 %v1620, %v1630
        %v1639 = vadd.f32 %v1621, %v1631
        %v1640 = vadd.f32 %v1622, %v1632
        %v1641 = vadd.f32 %v1623, %v1633
        %v1642 = vadd.f32 %v1624, %v1634
        %v1643 = vadd.f32 %v1625, %v1635
        %v1644 = vadd.f32 %v1626, %v1636
        %s1645 = sld [smem:[#allocation15 + $0x203]]
        %v1646 = vstv %s1645
        %v1647 = vmul.f32 %v1646, %v460
        %v1648 = vmul.f32 %v1646, %v461
        %v1649 = vmul.f32 %v1646, %v462
        %v1650 = vmul.f32 %v1646, %v463
        %v1651 = vmul.f32 %v1646, %v464
        %v1652 = vmul.f32 %v1646, %v465
        %v1653 = vmul.f32 %v1646, %v466
        %v1654 = vmul.f32 %v1646, %v467
        %v1655 = vadd.f32 %v1637, %v1647
        %v1656 = vadd.f32 %v1638, %v1648
        %v1657 = vadd.f32 %v1639, %v1649
        %v1658 = vadd.f32 %v1640, %v1650
        %v1659 = vadd.f32 %v1641, %v1651
        %v1660 = vadd.f32 %v1642, %v1652
        %v1661 = vadd.f32 %v1643, %v1653
        %v1662 = vadd.f32 %v1644, %v1654
        %v1663 = vtanh.pop %v1655
        %v1664 = vtanh.pop %v1656
        %v1665 = vtanh.pop %v1657
        %v1666 = vtanh.pop %v1658
        %v1667 = vtanh.pop %v1659
        %v1668 = vtanh.pop %v1660
        %v1669 = vtanh.pop %v1661
        %v1670 = vtanh.pop %v1662
        %s1671 = scalar_lea.vmem [#allocation4], 256
        %1672 = vst [vmem:[%s1671] sm:$0xff] %v1663
        %1673 = vst [vmem:[%s1671 + $0x8] sm:$0xff] %v1664
        %1674 = vst [vmem:[%s1671 + $0x10] sm:$0xff] %v1665
        %1675 = vst [vmem:[%s1671 + $0x18] sm:$0xff] %v1666
        %1676 = vst [vmem:[%s1671 + $0x20] sm:$0xff] %v1667
        %1677 = vst [vmem:[%s1671 + $0x28] sm:$0xff] %v1668
        %1678 = vst [vmem:[%s1671 + $0x30] sm:$0xff] %v1669
        %1679 = vst [vmem:[%s1671 + $0x38] sm:$0xff] %v1670
        %s1680 = sld [smem:[#allocation12 + $0x280]]
        %v1681 = vstv %s1680
        %v1682 = vmul.f32 %v1681, %v433
        %v1683 = vmul.f32 %v1681, %v434
        %v1684 = vmul.f32 %v1681, %v435
        %v1685 = vmul.f32 %v1681, %v436
        %v1686 = vmul.f32 %v1681, %v437
        %v1687 = vmul.f32 %v1681, %v438
        %v1688 = vmul.f32 %v1681, %v439
        %v1689 = vmul.f32 %v1681, %v440
        %s1690 = sld [smem:[#allocation12 + $0x281]]
        %v1691 = vstv %s1690
        %v1692 = vmul.f32 %v1691, %v442
        %v1693 = vmul.f32 %v1691, %v443
        %v1694 = vmul.f32 %v1691, %v444
        %v1695 = vmul.f32 %v1691, %v445
        %v1696 = vmul.f32 %v1691, %v446
        %v1697 = vmul.f32 %v1691, %v447
        %v1698 = vmul.f32 %v1691, %v448
        %v1699 = vmul.f32 %v1691, %v449
        %v1700 = vadd.f32 %v1682, %v1692
        %v1701 = vadd.f32 %v1683, %v1693
        %v1702 = vadd.f32 %v1684, %v1694
        %v1703 = vadd.f32 %v1685, %v1695
        %v1704 = vadd.f32 %v1686, %v1696
        %v1705 = vadd.f32 %v1687, %v1697
        %v1706 = vadd.f32 %v1688, %v1698
        %v1707 = vadd.f32 %v1689, %v1699
        %s1708 = sld [smem:[#allocation12 + $0x282]]
        %v1709 = vstv %s1708
        %v1710 = vmul.f32 %v1709, %v451
        %v1711 = vmul.f32 %v1709, %v452
        %v1712 = vmul.f32 %v1709, %v453
        %v1713 = vmul.f32 %v1709, %v454
        %v1714 = vmul.f32 %v1709, %v455
        %v1715 = vmul.f32 %v1709, %v456
        %v1716 = vmul.f32 %v1709, %v457
        %v1717 = vmul.f32 %v1709, %v458
        %v1718 = vadd.f32 %v1700, %v1710
        %v1719 = vadd.f32 %v1701, %v1711
        %v1720 = vadd.f32 %v1702, %v1712
        %v1721 = vadd.f32 %v1703, %v1713
        %v1722 = vadd.f32 %v1704, %v1714
        %v1723 = vadd.f32 %v1705, %v1715
        %v1724 = vadd.f32 %v1706, %v1716
        %v1725 = vadd.f32 %v1707, %v1717
        %s1726 = sld [smem:[#allocation12 + $0x283]]
        %v1727 = vstv %s1726
        %v1728 = vmul.f32 %v1727, %v460
        %v1729 = vmul.f32 %v1727, %v461
        %v1730 = vmul.f32 %v1727, %v462
        %v1731 = vmul.f32 %v1727, %v463
        %v1732 = vmul.f32 %v1727, %v464
        %v1733 = vmul.f32 %v1727, %v465
        %v1734 = vmul.f32 %v1727, %v466
        %v1735 = vmul.f32 %v1727, %v467
        %v1736 = vadd.f32 %v1718, %v1728
        %v1737 = vadd.f32 %v1719, %v1729
        %v1738 = vadd.f32 %v1720, %v1730
        %v1739 = vadd.f32 %v1721, %v1731
        %v1740 = vadd.f32 %v1722, %v1732
        %v1741 = vadd.f32 %v1723, %v1733
        %v1742 = vadd.f32 %v1724, %v1734
        %v1743 = vadd.f32 %v1725, %v1735
        %v1744 = vtanh.pop %v1736
        %v1745 = vtanh.pop %v1737
        %v1746 = vtanh.pop %v1738
        %v1747 = vtanh.pop %v1739
        %v1748 = vtanh.pop %v1740
        %v1749 = vtanh.pop %v1741
        %v1750 = vtanh.pop %v1742
        %v1751 = vtanh.pop %v1743
        %s1752 = scalar_lea.vmem [#allocation2], 320
        %1753 = vst [vmem:[%s1752] sm:$0xff] %v1744
        %1754 = vst [vmem:[%s1752 + $0x8] sm:$0xff] %v1745
        %1755 = vst [vmem:[%s1752 + $0x10] sm:$0xff] %v1746
        %1756 = vst [vmem:[%s1752 + $0x18] sm:$0xff] %v1747
        %1757 = vst [vmem:[%s1752 + $0x20] sm:$0xff] %v1748
        %1758 = vst [vmem:[%s1752 + $0x28] sm:$0xff] %v1749
        %1759 = vst [vmem:[%s1752 + $0x30] sm:$0xff] %v1750
        %1760 = vst [vmem:[%s1752 + $0x38] sm:$0xff] %v1751
        %s1761 = sld [smem:[#allocation13 + $0x280]]
        %v1762 = vstv %s1761
        %v1763 = vmul.f32 %v1762, %v433
        %v1764 = vmul.f32 %v1762, %v434
        %v1765 = vmul.f32 %v1762, %v435
        %v1766 = vmul.f32 %v1762, %v436
        %v1767 = vmul.f32 %v1762, %v437
        %v1768 = vmul.f32 %v1762, %v438
        %v1769 = vmul.f32 %v1762, %v439
        %v1770 = vmul.f32 %v1762, %v440
        %s1771 = sld [smem:[#allocation13 + $0x281]]
        %v1772 = vstv %s1771
        %v1773 = vmul.f32 %v1772, %v442
        %v1774 = vmul.f32 %v1772, %v443
        %v1775 = vmul.f32 %v1772, %v444
        %v1776 = vmul.f32 %v1772, %v445
        %v1777 = vmul.f32 %v1772, %v446
        %v1778 = vmul.f32 %v1772, %v447
        %v1779 = vmul.f32 %v1772, %v448
        %v1780 = vmul.f32 %v1772, %v449
        %v1781 = vadd.f32 %v1763, %v1773
        %v1782 = vadd.f32 %v1764, %v1774
        %v1783 = vadd.f32 %v1765, %v1775
        %v1784 = vadd.f32 %v1766, %v1776
        %v1785 = vadd.f32 %v1767, %v1777
        %v1786 = vadd.f32 %v1768, %v1778
        %v1787 = vadd.f32 %v1769, %v1779
        %v1788 = vadd.f32 %v1770, %v1780
        %s1789 = sld [smem:[#allocation13 + $0x282]]
        %v1790 = vstv %s1789
        %v1791 = vmul.f32 %v1790, %v451
        %v1792 = vmul.f32 %v1790, %v452
        %v1793 = vmul.f32 %v1790, %v453
        %v1794 = vmul.f32 %v1790, %v454
        %v1795 = vmul.f32 %v1790, %v455
        %v1796 = vmul.f32 %v1790, %v456
        %v1797 = vmul.f32 %v1790, %v457
        %v1798 = vmul.f32 %v1790, %v458
        %v1799 = vadd.f32 %v1781, %v1791
        %v1800 = vadd.f32 %v1782, %v1792
        %v1801 = vadd.f32 %v1783, %v1793
        %v1802 = vadd.f32 %v1784, %v1794
        %v1803 = vadd.f32 %v1785, %v1795
        %v1804 = vadd.f32 %v1786, %v1796
        %v1805 = vadd.f32 %v1787, %v1797
        %v1806 = vadd.f32 %v1788, %v1798
        %s1807 = sld [smem:[#allocation13 + $0x283]]
        %v1808 = vstv %s1807
        %v1809 = vmul.f32 %v1808, %v460
        %v1810 = vmul.f32 %v1808, %v461
        %v1811 = vmul.f32 %v1808, %v462
        %v1812 = vmul.f32 %v1808, %v463
        %v1813 = vmul.f32 %v1808, %v464
        %v1814 = vmul.f32 %v1808, %v465
        %v1815 = vmul.f32 %v1808, %v466
        %v1816 = vmul.f32 %v1808, %v467
        %v1817 = vadd.f32 %v1799, %v1809
        %v1818 = vadd.f32 %v1800, %v1810
        %v1819 = vadd.f32 %v1801, %v1811
        %v1820 = vadd.f32 %v1802, %v1812
        %v1821 = vadd.f32 %v1803, %v1813
        %v1822 = vadd.f32 %v1804, %v1814
        %v1823 = vadd.f32 %v1805, %v1815
        %v1824 = vadd.f32 %v1806, %v1816
        %v1825 = vtanh.pop %v1817
        %v1826 = vtanh.pop %v1818
        %v1827 = vtanh.pop %v1819
        %v1828 = vtanh.pop %v1820
        %v1829 = vtanh.pop %v1821
        %v1830 = vtanh.pop %v1822
        %v1831 = vtanh.pop %v1823
        %v1832 = vtanh.pop %v1824
        %s1833 = scalar_lea.vmem [#allocation3], 320
        %1834 = vst [vmem:[%s1833] sm:$0xff] %v1825
        %1835 = vst [vmem:[%s1833 + $0x8] sm:$0xff] %v1826
        %1836 = vst [vmem:[%s1833 + $0x10] sm:$0xff] %v1827
        %1837 = vst [vmem:[%s1833 + $0x18] sm:$0xff] %v1828
        %1838 = vst [vmem:[%s1833 + $0x20] sm:$0xff] %v1829
        %1839 = vst [vmem:[%s1833 + $0x28] sm:$0xff] %v1830
        %1840 = vst [vmem:[%s1833 + $0x30] sm:$0xff] %v1831
        %1841 = vst [vmem:[%s1833 + $0x38] sm:$0xff] %v1832
        %s1842 = sld [smem:[#allocation15 + $0x280]]
        %v1843 = vstv %s1842
        %v1844 = vmul.f32 %v1843, %v433
        %v1845 = vmul.f32 %v1843, %v434
        %v1846 = vmul.f32 %v1843, %v435
        %v1847 = vmul.f32 %v1843, %v436
        %v1848 = vmul.f32 %v1843, %v437
        %v1849 = vmul.f32 %v1843, %v438
        %v1850 = vmul.f32 %v1843, %v439
        %v1851 = vmul.f32 %v1843, %v440
        %s1852 = sld [smem:[#allocation15 + $0x281]]
        %v1853 = vstv %s1852
        %v1854 = vmul.f32 %v1853, %v442
        %v1855 = vmul.f32 %v1853, %v443
        %v1856 = vmul.f32 %v1853, %v444
        %v1857 = vmul.f32 %v1853, %v445
        %v1858 = vmul.f32 %v1853, %v446
        %v1859 = vmul.f32 %v1853, %v447
        %v1860 = vmul.f32 %v1853, %v448
        %v1861 = vmul.f32 %v1853, %v449
        %v1862 = vadd.f32 %v1844, %v1854
        %v1863 = vadd.f32 %v1845, %v1855
        %v1864 = vadd.f32 %v1846, %v1856
        %v1865 = vadd.f32 %v1847, %v1857
        %v1866 = vadd.f32 %v1848, %v1858
        %v1867 = vadd.f32 %v1849, %v1859
        %v1868 = vadd.f32 %v1850, %v1860
        %v1869 = vadd.f32 %v1851, %v1861
        %s1870 = sld [smem:[#allocation15 + $0x282]]
        %v1871 = vstv %s1870
        %v1872 = vmul.f32 %v1871, %v451
        %v1873 = vmul.f32 %v1871, %v452
        %v1874 = vmul.f32 %v1871, %v453
        %v1875 = vmul.f32 %v1871, %v454
        %v1876 = vmul.f32 %v1871, %v455
        %v1877 = vmul.f32 %v1871, %v456
        %v1878 = vmul.f32 %v1871, %v457
        %v1879 = vmul.f32 %v1871, %v458
        %v1880 = vadd.f32 %v1862, %v1872
        %v1881 = vadd.f32 %v1863, %v1873
        %v1882 = vadd.f32 %v1864, %v1874
        %v1883 = vadd.f32 %v1865, %v1875
        %v1884 = vadd.f32 %v1866, %v1876
        %v1885 = vadd.f32 %v1867, %v1877
        %v1886 = vadd.f32 %v1868, %v1878
        %v1887 = vadd.f32 %v1869, %v1879
        %s1888 = sld [smem:[#allocation15 + $0x283]]
        %v1889 = vstv %s1888
        %v1890 = vmul.f32 %v1889, %v460
        %v1891 = vmul.f32 %v1889, %v461
        %v1892 = vmul.f32 %v1889, %v462
        %v1893 = vmul.f32 %v1889, %v463
        %v1894 = vmul.f32 %v1889, %v464
        %v1895 = vmul.f32 %v1889, %v465
        %v1896 = vmul.f32 %v1889, %v466
        %v1897 = vmul.f32 %v1889, %v467
        %v1898 = vadd.f32 %v1880, %v1890
        %v1899 = vadd.f32 %v1881, %v1891
        %v1900 = vadd.f32 %v1882, %v1892
        %v1901 = vadd.f32 %v1883, %v1893
        %v1902 = vadd.f32 %v1884, %v1894
        %v1903 = vadd.f32 %v1885, %v1895
        %v1904 = vadd.f32 %v1886, %v1896
        %v1905 = vadd.f32 %v1887, %v1897
        %v1906 = vtanh.pop %v1898
        %v1907 = vtanh.pop %v1899
        %v1908 = vtanh.pop %v1900
        %v1909 = vtanh.pop %v1901
        %v1910 = vtanh.pop %v1902
        %v1911 = vtanh.pop %v1903
        %v1912 = vtanh.pop %v1904
        %v1913 = vtanh.pop %v1905
        %s1914 = scalar_lea.vmem [#allocation4], 320
        %1915 = vst [vmem:[%s1914] sm:$0xff] %v1906
        %1916 = vst [vmem:[%s1914 + $0x8] sm:$0xff] %v1907
        %1917 = vst [vmem:[%s1914 + $0x10] sm:$0xff] %v1908
        %1918 = vst [vmem:[%s1914 + $0x18] sm:$0xff] %v1909
        %1919 = vst [vmem:[%s1914 + $0x20] sm:$0xff] %v1910
        %1920 = vst [vmem:[%s1914 + $0x28] sm:$0xff] %v1911
        %1921 = vst [vmem:[%s1914 + $0x30] sm:$0xff] %v1912
        %1922 = vst [vmem:[%s1914 + $0x38] sm:$0xff] %v1913
        %s1923 = sld [smem:[#allocation12 + $0x300]]
        %v1924 = vstv %s1923
        %v1925 = vmul.f32 %v1924, %v433
        %v1926 = vmul.f32 %v1924, %v434
        %v1927 = vmul.f32 %v1924, %v435
        %v1928 = vmul.f32 %v1924, %v436
        %v1929 = vmul.f32 %v1924, %v437
        %v1930 = vmul.f32 %v1924, %v438
        %v1931 = vmul.f32 %v1924, %v439
        %v1932 = vmul.f32 %v1924, %v440
        %s1933 = sld [smem:[#allocation12 + $0x301]]
        %v1934 = vstv %s1933
        %v1935 = vmul.f32 %v1934, %v442
        %v1936 = vmul.f32 %v1934, %v443
        %v1937 = vmul.f32 %v1934, %v444
        %v1938 = vmul.f32 %v1934, %v445
        %v1939 = vmul.f32 %v1934, %v446
        %v1940 = vmul.f32 %v1934, %v447
        %v1941 = vmul.f32 %v1934, %v448
        %v1942 = vmul.f32 %v1934, %v449
        %v1943 = vadd.f32 %v1925, %v1935
        %v1944 = vadd.f32 %v1926, %v1936
        %v1945 = vadd.f32 %v1927, %v1937
        %v1946 = vadd.f32 %v1928, %v1938
        %v1947 = vadd.f32 %v1929, %v1939
        %v1948 = vadd.f32 %v1930, %v1940
        %v1949 = vadd.f32 %v1931, %v1941
        %v1950 = vadd.f32 %v1932, %v1942
        %s1951 = sld [smem:[#allocation12 + $0x302]]
        %v1952 = vstv %s1951
        %v1953 = vmul.f32 %v1952, %v451
        %v1954 = vmul.f32 %v1952, %v452
        %v1955 = vmul.f32 %v1952, %v453
        %v1956 = vmul.f32 %v1952, %v454
        %v1957 = vmul.f32 %v1952, %v455
        %v1958 = vmul.f32 %v1952, %v456
        %v1959 = vmul.f32 %v1952, %v457
        %v1960 = vmul.f32 %v1952, %v458
        %v1961 = vadd.f32 %v1943, %v1953
        %v1962 = vadd.f32 %v1944, %v1954
        %v1963 = vadd.f32 %v1945, %v1955
        %v1964 = vadd.f32 %v1946, %v1956
        %v1965 = vadd.f32 %v1947, %v1957
        %v1966 = vadd.f32 %v1948, %v1958
        %v1967 = vadd.f32 %v1949, %v1959
        %v1968 = vadd.f32 %v1950, %v1960
        %s1969 = sld [smem:[#allocation12 + $0x303]]
        %v1970 = vstv %s1969
        %v1971 = vmul.f32 %v1970, %v460
        %v1972 = vmul.f32 %v1970, %v461
        %v1973 = vmul.f32 %v1970, %v462
        %v1974 = vmul.f32 %v1970, %v463
        %v1975 = vmul.f32 %v1970, %v464
        %v1976 = vmul.f32 %v1970, %v465
        %v1977 = vmul.f32 %v1970, %v466
        %v1978 = vmul.f32 %v1970, %v467
        %v1979 = vadd.f32 %v1961, %v1971
        %v1980 = vadd.f32 %v1962, %v1972
        %v1981 = vadd.f32 %v1963, %v1973
        %v1982 = vadd.f32 %v1964, %v1974
        %v1983 = vadd.f32 %v1965, %v1975
        %v1984 = vadd.f32 %v1966, %v1976
        %v1985 = vadd.f32 %v1967, %v1977
        %v1986 = vadd.f32 %v1968, %v1978
        %v1987 = vtanh.pop %v1979
        %v1988 = vtanh.pop %v1980
        %v1989 = vtanh.pop %v1981
        %v1990 = vtanh.pop %v1982
        %v1991 = vtanh.pop %v1983
        %v1992 = vtanh.pop %v1984
        %v1993 = vtanh.pop %v1985
        %v1994 = vtanh.pop %v1986
        %s1995 = scalar_lea.vmem [#allocation2], 384
        %1996 = vst [vmem:[%s1995] sm:$0xff] %v1987
        %1997 = vst [vmem:[%s1995 + $0x8] sm:$0xff] %v1988
        %1998 = vst [vmem:[%s1995 + $0x10] sm:$0xff] %v1989
        %1999 = vst [vmem:[%s1995 + $0x18] sm:$0xff] %v1990
        %2000 = vst [vmem:[%s1995 + $0x20] sm:$0xff] %v1991
        %2001 = vst [vmem:[%s1995 + $0x28] sm:$0xff] %v1992
        %2002 = vst [vmem:[%s1995 + $0x30] sm:$0xff] %v1993
        %2003 = vst [vmem:[%s1995 + $0x38] sm:$0xff] %v1994
        %s2004 = sld [smem:[#allocation13 + $0x300]]
        %v2005 = vstv %s2004
        %v2006 = vmul.f32 %v2005, %v433
        %v2007 = vmul.f32 %v2005, %v434
        %v2008 = vmul.f32 %v2005, %v435
        %v2009 = vmul.f32 %v2005, %v436
        %v2010 = vmul.f32 %v2005, %v437
        %v2011 = vmul.f32 %v2005, %v438
        %v2012 = vmul.f32 %v2005, %v439
        %v2013 = vmul.f32 %v2005, %v440
        %s2014 = sld [smem:[#allocation13 + $0x301]]
        %v2015 = vstv %s2014
        %v2016 = vmul.f32 %v2015, %v442
        %v2017 = vmul.f32 %v2015, %v443
        %v2018 = vmul.f32 %v2015, %v444
        %v2019 = vmul.f32 %v2015, %v445
        %v2020 = vmul.f32 %v2015, %v446
        %v2021 = vmul.f32 %v2015, %v447
        %v2022 = vmul.f32 %v2015, %v448
        %v2023 = vmul.f32 %v2015, %v449
        %v2024 = vadd.f32 %v2006, %v2016
        %v2025 = vadd.f32 %v2007, %v2017
        %v2026 = vadd.f32 %v2008, %v2018
        %v2027 = vadd.f32 %v2009, %v2019
        %v2028 = vadd.f32 %v2010, %v2020
        %v2029 = vadd.f32 %v2011, %v2021
        %v2030 = vadd.f32 %v2012, %v2022
        %v2031 = vadd.f32 %v2013, %v2023
        %s2032 = sld [smem:[#allocation13 + $0x302]]
        %v2033 = vstv %s2032
        %v2034 = vmul.f32 %v2033, %v451
        %v2035 = vmul.f32 %v2033, %v452
        %v2036 = vmul.f32 %v2033, %v453
        %v2037 = vmul.f32 %v2033, %v454
        %v2038 = vmul.f32 %v2033, %v455
        %v2039 = vmul.f32 %v2033, %v456
        %v2040 = vmul.f32 %v2033, %v457
        %v2041 = vmul.f32 %v2033, %v458
        %v2042 = vadd.f32 %v2024, %v2034
        %v2043 = vadd.f32 %v2025, %v2035
        %v2044 = vadd.f32 %v2026, %v2036
        %v2045 = vadd.f32 %v2027, %v2037
        %v2046 = vadd.f32 %v2028, %v2038
        %v2047 = vadd.f32 %v2029, %v2039
        %v2048 = vadd.f32 %v2030, %v2040
        %v2049 = vadd.f32 %v2031, %v2041
        %s2050 = sld [smem:[#allocation13 + $0x303]]
        %v2051 = vstv %s2050
        %v2052 = vmul.f32 %v2051, %v460
        %v2053 = vmul.f32 %v2051, %v461
        %v2054 = vmul.f32 %v2051, %v462
        %v2055 = vmul.f32 %v2051, %v463
        %v2056 = vmul.f32 %v2051, %v464
        %v2057 = vmul.f32 %v2051, %v465
        %v2058 = vmul.f32 %v2051, %v466
        %v2059 = vmul.f32 %v2051, %v467
        %v2060 = vadd.f32 %v2042, %v2052
        %v2061 = vadd.f32 %v2043, %v2053
        %v2062 = vadd.f32 %v2044, %v2054
        %v2063 = vadd.f32 %v2045, %v2055
        %v2064 = vadd.f32 %v2046, %v2056
        %v2065 = vadd.f32 %v2047, %v2057
        %v2066 = vadd.f32 %v2048, %v2058
        %v2067 = vadd.f32 %v2049, %v2059
        %v2068 = vtanh.pop %v2060
        %v2069 = vtanh.pop %v2061
        %v2070 = vtanh.pop %v2062
        %v2071 = vtanh.pop %v2063
        %v2072 = vtanh.pop %v2064
        %v2073 = vtanh.pop %v2065
        %v2074 = vtanh.pop %v2066
        %v2075 = vtanh.pop %v2067
        %s2076 = scalar_lea.vmem [#allocation3], 384
        %2077 = vst [vmem:[%s2076] sm:$0xff] %v2068
        %2078 = vst [vmem:[%s2076 + $0x8] sm:$0xff] %v2069
        %2079 = vst [vmem:[%s2076 + $0x10] sm:$0xff] %v2070
        %2080 = vst [vmem:[%s2076 + $0x18] sm:$0xff] %v2071
        %2081 = vst [vmem:[%s2076 + $0x20] sm:$0xff] %v2072
        %2082 = vst [vmem:[%s2076 + $0x28] sm:$0xff] %v2073
        %2083 = vst [vmem:[%s2076 + $0x30] sm:$0xff] %v2074
        %2084 = vst [vmem:[%s2076 + $0x38] sm:$0xff] %v2075
        %s2085 = sld [smem:[#allocation15 + $0x300]]
        %v2086 = vstv %s2085
        %v2087 = vmul.f32 %v2086, %v433
        %v2088 = vmul.f32 %v2086, %v434
        %v2089 = vmul.f32 %v2086, %v435
        %v2090 = vmul.f32 %v2086, %v436
        %v2091 = vmul.f32 %v2086, %v437
        %v2092 = vmul.f32 %v2086, %v438
        %v2093 = vmul.f32 %v2086, %v439
        %v2094 = vmul.f32 %v2086, %v440
        %s2095 = sld [smem:[#allocation15 + $0x301]]
        %v2096 = vstv %s2095
        %v2097 = vmul.f32 %v2096, %v442
        %v2098 = vmul.f32 %v2096, %v443
        %v2099 = vmul.f32 %v2096, %v444
        %v2100 = vmul.f32 %v2096, %v445
        %v2101 = vmul.f32 %v2096, %v446
        %v2102 = vmul.f32 %v2096, %v447
        %v2103 = vmul.f32 %v2096, %v448
        %v2104 = vmul.f32 %v2096, %v449
        %v2105 = vadd.f32 %v2087, %v2097
        %v2106 = vadd.f32 %v2088, %v2098
        %v2107 = vadd.f32 %v2089, %v2099
        %v2108 = vadd.f32 %v2090, %v2100
        %v2109 = vadd.f32 %v2091, %v2101
        %v2110 = vadd.f32 %v2092, %v2102
        %v2111 = vadd.f32 %v2093, %v2103
        %v2112 = vadd.f32 %v2094, %v2104
        %s2113 = sld [smem:[#allocation15 + $0x302]]
        %v2114 = vstv %s2113
        %v2115 = vmul.f32 %v2114, %v451
        %v2116 = vmul.f32 %v2114, %v452
        %v2117 = vmul.f32 %v2114, %v453
        %v2118 = vmul.f32 %v2114, %v454
        %v2119 = vmul.f32 %v2114, %v455
        %v2120 = vmul.f32 %v2114, %v456
        %v2121 = vmul.f32 %v2114, %v457
        %v2122 = vmul.f32 %v2114, %v458
        %v2123 = vadd.f32 %v2105, %v2115
        %v2124 = vadd.f32 %v2106, %v2116
        %v2125 = vadd.f32 %v2107, %v2117
        %v2126 = vadd.f32 %v2108, %v2118
        %v2127 = vadd.f32 %v2109, %v2119
        %v2128 = vadd.f32 %v2110, %v2120
        %v2129 = vadd.f32 %v2111, %v2121
        %v2130 = vadd.f32 %v2112, %v2122
        %s2131 = sld [smem:[#allocation15 + $0x303]]
        %v2132 = vstv %s2131
        %v2133 = vmul.f32 %v2132, %v460
        %v2134 = vmul.f32 %v2132, %v461
        %v2135 = vmul.f32 %v2132, %v462
        %v2136 = vmul.f32 %v2132, %v463
        %v2137 = vmul.f32 %v2132, %v464
        %v2138 = vmul.f32 %v2132, %v465
        %v2139 = vmul.f32 %v2132, %v466
        %v2140 = vmul.f32 %v2132, %v467
        %v2141 = vadd.f32 %v2123, %v2133
        %v2142 = vadd.f32 %v2124, %v2134
        %v2143 = vadd.f32 %v2125, %v2135
        %v2144 = vadd.f32 %v2126, %v2136
        %v2145 = vadd.f32 %v2127, %v2137
        %v2146 = vadd.f32 %v2128, %v2138
        %v2147 = vadd.f32 %v2129, %v2139
        %v2148 = vadd.f32 %v2130, %v2140
        %v2149 = vtanh.pop %v2141
        %v2150 = vtanh.pop %v2142
        %v2151 = vtanh.pop %v2143
        %v2152 = vtanh.pop %v2144
        %v2153 = vtanh.pop %v2145
        %v2154 = vtanh.pop %v2146
        %v2155 = vtanh.pop %v2147
        %v2156 = vtanh.pop %v2148
        %s2157 = scalar_lea.vmem [#allocation4], 384
        %2158 = vst [vmem:[%s2157] sm:$0xff] %v2149
        %2159 = vst [vmem:[%s2157 + $0x8] sm:$0xff] %v2150
        %2160 = vst [vmem:[%s2157 + $0x10] sm:$0xff] %v2151
        %2161 = vst [vmem:[%s2157 + $0x18] sm:$0xff] %v2152
        %2162 = vst [vmem:[%s2157 + $0x20] sm:$0xff] %v2153
        %2163 = vst [vmem:[%s2157 + $0x28] sm:$0xff] %v2154
        %2164 = vst [vmem:[%s2157 + $0x30] sm:$0xff] %v2155
        %2165 = vst [vmem:[%s2157 + $0x38] sm:$0xff] %v2156
        %s2166 = sld [smem:[#allocation12 + $0x380]]
        %v2167 = vstv %s2166
        %v2168 = vmul.f32 %v2167, %v433
        %v2169 = vmul.f32 %v2167, %v434
        %v2170 = vmul.f32 %v2167, %v435
        %v2171 = vmul.f32 %v2167, %v436
        %v2172 = vmul.f32 %v2167, %v437
        %v2173 = vmul.f32 %v2167, %v438
        %v2174 = vmul.f32 %v2167, %v439
        %v2175 = vmul.f32 %v2167, %v440
        %s2176 = sld [smem:[#allocation12 + $0x381]]
        %v2177 = vstv %s2176
        %v2178 = vmul.f32 %v2177, %v442
        %v2179 = vmul.f32 %v2177, %v443
        %v2180 = vmul.f32 %v2177, %v444
        %v2181 = vmul.f32 %v2177, %v445
        %v2182 = vmul.f32 %v2177, %v446
        %v2183 = vmul.f32 %v2177, %v447
        %v2184 = vmul.f32 %v2177, %v448
        %v2185 = vmul.f32 %v2177, %v449
        %v2186 = vadd.f32 %v2168, %v2178
        %v2187 = vadd.f32 %v2169, %v2179
        %v2188 = vadd.f32 %v2170, %v2180
        %v2189 = vadd.f32 %v2171, %v2181
        %v2190 = vadd.f32 %v2172, %v2182
        %v2191 = vadd.f32 %v2173, %v2183
        %v2192 = vadd.f32 %v2174, %v2184
        %v2193 = vadd.f32 %v2175, %v2185
        %s2194 = sld [smem:[#allocation12 + $0x382]]
        %v2195 = vstv %s2194
        %v2196 = vmul.f32 %v2195, %v451
        %v2197 = vmul.f32 %v2195, %v452
        %v2198 = vmul.f32 %v2195, %v453
        %v2199 = vmul.f32 %v2195, %v454
        %v2200 = vmul.f32 %v2195, %v455
        %v2201 = vmul.f32 %v2195, %v456
        %v2202 = vmul.f32 %v2195, %v457
        %v2203 = vmul.f32 %v2195, %v458
        %v2204 = vadd.f32 %v2186, %v2196
        %v2205 = vadd.f32 %v2187, %v2197
        %v2206 = vadd.f32 %v2188, %v2198
        %v2207 = vadd.f32 %v2189, %v2199
        %v2208 = vadd.f32 %v2190, %v2200
        %v2209 = vadd.f32 %v2191, %v2201
        %v2210 = vadd.f32 %v2192, %v2202
        %v2211 = vadd.f32 %v2193, %v2203
        %s2212 = sld [smem:[#allocation12 + $0x383]]
        %v2213 = vstv %s2212
        %v2214 = vmul.f32 %v2213, %v460
        %v2215 = vmul.f32 %v2213, %v461
        %v2216 = vmul.f32 %v2213, %v462
        %v2217 = vmul.f32 %v2213, %v463
        %v2218 = vmul.f32 %v2213, %v464
        %v2219 = vmul.f32 %v2213, %v465
        %v2220 = vmul.f32 %v2213, %v466
        %v2221 = vmul.f32 %v2213, %v467
        %v2222 = vadd.f32 %v2204, %v2214
        %v2223 = vadd.f32 %v2205, %v2215
        %v2224 = vadd.f32 %v2206, %v2216
        %v2225 = vadd.f32 %v2207, %v2217
        %v2226 = vadd.f32 %v2208, %v2218
        %v2227 = vadd.f32 %v2209, %v2219
        %v2228 = vadd.f32 %v2210, %v2220
        %v2229 = vadd.f32 %v2211, %v2221
        %v2230 = vtanh.pop %v2222
        %v2231 = vtanh.pop %v2223
        %v2232 = vtanh.pop %v2224
        %v2233 = vtanh.pop %v2225
        %v2234 = vtanh.pop %v2226
        %v2235 = vtanh.pop %v2227
        %v2236 = vtanh.pop %v2228
        %v2237 = vtanh.pop %v2229
        %s2238 = scalar_lea.vmem [#allocation2], 448
        %2239 = vst [vmem:[%s2238] sm:$0xff] %v2230
        %2240 = vst [vmem:[%s2238 + $0x8] sm:$0xff] %v2231
        %2241 = vst [vmem:[%s2238 + $0x10] sm:$0xff] %v2232
        %2242 = vst [vmem:[%s2238 + $0x18] sm:$0xff] %v2233
        %2243 = vst [vmem:[%s2238 + $0x20] sm:$0xff] %v2234
        %2244 = vst [vmem:[%s2238 + $0x28] sm:$0xff] %v2235
        %2245 = vst [vmem:[%s2238 + $0x30] sm:$0xff] %v2236
        %2246 = vst [vmem:[%s2238 + $0x38] sm:$0xff] %v2237
        %s2247 = sld [smem:[#allocation13 + $0x380]]
        %v2248 = vstv %s2247
        %v2249 = vmul.f32 %v2248, %v433
        %v2250 = vmul.f32 %v2248, %v434
        %v2251 = vmul.f32 %v2248, %v435
        %v2252 = vmul.f32 %v2248, %v436
        %v2253 = vmul.f32 %v2248, %v437
        %v2254 = vmul.f32 %v2248, %v438
        %v2255 = vmul.f32 %v2248, %v439
        %v2256 = vmul.f32 %v2248, %v440
        %s2257 = sld [smem:[#allocation13 + $0x381]]
        %v2258 = vstv %s2257
        %v2259 = vmul.f32 %v2258, %v442
        %v2260 = vmul.f32 %v2258, %v443
        %v2261 = vmul.f32 %v2258, %v444
        %v2262 = vmul.f32 %v2258, %v445
        %v2263 = vmul.f32 %v2258, %v446
        %v2264 = vmul.f32 %v2258, %v447
        %v2265 = vmul.f32 %v2258, %v448
        %v2266 = vmul.f32 %v2258, %v449
        %v2267 = vadd.f32 %v2249, %v2259
        %v2268 = vadd.f32 %v2250, %v2260
        %v2269 = vadd.f32 %v2251, %v2261
        %v2270 = vadd.f32 %v2252, %v2262
        %v2271 = vadd.f32 %v2253, %v2263
        %v2272 = vadd.f32 %v2254, %v2264
        %v2273 = vadd.f32 %v2255, %v2265
        %v2274 = vadd.f32 %v2256, %v2266
        %s2275 = sld [smem:[#allocation13 + $0x382]]
        %v2276 = vstv %s2275
        %v2277 = vmul.f32 %v2276, %v451
        %v2278 = vmul.f32 %v2276, %v452
        %v2279 = vmul.f32 %v2276, %v453
        %v2280 = vmul.f32 %v2276, %v454
        %v2281 = vmul.f32 %v2276, %v455
        %v2282 = vmul.f32 %v2276, %v456
        %v2283 = vmul.f32 %v2276, %v457
        %v2284 = vmul.f32 %v2276, %v458
        %v2285 = vadd.f32 %v2267, %v2277
        %v2286 = vadd.f32 %v2268, %v2278
        %v2287 = vadd.f32 %v2269, %v2279
        %v2288 = vadd.f32 %v2270, %v2280
        %v2289 = vadd.f32 %v2271, %v2281
        %v2290 = vadd.f32 %v2272, %v2282
        %v2291 = vadd.f32 %v2273, %v2283
        %v2292 = vadd.f32 %v2274, %v2284
        %s2293 = sld [smem:[#allocation13 + $0x383]]
        %v2294 = vstv %s2293
        %v2295 = vmul.f32 %v2294, %v460
        %v2296 = vmul.f32 %v2294, %v461
        %v2297 = vmul.f32 %v2294, %v462
        %v2298 = vmul.f32 %v2294, %v463
        %v2299 = vmul.f32 %v2294, %v464
        %v2300 = vmul.f32 %v2294, %v465
        %v2301 = vmul.f32 %v2294, %v466
        %v2302 = vmul.f32 %v2294, %v467
        %v2303 = vadd.f32 %v2285, %v2295
        %v2304 = vadd.f32 %v2286, %v2296
        %v2305 = vadd.f32 %v2287, %v2297
        %v2306 = vadd.f32 %v2288, %v2298
        %v2307 = vadd.f32 %v2289, %v2299
        %v2308 = vadd.f32 %v2290, %v2300
        %v2309 = vadd.f32 %v2291, %v2301
        %v2310 = vadd.f32 %v2292, %v2302
        %v2311 = vtanh.pop %v2303
        %v2312 = vtanh.pop %v2304
        %v2313 = vtanh.pop %v2305
        %v2314 = vtanh.pop %v2306
        %v2315 = vtanh.pop %v2307
        %v2316 = vtanh.pop %v2308
        %v2317 = vtanh.pop %v2309
        %v2318 = vtanh.pop %v2310
        %s2319 = scalar_lea.vmem [#allocation3], 448
        %2320 = vst [vmem:[%s2319] sm:$0xff] %v2311
        %2321 = vst [vmem:[%s2319 + $0x8] sm:$0xff] %v2312
        %2322 = vst [vmem:[%s2319 + $0x10] sm:$0xff] %v2313
        %2323 = vst [vmem:[%s2319 + $0x18] sm:$0xff] %v2314
        %2324 = vst [vmem:[%s2319 + $0x20] sm:$0xff] %v2315
        %2325 = vst [vmem:[%s2319 + $0x28] sm:$0xff] %v2316
        %2326 = vst [vmem:[%s2319 + $0x30] sm:$0xff] %v2317
        %2327 = vst [vmem:[%s2319 + $0x38] sm:$0xff] %v2318
        %s2328 = sld [smem:[#allocation15 + $0x380]]
        %v2329 = vstv %s2328
        %v2330 = vmul.f32 %v2329, %v433
        %v2331 = vmul.f32 %v2329, %v434
        %v2332 = vmul.f32 %v2329, %v435
        %v2333 = vmul.f32 %v2329, %v436
        %v2334 = vmul.f32 %v2329, %v437
        %v2335 = vmul.f32 %v2329, %v438
        %v2336 = vmul.f32 %v2329, %v439
        %v2337 = vmul.f32 %v2329, %v440
        %s2338 = sld [smem:[#allocation15 + $0x381]]
        %v2339 = vstv %s2338
        %v2340 = vmul.f32 %v2339, %v442
        %v2341 = vmul.f32 %v2339, %v443
        %v2342 = vmul.f32 %v2339, %v444
        %v2343 = vmul.f32 %v2339, %v445
        %v2344 = vmul.f32 %v2339, %v446
        %v2345 = vmul.f32 %v2339, %v447
        %v2346 = vmul.f32 %v2339, %v448
        %v2347 = vmul.f32 %v2339, %v449
        %v2348 = vadd.f32 %v2330, %v2340
        %v2349 = vadd.f32 %v2331, %v2341
        %v2350 = vadd.f32 %v2332, %v2342
        %v2351 = vadd.f32 %v2333, %v2343
        %v2352 = vadd.f32 %v2334, %v2344
        %v2353 = vadd.f32 %v2335, %v2345
        %v2354 = vadd.f32 %v2336, %v2346
        %v2355 = vadd.f32 %v2337, %v2347
        %s2356 = sld [smem:[#allocation15 + $0x382]]
        %v2357 = vstv %s2356
        %v2358 = vmul.f32 %v2357, %v451
        %v2359 = vmul.f32 %v2357, %v452
        %v2360 = vmul.f32 %v2357, %v453
        %v2361 = vmul.f32 %v2357, %v454
        %v2362 = vmul.f32 %v2357, %v455
        %v2363 = vmul.f32 %v2357, %v456
        %v2364 = vmul.f32 %v2357, %v457
        %v2365 = vmul.f32 %v2357, %v458
        %v2366 = vadd.f32 %v2348, %v2358
        %v2367 = vadd.f32 %v2349, %v2359
        %v2368 = vadd.f32 %v2350, %v2360
        %v2369 = vadd.f32 %v2351, %v2361
        %v2370 = vadd.f32 %v2352, %v2362
        %v2371 = vadd.f32 %v2353, %v2363
        %v2372 = vadd.f32 %v2354, %v2364
        %v2373 = vadd.f32 %v2355, %v2365
        %s2374 = sld [smem:[#allocation15 + $0x383]]
        %v2375 = vstv %s2374
        %v2376 = vmul.f32 %v2375, %v460
        %v2377 = vmul.f32 %v2375, %v461
        %v2378 = vmul.f32 %v2375, %v462
        %v2379 = vmul.f32 %v2375, %v463
        %v2380 = vmul.f32 %v2375, %v464
        %v2381 = vmul.f32 %v2375, %v465
        %v2382 = vmul.f32 %v2375, %v466
        %v2383 = vmul.f32 %v2375, %v467
        %v2384 = vadd.f32 %v2366, %v2376
        %v2385 = vadd.f32 %v2367, %v2377
        %v2386 = vadd.f32 %v2368, %v2378
        %v2387 = vadd.f32 %v2369, %v2379
        %v2388 = vadd.f32 %v2370, %v2380
        %v2389 = vadd.f32 %v2371, %v2381
        %v2390 = vadd.f32 %v2372, %v2382
        %v2391 = vadd.f32 %v2373, %v2383
        %v2392 = vtanh.pop %v2384
        %v2393 = vtanh.pop %v2385
        %v2394 = vtanh.pop %v2386
        %v2395 = vtanh.pop %v2387
        %v2396 = vtanh.pop %v2388
        %v2397 = vtanh.pop %v2389
        %v2398 = vtanh.pop %v2390
        %v2399 = vtanh.pop %v2391
        %s2400 = scalar_lea.vmem [#allocation4], 448
        %2401 = vst [vmem:[%s2400] sm:$0xff] %v2392
        %2402 = vst [vmem:[%s2400 + $0x8] sm:$0xff] %v2393
        %2403 = vst [vmem:[%s2400 + $0x10] sm:$0xff] %v2394
        %2404 = vst [vmem:[%s2400 + $0x18] sm:$0xff] %v2395
        %2405 = vst [vmem:[%s2400 + $0x20] sm:$0xff] %v2396
        %2406 = vst [vmem:[%s2400 + $0x28] sm:$0xff] %v2397
        %2407 = vst [vmem:[%s2400 + $0x30] sm:$0xff] %v2398
        %2408 = vst [vmem:[%s2400 + $0x38] sm:$0xff] %v2399
        %v2409 = vld [vmem:[#allocation2] sm:$0xff]
        %v2410 = vld [vmem:[#allocation2 + $0x8] sm:$0xff]
        %v2411 = vld [vmem:[#allocation2 + $0x10] sm:$0xff]
        %v2412 = vld [vmem:[#allocation2 + $0x18] sm:$0xff]
        %v2413 = vld [vmem:[#allocation2 + $0x20] sm:$0xff]
        %v2414 = vld [vmem:[#allocation2 + $0x28] sm:$0xff]
        %v2415 = vld [vmem:[#allocation2 + $0x30] sm:$0xff]
        %v2416 = vld [vmem:[#allocation2 + $0x38] sm:$0xff]
        %v2417 = vld [vmem:[#allocation3] sm:$0xff]
        %v2418 = vld [vmem:[#allocation3 + $0x8] sm:$0xff]
        %v2419 = vld [vmem:[#allocation3 + $0x10] sm:$0xff]
        %v2420 = vld [vmem:[#allocation3 + $0x18] sm:$0xff]
        %v2421 = vld [vmem:[#allocation3 + $0x20] sm:$0xff]
        %v2422 = vld [vmem:[#allocation3 + $0x28] sm:$0xff]
        %v2423 = vld [vmem:[#allocation3 + $0x30] sm:$0xff]
        %v2424 = vld [vmem:[#allocation3 + $0x38] sm:$0xff]
        %v2425 = vmul.f32 %v2409, %v2417
        %v2426 = vmul.f32 %v2410, %v2418
        %v2427 = vmul.f32 %v2411, %v2419
        %v2428 = vmul.f32 %v2412, %v2420
        %v2429 = vmul.f32 %v2413, %v2421
        %v2430 = vmul.f32 %v2414, %v2422
        %v2431 = vmul.f32 %v2415, %v2423
        %v2432 = vmul.f32 %v2416, %v2424
        %v2433 = vadd.f32 %v2425, %v2429
        %v2434 = vrot.slane %v2433, 4
        %v2435 = vadd.f32 %v2433, %v2434
        %v2436 = vrot.slane %v2435, 2
        %v2437 = vadd.f32 %v2435, %v2436
        %v2438 = vrot.slane %v2437, 1
        %v2439 = vadd.f32 %v2437, %v2438
        %v2440 = vadd.f32 %v2426, %v2430
        %v2441 = vrot.slane %v2440, 4
        %v2442 = vadd.f32 %v2440, %v2441
        %v2443 = vrot.slane %v2442, 2
        %v2444 = vadd.f32 %v2442, %v2443
        %v2445 = vrot.slane %v2444, 1
        %v2446 = vadd.f32 %v2444, %v2445
        %v2447 = vadd.f32 %v2427, %v2431
        %v2448 = vrot.slane %v2447, 4
        %v2449 = vadd.f32 %v2447, %v2448
        %v2450 = vrot.slane %v2449, 2
        %v2451 = vadd.f32 %v2449, %v2450
        %v2452 = vrot.slane %v2451, 1
        %v2453 = vadd.f32 %v2451, %v2452
        %v2454 = vadd.f32 %v2428, %v2432
        %v2455 = vrot.slane %v2454, 4
        %v2456 = vadd.f32 %v2454, %v2455
        %v2457 = vrot.slane %v2456, 2
        %v2458 = vadd.f32 %v2456, %v2457
        %v2459 = vrot.slane %v2458, 1
        %v2460 = vadd.f32 %v2458, %v2459
        %v2465 = vcombine.low %v2439, %v2446
        %v2466 = vcombine.low %v2453, %v2460
        %v2468 = vunpack.c.l.s4 1966171168
        %v2469 = vunpack.c.0.s8 %v2468
        %v2470 = vlaneseq
        %v2471 = vshrl.u32 %v2470, 7
        %v2472 = vsub.s32 %v2469, %v2471
        %v2473 = vrot.slane %v2465, %v2472
        %v2475 = vunpack.c.l.s4 1966171168
        %v2476 = vunpack.c.0.s8 %v2475
        %v2477 = vlaneseq
        %v2478 = vshrl.u32 %v2477, 7
        %v2479 = vsub.s32 %v2476, %v2478
        %v2480 = vrot.slane %v2466, %v2479
        %v2481 = vcombine.low %v2473, %v2480
        %v2483 = vunpack.c.l.s4 1966171168
        %v2484 = vunpack.c.0.s8 %v2483
        %v2485 = vlaneseq
        %v2486 = vshrl.u32 %v2485, 7
        %v2487 = vsub.s32 %v2484, %v2486
        %v2488 = vrot.slane %v2481, %v2487
        %v2490 = vlaneseq
        %vm2491 = vcmp.ge.s32.totalorder %v2490, 0
        %vm2492 = vcmp.lt.s32.totalorder %v2490, 512
        %vm2493 = vmand %vm2491, %vm2492
        %2494 = vst.msk [vmem:[#allocation5] ss:$8 sm:$0xf] %vm2493, %v2488
        %2495 = vst.msk [vmem:[#allocation5] ss:$8 sm:$0x0] %vm2493, %v2488
        %v2496 = vld [vmem:[%s861] sm:$0xff]
        %v2497 = vld [vmem:[%s861 + $0x8] sm:$0xff]
        %v2498 = vld [vmem:[%s861 + $0x10] sm:$0xff]
        %v2499 = vld [vmem:[%s861 + $0x18] sm:$0xff]
        %v2500 = vld [vmem:[%s861 + $0x20] sm:$0xff]
        %v2501 = vld [vmem:[%s861 + $0x28] sm:$0xff]
        %v2502 = vld [vmem:[%s861 + $0x30] sm:$0xff]
        %v2503 = vld [vmem:[%s861 + $0x38] sm:$0xff]
        %v2504 = vmul.f32 %v2409, %v2496
        %v2505 = vmul.f32 %v2410, %v2497
        %v2506 = vmul.f32 %v2411, %v2498
        %v2507 = vmul.f32 %v2412, %v2499
        %v2508 = vmul.f32 %v2413, %v2500
        %v2509 = vmul.f32 %v2414, %v2501
        %v2510 = vmul.f32 %v2415, %v2502
        %v2511 = vmul.f32 %v2416, %v2503
        %v2512 = vadd.f32 %v2504, %v2508
        %v2513 = vrot.slane %v2512, 4
        %v2514 = vadd.f32 %v2512, %v2513
        %v2515 = vrot.slane %v2514, 2
        %v2516 = vadd.f32 %v2514, %v2515
        %v2517 = vrot.slane %v2516, 1
        %v2518 = vadd.f32 %v2516, %v2517
        %v2519 = vadd.f32 %v2505, %v2509
        %v2520 = vrot.slane %v2519, 4
        %v2521 = vadd.f32 %v2519, %v2520
        %v2522 = vrot.slane %v2521, 2
        %v2523 = vadd.f32 %v2521, %v2522
        %v2524 = vrot.slane %v2523, 1
        %v2525 = vadd.f32 %v2523, %v2524
        %v2526 = vadd.f32 %v2506, %v2510
        %v2527 = vrot.slane %v2526, 4
        %v2528 = vadd.f32 %v2526, %v2527
        %v2529 = vrot.slane %v2528, 2
        %v2530 = vadd.f32 %v2528, %v2529
        %v2531 = vrot.slane %v2530, 1
        %v2532 = vadd.f32 %v2530, %v2531
        %v2533 = vadd.f32 %v2507, %v2511
        %v2534 = vrot.slane %v2533, 4
        %v2535 = vadd.f32 %v2533, %v2534
        %v2536 = vrot.slane %v2535, 2
        %v2537 = vadd.f32 %v2535, %v2536
        %v2538 = vrot.slane %v2537, 1
        %v2539 = vadd.f32 %v2537, %v2538
        %v2544 = vcombine.low %v2518, %v2525
        %v2545 = vcombine.low %v2532, %v2539
        %v2547 = vunpack.c.l.s4 1966171168
        %v2548 = vunpack.c.0.s8 %v2547
        %v2549 = vlaneseq
        %v2550 = vshrl.u32 %v2549, 7
        %v2551 = vsub.s32 %v2548, %v2550
        %v2552 = vrot.slane %v2544, %v2551
        %v2554 = vunpack.c.l.s4 1966171168
        %v2555 = vunpack.c.0.s8 %v2554
        %v2556 = vlaneseq
        %v2557 = vshrl.u32 %v2556, 7
        %v2558 = vsub.s32 %v2555, %v2557
        %v2559 = vrot.slane %v2545, %v2558
        %v2560 = vcombine.low %v2552, %v2559
        %v2562 = vunpack.c.l.s4 1966171168
        %v2563 = vunpack.c.0.s8 %v2562
        %v2564 = vlaneseq
        %v2565 = vshrl.u32 %v2564, 7
        %v2566 = vsub.s32 %v2563, %v2565
        %v2567 = vrot.slane %v2560, %v2566
        %s2569 = scalar_lea.vmem [#allocation5], 1
        %2570 = vst.msk [vmem:[%s2569] ss:$8 sm:$0xf] %vm2493, %v2567
        %2571 = vst.msk [vmem:[%s2569] ss:$8 sm:$0x0] %vm2493, %v2567
        %v2572 = vld [vmem:[%s1104] sm:$0xff]
        %v2573 = vld [vmem:[%s1104 + $0x8] sm:$0xff]
        %v2574 = vld [vmem:[%s1104 + $0x10] sm:$0xff]
        %v2575 = vld [vmem:[%s1104 + $0x18] sm:$0xff]
        %v2576 = vld [vmem:[%s1104 + $0x20] sm:$0xff]
        %v2577 = vld [vmem:[%s1104 + $0x28] sm:$0xff]
        %v2578 = vld [vmem:[%s1104 + $0x30] sm:$0xff]
        %v2579 = vld [vmem:[%s1104 + $0x38] sm:$0xff]
        %v2580 = vmul.f32 %v2409, %v2572
        %v2581 = vmul.f32 %v2410, %v2573
        %v2582 = vmul.f32 %v2411, %v2574
        %v2583 = vmul.f32 %v2412, %v2575
        %v2584 = vmul.f32 %v2413, %v2576
        %v2585 = vmul.f32 %v2414, %v2577
        %v2586 = vmul.f32 %v2415, %v2578
        %v2587 = vmul.f32 %v2416, %v2579
        %v2588 = vadd.f32 %v2580, %v2584
        %v2589 = vrot.slane %v2588, 4
        %v2590 = vadd.f32 %v2588, %v2589
        %v2591 = vrot.slane %v2590, 2
        %v2592 = vadd.f32 %v2590, %v2591
        %v2593 = vrot.slane %v2592, 1
        %v2594 = vadd.f32 %v2592, %v2593
        %v2595 = vadd.f32 %v2581, %v2585
        %v2596 = vrot.slane %v2595, 4
        %v2597 = vadd.f32 %v2595, %v2596
        %v2598 = vrot.slane %v2597, 2
        %v2599 = vadd.f32 %v2597, %v2598
        %v2600 = vrot.slane %v2599, 1
        %v2601 = vadd.f32 %v2599, %v2600
        %v2602 = vadd.f32 %v2582, %v2586
        %v2603 = vrot.slane %v2602, 4
        %v2604 = vadd.f32 %v2602, %v2603
        %v2605 = vrot.slane %v2604, 2
        %v2606 = vadd.f32 %v2604, %v2605
        %v2607 = vrot.slane %v2606, 1
        %v2608 = vadd.f32 %v2606, %v2607
        %v2609 = vadd.f32 %v2583, %v2587
        %v2610 = vrot.slane %v2609, 4
        %v2611 = vadd.f32 %v2609, %v2610
        %v2612 = vrot.slane %v2611, 2
        %v2613 = vadd.f32 %v2611, %v2612
        %v2614 = vrot.slane %v2613, 1
        %v2615 = vadd.f32 %v2613, %v2614
        %v2620 = vcombine.low %v2594, %v2601
        %v2621 = vcombine.low %v2608, %v2615
        %v2623 = vunpack.c.l.s4 1966171168
        %v2624 = vunpack.c.0.s8 %v2623
        %v2625 = vlaneseq
        %v2626 = vshrl.u32 %v2625, 7
        %v2627 = vsub.s32 %v2624, %v2626
        %v2628 = vrot.slane %v2620, %v2627
        %v2630 = vunpack.c.l.s4 1966171168
        %v2631 = vunpack.c.0.s8 %v2630
        %v2632 = vlaneseq
        %v2633 = vshrl.u32 %v2632, 7
        %v2634 = vsub.s32 %v2631, %v2633
        %v2635 = vrot.slane %v2621, %v2634
        %v2636 = vcombine.low %v2628, %v2635
        %v2638 = vunpack.c.l.s4 1966171168
        %v2639 = vunpack.c.0.s8 %v2638
        %v2640 = vlaneseq
        %v2641 = vshrl.u32 %v2640, 7
        %v2642 = vsub.s32 %v2639, %v2641
        %v2643 = vrot.slane %v2636, %v2642
        %s2645 = scalar_lea.vmem [#allocation5], 2
        %2646 = vst.msk [vmem:[%s2645] ss:$8 sm:$0xf] %vm2493, %v2643
        %2647 = vst.msk [vmem:[%s2645] ss:$8 sm:$0x0] %vm2493, %v2643
        %v2648 = vld [vmem:[%s1347] sm:$0xff]
        %v2649 = vld [vmem:[%s1347 + $0x8] sm:$0xff]
        %v2650 = vld [vmem:[%s1347 + $0x10] sm:$0xff]
        %v2651 = vld [vmem:[%s1347 + $0x18] sm:$0xff]
        %v2652 = vld [vmem:[%s1347 + $0x20] sm:$0xff]
        %v2653 = vld [vmem:[%s1347 + $0x28] sm:$0xff]
        %v2654 = vld [vmem:[%s1347 + $0x30] sm:$0xff]
        %v2655 = vld [vmem:[%s1347 + $0x38] sm:$0xff]
        %v2656 = vmul.f32 %v2409, %v2648
        %v2657 = vmul.f32 %v2410, %v2649
        %v2658 = vmul.f32 %v2411, %v2650
        %v2659 = vmul.f32 %v2412, %v2651
        %v2660 = vmul.f32 %v2413, %v2652
        %v2661 = vmul.f32 %v2414, %v2653
        %v2662 = vmul.f32 %v2415, %v2654
        %v2663 = vmul.f32 %v2416, %v2655
        %v2664 = vadd.f32 %v2656, %v2660
        %v2665 = vrot.slane %v2664, 4
        %v2666 = vadd.f32 %v2664, %v2665
        %v2667 = vrot.slane %v2666, 2
        %v2668 = vadd.f32 %v2666, %v2667
        %v2669 = vrot.slane %v2668, 1
        %v2670 = vadd.f32 %v2668, %v2669
        %v2671 = vadd.f32 %v2657, %v2661
        %v2672 = vrot.slane %v2671, 4
        %v2673 = vadd.f32 %v2671, %v2672
        %v2674 = vrot.slane %v2673, 2
        %v2675 = vadd.f32 %v2673, %v2674
        %v2676 = vrot.slane %v2675, 1
        %v2677 = vadd.f32 %v2675, %v2676
        %v2678 = vadd.f32 %v2658, %v2662
        %v2679 = vrot.slane %v2678, 4
        %v2680 = vadd.f32 %v2678, %v2679
        %v2681 = vrot.slane %v2680, 2
        %v2682 = vadd.f32 %v2680, %v2681
        %v2683 = vrot.slane %v2682, 1
        %v2684 = vadd.f32 %v2682, %v2683
        %v2685 = vadd.f32 %v2659, %v2663
        %v2686 = vrot.slane %v2685, 4
        %v2687 = vadd.f32 %v2685, %v2686
        %v2688 = vrot.slane %v2687, 2
        %v2689 = vadd.f32 %v2687, %v2688
        %v2690 = vrot.slane %v2689, 1
        %v2691 = vadd.f32 %v2689, %v2690
        %v2696 = vcombine.low %v2670, %v2677
        %v2697 = vcombine.low %v2684, %v2691
        %v2699 = vunpack.c.l.s4 1966171168
        %v2700 = vunpack.c.0.s8 %v2699
        %v2701 = vlaneseq
        %v2702 = vshrl.u32 %v2701, 7
        %v2703 = vsub.s32 %v2700, %v2702
        %v2704 = vrot.slane %v2696, %v2703
        %v2706 = vunpack.c.l.s4 1966171168
        %v2707 = vunpack.c.0.s8 %v2706
        %v2708 = vlaneseq
        %v2709 = vshrl.u32 %v2708, 7
        %v2710 = vsub.s32 %v2707, %v2709
        %v2711 = vrot.slane %v2697, %v2710
        %v2712 = vcombine.low %v2704, %v2711
        %v2714 = vunpack.c.l.s4 1966171168
        %v2715 = vunpack.c.0.s8 %v2714
        %v2716 = vlaneseq
        %v2717 = vshrl.u32 %v2716, 7
        %v2718 = vsub.s32 %v2715, %v2717
        %v2719 = vrot.slane %v2712, %v2718
        %s2721 = scalar_lea.vmem [#allocation5], 3
        %2722 = vst.msk [vmem:[%s2721] ss:$8 sm:$0xf] %vm2493, %v2719
        %2723 = vst.msk [vmem:[%s2721] ss:$8 sm:$0x0] %vm2493, %v2719
        %v2724 = vld [vmem:[%s1590] sm:$0xff]
        %v2725 = vld [vmem:[%s1590 + $0x8] sm:$0xff]
        %v2726 = vld [vmem:[%s1590 + $0x10] sm:$0xff]
        %v2727 = vld [vmem:[%s1590 + $0x18] sm:$0xff]
        %v2728 = vld [vmem:[%s1590 + $0x20] sm:$0xff]
        %v2729 = vld [vmem:[%s1590 + $0x28] sm:$0xff]
        %v2730 = vld [vmem:[%s1590 + $0x30] sm:$0xff]
        %v2731 = vld [vmem:[%s1590 + $0x38] sm:$0xff]
        %v2732 = vmul.f32 %v2409, %v2724
        %v2733 = vmul.f32 %v2410, %v2725
        %v2734 = vmul.f32 %v2411, %v2726
        %v2735 = vmul.f32 %v2412, %v2727
        %v2736 = vmul.f32 %v2413, %v2728
        %v2737 = vmul.f32 %v2414, %v2729
        %v2738 = vmul.f32 %v2415, %v2730
        %v2739 = vmul.f32 %v2416, %v2731
        %v2740 = vadd.f32 %v2732, %v2736
        %v2741 = vrot.slane %v2740, 4
        %v2742 = vadd.f32 %v2740, %v2741
        %v2743 = vrot.slane %v2742, 2
        %v2744 = vadd.f32 %v2742, %v2743
        %v2745 = vrot.slane %v2744, 1
        %v2746 = vadd.f32 %v2744, %v2745
        %v2747 = vadd.f32 %v2733, %v2737
        %v2748 = vrot.slane %v2747, 4
        %v2749 = vadd.f32 %v2747, %v2748
        %v2750 = vrot.slane %v2749, 2
        %v2751 = vadd.f32 %v2749, %v2750
        %v2752 = vrot.slane %v2751, 1
        %v2753 = vadd.f32 %v2751, %v2752
        %v2754 = vadd.f32 %v2734, %v2738
        %v2755 = vrot.slane %v2754, 4
        %v2756 = vadd.f32 %v2754, %v2755
        %v2757 = vrot.slane %v2756, 2
        %v2758 = vadd.f32 %v2756, %v2757
        %v2759 = vrot.slane %v2758, 1
        %v2760 = vadd.f32 %v2758, %v2759
        %v2761 = vadd.f32 %v2735, %v2739
        %v2762 = vrot.slane %v2761, 4
        %v2763 = vadd.f32 %v2761, %v2762
        %v2764 = vrot.slane %v2763, 2
        %v2765 = vadd.f32 %v2763, %v2764
        %v2766 = vrot.slane %v2765, 1
        %v2767 = vadd.f32 %v2765, %v2766
        %v2772 = vcombine.low %v2746, %v2753
        %v2773 = vcombine.low %v2760, %v2767
        %v2775 = vunpack.c.l.s4 1966171168
        %v2776 = vunpack.c.0.s8 %v2775
        %v2777 = vlaneseq
        %v2778 = vshrl.u32 %v2777, 7
        %v2779 = vsub.s32 %v2776, %v2778
        %v2780 = vrot.slane %v2772, %v2779
        %v2782 = vunpack.c.l.s4 1966171168
        %v2783 = vunpack.c.0.s8 %v2782
        %v2784 = vlaneseq
        %v2785 = vshrl.u32 %v2784, 7
        %v2786 = vsub.s32 %v2783, %v2785
        %v2787 = vrot.slane %v2773, %v2786
        %v2788 = vcombine.low %v2780, %v2787
        %v2790 = vunpack.c.l.s4 1966171168
        %v2791 = vunpack.c.0.s8 %v2790
        %v2792 = vlaneseq
        %v2793 = vshrl.u32 %v2792, 7
        %v2794 = vsub.s32 %v2791, %v2793
        %v2795 = vrot.slane %v2788, %v2794
        %s2797 = scalar_lea.vmem [#allocation5], 4
        %2798 = vst.msk [vmem:[%s2797] ss:$8 sm:$0xf] %vm2493, %v2795
        %2799 = vst.msk [vmem:[%s2797] ss:$8 sm:$0x0] %vm2493, %v2795
        %v2800 = vld [vmem:[%s1833] sm:$0xff]
        %v2801 = vld [vmem:[%s1833 + $0x8] sm:$0xff]
        %v2802 = vld [vmem:[%s1833 + $0x10] sm:$0xff]
        %v2803 = vld [vmem:[%s1833 + $0x18] sm:$0xff]
        %v2804 = vld [vmem:[%s1833 + $0x20] sm:$0xff]
        %v2805 = vld [vmem:[%s1833 + $0x28] sm:$0xff]
        %v2806 = vld [vmem:[%s1833 + $0x30] sm:$0xff]
        %v2807 = vld [vmem:[%s1833 + $0x38] sm:$0xff]
        %v2808 = vmul.f32 %v2409, %v2800
        %v2809 = vmul.f32 %v2410, %v2801
        %v2810 = vmul.f32 %v2411, %v2802
        %v2811 = vmul.f32 %v2412, %v2803
        %v2812 = vmul.f32 %v2413, %v2804
        %v2813 = vmul.f32 %v2414, %v2805
        %v2814 = vmul.f32 %v2415, %v2806
        %v2815 = vmul.f32 %v2416, %v2807
        %v2816 = vadd.f32 %v2808, %v2812
        %v2817 = vrot.slane %v2816, 4
        %v2818 = vadd.f32 %v2816, %v2817
        %v2819 = vrot.slane %v2818, 2
        %v2820 = vadd.f32 %v2818, %v2819
        %v2821 = vrot.slane %v2820, 1
        %v2822 = vadd.f32 %v2820, %v2821
        %v2823 = vadd.f32 %v2809, %v2813
        %v2824 = vrot.slane %v2823, 4
        %v2825 = vadd.f32 %v2823, %v2824
        %v2826 = vrot.slane %v2825, 2
        %v2827 = vadd.f32 %v2825, %v2826
        %v2828 = vrot.slane %v2827, 1
        %v2829 = vadd.f32 %v2827, %v2828
        %v2830 = vadd.f32 %v2810, %v2814
        %v2831 = vrot.slane %v2830, 4
        %v2832 = vadd.f32 %v2830, %v2831
        %v2833 = vrot.slane %v2832, 2
        %v2834 = vadd.f32 %v2832, %v2833
        %v2835 = vrot.slane %v2834, 1
        %v2836 = vadd.f32 %v2834, %v2835
        %v2837 = vadd.f32 %v2811, %v2815
        %v2838 = vrot.slane %v2837, 4
        %v2839 = vadd.f32 %v2837, %v2838
        %v2840 = vrot.slane %v2839, 2
        %v2841 = vadd.f32 %v2839, %v2840
        %v2842 = vrot.slane %v2841, 1
        %v2843 = vadd.f32 %v2841, %v2842
        %v2848 = vcombine.low %v2822, %v2829
        %v2849 = vcombine.low %v2836, %v2843
        %v2851 = vunpack.c.l.s4 1966171168
        %v2852 = vunpack.c.0.s8 %v2851
        %v2853 = vlaneseq
        %v2854 = vshrl.u32 %v2853, 7
        %v2855 = vsub.s32 %v2852, %v2854
        %v2856 = vrot.slane %v2848, %v2855
        %v2858 = vunpack.c.l.s4 1966171168
        %v2859 = vunpack.c.0.s8 %v2858
        %v2860 = vlaneseq
        %v2861 = vshrl.u32 %v2860, 7
        %v2862 = vsub.s32 %v2859, %v2861
        %v2863 = vrot.slane %v2849, %v2862
        %v2864 = vcombine.low %v2856, %v2863
        %v2866 = vunpack.c.l.s4 1966171168
        %v2867 = vunpack.c.0.s8 %v2866
        %v2868 = vlaneseq
        %v2869 = vshrl.u32 %v2868, 7
        %v2870 = vsub.s32 %v2867, %v2869
        %v2871 = vrot.slane %v2864, %v2870
        %s2873 = scalar_lea.vmem [#allocation5], 5
        %2874 = vst.msk [vmem:[%s2873] ss:$8 sm:$0xf] %vm2493, %v2871
        %2875 = vst.msk [vmem:[%s2873] ss:$8 sm:$0x0] %vm2493, %v2871
        %v2876 = vld [vmem:[%s2076] sm:$0xff]
        %v2877 = vld [vmem:[%s2076 + $0x8] sm:$0xff]
        %v2878 = vld [vmem:[%s2076 + $0x10] sm:$0xff]
        %v2879 = vld [vmem:[%s2076 + $0x18] sm:$0xff]
        %v2880 = vld [vmem:[%s2076 + $0x20] sm:$0xff]
        %v2881 = vld [vmem:[%s2076 + $0x28] sm:$0xff]
        %v2882 = vld [vmem:[%s2076 + $0x30] sm:$0xff]
        %v2883 = vld [vmem:[%s2076 + $0x38] sm:$0xff]
        %v2884 = vmul.f32 %v2409, %v2876
        %v2885 = vmul.f32 %v2410, %v2877
        %v2886 = vmul.f32 %v2411, %v2878
        %v2887 = vmul.f32 %v2412, %v2879
        %v2888 = vmul.f32 %v2413, %v2880
        %v2889 = vmul.f32 %v2414, %v2881
        %v2890 = vmul.f32 %v2415, %v2882
        %v2891 = vmul.f32 %v2416, %v2883
        %v2892 = vadd.f32 %v2884, %v2888
        %v2893 = vrot.slane %v2892, 4
        %v2894 = vadd.f32 %v2892, %v2893
        %v2895 = vrot.slane %v2894, 2
        %v2896 = vadd.f32 %v2894, %v2895
        %v2897 = vrot.slane %v2896, 1
        %v2898 = vadd.f32 %v2896, %v2897
        %v2899 = vadd.f32 %v2885, %v2889
        %v2900 = vrot.slane %v2899, 4
        %v2901 = vadd.f32 %v2899, %v2900
        %v2902 = vrot.slane %v2901, 2
        %v2903 = vadd.f32 %v2901, %v2902
        %v2904 = vrot.slane %v2903, 1
        %v2905 = vadd.f32 %v2903, %v2904
        %v2906 = vadd.f32 %v2886, %v2890
        %v2907 = vrot.slane %v2906, 4
        %v2908 = vadd.f32 %v2906, %v2907
        %v2909 = vrot.slane %v2908, 2
        %v2910 = vadd.f32 %v2908, %v2909
        %v2911 = vrot.slane %v2910, 1
        %v2912 = vadd.f32 %v2910, %v2911
        %v2913 = vadd.f32 %v2887, %v2891
        %v2914 = vrot.slane %v2913, 4
        %v2915 = vadd.f32 %v2913, %v2914
        %v2916 = vrot.slane %v2915, 2
        %v2917 = vadd.f32 %v2915, %v2916
        %v2918 = vrot.slane %v2917, 1
        %v2919 = vadd.f32 %v2917, %v2918
        %v2924 = vcombine.low %v2898, %v2905
        %v2925 = vcombine.low %v2912, %v2919
        %v2927 = vunpack.c.l.s4 1966171168
        %v2928 = vunpack.c.0.s8 %v2927
        %v2929 = vlaneseq
        %v2930 = vshrl.u32 %v2929, 7
        %v2931 = vsub.s32 %v2928, %v2930
        %v2932 = vrot.slane %v2924, %v2931
        %v2934 = vunpack.c.l.s4 1966171168
        %v2935 = vunpack.c.0.s8 %v2934
        %v2936 = vlaneseq
        %v2937 = vshrl.u32 %v2936, 7
        %v2938 = vsub.s32 %v2935, %v2937
        %v2939 = vrot.slane %v2925, %v2938
        %v2940 = vcombine.low %v2932, %v2939
        %v2942 = vunpack.c.l.s4 1966171168
        %v2943 = vunpack.c.0.s8 %v2942
        %v2944 = vlaneseq
        %v2945 = vshrl.u32 %v2944, 7
        %v2946 = vsub.s32 %v2943, %v2945
        %v2947 = vrot.slane %v2940, %v2946
        %s2949 = scalar_lea.vmem [#allocation5], 6
        %2950 = vst.msk [vmem:[%s2949] ss:$8 sm:$0xf] %vm2493, %v2947
        %2951 = vst.msk [vmem:[%s2949] ss:$8 sm:$0x0] %vm2493, %v2947
        %v2952 = vld [vmem:[%s2319] sm:$0xff]
        %v2953 = vld [vmem:[%s2319 + $0x8] sm:$0xff]
        %v2954 = vld [vmem:[%s2319 + $0x10] sm:$0xff]
        %v2955 = vld [vmem:[%s2319 + $0x18] sm:$0xff]
        %v2956 = vld [vmem:[%s2319 + $0x20] sm:$0xff]
        %v2957 = vld [vmem:[%s2319 + $0x28] sm:$0xff]
        %v2958 = vld [vmem:[%s2319 + $0x30] sm:$0xff]
        %v2959 = vld [vmem:[%s2319 + $0x38] sm:$0xff]
        %v2960 = vmul.f32 %v2409, %v2952
        %v2961 = vmul.f32 %v2410, %v2953
        %v2962 = vmul.f32 %v2411, %v2954
        %v2963 = vmul.f32 %v2412, %v2955
        %v2964 = vmul.f32 %v2413, %v2956
        %v2965 = vmul.f32 %v2414, %v2957
        %v2966 = vmul.f32 %v2415, %v2958
        %v2967 = vmul.f32 %v2416, %v2959
        %v2968 = vadd.f32 %v2960, %v2964
        %v2969 = vrot.slane %v2968, 4
        %v2970 = vadd.f32 %v2968, %v2969
        %v2971 = vrot.slane %v2970, 2
        %v2972 = vadd.f32 %v2970, %v2971
        %v2973 = vrot.slane %v2972, 1
        %v2974 = vadd.f32 %v2972, %v2973
        %v2975 = vadd.f32 %v2961, %v2965
        %v2976 = vrot.slane %v2975, 4
        %v2977 = vadd.f32 %v2975, %v2976
        %v2978 = vrot.slane %v2977, 2
        %v2979 = vadd.f32 %v2977, %v2978
        %v2980 = vrot.slane %v2979, 1
        %v2981 = vadd.f32 %v2979, %v2980
        %v2982 = vadd.f32 %v2962, %v2966
        %v2983 = vrot.slane %v2982, 4
        %v2984 = vadd.f32 %v2982, %v2983
        %v2985 = vrot.slane %v2984, 2
        %v2986 = vadd.f32 %v2984, %v2985
        %v2987 = vrot.slane %v2986, 1
        %v2988 = vadd.f32 %v2986, %v2987
        %v2989 = vadd.f32 %v2963, %v2967
        %v2990 = vrot.slane %v2989, 4
        %v2991 = vadd.f32 %v2989, %v2990
        %v2992 = vrot.slane %v2991, 2
        %v2993 = vadd.f32 %v2991, %v2992
        %v2994 = vrot.slane %v2993, 1
        %v2995 = vadd.f32 %v2993, %v2994
        %v3000 = vcombine.low %v2974, %v2981
        %v3001 = vcombine.low %v2988, %v2995
        %v3003 = vunpack.c.l.s4 1966171168
        %v3004 = vunpack.c.0.s8 %v3003
        %v3005 = vlaneseq
        %v3006 = vshrl.u32 %v3005, 7
        %v3007 = vsub.s32 %v3004, %v3006
        %v3008 = vrot.slane %v3000, %v3007
        %v3010 = vunpack.c.l.s4 1966171168
        %v3011 = vunpack.c.0.s8 %v3010
        %v3012 = vlaneseq
        %v3013 = vshrl.u32 %v3012, 7
        %v3014 = vsub.s32 %v3011, %v3013
        %v3015 = vrot.slane %v3001, %v3014
        %v3016 = vcombine.low %v3008, %v3015
        %v3018 = vunpack.c.l.s4 1966171168
        %v3019 = vunpack.c.0.s8 %v3018
        %v3020 = vlaneseq
        %v3021 = vshrl.u32 %v3020, 7
        %v3022 = vsub.s32 %v3019, %v3021
        %v3023 = vrot.slane %v3016, %v3022
        %s3025 = scalar_lea.vmem [#allocation5], 7
        %3026 = vst.msk [vmem:[%s3025] ss:$8 sm:$0xf] %vm2493, %v3023
        %3027 = vst.msk [vmem:[%s3025] ss:$8 sm:$0x0] %vm2493, %v3023
        %v3028 = vld [vmem:[#allocation5] sm:$0xff]
        %v3029 = vld [vmem:[#allocation5 + $0x8] sm:$0xff]
        %v3030 = vld [vmem:[#allocation5 + $0x10] sm:$0xff]
        %v3031 = vld [vmem:[#allocation5 + $0x18] sm:$0xff]
        %v3032 = vmul.f32 %v3028, %v429
        %v3033 = vmul.f32 %v3029, %v430
        %v3034 = vmul.f32 %v3030, %v431
        %v3035 = vmul.f32 %v3031, %v432
        %v3036 = vmul.f32 %v3032, 1.442695
        %v3037 = vpow.pop %v3036
        %v3038 = vmul.f32 %v3033, 1.442695
        %v3039 = vpow.pop %v3038
        %v3040 = vmul.f32 %v3034, 1.442695
        %v3041 = vpow.pop %v3040
        %v3042 = vmul.f32 %v3035, 1.442695
        %v3043 = vpow.pop %v3042
        %v3044 = vrot.slane %v3037, 4
        %v3045 = vadd.f32 %v3037, %v3044
        %v3046 = vrot.slane %v3045, 2
        %v3047 = vadd.f32 %v3045, %v3046
        %v3048 = vrot.slane %v3047, 1
        %v3049 = vadd.f32 %v3047, %v3048
        %v3050 = vrot.slane %v3039, 4
        %v3051 = vadd.f32 %v3039, %v3050
        %v3052 = vrot.slane %v3051, 2
        %v3053 = vadd.f32 %v3051, %v3052
        %v3054 = vrot.slane %v3053, 1
        %v3055 = vadd.f32 %v3053, %v3054
        %v3056 = vrot.slane %v3041, 4
        %v3057 = vadd.f32 %v3041, %v3056
        %v3058 = vrot.slane %v3057, 2
        %v3059 = vadd.f32 %v3057, %v3058
        %v3060 = vrot.slane %v3059, 1
        %v3061 = vadd.f32 %v3059, %v3060
        %v3062 = vrot.slane %v3043, 4
        %v3063 = vadd.f32 %v3043, %v3062
        %v3064 = vrot.slane %v3063, 2
        %v3065 = vadd.f32 %v3063, %v3064
        %v3066 = vrot.slane %v3065, 1
        %v3067 = vadd.f32 %v3065, %v3066
        %s3068 = sld [smem:[#allocation16]]
        %v3069 = vrcp.pop %v3049
        %v3070 = vrcp.pop %v3055
        %v3071 = vrcp.pop %v3061
        %v3072 = vrcp.pop %v3067
        %v3073 = vstv %s3068
        %v3074 = vmul.f32 %v3073, %v3069
        %v3075 = vmul.f32 %v3073, %v3070
        %v3076 = vmul.f32 %v3073, %v3071
        %v3077 = vmul.f32 %v3073, %v3072
        %v3078 = vmul.f32 %v3074, %v3037
        %v3079 = vmul.f32 %v3075, %v3039
        %v3080 = vmul.f32 %v3076, %v3041
        %v3081 = vmul.f32 %v3077, %v3043
        %v3082 = vadd.f32 %v3078, 0.0
        %v3083 = vadd.f32 %v3079, 0.0
        %v3084 = vadd.f32 %v3080, 0.0
        %v3085 = vadd.f32 %v3081, 0.0
        %v3086 = vld [vmem:[%s780] sm:$0xff]
        %v3087 = vld [vmem:[%s780 + $0x8] sm:$0xff]
        %v3088 = vld [vmem:[%s780 + $0x10] sm:$0xff]
        %v3089 = vld [vmem:[%s780 + $0x18] sm:$0xff]
        %v3090 = vld [vmem:[%s780 + $0x20] sm:$0xff]
        %v3091 = vld [vmem:[%s780 + $0x28] sm:$0xff]
        %v3092 = vld [vmem:[%s780 + $0x30] sm:$0xff]
        %v3093 = vld [vmem:[%s780 + $0x38] sm:$0xff]
        %v3094 = vld [vmem:[#allocation3] sm:$0xff]
        %v3095 = vld [vmem:[#allocation3 + $0x8] sm:$0xff]
        %v3096 = vld [vmem:[#allocation3 + $0x10] sm:$0xff]
        %v3097 = vld [vmem:[#allocation3 + $0x18] sm:$0xff]
        %v3098 = vld [vmem:[#allocation3 + $0x20] sm:$0xff]
        %v3099 = vld [vmem:[#allocation3 + $0x28] sm:$0xff]
        %v3100 = vld [vmem:[#allocation3 + $0x30] sm:$0xff]
        %v3101 = vld [vmem:[#allocation3 + $0x38] sm:$0xff]
        %v3102 = vmul.f32 %v3086, %v3094
        %v3103 = vmul.f32 %v3087, %v3095
        %v3104 = vmul.f32 %v3088, %v3096
        %v3105 = vmul.f32 %v3089, %v3097
        %v3106 = vmul.f32 %v3090, %v3098
        %v3107 = vmul.f32 %v3091, %v3099
        %v3108 = vmul.f32 %v3092, %v3100
        %v3109 = vmul.f32 %v3093, %v3101
        %v3110 = vadd.f32 %v3102, %v3106
        %v3111 = vrot.slane %v3110, 4
        %v3112 = vadd.f32 %v3110, %v3111
        %v3113 = vrot.slane %v3112, 2
        %v3114 = vadd.f32 %v3112, %v3113
        %v3115 = vrot.slane %v3114, 1
        %v3116 = vadd.f32 %v3114, %v3115
        %v3117 = vadd.f32 %v3103, %v3107
        %v3118 = vrot.slane %v3117, 4
        %v3119 = vadd.f32 %v3117, %v3118
        %v3120 = vrot.slane %v3119, 2
        %v3121 = vadd.f32 %v3119, %v3120
        %v3122 = vrot.slane %v3121, 1
        %v3123 = vadd.f32 %v3121, %v3122
        %v3124 = vadd.f32 %v3104, %v3108
        %v3125 = vrot.slane %v3124, 4
        %v3126 = vadd.f32 %v3124, %v3125
        %v3127 = vrot.slane %v3126, 2
        %v3128 = vadd.f32 %v3126, %v3127
        %v3129 = vrot.slane %v3128, 1
        %v3130 = vadd.f32 %v3128, %v3129
        %v3131 = vadd.f32 %v3105, %v3109
        %v3132 = vrot.slane %v3131, 4
        %v3133 = vadd.f32 %v3131, %v3132
        %v3134 = vrot.slane %v3133, 2
        %v3135 = vadd.f32 %v3133, %v3134
        %v3136 = vrot.slane %v3135, 1
        %v3137 = vadd.f32 %v3135, %v3136
        %v3142 = vcombine.low %v3116, %v3123
        %v3143 = vcombine.low %v3130, %v3137
        %v3145 = vunpack.c.l.s4 1966171168
        %v3146 = vunpack.c.0.s8 %v3145
        %v3147 = vlaneseq
        %v3148 = vshrl.u32 %v3147, 7
        %v3149 = vsub.s32 %v3146, %v3148
        %v3150 = vrot.slane %v3142, %v3149
        %v3152 = vunpack.c.l.s4 1966171168
        %v3153 = vunpack.c.0.s8 %v3152
        %v3154 = vlaneseq
        %v3155 = vshrl.u32 %v3154, 7
        %v3156 = vsub.s32 %v3153, %v3155
        %v3157 = vrot.slane %v3143, %v3156
        %v3158 = vcombine.low %v3150, %v3157
        %v3160 = vunpack.c.l.s4 1966171168
        %v3161 = vunpack.c.0.s8 %v3160
        %v3162 = vlaneseq
        %v3163 = vshrl.u32 %v3162, 7
        %v3164 = vsub.s32 %v3161, %v3163
        %v3165 = vrot.slane %v3158, %v3164
        %3167 = vst.msk [vmem:[#allocation5] ss:$8 sm:$0xf] %vm2493, %v3165
        %3168 = vst.msk [vmem:[#allocation5] ss:$8 sm:$0x0] %vm2493, %v3165
        %v3169 = vld [vmem:[%s861] sm:$0xff]
        %v3170 = vld [vmem:[%s861 + $0x8] sm:$0xff]
        %v3171 = vld [vmem:[%s861 + $0x10] sm:$0xff]
        %v3172 = vld [vmem:[%s861 + $0x18] sm:$0xff]
        %v3173 = vld [vmem:[%s861 + $0x20] sm:$0xff]
        %v3174 = vld [vmem:[%s861 + $0x28] sm:$0xff]
        %v3175 = vld [vmem:[%s861 + $0x30] sm:$0xff]
        %v3176 = vld [vmem:[%s861 + $0x38] sm:$0xff]
        %v3177 = vmul.f32 %v3086, %v3169
        %v3178 = vmul.f32 %v3087, %v3170
        %v3179 = vmul.f32 %v3088, %v3171
        %v3180 = vmul.f32 %v3089, %v3172
        %v3181 = vmul.f32 %v3090, %v3173
        %v3182 = vmul.f32 %v3091, %v3174
        %v3183 = vmul.f32 %v3092, %v3175
        %v3184 = vmul.f32 %v3093, %v3176
        %v3185 = vadd.f32 %v3177, %v3181
        %v3186 = vrot.slane %v3185, 4
        %v3187 = vadd.f32 %v3185, %v3186
        %v3188 = vrot.slane %v3187, 2
        %v3189 = vadd.f32 %v3187, %v3188
        %v3190 = vrot.slane %v3189, 1
        %v3191 = vadd.f32 %v3189, %v3190
        %v3192 = vadd.f32 %v3178, %v3182
        %v3193 = vrot.slane %v3192, 4
        %v3194 = vadd.f32 %v3192, %v3193
        %v3195 = vrot.slane %v3194, 2
        %v3196 = vadd.f32 %v3194, %v3195
        %v3197 = vrot.slane %v3196, 1
        %v3198 = vadd.f32 %v3196, %v3197
        %v3199 = vadd.f32 %v3179, %v3183
        %v3200 = vrot.slane %v3199, 4
        %v3201 = vadd.f32 %v3199, %v3200
        %v3202 = vrot.slane %v3201, 2
        %v3203 = vadd.f32 %v3201, %v3202
        %v3204 = vrot.slane %v3203, 1
        %v3205 = vadd.f32 %v3203, %v3204
        %v3206 = vadd.f32 %v3180, %v3184
        %v3207 = vrot.slane %v3206, 4
        %v3208 = vadd.f32 %v3206, %v3207
        %v3209 = vrot.slane %v3208, 2
        %v3210 = vadd.f32 %v3208, %v3209
        %v3211 = vrot.slane %v3210, 1
        %v3212 = vadd.f32 %v3210, %v3211
        %v3217 = vcombine.low %v3191, %v3198
        %v3218 = vcombine.low %v3205, %v3212
        %v3220 = vunpack.c.l.s4 1966171168
        %v3221 = vunpack.c.0.s8 %v3220
        %v3222 = vlaneseq
        %v3223 = vshrl.u32 %v3222, 7
        %v3224 = vsub.s32 %v3221, %v3223
        %v3225 = vrot.slane %v3217, %v3224
        %v3227 = vunpack.c.l.s4 1966171168
        %v3228 = vunpack.c.0.s8 %v3227
        %v3229 = vlaneseq
        %v3230 = vshrl.u32 %v3229, 7
        %v3231 = vsub.s32 %v3228, %v3230
        %v3232 = vrot.slane %v3218, %v3231
        %v3233 = vcombine.low %v3225, %v3232
        %v3235 = vunpack.c.l.s4 1966171168
        %v3236 = vunpack.c.0.s8 %v3235
        %v3237 = vlaneseq
        %v3238 = vshrl.u32 %v3237, 7
        %v3239 = vsub.s32 %v3236, %v3238
        %v3240 = vrot.slane %v3233, %v3239
        %3242 = vst.msk [vmem:[%s2569] ss:$8 sm:$0xf] %vm2493, %v3240
        %3243 = vst.msk [vmem:[%s2569] ss:$8 sm:$0x0] %vm2493, %v3240
        %v3244 = vld [vmem:[%s1104] sm:$0xff]
        %v3245 = vld [vmem:[%s1104 + $0x8] sm:$0xff]
        %v3246 = vld [vmem:[%s1104 + $0x10] sm:$0xff]
        %v3247 = vld [vmem:[%s1104 + $0x18] sm:$0xff]
        %v3248 = vld [vmem:[%s1104 + $0x20] sm:$0xff]
        %v3249 = vld [vmem:[%s1104 + $0x28] sm:$0xff]
        %v3250 = vld [vmem:[%s1104 + $0x30] sm:$0xff]
        %v3251 = vld [vmem:[%s1104 + $0x38] sm:$0xff]
        %v3252 = vmul.f32 %v3086, %v3244
        %v3253 = vmul.f32 %v3087, %v3245
        %v3254 = vmul.f32 %v3088, %v3246
        %v3255 = vmul.f32 %v3089, %v3247
        %v3256 = vmul.f32 %v3090, %v3248
        %v3257 = vmul.f32 %v3091, %v3249
        %v3258 = vmul.f32 %v3092, %v3250
        %v3259 = vmul.f32 %v3093, %v3251
        %v3260 = vadd.f32 %v3252, %v3256
        %v3261 = vrot.slane %v3260, 4
        %v3262 = vadd.f32 %v3260, %v3261
        %v3263 = vrot.slane %v3262, 2
        %v3264 = vadd.f32 %v3262, %v3263
        %v3265 = vrot.slane %v3264, 1
        %v3266 = vadd.f32 %v3264, %v3265
        %v3267 = vadd.f32 %v3253, %v3257
        %v3268 = vrot.slane %v3267, 4
        %v3269 = vadd.f32 %v3267, %v3268
        %v3270 = vrot.slane %v3269, 2
        %v3271 = vadd.f32 %v3269, %v3270
        %v3272 = vrot.slane %v3271, 1
        %v3273 = vadd.f32 %v3271, %v3272
        %v3274 = vadd.f32 %v3254, %v3258
        %v3275 = vrot.slane %v3274, 4
        %v3276 = vadd.f32 %v3274, %v3275
        %v3277 = vrot.slane %v3276, 2
        %v3278 = vadd.f32 %v3276, %v3277
        %v3279 = vrot.slane %v3278, 1
        %v3280 = vadd.f32 %v3278, %v3279
        %v3281 = vadd.f32 %v3255, %v3259
        %v3282 = vrot.slane %v3281, 4
        %v3283 = vadd.f32 %v3281, %v3282
        %v3284 = vrot.slane %v3283, 2
        %v3285 = vadd.f32 %v3283, %v3284
        %v3286 = vrot.slane %v3285, 1
        %v3287 = vadd.f32 %v3285, %v3286
        %v3292 = vcombine.low %v3266, %v3273
        %v3293 = vcombine.low %v3280, %v3287
        %v3295 = vunpack.c.l.s4 1966171168
        %v3296 = vunpack.c.0.s8 %v3295
        %v3297 = vlaneseq
        %v3298 = vshrl.u32 %v3297, 7
        %v3299 = vsub.s32 %v3296, %v3298
        %v3300 = vrot.slane %v3292, %v3299
        %v3302 = vunpack.c.l.s4 1966171168
        %v3303 = vunpack.c.0.s8 %v3302
        %v3304 = vlaneseq
        %v3305 = vshrl.u32 %v3304, 7
        %v3306 = vsub.s32 %v3303, %v3305
        %v3307 = vrot.slane %v3293, %v3306
        %v3308 = vcombine.low %v3300, %v3307
        %v3310 = vunpack.c.l.s4 1966171168
        %v3311 = vunpack.c.0.s8 %v3310
        %v3312 = vlaneseq
        %v3313 = vshrl.u32 %v3312, 7
        %v3314 = vsub.s32 %v3311, %v3313
        %v3315 = vrot.slane %v3308, %v3314
        %3317 = vst.msk [vmem:[%s2645] ss:$8 sm:$0xf] %vm2493, %v3315
        %3318 = vst.msk [vmem:[%s2645] ss:$8 sm:$0x0] %vm2493, %v3315
        %v3319 = vld [vmem:[%s1347] sm:$0xff]
        %v3320 = vld [vmem:[%s1347 + $0x8] sm:$0xff]
        %v3321 = vld [vmem:[%s1347 + $0x10] sm:$0xff]
        %v3322 = vld [vmem:[%s1347 + $0x18] sm:$0xff]
        %v3323 = vld [vmem:[%s1347 + $0x20] sm:$0xff]
        %v3324 = vld [vmem:[%s1347 + $0x28] sm:$0xff]
        %v3325 = vld [vmem:[%s1347 + $0x30] sm:$0xff]
        %v3326 = vld [vmem:[%s1347 + $0x38] sm:$0xff]
        %v3327 = vmul.f32 %v3086, %v3319
        %v3328 = vmul.f32 %v3087, %v3320
        %v3329 = vmul.f32 %v3088, %v3321
        %v3330 = vmul.f32 %v3089, %v3322
        %v3331 = vmul.f32 %v3090, %v3323
        %v3332 = vmul.f32 %v3091, %v3324
        %v3333 = vmul.f32 %v3092, %v3325
        %v3334 = vmul.f32 %v3093, %v3326
        %v3335 = vadd.f32 %v3327, %v3331
        %v3336 = vrot.slane %v3335, 4
        %v3337 = vadd.f32 %v3335, %v3336
        %v3338 = vrot.slane %v3337, 2
        %v3339 = vadd.f32 %v3337, %v3338
        %v3340 = vrot.slane %v3339, 1
        %v3341 = vadd.f32 %v3339, %v3340
        %v3342 = vadd.f32 %v3328, %v3332
        %v3343 = vrot.slane %v3342, 4
        %v3344 = vadd.f32 %v3342, %v3343
        %v3345 = vrot.slane %v3344, 2
        %v3346 = vadd.f32 %v3344, %v3345
        %v3347 = vrot.slane %v3346, 1
        %v3348 = vadd.f32 %v3346, %v3347
        %v3349 = vadd.f32 %v3329, %v3333
        %v3350 = vrot.slane %v3349, 4
        %v3351 = vadd.f32 %v3349, %v3350
        %v3352 = vrot.slane %v3351, 2
        %v3353 = vadd.f32 %v3351, %v3352
        %v3354 = vrot.slane %v3353, 1
        %v3355 = vadd.f32 %v3353, %v3354
        %v3356 = vadd.f32 %v3330, %v3334
        %v3357 = vrot.slane %v3356, 4
        %v3358 = vadd.f32 %v3356, %v3357
        %v3359 = vrot.slane %v3358, 2
        %v3360 = vadd.f32 %v3358, %v3359
        %v3361 = vrot.slane %v3360, 1
        %v3362 = vadd.f32 %v3360, %v3361
        %v3367 = vcombine.low %v3341, %v3348
        %v3368 = vcombine.low %v3355, %v3362
        %v3370 = vunpack.c.l.s4 1966171168
        %v3371 = vunpack.c.0.s8 %v3370
        %v3372 = vlaneseq
        %v3373 = vshrl.u32 %v3372, 7
        %v3374 = vsub.s32 %v3371, %v3373
        %v3375 = vrot.slane %v3367, %v3374
        %v3377 = vunpack.c.l.s4 1966171168
        %v3378 = vunpack.c.0.s8 %v3377
        %v3379 = vlaneseq
        %v3380 = vshrl.u32 %v3379, 7
        %v3381 = vsub.s32 %v3378, %v3380
        %v3382 = vrot.slane %v3368, %v3381
        %v3383 = vcombine.low %v3375, %v3382
        %v3385 = vunpack.c.l.s4 1966171168
        %v3386 = vunpack.c.0.s8 %v3385
        %v3387 = vlaneseq
        %v3388 = vshrl.u32 %v3387, 7
        %v3389 = vsub.s32 %v3386, %v3388
        %v3390 = vrot.slane %v3383, %v3389
        %3392 = vst.msk [vmem:[%s2721] ss:$8 sm:$0xf] %vm2493, %v3390
        %3393 = vst.msk [vmem:[%s2721] ss:$8 sm:$0x0] %vm2493, %v3390
        %v3394 = vld [vmem:[%s1590] sm:$0xff]
        %v3395 = vld [vmem:[%s1590 + $0x8] sm:$0xff]
        %v3396 = vld [vmem:[%s1590 + $0x10] sm:$0xff]
        %v3397 = vld [vmem:[%s1590 + $0x18] sm:$0xff]
        %v3398 = vld [vmem:[%s1590 + $0x20] sm:$0xff]
        %v3399 = vld [vmem:[%s1590 + $0x28] sm:$0xff]
        %v3400 = vld [vmem:[%s1590 + $0x30] sm:$0xff]
        %v3401 = vld [vmem:[%s1590 + $0x38] sm:$0xff]
        %v3402 = vmul.f32 %v3086, %v3394
        %v3403 = vmul.f32 %v3087, %v3395
        %v3404 = vmul.f32 %v3088, %v3396
        %v3405 = vmul.f32 %v3089, %v3397
        %v3406 = vmul.f32 %v3090, %v3398
        %v3407 = vmul.f32 %v3091, %v3399
        %v3408 = vmul.f32 %v3092, %v3400
        %v3409 = vmul.f32 %v3093, %v3401
        %v3410 = vadd.f32 %v3402, %v3406
        %v3411 = vrot.slane %v3410, 4
        %v3412 = vadd.f32 %v3410, %v3411
        %v3413 = vrot.slane %v3412, 2
        %v3414 = vadd.f32 %v3412, %v3413
        %v3415 = vrot.slane %v3414, 1
        %v3416 = vadd.f32 %v3414, %v3415
        %v3417 = vadd.f32 %v3403, %v3407
        %v3418 = vrot.slane %v3417, 4
        %v3419 = vadd.f32 %v3417, %v3418
        %v3420 = vrot.slane %v3419, 2
        %v3421 = vadd.f32 %v3419, %v3420
        %v3422 = vrot.slane %v3421, 1
        %v3423 = vadd.f32 %v3421, %v3422
        %v3424 = vadd.f32 %v3404, %v3408
        %v3425 = vrot.slane %v3424, 4
        %v3426 = vadd.f32 %v3424, %v3425
        %v3427 = vrot.slane %v3426, 2
        %v3428 = vadd.f32 %v3426, %v3427
        %v3429 = vrot.slane %v3428, 1
        %v3430 = vadd.f32 %v3428, %v3429
        %v3431 = vadd.f32 %v3405, %v3409
        %v3432 = vrot.slane %v3431, 4
        %v3433 = vadd.f32 %v3431, %v3432
        %v3434 = vrot.slane %v3433, 2
        %v3435 = vadd.f32 %v3433, %v3434
        %v3436 = vrot.slane %v3435, 1
        %v3437 = vadd.f32 %v3435, %v3436
        %v3442 = vcombine.low %v3416, %v3423
        %v3443 = vcombine.low %v3430, %v3437
        %v3445 = vunpack.c.l.s4 1966171168
        %v3446 = vunpack.c.0.s8 %v3445
        %v3447 = vlaneseq
        %v3448 = vshrl.u32 %v3447, 7
        %v3449 = vsub.s32 %v3446, %v3448
        %v3450 = vrot.slane %v3442, %v3449
        %v3452 = vunpack.c.l.s4 1966171168
        %v3453 = vunpack.c.0.s8 %v3452
        %v3454 = vlaneseq
        %v3455 = vshrl.u32 %v3454, 7
        %v3456 = vsub.s32 %v3453, %v3455
        %v3457 = vrot.slane %v3443, %v3456
        %v3458 = vcombine.low %v3450, %v3457
        %v3460 = vunpack.c.l.s4 1966171168
        %v3461 = vunpack.c.0.s8 %v3460
        %v3462 = vlaneseq
        %v3463 = vshrl.u32 %v3462, 7
        %v3464 = vsub.s32 %v3461, %v3463
        %v3465 = vrot.slane %v3458, %v3464
        %3467 = vst.msk [vmem:[%s2797] ss:$8 sm:$0xf] %vm2493, %v3465
        %3468 = vst.msk [vmem:[%s2797] ss:$8 sm:$0x0] %vm2493, %v3465
        %v3469 = vld [vmem:[%s1833] sm:$0xff]
        %v3470 = vld [vmem:[%s1833 + $0x8] sm:$0xff]
        %v3471 = vld [vmem:[%s1833 + $0x10] sm:$0xff]
        %v3472 = vld [vmem:[%s1833 + $0x18] sm:$0xff]
        %v3473 = vld [vmem:[%s1833 + $0x20] sm:$0xff]
        %v3474 = vld [vmem:[%s1833 + $0x28] sm:$0xff]
        %v3475 = vld [vmem:[%s1833 + $0x30] sm:$0xff]
        %v3476 = vld [vmem:[%s1833 + $0x38] sm:$0xff]
        %v3477 = vmul.f32 %v3086, %v3469
        %v3478 = vmul.f32 %v3087, %v3470
        %v3479 = vmul.f32 %v3088, %v3471
        %v3480 = vmul.f32 %v3089, %v3472
        %v3481 = vmul.f32 %v3090, %v3473
        %v3482 = vmul.f32 %v3091, %v3474
        %v3483 = vmul.f32 %v3092, %v3475
        %v3484 = vmul.f32 %v3093, %v3476
        %v3485 = vadd.f32 %v3477, %v3481
        %v3486 = vrot.slane %v3485, 4
        %v3487 = vadd.f32 %v3485, %v3486
        %v3488 = vrot.slane %v3487, 2
        %v3489 = vadd.f32 %v3487, %v3488
        %v3490 = vrot.slane %v3489, 1
        %v3491 = vadd.f32 %v3489, %v3490
        %v3492 = vadd.f32 %v3478, %v3482
        %v3493 = vrot.slane %v3492, 4
        %v3494 = vadd.f32 %v3492, %v3493
        %v3495 = vrot.slane %v3494, 2
        %v3496 = vadd.f32 %v3494, %v3495
        %v3497 = vrot.slane %v3496, 1
        %v3498 = vadd.f32 %v3496, %v3497
        %v3499 = vadd.f32 %v3479, %v3483
        %v3500 = vrot.slane %v3499, 4
        %v3501 = vadd.f32 %v3499, %v3500
        %v3502 = vrot.slane %v3501, 2
        %v3503 = vadd.f32 %v3501, %v3502
        %v3504 = vrot.slane %v3503, 1
        %v3505 = vadd.f32 %v3503, %v3504
        %v3506 = vadd.f32 %v3480, %v3484
        %v3507 = vrot.slane %v3506, 4
        %v3508 = vadd.f32 %v3506, %v3507
        %v3509 = vrot.slane %v3508, 2
        %v3510 = vadd.f32 %v3508, %v3509
        %v3511 = vrot.slane %v3510, 1
        %v3512 = vadd.f32 %v3510, %v3511
        %v3517 = vcombine.low %v3491, %v3498
        %v3518 = vcombine.low %v3505, %v3512
        %v3520 = vunpack.c.l.s4 1966171168
        %v3521 = vunpack.c.0.s8 %v3520
        %v3522 = vlaneseq
        %v3523 = vshrl.u32 %v3522, 7
        %v3524 = vsub.s32 %v3521, %v3523
        %v3525 = vrot.slane %v3517, %v3524
        %v3527 = vunpack.c.l.s4 1966171168
        %v3528 = vunpack.c.0.s8 %v3527
        %v3529 = vlaneseq
        %v3530 = vshrl.u32 %v3529, 7
        %v3531 = vsub.s32 %v3528, %v3530
        %v3532 = vrot.slane %v3518, %v3531
        %v3533 = vcombine.low %v3525, %v3532
        %v3535 = vunpack.c.l.s4 1966171168
        %v3536 = vunpack.c.0.s8 %v3535
        %v3537 = vlaneseq
        %v3538 = vshrl.u32 %v3537, 7
        %v3539 = vsub.s32 %v3536, %v3538
        %v3540 = vrot.slane %v3533, %v3539
        %3542 = vst.msk [vmem:[%s2873] ss:$8 sm:$0xf] %vm2493, %v3540
        %3543 = vst.msk [vmem:[%s2873] ss:$8 sm:$0x0] %vm2493, %v3540
        %v3544 = vld [vmem:[%s2076] sm:$0xff]
        %v3545 = vld [vmem:[%s2076 + $0x8] sm:$0xff]
        %v3546 = vld [vmem:[%s2076 + $0x10] sm:$0xff]
        %v3547 = vld [vmem:[%s2076 + $0x18] sm:$0xff]
        %v3548 = vld [vmem:[%s2076 + $0x20] sm:$0xff]
        %v3549 = vld [vmem:[%s2076 + $0x28] sm:$0xff]
        %v3550 = vld [vmem:[%s2076 + $0x30] sm:$0xff]
        %v3551 = vld [vmem:[%s2076 + $0x38] sm:$0xff]
        %v3552 = vmul.f32 %v3086, %v3544
        %v3553 = vmul.f32 %v3087, %v3545
        %v3554 = vmul.f32 %v3088, %v3546
        %v3555 = vmul.f32 %v3089, %v3547
        %v3556 = vmul.f32 %v3090, %v3548
        %v3557 = vmul.f32 %v3091, %v3549
        %v3558 = vmul.f32 %v3092, %v3550
        %v3559 = vmul.f32 %v3093, %v3551
        %v3560 = vadd.f32 %v3552, %v3556
        %v3561 = vrot.slane %v3560, 4
        %v3562 = vadd.f32 %v3560, %v3561
        %v3563 = vrot.slane %v3562, 2
        %v3564 = vadd.f32 %v3562, %v3563
        %v3565 = vrot.slane %v3564, 1
        %v3566 = vadd.f32 %v3564, %v3565
        %v3567 = vadd.f32 %v3553, %v3557
        %v3568 = vrot.slane %v3567, 4
        %v3569 = vadd.f32 %v3567, %v3568
        %v3570 = vrot.slane %v3569, 2
        %v3571 = vadd.f32 %v3569, %v3570
        %v3572 = vrot.slane %v3571, 1
        %v3573 = vadd.f32 %v3571, %v3572
        %v3574 = vadd.f32 %v3554, %v3558
        %v3575 = vrot.slane %v3574, 4
        %v3576 = vadd.f32 %v3574, %v3575
        %v3577 = vrot.slane %v3576, 2
        %v3578 = vadd.f32 %v3576, %v3577
        %v3579 = vrot.slane %v3578, 1
        %v3580 = vadd.f32 %v3578, %v3579
        %v3581 = vadd.f32 %v3555, %v3559
        %v3582 = vrot.slane %v3581, 4
        %v3583 = vadd.f32 %v3581, %v3582
        %v3584 = vrot.slane %v3583, 2
        %v3585 = vadd.f32 %v3583, %v3584
        %v3586 = vrot.slane %v3585, 1
        %v3587 = vadd.f32 %v3585, %v3586
        %v3592 = vcombine.low %v3566, %v3573
        %v3593 = vcombine.low %v3580, %v3587
        %v3595 = vunpack.c.l.s4 1966171168
        %v3596 = vunpack.c.0.s8 %v3595
        %v3597 = vlaneseq
        %v3598 = vshrl.u32 %v3597, 7
        %v3599 = vsub.s32 %v3596, %v3598
        %v3600 = vrot.slane %v3592, %v3599
        %v3602 = vunpack.c.l.s4 1966171168
        %v3603 = vunpack.c.0.s8 %v3602
        %v3604 = vlaneseq
        %v3605 = vshrl.u32 %v3604, 7
        %v3606 = vsub.s32 %v3603, %v3605
        %v3607 = vrot.slane %v3593, %v3606
        %v3608 = vcombine.low %v3600, %v3607
        %v3610 = vunpack.c.l.s4 1966171168
        %v3611 = vunpack.c.0.s8 %v3610
        %v3612 = vlaneseq
        %v3613 = vshrl.u32 %v3612, 7
        %v3614 = vsub.s32 %v3611, %v3613
        %v3615 = vrot.slane %v3608, %v3614
        %3617 = vst.msk [vmem:[%s2949] ss:$8 sm:$0xf] %vm2493, %v3615
        %3618 = vst.msk [vmem:[%s2949] ss:$8 sm:$0x0] %vm2493, %v3615
        %v3619 = vld [vmem:[%s2319] sm:$0xff]
        %v3620 = vld [vmem:[%s2319 + $0x8] sm:$0xff]
        %v3621 = vld [vmem:[%s2319 + $0x10] sm:$0xff]
        %v3622 = vld [vmem:[%s2319 + $0x18] sm:$0xff]
        %v3623 = vld [vmem:[%s2319 + $0x20] sm:$0xff]
        %v3624 = vld [vmem:[%s2319 + $0x28] sm:$0xff]
        %v3625 = vld [vmem:[%s2319 + $0x30] sm:$0xff]
        %v3626 = vld [vmem:[%s2319 + $0x38] sm:$0xff]
        %v3627 = vmul.f32 %v3086, %v3619
        %v3628 = vmul.f32 %v3087, %v3620
        %v3629 = vmul.f32 %v3088, %v3621
        %v3630 = vmul.f32 %v3089, %v3622
        %v3631 = vmul.f32 %v3090, %v3623
        %v3632 = vmul.f32 %v3091, %v3624
        %v3633 = vmul.f32 %v3092, %v3625
        %v3634 = vmul.f32 %v3093, %v3626
        %v3635 = vadd.f32 %v3627, %v3631
        %v3636 = vrot.slane %v3635, 4
        %v3637 = vadd.f32 %v3635, %v3636
        %v3638 = vrot.slane %v3637, 2
        %v3639 = vadd.f32 %v3637, %v3638
        %v3640 = vrot.slane %v3639, 1
        %v3641 = vadd.f32 %v3639, %v3640
        %v3642 = vadd.f32 %v3628, %v3632
        %v3643 = vrot.slane %v3642, 4
        %v3644 = vadd.f32 %v3642, %v3643
        %v3645 = vrot.slane %v3644, 2
        %v3646 = vadd.f32 %v3644, %v3645
        %v3647 = vrot.slane %v3646, 1
        %v3648 = vadd.f32 %v3646, %v3647
        %v3649 = vadd.f32 %v3629, %v3633
        %v3650 = vrot.slane %v3649, 4
        %v3651 = vadd.f32 %v3649, %v3650
        %v3652 = vrot.slane %v3651, 2
        %v3653 = vadd.f32 %v3651, %v3652
        %v3654 = vrot.slane %v3653, 1
        %v3655 = vadd.f32 %v3653, %v3654
        %v3656 = vadd.f32 %v3630, %v3634
        %v3657 = vrot.slane %v3656, 4
        %v3658 = vadd.f32 %v3656, %v3657
        %v3659 = vrot.slane %v3658, 2
        %v3660 = vadd.f32 %v3658, %v3659
        %v3661 = vrot.slane %v3660, 1
        %v3662 = vadd.f32 %v3660, %v3661
        %v3667 = vcombine.low %v3641, %v3648
        %v3668 = vcombine.low %v3655, %v3662
        %v3670 = vunpack.c.l.s4 1966171168
        %v3671 = vunpack.c.0.s8 %v3670
        %v3672 = vlaneseq
        %v3673 = vshrl.u32 %v3672, 7
        %v3674 = vsub.s32 %v3671, %v3673
        %v3675 = vrot.slane %v3667, %v3674
        %v3677 = vunpack.c.l.s4 1966171168
        %v3678 = vunpack.c.0.s8 %v3677
        %v3679 = vlaneseq
        %v3680 = vshrl.u32 %v3679, 7
        %v3681 = vsub.s32 %v3678, %v3680
        %v3682 = vrot.slane %v3668, %v3681
        %v3683 = vcombine.low %v3675, %v3682
        %v3685 = vunpack.c.l.s4 1966171168
        %v3686 = vunpack.c.0.s8 %v3685
        %v3687 = vlaneseq
        %v3688 = vshrl.u32 %v3687, 7
        %v3689 = vsub.s32 %v3686, %v3688
        %v3690 = vrot.slane %v3683, %v3689
        %3692 = vst.msk [vmem:[%s3025] ss:$8 sm:$0xf] %vm2493, %v3690
        %3693 = vst.msk [vmem:[%s3025] ss:$8 sm:$0x0] %vm2493, %v3690
        %v3694 = vld [vmem:[#allocation5] sm:$0xff]
        %v3695 = vld [vmem:[#allocation5 + $0x8] sm:$0xff]
        %v3696 = vld [vmem:[#allocation5 + $0x10] sm:$0xff]
        %v3697 = vld [vmem:[#allocation5 + $0x18] sm:$0xff]
        %v3698 = vmul.f32 %v3694, %v429
        %v3699 = vmul.f32 %v3695, %v430
        %v3700 = vmul.f32 %v3696, %v431
        %v3701 = vmul.f32 %v3697, %v432
        %v3702 = vmul.f32 %v3698, 1.442695
        %v3703 = vpow.pop %v3702
        %v3704 = vmul.f32 %v3699, 1.442695
        %v3705 = vpow.pop %v3704
        %v3706 = vmul.f32 %v3700, 1.442695
        %v3707 = vpow.pop %v3706
        %v3708 = vmul.f32 %v3701, 1.442695
        %v3709 = vpow.pop %v3708
        %v3710 = vrot.slane %v3703, 4
        %v3711 = vadd.f32 %v3703, %v3710
        %v3712 = vrot.slane %v3711, 2
        %v3713 = vadd.f32 %v3711, %v3712
        %v3714 = vrot.slane %v3713, 1
        %v3715 = vadd.f32 %v3713, %v3714
        %v3716 = vrot.slane %v3705, 4
        %v3717 = vadd.f32 %v3705, %v3716
        %v3718 = vrot.slane %v3717, 2
        %v3719 = vadd.f32 %v3717, %v3718
        %v3720 = vrot.slane %v3719, 1
        %v3721 = vadd.f32 %v3719, %v3720
        %v3722 = vrot.slane %v3707, 4
        %v3723 = vadd.f32 %v3707, %v3722
        %v3724 = vrot.slane %v3723, 2
        %v3725 = vadd.f32 %v3723, %v3724
        %v3726 = vrot.slane %v3725, 1
        %v3727 = vadd.f32 %v3725, %v3726
        %v3728 = vrot.slane %v3709, 4
        %v3729 = vadd.f32 %v3709, %v3728
        %v3730 = vrot.slane %v3729, 2
        %v3731 = vadd.f32 %v3729, %v3730
        %v3732 = vrot.slane %v3731, 1
        %v3733 = vadd.f32 %v3731, %v3732
        %s3734 = sld [smem:[#allocation16 + $0x1]]
        %v3735 = vrcp.pop %v3715
        %v3736 = vrcp.pop %v3721
        %v3737 = vrcp.pop %v3727
        %v3738 = vrcp.pop %v3733
        %v3739 = vstv %s3734
        %v3740 = vmul.f32 %v3739, %v3735
        %v3741 = vmul.f32 %v3739, %v3736
        %v3742 = vmul.f32 %v3739, %v3737
        %v3743 = vmul.f32 %v3739, %v3738
        %v3744 = vmul.f32 %v3740, %v3703
        %v3745 = vmul.f32 %v3741, %v3705
        %v3746 = vmul.f32 %v3742, %v3707
        %v3747 = vmul.f32 %v3743, %v3709
        %v3748 = vadd.f32 %v3082, %v3744
        %v3749 = vadd.f32 %v3083, %v3745
        %v3750 = vadd.f32 %v3084, %v3746
        %v3751 = vadd.f32 %v3085, %v3747
        %v3752 = vld [vmem:[%s1023] sm:$0xff]
        %v3753 = vld [vmem:[%s1023 + $0x8] sm:$0xff]
        %v3754 = vld [vmem:[%s1023 + $0x10] sm:$0xff]
        %v3755 = vld [vmem:[%s1023 + $0x18] sm:$0xff]
        %v3756 = vld [vmem:[%s1023 + $0x20] sm:$0xff]
        %v3757 = vld [vmem:[%s1023 + $0x28] sm:$0xff]
        %v3758 = vld [vmem:[%s1023 + $0x30] sm:$0xff]
        %v3759 = vld [vmem:[%s1023 + $0x38] sm:$0xff]
        %v3760 = vld [vmem:[#allocation3] sm:$0xff]
        %v3761 = vld [vmem:[#allocation3 + $0x8] sm:$0xff]
        %v3762 = vld [vmem:[#allocation3 + $0x10] sm:$0xff]
        %v3763 = vld [vmem:[#allocation3 + $0x18] sm:$0xff]
        %v3764 = vld [vmem:[#allocation3 + $0x20] sm:$0xff]
        %v3765 = vld [vmem:[#allocation3 + $0x28] sm:$0xff]
        %v3766 = vld [vmem:[#allocation3 + $0x30] sm:$0xff]
        %v3767 = vld [vmem:[#allocation3 + $0x38] sm:$0xff]
        %v3768 = vmul.f32 %v3752, %v3760
        %v3769 = vmul.f32 %v3753, %v3761
        %v3770 = vmul.f32 %v3754, %v3762
        %v3771 = vmul.f32 %v3755, %v3763
        %v3772 = vmul.f32 %v3756, %v3764
        %v3773 = vmul.f32 %v3757, %v3765
        %v3774 = vmul.f32 %v3758, %v3766
        %v3775 = vmul.f32 %v3759, %v3767
        %v3776 = vadd.f32 %v3768, %v3772
        %v3777 = vrot.slane %v3776, 4
        %v3778 = vadd.f32 %v3776, %v3777
        %v3779 = vrot.slane %v3778, 2
        %v3780 = vadd.f32 %v3778, %v3779
        %v3781 = vrot.slane %v3780, 1
        %v3782 = vadd.f32 %v3780, %v3781
        %v3783 = vadd.f32 %v3769, %v3773
        %v3784 = vrot.slane %v3783, 4
        %v3785 = vadd.f32 %v3783, %v3784
        %v3786 = vrot.slane %v3785, 2
        %v3787 = vadd.f32 %v3785, %v3786
        %v3788 = vrot.slane %v3787, 1
        %v3789 = vadd.f32 %v3787, %v3788
        %v3790 = vadd.f32 %v3770, %v3774
        %v3791 = vrot.slane %v3790, 4
        %v3792 = vadd.f32 %v3790, %v3791
        %v3793 = vrot.slane %v3792, 2
        %v3794 = vadd.f32 %v3792, %v3793
        %v3795 = vrot.slane %v3794, 1
        %v3796 = vadd.f32 %v3794, %v3795
        %v3797 = vadd.f32 %v3771, %v3775
        %v3798 = vrot.slane %v3797, 4
        %v3799 = vadd.f32 %v3797, %v3798
        %v3800 = vrot.slane %v3799, 2
        %v3801 = vadd.f32 %v3799, %v3800
        %v3802 = vrot.slane %v3801, 1
        %v3803 = vadd.f32 %v3801, %v3802
        %v3808 = vcombine.low %v3782, %v3789
        %v3809 = vcombine.low %v3796, %v3803
        %v3811 = vunpack.c.l.s4 1966171168
        %v3812 = vunpack.c.0.s8 %v3811
        %v3813 = vlaneseq
        %v3814 = vshrl.u32 %v3813, 7
        %v3815 = vsub.s32 %v3812, %v3814
        %v3816 = vrot.slane %v3808, %v3815
        %v3818 = vunpack.c.l.s4 1966171168
        %v3819 = vunpack.c.0.s8 %v3818
        %v3820 = vlaneseq
        %v3821 = vshrl.u32 %v3820, 7
        %v3822 = vsub.s32 %v3819, %v3821
        %v3823 = vrot.slane %v3809, %v3822
        %v3824 = vcombine.low %v3816, %v3823
        %v3826 = vunpack.c.l.s4 1966171168
        %v3827 = vunpack.c.0.s8 %v3826
        %v3828 = vlaneseq
        %v3829 = vshrl.u32 %v3828, 7
        %v3830 = vsub.s32 %v3827, %v3829
        %v3831 = vrot.slane %v3824, %v3830
        %3833 = vst.msk [vmem:[#allocation5] ss:$8 sm:$0xf] %vm2493, %v3831
        %3834 = vst.msk [vmem:[#allocation5] ss:$8 sm:$0x0] %vm2493, %v3831
        %v3835 = vld [vmem:[%s861] sm:$0xff]
        %v3836 = vld [vmem:[%s861 + $0x8] sm:$0xff]
        %v3837 = vld [vmem:[%s861 + $0x10] sm:$0xff]
        %v3838 = vld [vmem:[%s861 + $0x18] sm:$0xff]
        %v3839 = vld [vmem:[%s861 + $0x20] sm:$0xff]
        %v3840 = vld [vmem:[%s861 + $0x28] sm:$0xff]
        %v3841 = vld [vmem:[%s861 + $0x30] sm:$0xff]
        %v3842 = vld [vmem:[%s861 + $0x38] sm:$0xff]
        %v3843 = vmul.f32 %v3752, %v3835
        %v3844 = vmul.f32 %v3753, %v3836
        %v3845 = vmul.f32 %v3754, %v3837
        %v3846 = vmul.f32 %v3755, %v3838
        %v3847 = vmul.f32 %v3756, %v3839
        %v3848 = vmul.f32 %v3757, %v3840
        %v3849 = vmul.f32 %v3758, %v3841
        %v3850 = vmul.f32 %v3759, %v3842
        %v3851 = vadd.f32 %v3843, %v3847
        %v3852 = vrot.slane %v3851, 4
        %v3853 = vadd.f32 %v3851, %v3852
        %v3854 = vrot.slane %v3853, 2
        %v3855 = vadd.f32 %v3853, %v3854
        %v3856 = vrot.slane %v3855, 1
        %v3857 = vadd.f32 %v3855, %v3856
        %v3858 = vadd.f32 %v3844, %v3848
        %v3859 = vrot.slane %v3858, 4
        %v3860 = vadd.f32 %v3858, %v3859
        %v3861 = vrot.slane %v3860, 2
        %v3862 = vadd.f32 %v3860, %v3861
        %v3863 = vrot.slane %v3862, 1
        %v3864 = vadd.f32 %v3862, %v3863
        %v3865 = vadd.f32 %v3845, %v3849
        %v3866 = vrot.slane %v3865, 4
        %v3867 = vadd.f32 %v3865, %v3866
        %v3868 = vrot.slane %v3867, 2
        %v3869 = vadd.f32 %v3867, %v3868
        %v3870 = vrot.slane %v3869, 1
        %v3871 = vadd.f32 %v3869, %v3870
        %v3872 = vadd.f32 %v3846, %v3850
        %v3873 = vrot.slane %v3872, 4
        %v3874 = vadd.f32 %v3872, %v3873
        %v3875 = vrot.slane %v3874, 2
        %v3876 = vadd.f32 %v3874, %v3875
        %v3877 = vrot.slane %v3876, 1
        %v3878 = vadd.f32 %v3876, %v3877
        %v3883 = vcombine.low %v3857, %v3864
        %v3884 = vcombine.low %v3871, %v3878
        %v3886 = vunpack.c.l.s4 1966171168
        %v3887 = vunpack.c.0.s8 %v3886
        %v3888 = vlaneseq
        %v3889 = vshrl.u32 %v3888, 7
        %v3890 = vsub.s32 %v3887, %v3889
        %v3891 = vrot.slane %v3883, %v3890
        %v3893 = vunpack.c.l.s4 1966171168
        %v3894 = vunpack.c.0.s8 %v3893
        %v3895 = vlaneseq
        %v3896 = vshrl.u32 %v3895, 7
        %v3897 = vsub.s32 %v3894, %v3896
        %v3898 = vrot.slane %v3884, %v3897
        %v3899 = vcombine.low %v3891, %v3898
        %v3901 = vunpack.c.l.s4 1966171168
        %v3902 = vunpack.c.0.s8 %v3901
        %v3903 = vlaneseq
        %v3904 = vshrl.u32 %v3903, 7
        %v3905 = vsub.s32 %v3902, %v3904
        %v3906 = vrot.slane %v3899, %v3905
        %3908 = vst.msk [vmem:[%s2569] ss:$8 sm:$0xf] %vm2493, %v3906
        %3909 = vst.msk [vmem:[%s2569] ss:$8 sm:$0x0] %vm2493, %v3906
        %v3910 = vld [vmem:[%s1104] sm:$0xff]
        %v3911 = vld [vmem:[%s1104 + $0x8] sm:$0xff]
        %v3912 = vld [vmem:[%s1104 + $0x10] sm:$0xff]
        %v3913 = vld [vmem:[%s1104 + $0x18] sm:$0xff]
        %v3914 = vld [vmem:[%s1104 + $0x20] sm:$0xff]
        %v3915 = vld [vmem:[%s1104 + $0x28] sm:$0xff]
        %v3916 = vld [vmem:[%s1104 + $0x30] sm:$0xff]
        %v3917 = vld [vmem:[%s1104 + $0x38] sm:$0xff]
        %v3918 = vmul.f32 %v3752, %v3910
        %v3919 = vmul.f32 %v3753, %v3911
        %v3920 = vmul.f32 %v3754, %v3912
        %v3921 = vmul.f32 %v3755, %v3913
        %v3922 = vmul.f32 %v3756, %v3914
        %v3923 = vmul.f32 %v3757, %v3915
        %v3924 = vmul.f32 %v3758, %v3916
        %v3925 = vmul.f32 %v3759, %v3917
        %v3926 = vadd.f32 %v3918, %v3922
        %v3927 = vrot.slane %v3926, 4
        %v3928 = vadd.f32 %v3926, %v3927
        %v3929 = vrot.slane %v3928, 2
        %v3930 = vadd.f32 %v3928, %v3929
        %v3931 = vrot.slane %v3930, 1
        %v3932 = vadd.f32 %v3930, %v3931
        %v3933 = vadd.f32 %v3919, %v3923
        %v3934 = vrot.slane %v3933, 4
        %v3935 = vadd.f32 %v3933, %v3934
        %v3936 = vrot.slane %v3935, 2
        %v3937 = vadd.f32 %v3935, %v3936
        %v3938 = vrot.slane %v3937, 1
        %v3939 = vadd.f32 %v3937, %v3938
        %v3940 = vadd.f32 %v3920, %v3924
        %v3941 = vrot.slane %v3940, 4
        %v3942 = vadd.f32 %v3940, %v3941
        %v3943 = vrot.slane %v3942, 2
        %v3944 = vadd.f32 %v3942, %v3943
        %v3945 = vrot.slane %v3944, 1
        %v3946 = vadd.f32 %v3944, %v3945
        %v3947 = vadd.f32 %v3921, %v3925
        %v3948 = vrot.slane %v3947, 4
        %v3949 = vadd.f32 %v3947, %v3948
        %v3950 = vrot.slane %v3949, 2
        %v3951 = vadd.f32 %v3949, %v3950
        %v3952 = vrot.slane %v3951, 1
        %v3953 = vadd.f32 %v3951, %v3952
        %v3958 = vcombine.low %v3932, %v3939
        %v3959 = vcombine.low %v3946, %v3953
        %v3961 = vunpack.c.l.s4 1966171168
        %v3962 = vunpack.c.0.s8 %v3961
        %v3963 = vlaneseq
        %v3964 = vshrl.u32 %v3963, 7
        %v3965 = vsub.s32 %v3962, %v3964
        %v3966 = vrot.slane %v3958, %v3965
        %v3968 = vunpack.c.l.s4 1966171168
        %v3969 = vunpack.c.0.s8 %v3968
        %v3970 = vlaneseq
        %v3971 = vshrl.u32 %v3970, 7
        %v3972 = vsub.s32 %v3969, %v3971
        %v3973 = vrot.slane %v3959, %v3972
        %v3974 = vcombine.low %v3966, %v3973
        %v3976 = vunpack.c.l.s4 1966171168
        %v3977 = vunpack.c.0.s8 %v3976
        %v3978 = vlaneseq
        %v3979 = vshrl.u32 %v3978, 7
        %v3980 = vsub.s32 %v3977, %v3979
        %v3981 = vrot.slane %v3974, %v3980
        %3983 = vst.msk [vmem:[%s2645] ss:$8 sm:$0xf] %vm2493, %v3981
        %3984 = vst.msk [vmem:[%s2645] ss:$8 sm:$0x0] %vm2493, %v3981
        %v3985 = vld [vmem:[%s1347] sm:$0xff]
        %v3986 = vld [vmem:[%s1347 + $0x8] sm:$0xff]
        %v3987 = vld [vmem:[%s1347 + $0x10] sm:$0xff]
        %v3988 = vld [vmem:[%s1347 + $0x18] sm:$0xff]
        %v3989 = vld [vmem:[%s1347 + $0x20] sm:$0xff]
        %v3990 = vld [vmem:[%s1347 + $0x28] sm:$0xff]
        %v3991 = vld [vmem:[%s1347 + $0x30] sm:$0xff]
        %v3992 = vld [vmem:[%s1347 + $0x38] sm:$0xff]
        %v3993 = vmul.f32 %v3752, %v3985
        %v3994 = vmul.f32 %v3753, %v3986
        %v3995 = vmul.f32 %v3754, %v3987
        %v3996 = vmul.f32 %v3755, %v3988
        %v3997 = vmul.f32 %v3756, %v3989
        %v3998 = vmul.f32 %v3757, %v3990
        %v3999 = vmul.f32 %v3758, %v3991
        %v4000 = vmul.f32 %v3759, %v3992
        %v4001 = vadd.f32 %v3993, %v3997
        %v4002 = vrot.slane %v4001, 4
        %v4003 = vadd.f32 %v4001, %v4002
        %v4004 = vrot.slane %v4003, 2
        %v4005 = vadd.f32 %v4003, %v4004
        %v4006 = vrot.slane %v4005, 1
        %v4007 = vadd.f32 %v4005, %v4006
        %v4008 = vadd.f32 %v3994, %v3998
        %v4009 = vrot.slane %v4008, 4
        %v4010 = vadd.f32 %v4008, %v4009
        %v4011 = vrot.slane %v4010, 2
        %v4012 = vadd.f32 %v4010, %v4011
        %v4013 = vrot.slane %v4012, 1
        %v4014 = vadd.f32 %v4012, %v4013
        %v4015 = vadd.f32 %v3995, %v3999
        %v4016 = vrot.slane %v4015, 4
        %v4017 = vadd.f32 %v4015, %v4016
        %v4018 = vrot.slane %v4017, 2
        %v4019 = vadd.f32 %v4017, %v4018
        %v4020 = vrot.slane %v4019, 1
        %v4021 = vadd.f32 %v4019, %v4020
        %v4022 = vadd.f32 %v3996, %v4000
        %v4023 = vrot.slane %v4022, 4
        %v4024 = vadd.f32 %v4022, %v4023
        %v4025 = vrot.slane %v4024, 2
        %v4026 = vadd.f32 %v4024, %v4025
        %v4027 = vrot.slane %v4026, 1
        %v4028 = vadd.f32 %v4026, %v4027
        %v4033 = vcombine.low %v4007, %v4014
        %v4034 = vcombine.low %v4021, %v4028
        %v4036 = vunpack.c.l.s4 1966171168
        %v4037 = vunpack.c.0.s8 %v4036
        %v4038 = vlaneseq
        %v4039 = vshrl.u32 %v4038, 7
        %v4040 = vsub.s32 %v4037, %v4039
        %v4041 = vrot.slane %v4033, %v4040
        %v4043 = vunpack.c.l.s4 1966171168
        %v4044 = vunpack.c.0.s8 %v4043
        %v4045 = vlaneseq
        %v4046 = vshrl.u32 %v4045, 7
        %v4047 = vsub.s32 %v4044, %v4046
        %v4048 = vrot.slane %v4034, %v4047
        %v4049 = vcombine.low %v4041, %v4048
        %v4051 = vunpack.c.l.s4 1966171168
        %v4052 = vunpack.c.0.s8 %v4051
        %v4053 = vlaneseq
        %v4054 = vshrl.u32 %v4053, 7
        %v4055 = vsub.s32 %v4052, %v4054
        %v4056 = vrot.slane %v4049, %v4055
        %4058 = vst.msk [vmem:[%s2721] ss:$8 sm:$0xf] %vm2493, %v4056
        %4059 = vst.msk [vmem:[%s2721] ss:$8 sm:$0x0] %vm2493, %v4056
        %v4060 = vld [vmem:[%s1590] sm:$0xff]
        %v4061 = vld [vmem:[%s1590 + $0x8] sm:$0xff]
        %v4062 = vld [vmem:[%s1590 + $0x10] sm:$0xff]
        %v4063 = vld [vmem:[%s1590 + $0x18] sm:$0xff]
        %v4064 = vld [vmem:[%s1590 + $0x20] sm:$0xff]
        %v4065 = vld [vmem:[%s1590 + $0x28] sm:$0xff]
        %v4066 = vld [vmem:[%s1590 + $0x30] sm:$0xff]
        %v4067 = vld [vmem:[%s1590 + $0x38] sm:$0xff]
        %v4068 = vmul.f32 %v3752, %v4060
        %v4069 = vmul.f32 %v3753, %v4061
        %v4070 = vmul.f32 %v3754, %v4062
        %v4071 = vmul.f32 %v3755, %v4063
        %v4072 = vmul.f32 %v3756, %v4064
        %v4073 = vmul.f32 %v3757, %v4065
        %v4074 = vmul.f32 %v3758, %v4066
        %v4075 = vmul.f32 %v3759, %v4067
        %v4076 = vadd.f32 %v4068, %v4072
        %v4077 = vrot.slane %v4076, 4
        %v4078 = vadd.f32 %v4076, %v4077
        %v4079 = vrot.slane %v4078, 2
        %v4080 = vadd.f32 %v4078, %v4079
        %v4081 = vrot.slane %v4080, 1
        %v4082 = vadd.f32 %v4080, %v4081
        %v4083 = vadd.f32 %v4069, %v4073
        %v4084 = vrot.slane %v4083, 4
        %v4085 = vadd.f32 %v4083, %v4084
        %v4086 = vrot.slane %v4085, 2
        %v4087 = vadd.f32 %v4085, %v4086
        %v4088 = vrot.slane %v4087, 1
        %v4089 = vadd.f32 %v4087, %v4088
        %v4090 = vadd.f32 %v4070, %v4074
        %v4091 = vrot.slane %v4090, 4
        %v4092 = vadd.f32 %v4090, %v4091
        %v4093 = vrot.slane %v4092, 2
        %v4094 = vadd.f32 %v4092, %v4093
        %v4095 = vrot.slane %v4094, 1
        %v4096 = vadd.f32 %v4094, %v4095
        %v4097 = vadd.f32 %v4071, %v4075
        %v4098 = vrot.slane %v4097, 4
        %v4099 = vadd.f32 %v4097, %v4098
        %v4100 = vrot.slane %v4099, 2
        %v4101 = vadd.f32 %v4099, %v4100
        %v4102 = vrot.slane %v4101, 1
        %v4103 = vadd.f32 %v4101, %v4102
        %v4108 = vcombine.low %v4082, %v4089
        %v4109 = vcombine.low %v4096, %v4103
        %v4111 = vunpack.c.l.s4 1966171168
        %v4112 = vunpack.c.0.s8 %v4111
        %v4113 = vlaneseq
        %v4114 = vshrl.u32 %v4113, 7
        %v4115 = vsub.s32 %v4112, %v4114
        %v4116 = vrot.slane %v4108, %v4115
        %v4118 = vunpack.c.l.s4 1966171168
        %v4119 = vunpack.c.0.s8 %v4118
        %v4120 = vlaneseq
        %v4121 = vshrl.u32 %v4120, 7
        %v4122 = vsub.s32 %v4119, %v4121
        %v4123 = vrot.slane %v4109, %v4122
        %v4124 = vcombine.low %v4116, %v4123
        %v4126 = vunpack.c.l.s4 1966171168
        %v4127 = vunpack.c.0.s8 %v4126
        %v4128 = vlaneseq
        %v4129 = vshrl.u32 %v4128, 7
        %v4130 = vsub.s32 %v4127, %v4129
        %v4131 = vrot.slane %v4124, %v4130
        %4133 = vst.msk [vmem:[%s2797] ss:$8 sm:$0xf] %vm2493, %v4131
        %4134 = vst.msk [vmem:[%s2797] ss:$8 sm:$0x0] %vm2493, %v4131
        %v4135 = vld [vmem:[%s1833] sm:$0xff]
        %v4136 = vld [vmem:[%s1833 + $0x8] sm:$0xff]
        %v4137 = vld [vmem:[%s1833 + $0x10] sm:$0xff]
        %v4138 = vld [vmem:[%s1833 + $0x18] sm:$0xff]
        %v4139 = vld [vmem:[%s1833 + $0x20] sm:$0xff]
        %v4140 = vld [vmem:[%s1833 + $0x28] sm:$0xff]
        %v4141 = vld [vmem:[%s1833 + $0x30] sm:$0xff]
        %v4142 = vld [vmem:[%s1833 + $0x38] sm:$0xff]
        %v4143 = vmul.f32 %v3752, %v4135
        %v4144 = vmul.f32 %v3753, %v4136
        %v4145 = vmul.f32 %v3754, %v4137
        %v4146 = vmul.f32 %v3755, %v4138
        %v4147 = vmul.f32 %v3756, %v4139
        %v4148 = vmul.f32 %v3757, %v4140
        %v4149 = vmul.f32 %v3758, %v4141
        %v4150 = vmul.f32 %v3759, %v4142
        %v4151 = vadd.f32 %v4143, %v4147
        %v4152 = vrot.slane %v4151, 4
        %v4153 = vadd.f32 %v4151, %v4152
        %v4154 = vrot.slane %v4153, 2
        %v4155 = vadd.f32 %v4153, %v4154
        %v4156 = vrot.slane %v4155, 1
        %v4157 = vadd.f32 %v4155, %v4156
        %v4158 = vadd.f32 %v4144, %v4148
        %v4159 = vrot.slane %v4158, 4
        %v4160 = vadd.f32 %v4158, %v4159
        %v4161 = vrot.slane %v4160, 2
        %v4162 = vadd.f32 %v4160, %v4161
        %v4163 = vrot.slane %v4162, 1
        %v4164 = vadd.f32 %v4162, %v4163
        %v4165 = vadd.f32 %v4145, %v4149
        %v4166 = vrot.slane %v4165, 4
        %v4167 = vadd.f32 %v4165, %v4166
        %v4168 = vrot.slane %v4167, 2
        %v4169 = vadd.f32 %v4167, %v4168
        %v4170 = vrot.slane %v4169, 1
        %v4171 = vadd.f32 %v4169, %v4170
        %v4172 = vadd.f32 %v4146, %v4150
        %v4173 = vrot.slane %v4172, 4
        %v4174 = vadd.f32 %v4172, %v4173
        %v4175 = vrot.slane %v4174, 2
        %v4176 = vadd.f32 %v4174, %v4175
        %v4177 = vrot.slane %v4176, 1
        %v4178 = vadd.f32 %v4176, %v4177
        %v4183 = vcombine.low %v4157, %v4164
        %v4184 = vcombine.low %v4171, %v4178
        %v4186 = vunpack.c.l.s4 1966171168
        %v4187 = vunpack.c.0.s8 %v4186
        %v4188 = vlaneseq
        %v4189 = vshrl.u32 %v4188, 7
        %v4190 = vsub.s32 %v4187, %v4189
        %v4191 = vrot.slane %v4183, %v4190
        %v4193 = vunpack.c.l.s4 1966171168
        %v4194 = vunpack.c.0.s8 %v4193
        %v4195 = vlaneseq
        %v4196 = vshrl.u32 %v4195, 7
        %v4197 = vsub.s32 %v4194, %v4196
        %v4198 = vrot.slane %v4184, %v4197
        %v4199 = vcombine.low %v4191, %v4198
        %v4201 = vunpack.c.l.s4 1966171168
        %v4202 = vunpack.c.0.s8 %v4201
        %v4203 = vlaneseq
        %v4204 = vshrl.u32 %v4203, 7
        %v4205 = vsub.s32 %v4202, %v4204
        %v4206 = vrot.slane %v4199, %v4205
        %4208 = vst.msk [vmem:[%s2873] ss:$8 sm:$0xf] %vm2493, %v4206
        %4209 = vst.msk [vmem:[%s2873] ss:$8 sm:$0x0] %vm2493, %v4206
        %v4210 = vld [vmem:[%s2076] sm:$0xff]
        %v4211 = vld [vmem:[%s2076 + $0x8] sm:$0xff]
        %v4212 = vld [vmem:[%s2076 + $0x10] sm:$0xff]
        %v4213 = vld [vmem:[%s2076 + $0x18] sm:$0xff]
        %v4214 = vld [vmem:[%s2076 + $0x20] sm:$0xff]
        %v4215 = vld [vmem:[%s2076 + $0x28] sm:$0xff]
        %v4216 = vld [vmem:[%s2076 + $0x30] sm:$0xff]
        %v4217 = vld [vmem:[%s2076 + $0x38] sm:$0xff]
        %v4218 = vmul.f32 %v3752, %v4210
        %v4219 = vmul.f32 %v3753, %v4211
        %v4220 = vmul.f32 %v3754, %v4212
        %v4221 = vmul.f32 %v3755, %v4213
        %v4222 = vmul.f32 %v3756, %v4214
        %v4223 = vmul.f32 %v3757, %v4215
        %v4224 = vmul.f32 %v3758, %v4216
        %v4225 = vmul.f32 %v3759, %v4217
        %v4226 = vadd.f32 %v4218, %v4222
        %v4227 = vrot.slane %v4226, 4
        %v4228 = vadd.f32 %v4226, %v4227
        %v4229 = vrot.slane %v4228, 2
        %v4230 = vadd.f32 %v4228, %v4229
        %v4231 = vrot.slane %v4230, 1
        %v4232 = vadd.f32 %v4230, %v4231
        %v4233 = vadd.f32 %v4219, %v4223
        %v4234 = vrot.slane %v4233, 4
        %v4235 = vadd.f32 %v4233, %v4234
        %v4236 = vrot.slane %v4235, 2
        %v4237 = vadd.f32 %v4235, %v4236
        %v4238 = vrot.slane %v4237, 1
        %v4239 = vadd.f32 %v4237, %v4238
        %v4240 = vadd.f32 %v4220, %v4224
        %v4241 = vrot.slane %v4240, 4
        %v4242 = vadd.f32 %v4240, %v4241
        %v4243 = vrot.slane %v4242, 2
        %v4244 = vadd.f32 %v4242, %v4243
        %v4245 = vrot.slane %v4244, 1
        %v4246 = vadd.f32 %v4244, %v4245
        %v4247 = vadd.f32 %v4221, %v4225
        %v4248 = vrot.slane %v4247, 4
        %v4249 = vadd.f32 %v4247, %v4248
        %v4250 = vrot.slane %v4249, 2
        %v4251 = vadd.f32 %v4249, %v4250
        %v4252 = vrot.slane %v4251, 1
        %v4253 = vadd.f32 %v4251, %v4252
        %v4258 = vcombine.low %v4232, %v4239
        %v4259 = vcombine.low %v4246, %v4253
        %v4261 = vunpack.c.l.s4 1966171168
        %v4262 = vunpack.c.0.s8 %v4261
        %v4263 = vlaneseq
        %v4264 = vshrl.u32 %v4263, 7
        %v4265 = vsub.s32 %v4262, %v4264
        %v4266 = vrot.slane %v4258, %v4265
        %v4268 = vunpack.c.l.s4 1966171168
        %v4269 = vunpack.c.0.s8 %v4268
        %v4270 = vlaneseq
        %v4271 = vshrl.u32 %v4270, 7
        %v4272 = vsub.s32 %v4269, %v4271
        %v4273 = vrot.slane %v4259, %v4272
        %v4274 = vcombine.low %v4266, %v4273
        %v4276 = vunpack.c.l.s4 1966171168
        %v4277 = vunpack.c.0.s8 %v4276
        %v4278 = vlaneseq
        %v4279 = vshrl.u32 %v4278, 7
        %v4280 = vsub.s32 %v4277, %v4279
        %v4281 = vrot.slane %v4274, %v4280
        %4283 = vst.msk [vmem:[%s2949] ss:$8 sm:$0xf] %vm2493, %v4281
        %4284 = vst.msk [vmem:[%s2949] ss:$8 sm:$0x0] %vm2493, %v4281
        %v4285 = vld [vmem:[%s2319] sm:$0xff]
        %v4286 = vld [vmem:[%s2319 + $0x8] sm:$0xff]
        %v4287 = vld [vmem:[%s2319 + $0x10] sm:$0xff]
        %v4288 = vld [vmem:[%s2319 + $0x18] sm:$0xff]
        %v4289 = vld [vmem:[%s2319 + $0x20] sm:$0xff]
        %v4290 = vld [vmem:[%s2319 + $0x28] sm:$0xff]
        %v4291 = vld [vmem:[%s2319 + $0x30] sm:$0xff]
        %v4292 = vld [vmem:[%s2319 + $0x38] sm:$0xff]
        %v4293 = vmul.f32 %v3752, %v4285
        %v4294 = vmul.f32 %v3753, %v4286
        %v4295 = vmul.f32 %v3754, %v4287
        %v4296 = vmul.f32 %v3755, %v4288
        %v4297 = vmul.f32 %v3756, %v4289
        %v4298 = vmul.f32 %v3757, %v4290
        %v4299 = vmul.f32 %v3758, %v4291
        %v4300 = vmul.f32 %v3759, %v4292
        %v4301 = vadd.f32 %v4293, %v4297
        %v4302 = vrot.slane %v4301, 4
        %v4303 = vadd.f32 %v4301, %v4302
        %v4304 = vrot.slane %v4303, 2
        %v4305 = vadd.f32 %v4303, %v4304
        %v4306 = vrot.slane %v4305, 1
        %v4307 = vadd.f32 %v4305, %v4306
        %v4308 = vadd.f32 %v4294, %v4298
        %v4309 = vrot.slane %v4308, 4
        %v4310 = vadd.f32 %v4308, %v4309
        %v4311 = vrot.slane %v4310, 2
        %v4312 = vadd.f32 %v4310, %v4311
        %v4313 = vrot.slane %v4312, 1
        %v4314 = vadd.f32 %v4312, %v4313
        %v4315 = vadd.f32 %v4295, %v4299
        %v4316 = vrot.slane %v4315, 4
        %v4317 = vadd.f32 %v4315, %v4316
        %v4318 = vrot.slane %v4317, 2
        %v4319 = vadd.f32 %v4317, %v4318
        %v4320 = vrot.slane %v4319, 1
        %v4321 = vadd.f32 %v4319, %v4320
        %v4322 = vadd.f32 %v4296, %v4300
        %v4323 = vrot.slane %v4322, 4
        %v4324 = vadd.f32 %v4322, %v4323
        %v4325 = vrot.slane %v4324, 2
        %v4326 = vadd.f32 %v4324, %v4325
        %v4327 = vrot.slane %v4326, 1
        %v4328 = vadd.f32 %v4326, %v4327
        %v4333 = vcombine.low %v4307, %v4314
        %v4334 = vcombine.low %v4321, %v4328
        %v4336 = vunpack.c.l.s4 1966171168
        %v4337 = vunpack.c.0.s8 %v4336
        %v4338 = vlaneseq
        %v4339 = vshrl.u32 %v4338, 7
        %v4340 = vsub.s32 %v4337, %v4339
        %v4341 = vrot.slane %v4333, %v4340
        %v4343 = vunpack.c.l.s4 1966171168
        %v4344 = vunpack.c.0.s8 %v4343
        %v4345 = vlaneseq
        %v4346 = vshrl.u32 %v4345, 7
        %v4347 = vsub.s32 %v4344, %v4346
        %v4348 = vrot.slane %v4334, %v4347
        %v4349 = vcombine.low %v4341, %v4348
        %v4351 = vunpack.c.l.s4 1966171168
        %v4352 = vunpack.c.0.s8 %v4351
        %v4353 = vlaneseq
        %v4354 = vshrl.u32 %v4353, 7
        %v4355 = vsub.s32 %v4352, %v4354
        %v4356 = vrot.slane %v4349, %v4355
        %4358 = vst.msk [vmem:[%s3025] ss:$8 sm:$0xf] %vm2493, %v4356
        %4359 = vst.msk [vmem:[%s3025] ss:$8 sm:$0x0] %vm2493, %v4356
        %v4360 = vld [vmem:[#allocation5] sm:$0xff]
        %v4361 = vld [vmem:[#allocation5 + $0x8] sm:$0xff]
        %v4362 = vld [vmem:[#allocation5 + $0x10] sm:$0xff]
        %v4363 = vld [vmem:[#allocation5 + $0x18] sm:$0xff]
        %v4364 = vmul.f32 %v4360, %v429
        %v4365 = vmul.f32 %v4361, %v430
        %v4366 = vmul.f32 %v4362, %v431
        %v4367 = vmul.f32 %v4363, %v432
        %v4368 = vmul.f32 %v4364, 1.442695
        %v4369 = vpow.pop %v4368
        %v4370 = vmul.f32 %v4365, 1.442695
        %v4371 = vpow.pop %v4370
        %v4372 = vmul.f32 %v4366, 1.442695
        %v4373 = vpow.pop %v4372
        %v4374 = vmul.f32 %v4367, 1.442695
        %v4375 = vpow.pop %v4374
        %v4376 = vrot.slane %v4369, 4
        %v4377 = vadd.f32 %v4369, %v4376
        %v4378 = vrot.slane %v4377, 2
        %v4379 = vadd.f32 %v4377, %v4378
        %v4380 = vrot.slane %v4379, 1
        %v4381 = vadd.f32 %v4379, %v4380
        %v4382 = vrot.slane %v4371, 4
        %v4383 = vadd.f32 %v4371, %v4382
        %v4384 = vrot.slane %v4383, 2
        %v4385 = vadd.f32 %v4383, %v4384
        %v4386 = vrot.slane %v4385, 1
        %v4387 = vadd.f32 %v4385, %v4386
        %v4388 = vrot.slane %v4373, 4
        %v4389 = vadd.f32 %v4373, %v4388
        %v4390 = vrot.slane %v4389, 2
        %v4391 = vadd.f32 %v4389, %v4390
        %v4392 = vrot.slane %v4391, 1
        %v4393 = vadd.f32 %v4391, %v4392
        %v4394 = vrot.slane %v4375, 4
        %v4395 = vadd.f32 %v4375, %v4394
        %v4396 = vrot.slane %v4395, 2
        %v4397 = vadd.f32 %v4395, %v4396
        %v4398 = vrot.slane %v4397, 1
        %v4399 = vadd.f32 %v4397, %v4398
        %s4400 = sld [smem:[#allocation16 + $0x2]]
        %v4401 = vrcp.pop %v4381
        %v4402 = vrcp.pop %v4387
        %v4403 = vrcp.pop %v4393
        %v4404 = vrcp.pop %v4399
        %v4405 = vstv %s4400
        %v4406 = vmul.f32 %v4405, %v4401
        %v4407 = vmul.f32 %v4405, %v4402
        %v4408 = vmul.f32 %v4405, %v4403
        %v4409 = vmul.f32 %v4405, %v4404
        %v4410 = vmul.f32 %v4406, %v4369
        %v4411 = vmul.f32 %v4407, %v4371
        %v4412 = vmul.f32 %v4408, %v4373
        %v4413 = vmul.f32 %v4409, %v4375
        %v4414 = vadd.f32 %v3748, %v4410
        %v4415 = vadd.f32 %v3749, %v4411
        %v4416 = vadd.f32 %v3750, %v4412
        %v4417 = vadd.f32 %v3751, %v4413
        %v4418 = vld [vmem:[%s1266] sm:$0xff]
        %v4419 = vld [vmem:[%s1266 + $0x8] sm:$0xff]
        %v4420 = vld [vmem:[%s1266 + $0x10] sm:$0xff]
        %v4421 = vld [vmem:[%s1266 + $0x18] sm:$0xff]
        %v4422 = vld [vmem:[%s1266 + $0x20] sm:$0xff]
        %v4423 = vld [vmem:[%s1266 + $0x28] sm:$0xff]
        %v4424 = vld [vmem:[%s1266 + $0x30] sm:$0xff]
        %v4425 = vld [vmem:[%s1266 + $0x38] sm:$0xff]
        %v4426 = vld [vmem:[#allocation3] sm:$0xff]
        %v4427 = vld [vmem:[#allocation3 + $0x8] sm:$0xff]
        %v4428 = vld [vmem:[#allocation3 + $0x10] sm:$0xff]
        %v4429 = vld [vmem:[#allocation3 + $0x18] sm:$0xff]
        %v4430 = vld [vmem:[#allocation3 + $0x20] sm:$0xff]
        %v4431 = vld [vmem:[#allocation3 + $0x28] sm:$0xff]
        %v4432 = vld [vmem:[#allocation3 + $0x30] sm:$0xff]
        %v4433 = vld [vmem:[#allocation3 + $0x38] sm:$0xff]
        %v4434 = vmul.f32 %v4418, %v4426
        %v4435 = vmul.f32 %v4419, %v4427
        %v4436 = vmul.f32 %v4420, %v4428
        %v4437 = vmul.f32 %v4421, %v4429
        %v4438 = vmul.f32 %v4422, %v4430
        %v4439 = vmul.f32 %v4423, %v4431
        %v4440 = vmul.f32 %v4424, %v4432
        %v4441 = vmul.f32 %v4425, %v4433
        %v4442 = vadd.f32 %v4434, %v4438
        %v4443 = vrot.slane %v4442, 4
        %v4444 = vadd.f32 %v4442, %v4443
        %v4445 = vrot.slane %v4444, 2
        %v4446 = vadd.f32 %v4444, %v4445
        %v4447 = vrot.slane %v4446, 1
        %v4448 = vadd.f32 %v4446, %v4447
        %v4449 = vadd.f32 %v4435, %v4439
        %v4450 = vrot.slane %v4449, 4
        %v4451 = vadd.f32 %v4449, %v4450
        %v4452 = vrot.slane %v4451, 2
        %v4453 = vadd.f32 %v4451, %v4452
        %v4454 = vrot.slane %v4453, 1
        %v4455 = vadd.f32 %v4453, %v4454
        %v4456 = vadd.f32 %v4436, %v4440
        %v4457 = vrot.slane %v4456, 4
        %v4458 = vadd.f32 %v4456, %v4457
        %v4459 = vrot.slane %v4458, 2
        %v4460 = vadd.f32 %v4458, %v4459
        %v4461 = vrot.slane %v4460, 1
        %v4462 = vadd.f32 %v4460, %v4461
        %v4463 = vadd.f32 %v4437, %v4441
        %v4464 = vrot.slane %v4463, 4
        %v4465 = vadd.f32 %v4463, %v4464
        %v4466 = vrot.slane %v4465, 2
        %v4467 = vadd.f32 %v4465, %v4466
        %v4468 = vrot.slane %v4467, 1
        %v4469 = vadd.f32 %v4467, %v4468
        %v4474 = vcombine.low %v4448, %v4455
        %v4475 = vcombine.low %v4462, %v4469
        %v4477 = vunpack.c.l.s4 1966171168
        %v4478 = vunpack.c.0.s8 %v4477
        %v4479 = vlaneseq
        %v4480 = vshrl.u32 %v4479, 7
        %v4481 = vsub.s32 %v4478, %v4480
        %v4482 = vrot.slane %v4474, %v4481
        %v4484 = vunpack.c.l.s4 1966171168
        %v4485 = vunpack.c.0.s8 %v4484
        %v4486 = vlaneseq
        %v4487 = vshrl.u32 %v4486, 7
        %v4488 = vsub.s32 %v4485, %v4487
        %v4489 = vrot.slane %v4475, %v4488
        %v4490 = vcombine.low %v4482, %v4489
        %v4492 = vunpack.c.l.s4 1966171168
        %v4493 = vunpack.c.0.s8 %v4492
        %v4494 = vlaneseq
        %v4495 = vshrl.u32 %v4494, 7
        %v4496 = vsub.s32 %v4493, %v4495
        %v4497 = vrot.slane %v4490, %v4496
        %4499 = vst.msk [vmem:[#allocation5] ss:$8 sm:$0xf] %vm2493, %v4497
        %4500 = vst.msk [vmem:[#allocation5] ss:$8 sm:$0x0] %vm2493, %v4497
        %v4501 = vld [vmem:[%s861] sm:$0xff]
        %v4502 = vld [vmem:[%s861 + $0x8] sm:$0xff]
        %v4503 = vld [vmem:[%s861 + $0x10] sm:$0xff]
        %v4504 = vld [vmem:[%s861 + $0x18] sm:$0xff]
        %v4505 = vld [vmem:[%s861 + $0x20] sm:$0xff]
        %v4506 = vld [vmem:[%s861 + $0x28] sm:$0xff]
        %v4507 = vld [vmem:[%s861 + $0x30] sm:$0xff]
        %v4508 = vld [vmem:[%s861 + $0x38] sm:$0xff]
        %v4509 = vmul.f32 %v4418, %v4501
        %v4510 = vmul.f32 %v4419, %v4502
        %v4511 = vmul.f32 %v4420, %v4503
        %v4512 = vmul.f32 %v4421, %v4504
        %v4513 = vmul.f32 %v4422, %v4505
        %v4514 = vmul.f32 %v4423, %v4506
        %v4515 = vmul.f32 %v4424, %v4507
        %v4516 = vmul.f32 %v4425, %v4508
        %v4517 = vadd.f32 %v4509, %v4513
        %v4518 = vrot.slane %v4517, 4
        %v4519 = vadd.f32 %v4517, %v4518
        %v4520 = vrot.slane %v4519, 2
        %v4521 = vadd.f32 %v4519, %v4520
        %v4522 = vrot.slane %v4521, 1
        %v4523 = vadd.f32 %v4521, %v4522
        %v4524 = vadd.f32 %v4510, %v4514
        %v4525 = vrot.slane %v4524, 4
        %v4526 = vadd.f32 %v4524, %v4525
        %v4527 = vrot.slane %v4526, 2
        %v4528 = vadd.f32 %v4526, %v4527
        %v4529 = vrot.slane %v4528, 1
        %v4530 = vadd.f32 %v4528, %v4529
        %v4531 = vadd.f32 %v4511, %v4515
        %v4532 = vrot.slane %v4531, 4
        %v4533 = vadd.f32 %v4531, %v4532
        %v4534 = vrot.slane %v4533, 2
        %v4535 = vadd.f32 %v4533, %v4534
        %v4536 = vrot.slane %v4535, 1
        %v4537 = vadd.f32 %v4535, %v4536
        %v4538 = vadd.f32 %v4512, %v4516
        %v4539 = vrot.slane %v4538, 4
        %v4540 = vadd.f32 %v4538, %v4539
        %v4541 = vrot.slane %v4540, 2
        %v4542 = vadd.f32 %v4540, %v4541
        %v4543 = vrot.slane %v4542, 1
        %v4544 = vadd.f32 %v4542, %v4543
        %v4549 = vcombine.low %v4523, %v4530
        %v4550 = vcombine.low %v4537, %v4544
        %v4552 = vunpack.c.l.s4 1966171168
        %v4553 = vunpack.c.0.s8 %v4552
        %v4554 = vlaneseq
        %v4555 = vshrl.u32 %v4554, 7
        %v4556 = vsub.s32 %v4553, %v4555
        %v4557 = vrot.slane %v4549, %v4556
        %v4559 = vunpack.c.l.s4 1966171168
        %v4560 = vunpack.c.0.s8 %v4559
        %v4561 = vlaneseq
        %v4562 = vshrl.u32 %v4561, 7
        %v4563 = vsub.s32 %v4560, %v4562
        %v4564 = vrot.slane %v4550, %v4563
        %v4565 = vcombine.low %v4557, %v4564
        %v4567 = vunpack.c.l.s4 1966171168
        %v4568 = vunpack.c.0.s8 %v4567
        %v4569 = vlaneseq
        %v4570 = vshrl.u32 %v4569, 7
        %v4571 = vsub.s32 %v4568, %v4570
        %v4572 = vrot.slane %v4565, %v4571
        %4574 = vst.msk [vmem:[%s2569] ss:$8 sm:$0xf] %vm2493, %v4572
        %4575 = vst.msk [vmem:[%s2569] ss:$8 sm:$0x0] %vm2493, %v4572
        %v4576 = vld [vmem:[%s1104] sm:$0xff]
        %v4577 = vld [vmem:[%s1104 + $0x8] sm:$0xff]
        %v4578 = vld [vmem:[%s1104 + $0x10] sm:$0xff]
        %v4579 = vld [vmem:[%s1104 + $0x18] sm:$0xff]
        %v4580 = vld [vmem:[%s1104 + $0x20] sm:$0xff]
        %v4581 = vld [vmem:[%s1104 + $0x28] sm:$0xff]
        %v4582 = vld [vmem:[%s1104 + $0x30] sm:$0xff]
        %v4583 = vld [vmem:[%s1104 + $0x38] sm:$0xff]
        %v4584 = vmul.f32 %v4418, %v4576
        %v4585 = vmul.f32 %v4419, %v4577
        %v4586 = vmul.f32 %v4420, %v4578
        %v4587 = vmul.f32 %v4421, %v4579
        %v4588 = vmul.f32 %v4422, %v4580
        %v4589 = vmul.f32 %v4423, %v4581
        %v4590 = vmul.f32 %v4424, %v4582
        %v4591 = vmul.f32 %v4425, %v4583
        %v4592 = vadd.f32 %v4584, %v4588
        %v4593 = vrot.slane %v4592, 4
        %v4594 = vadd.f32 %v4592, %v4593
        %v4595 = vrot.slane %v4594, 2
        %v4596 = vadd.f32 %v4594, %v4595
        %v4597 = vrot.slane %v4596, 1
        %v4598 = vadd.f32 %v4596, %v4597
        %v4599 = vadd.f32 %v4585, %v4589
        %v4600 = vrot.slane %v4599, 4
        %v4601 = vadd.f32 %v4599, %v4600
        %v4602 = vrot.slane %v4601, 2
        %v4603 = vadd.f32 %v4601, %v4602
        %v4604 = vrot.slane %v4603, 1
        %v4605 = vadd.f32 %v4603, %v4604
        %v4606 = vadd.f32 %v4586, %v4590
        %v4607 = vrot.slane %v4606, 4
        %v4608 = vadd.f32 %v4606, %v4607
        %v4609 = vrot.slane %v4608, 2
        %v4610 = vadd.f32 %v4608, %v4609
        %v4611 = vrot.slane %v4610, 1
        %v4612 = vadd.f32 %v4610, %v4611
        %v4613 = vadd.f32 %v4587, %v4591
        %v4614 = vrot.slane %v4613, 4
        %v4615 = vadd.f32 %v4613, %v4614
        %v4616 = vrot.slane %v4615, 2
        %v4617 = vadd.f32 %v4615, %v4616
        %v4618 = vrot.slane %v4617, 1
        %v4619 = vadd.f32 %v4617, %v4618
        %v4624 = vcombine.low %v4598, %v4605
        %v4625 = vcombine.low %v4612, %v4619
        %v4627 = vunpack.c.l.s4 1966171168
        %v4628 = vunpack.c.0.s8 %v4627
        %v4629 = vlaneseq
        %v4630 = vshrl.u32 %v4629, 7
        %v4631 = vsub.s32 %v4628, %v4630
        %v4632 = vrot.slane %v4624, %v4631
        %v4634 = vunpack.c.l.s4 1966171168
        %v4635 = vunpack.c.0.s8 %v4634
        %v4636 = vlaneseq
        %v4637 = vshrl.u32 %v4636, 7
        %v4638 = vsub.s32 %v4635, %v4637
        %v4639 = vrot.slane %v4625, %v4638
        %v4640 = vcombine.low %v4632, %v4639
        %v4642 = vunpack.c.l.s4 1966171168
        %v4643 = vunpack.c.0.s8 %v4642
        %v4644 = vlaneseq
        %v4645 = vshrl.u32 %v4644, 7
        %v4646 = vsub.s32 %v4643, %v4645
        %v4647 = vrot.slane %v4640, %v4646
        %4649 = vst.msk [vmem:[%s2645] ss:$8 sm:$0xf] %vm2493, %v4647
        %4650 = vst.msk [vmem:[%s2645] ss:$8 sm:$0x0] %vm2493, %v4647
        %v4651 = vld [vmem:[%s1347] sm:$0xff]
        %v4652 = vld [vmem:[%s1347 + $0x8] sm:$0xff]
        %v4653 = vld [vmem:[%s1347 + $0x10] sm:$0xff]
        %v4654 = vld [vmem:[%s1347 + $0x18] sm:$0xff]
        %v4655 = vld [vmem:[%s1347 + $0x20] sm:$0xff]
        %v4656 = vld [vmem:[%s1347 + $0x28] sm:$0xff]
        %v4657 = vld [vmem:[%s1347 + $0x30] sm:$0xff]
        %v4658 = vld [vmem:[%s1347 + $0x38] sm:$0xff]
        %v4659 = vmul.f32 %v4418, %v4651
        %v4660 = vmul.f32 %v4419, %v4652
        %v4661 = vmul.f32 %v4420, %v4653
        %v4662 = vmul.f32 %v4421, %v4654
        %v4663 = vmul.f32 %v4422, %v4655
        %v4664 = vmul.f32 %v4423, %v4656
        %v4665 = vmul.f32 %v4424, %v4657
        %v4666 = vmul.f32 %v4425, %v4658
        %v4667 = vadd.f32 %v4659, %v4663
        %v4668 = vrot.slane %v4667, 4
        %v4669 = vadd.f32 %v4667, %v4668
        %v4670 = vrot.slane %v4669, 2
        %v4671 = vadd.f32 %v4669, %v4670
        %v4672 = vrot.slane %v4671, 1
        %v4673 = vadd.f32 %v4671, %v4672
        %v4674 = vadd.f32 %v4660, %v4664
        %v4675 = vrot.slane %v4674, 4
        %v4676 = vadd.f32 %v4674, %v4675
        %v4677 = vrot.slane %v4676, 2
        %v4678 = vadd.f32 %v4676, %v4677
        %v4679 = vrot.slane %v4678, 1
        %v4680 = vadd.f32 %v4678, %v4679
        %v4681 = vadd.f32 %v4661, %v4665
        %v4682 = vrot.slane %v4681, 4
        %v4683 = vadd.f32 %v4681, %v4682
        %v4684 = vrot.slane %v4683, 2
        %v4685 = vadd.f32 %v4683, %v4684
        %v4686 = vrot.slane %v4685, 1
        %v4687 = vadd.f32 %v4685, %v4686
        %v4688 = vadd.f32 %v4662, %v4666
        %v4689 = vrot.slane %v4688, 4
        %v4690 = vadd.f32 %v4688, %v4689
        %v4691 = vrot.slane %v4690, 2
        %v4692 = vadd.f32 %v4690, %v4691
        %v4693 = vrot.slane %v4692, 1
        %v4694 = vadd.f32 %v4692, %v4693
        %v4699 = vcombine.low %v4673, %v4680
        %v4700 = vcombine.low %v4687, %v4694
        %v4702 = vunpack.c.l.s4 1966171168
        %v4703 = vunpack.c.0.s8 %v4702
        %v4704 = vlaneseq
        %v4705 = vshrl.u32 %v4704, 7
        %v4706 = vsub.s32 %v4703, %v4705
        %v4707 = vrot.slane %v4699, %v4706
        %v4709 = vunpack.c.l.s4 1966171168
        %v4710 = vunpack.c.0.s8 %v4709
        %v4711 = vlaneseq
        %v4712 = vshrl.u32 %v4711, 7
        %v4713 = vsub.s32 %v4710, %v4712
        %v4714 = vrot.slane %v4700, %v4713
        %v4715 = vcombine.low %v4707, %v4714
        %v4717 = vunpack.c.l.s4 1966171168
        %v4718 = vunpack.c.0.s8 %v4717
        %v4719 = vlaneseq
        %v4720 = vshrl.u32 %v4719, 7
        %v4721 = vsub.s32 %v4718, %v4720
        %v4722 = vrot.slane %v4715, %v4721
        %4724 = vst.msk [vmem:[%s2721] ss:$8 sm:$0xf] %vm2493, %v4722
        %4725 = vst.msk [vmem:[%s2721] ss:$8 sm:$0x0] %vm2493, %v4722
        %v4726 = vld [vmem:[%s1590] sm:$0xff]
        %v4727 = vld [vmem:[%s1590 + $0x8] sm:$0xff]
        %v4728 = vld [vmem:[%s1590 + $0x10] sm:$0xff]
        %v4729 = vld [vmem:[%s1590 + $0x18] sm:$0xff]
        %v4730 = vld [vmem:[%s1590 + $0x20] sm:$0xff]
        %v4731 = vld [vmem:[%s1590 + $0x28] sm:$0xff]
        %v4732 = vld [vmem:[%s1590 + $0x30] sm:$0xff]
        %v4733 = vld [vmem:[%s1590 + $0x38] sm:$0xff]
        %v4734 = vmul.f32 %v4418, %v4726
        %v4735 = vmul.f32 %v4419, %v4727
        %v4736 = vmul.f32 %v4420, %v4728
        %v4737 = vmul.f32 %v4421, %v4729
        %v4738 = vmul.f32 %v4422, %v4730
        %v4739 = vmul.f32 %v4423, %v4731
        %v4740 = vmul.f32 %v4424, %v4732
        %v4741 = vmul.f32 %v4425, %v4733
        %v4742 = vadd.f32 %v4734, %v4738
        %v4743 = vrot.slane %v4742, 4
        %v4744 = vadd.f32 %v4742, %v4743
        %v4745 = vrot.slane %v4744, 2
        %v4746 = vadd.f32 %v4744, %v4745
        %v4747 = vrot.slane %v4746, 1
        %v4748 = vadd.f32 %v4746, %v4747
        %v4749 = vadd.f32 %v4735, %v4739
        %v4750 = vrot.slane %v4749, 4
        %v4751 = vadd.f32 %v4749, %v4750
        %v4752 = vrot.slane %v4751, 2
        %v4753 = vadd.f32 %v4751, %v4752
        %v4754 = vrot.slane %v4753, 1
        %v4755 = vadd.f32 %v4753, %v4754
        %v4756 = vadd.f32 %v4736, %v4740
        %v4757 = vrot.slane %v4756, 4
        %v4758 = vadd.f32 %v4756, %v4757
        %v4759 = vrot.slane %v4758, 2
        %v4760 = vadd.f32 %v4758, %v4759
        %v4761 = vrot.slane %v4760, 1
        %v4762 = vadd.f32 %v4760, %v4761
        %v4763 = vadd.f32 %v4737, %v4741
        %v4764 = vrot.slane %v4763, 4
        %v4765 = vadd.f32 %v4763, %v4764
        %v4766 = vrot.slane %v4765, 2
        %v4767 = vadd.f32 %v4765, %v4766
        %v4768 = vrot.slane %v4767, 1
        %v4769 = vadd.f32 %v4767, %v4768
        %v4774 = vcombine.low %v4748, %v4755
        %v4775 = vcombine.low %v4762, %v4769
        %v4777 = vunpack.c.l.s4 1966171168
        %v4778 = vunpack.c.0.s8 %v4777
        %v4779 = vlaneseq
        %v4780 = vshrl.u32 %v4779, 7
        %v4781 = vsub.s32 %v4778, %v4780
        %v4782 = vrot.slane %v4774, %v4781
        %v4784 = vunpack.c.l.s4 1966171168
        %v4785 = vunpack.c.0.s8 %v4784
        %v4786 = vlaneseq
        %v4787 = vshrl.u32 %v4786, 7
        %v4788 = vsub.s32 %v4785, %v4787
        %v4789 = vrot.slane %v4775, %v4788
        %v4790 = vcombine.low %v4782, %v4789
        %v4792 = vunpack.c.l.s4 1966171168
        %v4793 = vunpack.c.0.s8 %v4792
        %v4794 = vlaneseq
        %v4795 = vshrl.u32 %v4794, 7
        %v4796 = vsub.s32 %v4793, %v4795
        %v4797 = vrot.slane %v4790, %v4796
        %4799 = vst.msk [vmem:[%s2797] ss:$8 sm:$0xf] %vm2493, %v4797
        %4800 = vst.msk [vmem:[%s2797] ss:$8 sm:$0x0] %vm2493, %v4797
        %v4801 = vld [vmem:[%s1833] sm:$0xff]
        %v4802 = vld [vmem:[%s1833 + $0x8] sm:$0xff]
        %v4803 = vld [vmem:[%s1833 + $0x10] sm:$0xff]
        %v4804 = vld [vmem:[%s1833 + $0x18] sm:$0xff]
        %v4805 = vld [vmem:[%s1833 + $0x20] sm:$0xff]
        %v4806 = vld [vmem:[%s1833 + $0x28] sm:$0xff]
        %v4807 = vld [vmem:[%s1833 + $0x30] sm:$0xff]
        %v4808 = vld [vmem:[%s1833 + $0x38] sm:$0xff]
        %v4809 = vmul.f32 %v4418, %v4801
        %v4810 = vmul.f32 %v4419, %v4802
        %v4811 = vmul.f32 %v4420, %v4803
        %v4812 = vmul.f32 %v4421, %v4804
        %v4813 = vmul.f32 %v4422, %v4805
        %v4814 = vmul.f32 %v4423, %v4806
        %v4815 = vmul.f32 %v4424, %v4807
        %v4816 = vmul.f32 %v4425, %v4808
        %v4817 = vadd.f32 %v4809, %v4813
        %v4818 = vrot.slane %v4817, 4
        %v4819 = vadd.f32 %v4817, %v4818
        %v4820 = vrot.slane %v4819, 2
        %v4821 = vadd.f32 %v4819, %v4820
        %v4822 = vrot.slane %v4821, 1
        %v4823 = vadd.f32 %v4821, %v4822
        %v4824 = vadd.f32 %v4810, %v4814
        %v4825 = vrot.slane %v4824, 4
        %v4826 = vadd.f32 %v4824, %v4825
        %v4827 = vrot.slane %v4826, 2
        %v4828 = vadd.f32 %v4826, %v4827
        %v4829 = vrot.slane %v4828, 1
        %v4830 = vadd.f32 %v4828, %v4829
        %v4831 = vadd.f32 %v4811, %v4815
        %v4832 = vrot.slane %v4831, 4
        %v4833 = vadd.f32 %v4831, %v4832
        %v4834 = vrot.slane %v4833, 2
        %v4835 = vadd.f32 %v4833, %v4834
        %v4836 = vrot.slane %v4835, 1
        %v4837 = vadd.f32 %v4835, %v4836
        %v4838 = vadd.f32 %v4812, %v4816
        %v4839 = vrot.slane %v4838, 4
        %v4840 = vadd.f32 %v4838, %v4839
        %v4841 = vrot.slane %v4840, 2
        %v4842 = vadd.f32 %v4840, %v4841
        %v4843 = vrot.slane %v4842, 1
        %v4844 = vadd.f32 %v4842, %v4843
        %v4849 = vcombine.low %v4823, %v4830
        %v4850 = vcombine.low %v4837, %v4844
        %v4852 = vunpack.c.l.s4 1966171168
        %v4853 = vunpack.c.0.s8 %v4852
        %v4854 = vlaneseq
        %v4855 = vshrl.u32 %v4854, 7
        %v4856 = vsub.s32 %v4853, %v4855
        %v4857 = vrot.slane %v4849, %v4856
        %v4859 = vunpack.c.l.s4 1966171168
        %v4860 = vunpack.c.0.s8 %v4859
        %v4861 = vlaneseq
        %v4862 = vshrl.u32 %v4861, 7
        %v4863 = vsub.s32 %v4860, %v4862
        %v4864 = vrot.slane %v4850, %v4863
        %v4865 = vcombine.low %v4857, %v4864
        %v4867 = vunpack.c.l.s4 1966171168
        %v4868 = vunpack.c.0.s8 %v4867
        %v4869 = vlaneseq
        %v4870 = vshrl.u32 %v4869, 7
        %v4871 = vsub.s32 %v4868, %v4870
        %v4872 = vrot.slane %v4865, %v4871
        %4874 = vst.msk [vmem:[%s2873] ss:$8 sm:$0xf] %vm2493, %v4872
        %4875 = vst.msk [vmem:[%s2873] ss:$8 sm:$0x0] %vm2493, %v4872
        %v4876 = vld [vmem:[%s2076] sm:$0xff]
        %v4877 = vld [vmem:[%s2076 + $0x8] sm:$0xff]
        %v4878 = vld [vmem:[%s2076 + $0x10] sm:$0xff]
        %v4879 = vld [vmem:[%s2076 + $0x18] sm:$0xff]
        %v4880 = vld [vmem:[%s2076 + $0x20] sm:$0xff]
        %v4881 = vld [vmem:[%s2076 + $0x28] sm:$0xff]
        %v4882 = vld [vmem:[%s2076 + $0x30] sm:$0xff]
        %v4883 = vld [vmem:[%s2076 + $0x38] sm:$0xff]
        %v4884 = vmul.f32 %v4418, %v4876
        %v4885 = vmul.f32 %v4419, %v4877
        %v4886 = vmul.f32 %v4420, %v4878
        %v4887 = vmul.f32 %v4421, %v4879
        %v4888 = vmul.f32 %v4422, %v4880
        %v4889 = vmul.f32 %v4423, %v4881
        %v4890 = vmul.f32 %v4424, %v4882
        %v4891 = vmul.f32 %v4425, %v4883
        %v4892 = vadd.f32 %v4884, %v4888
        %v4893 = vrot.slane %v4892, 4
        %v4894 = vadd.f32 %v4892, %v4893
        %v4895 = vrot.slane %v4894, 2
        %v4896 = vadd.f32 %v4894, %v4895
        %v4897 = vrot.slane %v4896, 1
        %v4898 = vadd.f32 %v4896, %v4897
        %v4899 = vadd.f32 %v4885, %v4889
        %v4900 = vrot.slane %v4899, 4
        %v4901 = vadd.f32 %v4899, %v4900
        %v4902 = vrot.slane %v4901, 2
        %v4903 = vadd.f32 %v4901, %v4902
        %v4904 = vrot.slane %v4903, 1
        %v4905 = vadd.f32 %v4903, %v4904
        %v4906 = vadd.f32 %v4886, %v4890
        %v4907 = vrot.slane %v4906, 4
        %v4908 = vadd.f32 %v4906, %v4907
        %v4909 = vrot.slane %v4908, 2
        %v4910 = vadd.f32 %v4908, %v4909
        %v4911 = vrot.slane %v4910, 1
        %v4912 = vadd.f32 %v4910, %v4911
        %v4913 = vadd.f32 %v4887, %v4891
        %v4914 = vrot.slane %v4913, 4
        %v4915 = vadd.f32 %v4913, %v4914
        %v4916 = vrot.slane %v4915, 2
        %v4917 = vadd.f32 %v4915, %v4916
        %v4918 = vrot.slane %v4917, 1
        %v4919 = vadd.f32 %v4917, %v4918
        %v4924 = vcombine.low %v4898, %v4905
        %v4925 = vcombine.low %v4912, %v4919
        %v4927 = vunpack.c.l.s4 1966171168
        %v4928 = vunpack.c.0.s8 %v4927
        %v4929 = vlaneseq
        %v4930 = vshrl.u32 %v4929, 7
        %v4931 = vsub.s32 %v4928, %v4930
        %v4932 = vrot.slane %v4924, %v4931
        %v4934 = vunpack.c.l.s4 1966171168
        %v4935 = vunpack.c.0.s8 %v4934
        %v4936 = vlaneseq
        %v4937 = vshrl.u32 %v4936, 7
        %v4938 = vsub.s32 %v4935, %v4937
        %v4939 = vrot.slane %v4925, %v4938
        %v4940 = vcombine.low %v4932, %v4939
        %v4942 = vunpack.c.l.s4 1966171168
        %v4943 = vunpack.c.0.s8 %v4942
        %v4944 = vlaneseq
        %v4945 = vshrl.u32 %v4944, 7
        %v4946 = vsub.s32 %v4943, %v4945
        %v4947 = vrot.slane %v4940, %v4946
        %4949 = vst.msk [vmem:[%s2949] ss:$8 sm:$0xf] %vm2493, %v4947
        %4950 = vst.msk [vmem:[%s2949] ss:$8 sm:$0x0] %vm2493, %v4947
        %v4951 = vld [vmem:[%s2319] sm:$0xff]
        %v4952 = vld [vmem:[%s2319 + $0x8] sm:$0xff]
        %v4953 = vld [vmem:[%s2319 + $0x10] sm:$0xff]
        %v4954 = vld [vmem:[%s2319 + $0x18] sm:$0xff]
        %v4955 = vld [vmem:[%s2319 + $0x20] sm:$0xff]
        %v4956 = vld [vmem:[%s2319 + $0x28] sm:$0xff]
        %v4957 = vld [vmem:[%s2319 + $0x30] sm:$0xff]
        %v4958 = vld [vmem:[%s2319 + $0x38] sm:$0xff]
        %v4959 = vmul.f32 %v4418, %v4951
        %v4960 = vmul.f32 %v4419, %v4952
        %v4961 = vmul.f32 %v4420, %v4953
        %v4962 = vmul.f32 %v4421, %v4954
        %v4963 = vmul.f32 %v4422, %v4955
        %v4964 = vmul.f32 %v4423, %v4956
        %v4965 = vmul.f32 %v4424, %v4957
        %v4966 = vmul.f32 %v4425, %v4958
        %v4967 = vadd.f32 %v4959, %v4963
        %v4968 = vrot.slane %v4967, 4
        %v4969 = vadd.f32 %v4967, %v4968
        %v4970 = vrot.slane %v4969, 2
        %v4971 = vadd.f32 %v4969, %v4970
        %v4972 = vrot.slane %v4971, 1
        %v4973 = vadd.f32 %v4971, %v4972
        %v4974 = vadd.f32 %v4960, %v4964
        %v4975 = vrot.slane %v4974, 4
        %v4976 = vadd.f32 %v4974, %v4975
        %v4977 = vrot.slane %v4976, 2
        %v4978 = vadd.f32 %v4976, %v4977
        %v4979 = vrot.slane %v4978, 1
        %v4980 = vadd.f32 %v4978, %v4979
        %v4981 = vadd.f32 %v4961, %v4965
        %v4982 = vrot.slane %v4981, 4
        %v4983 = vadd.f32 %v4981, %v4982
        %v4984 = vrot.slane %v4983, 2
        %v4985 = vadd.f32 %v4983, %v4984
        %v4986 = vrot.slane %v4985, 1
        %v4987 = vadd.f32 %v4985, %v4986
        %v4988 = vadd.f32 %v4962, %v4966
        %v4989 = vrot.slane %v4988, 4
        %v4990 = vadd.f32 %v4988, %v4989
        %v4991 = vrot.slane %v4990, 2
        %v4992 = vadd.f32 %v4990, %v4991
        %v4993 = vrot.slane %v4992, 1
        %v4994 = vadd.f32 %v4992, %v4993
        %v4999 = vcombine.low %v4973, %v4980
        %v5000 = vcombine.low %v4987, %v4994
        %v5002 = vunpack.c.l.s4 1966171168
        %v5003 = vunpack.c.0.s8 %v5002
        %v5004 = vlaneseq
        %v5005 = vshrl.u32 %v5004, 7
        %v5006 = vsub.s32 %v5003, %v5005
        %v5007 = vrot.slane %v4999, %v5006
        %v5009 = vunpack.c.l.s4 1966171168
        %v5010 = vunpack.c.0.s8 %v5009
        %v5011 = vlaneseq
        %v5012 = vshrl.u32 %v5011, 7
        %v5013 = vsub.s32 %v5010, %v5012
        %v5014 = vrot.slane %v5000, %v5013
        %v5015 = vcombine.low %v5007, %v5014
        %v5017 = vunpack.c.l.s4 1966171168
        %v5018 = vunpack.c.0.s8 %v5017
        %v5019 = vlaneseq
        %v5020 = vshrl.u32 %v5019, 7
        %v5021 = vsub.s32 %v5018, %v5020
        %v5022 = vrot.slane %v5015, %v5021
        %5024 = vst.msk [vmem:[%s3025] ss:$8 sm:$0xf] %vm2493, %v5022
        %5025 = vst.msk [vmem:[%s3025] ss:$8 sm:$0x0] %vm2493, %v5022
        %v5026 = vld [vmem:[#allocation5] sm:$0xff]
        %v5027 = vld [vmem:[#allocation5 + $0x8] sm:$0xff]
        %v5028 = vld [vmem:[#allocation5 + $0x10] sm:$0xff]
        %v5029 = vld [vmem:[#allocation5 + $0x18] sm:$0xff]
        %v5030 = vmul.f32 %v5026, %v429
        %v5031 = vmul.f32 %v5027, %v430
        %v5032 = vmul.f32 %v5028, %v431
        %v5033 = vmul.f32 %v5029, %v432
        %v5034 = vmul.f32 %v5030, 1.442695
        %v5035 = vpow.pop %v5034
        %v5036 = vmul.f32 %v5031, 1.442695
        %v5037 = vpow.pop %v5036
        %v5038 = vmul.f32 %v5032, 1.442695
        %v5039 = vpow.pop %v5038
        %v5040 = vmul.f32 %v5033, 1.442695
        %v5041 = vpow.pop %v5040
        %v5042 = vrot.slane %v5035, 4
        %v5043 = vadd.f32 %v5035, %v5042
        %v5044 = vrot.slane %v5043, 2
        %v5045 = vadd.f32 %v5043, %v5044
        %v5046 = vrot.slane %v5045, 1
        %v5047 = vadd.f32 %v5045, %v5046
        %v5048 = vrot.slane %v5037, 4
        %v5049 = vadd.f32 %v5037, %v5048
        %v5050 = vrot.slane %v5049, 2
        %v5051 = vadd.f32 %v5049, %v5050
        %v5052 = vrot.slane %v5051, 1
        %v5053 = vadd.f32 %v5051, %v5052
        %v5054 = vrot.slane %v5039, 4
        %v5055 = vadd.f32 %v5039, %v5054
        %v5056 = vrot.slane %v5055, 2
        %v5057 = vadd.f32 %v5055, %v5056
        %v5058 = vrot.slane %v5057, 1
        %v5059 = vadd.f32 %v5057, %v5058
        %v5060 = vrot.slane %v5041, 4
        %v5061 = vadd.f32 %v5041, %v5060
        %v5062 = vrot.slane %v5061, 2
        %v5063 = vadd.f32 %v5061, %v5062
        %v5064 = vrot.slane %v5063, 1
        %v5065 = vadd.f32 %v5063, %v5064
        %s5066 = sld [smem:[#allocation16 + $0x3]]
        %v5067 = vrcp.pop %v5047
        %v5068 = vrcp.pop %v5053
        %v5069 = vrcp.pop %v5059
        %v5070 = vrcp.pop %v5065
        %v5071 = vstv %s5066
        %v5072 = vmul.f32 %v5071, %v5067
        %v5073 = vmul.f32 %v5071, %v5068
        %v5074 = vmul.f32 %v5071, %v5069
        %v5075 = vmul.f32 %v5071, %v5070
        %v5076 = vmul.f32 %v5072, %v5035
        %v5077 = vmul.f32 %v5073, %v5037
        %v5078 = vmul.f32 %v5074, %v5039
        %v5079 = vmul.f32 %v5075, %v5041
        %v5080 = vadd.f32 %v4414, %v5076
        %v5081 = vadd.f32 %v4415, %v5077
        %v5082 = vadd.f32 %v4416, %v5078
        %v5083 = vadd.f32 %v4417, %v5079
        %v5084 = vld [vmem:[%s1509] sm:$0xff]
        %v5085 = vld [vmem:[%s1509 + $0x8] sm:$0xff]
        %v5086 = vld [vmem:[%s1509 + $0x10] sm:$0xff]
        %v5087 = vld [vmem:[%s1509 + $0x18] sm:$0xff]
        %v5088 = vld [vmem:[%s1509 + $0x20] sm:$0xff]
        %v5089 = vld [vmem:[%s1509 + $0x28] sm:$0xff]
        %v5090 = vld [vmem:[%s1509 + $0x30] sm:$0xff]
        %v5091 = vld [vmem:[%s1509 + $0x38] sm:$0xff]
        %v5092 = vld [vmem:[#allocation3] sm:$0xff]
        %v5093 = vld [vmem:[#allocation3 + $0x8] sm:$0xff]
        %v5094 = vld [vmem:[#allocation3 + $0x10] sm:$0xff]
        %v5095 = vld [vmem:[#allocation3 + $0x18] sm:$0xff]
        %v5096 = vld [vmem:[#allocation3 + $0x20] sm:$0xff]
        %v5097 = vld [vmem:[#allocation3 + $0x28] sm:$0xff]
        %v5098 = vld [vmem:[#allocation3 + $0x30] sm:$0xff]
        %v5099 = vld [vmem:[#allocation3 + $0x38] sm:$0xff]
        %v5100 = vmul.f32 %v5084, %v5092
        %v5101 = vmul.f32 %v5085, %v5093
        %v5102 = vmul.f32 %v5086, %v5094
        %v5103 = vmul.f32 %v5087, %v5095
        %v5104 = vmul.f32 %v5088, %v5096
        %v5105 = vmul.f32 %v5089, %v5097
        %v5106 = vmul.f32 %v5090, %v5098
        %v5107 = vmul.f32 %v5091, %v5099
        %v5108 = vadd.f32 %v5100, %v5104
        %v5109 = vrot.slane %v5108, 4
        %v5110 = vadd.f32 %v5108, %v5109
        %v5111 = vrot.slane %v5110, 2
        %v5112 = vadd.f32 %v5110, %v5111
        %v5113 = vrot.slane %v5112, 1
        %v5114 = vadd.f32 %v5112, %v5113
        %v5115 = vadd.f32 %v5101, %v5105
        %v5116 = vrot.slane %v5115, 4
        %v5117 = vadd.f32 %v5115, %v5116
        %v5118 = vrot.slane %v5117, 2
        %v5119 = vadd.f32 %v5117, %v5118
        %v5120 = vrot.slane %v5119, 1
        %v5121 = vadd.f32 %v5119, %v5120
        %v5122 = vadd.f32 %v5102, %v5106
        %v5123 = vrot.slane %v5122, 4
        %v5124 = vadd.f32 %v5122, %v5123
        %v5125 = vrot.slane %v5124, 2
        %v5126 = vadd.f32 %v5124, %v5125
        %v5127 = vrot.slane %v5126, 1
        %v5128 = vadd.f32 %v5126, %v5127
        %v5129 = vadd.f32 %v5103, %v5107
        %v5130 = vrot.slane %v5129, 4
        %v5131 = vadd.f32 %v5129, %v5130
        %v5132 = vrot.slane %v5131, 2
        %v5133 = vadd.f32 %v5131, %v5132
        %v5134 = vrot.slane %v5133, 1
        %v5135 = vadd.f32 %v5133, %v5134
        %v5140 = vcombine.low %v5114, %v5121
        %v5141 = vcombine.low %v5128, %v5135
        %v5143 = vunpack.c.l.s4 1966171168
        %v5144 = vunpack.c.0.s8 %v5143
        %v5145 = vlaneseq
        %v5146 = vshrl.u32 %v5145, 7
        %v5147 = vsub.s32 %v5144, %v5146
        %v5148 = vrot.slane %v5140, %v5147
        %v5150 = vunpack.c.l.s4 1966171168
        %v5151 = vunpack.c.0.s8 %v5150
        %v5152 = vlaneseq
        %v5153 = vshrl.u32 %v5152, 7
        %v5154 = vsub.s32 %v5151, %v5153
        %v5155 = vrot.slane %v5141, %v5154
        %v5156 = vcombine.low %v5148, %v5155
        %v5158 = vunpack.c.l.s4 1966171168
        %v5159 = vunpack.c.0.s8 %v5158
        %v5160 = vlaneseq
        %v5161 = vshrl.u32 %v5160, 7
        %v5162 = vsub.s32 %v5159, %v5161
        %v5163 = vrot.slane %v5156, %v5162
        %5165 = vst.msk [vmem:[#allocation5] ss:$8 sm:$0xf] %vm2493, %v5163
        %5166 = vst.msk [vmem:[#allocation5] ss:$8 sm:$0x0] %vm2493, %v5163
        %v5167 = vld [vmem:[%s861] sm:$0xff]
        %v5168 = vld [vmem:[%s861 + $0x8] sm:$0xff]
        %v5169 = vld [vmem:[%s861 + $0x10] sm:$0xff]
        %v5170 = vld [vmem:[%s861 + $0x18] sm:$0xff]
        %v5171 = vld [vmem:[%s861 + $0x20] sm:$0xff]
        %v5172 = vld [vmem:[%s861 + $0x28] sm:$0xff]
        %v5173 = vld [vmem:[%s861 + $0x30] sm:$0xff]
        %v5174 = vld [vmem:[%s861 + $0x38] sm:$0xff]
        %v5175 = vmul.f32 %v5084, %v5167
        %v5176 = vmul.f32 %v5085, %v5168
        %v5177 = vmul.f32 %v5086, %v5169
        %v5178 = vmul.f32 %v5087, %v5170
        %v5179 = vmul.f32 %v5088, %v5171
        %v5180 = vmul.f32 %v5089, %v5172
        %v5181 = vmul.f32 %v5090, %v5173
        %v5182 = vmul.f32 %v5091, %v5174
        %v5183 = vadd.f32 %v5175, %v5179
        %v5184 = vrot.slane %v5183, 4
        %v5185 = vadd.f32 %v5183, %v5184
        %v5186 = vrot.slane %v5185, 2
        %v5187 = vadd.f32 %v5185, %v5186
        %v5188 = vrot.slane %v5187, 1
        %v5189 = vadd.f32 %v5187, %v5188
        %v5190 = vadd.f32 %v5176, %v5180
        %v5191 = vrot.slane %v5190, 4
        %v5192 = vadd.f32 %v5190, %v5191
        %v5193 = vrot.slane %v5192, 2
        %v5194 = vadd.f32 %v5192, %v5193
        %v5195 = vrot.slane %v5194, 1
        %v5196 = vadd.f32 %v5194, %v5195
        %v5197 = vadd.f32 %v5177, %v5181
        %v5198 = vrot.slane %v5197, 4
        %v5199 = vadd.f32 %v5197, %v5198
        %v5200 = vrot.slane %v5199, 2
        %v5201 = vadd.f32 %v5199, %v5200
        %v5202 = vrot.slane %v5201, 1
        %v5203 = vadd.f32 %v5201, %v5202
        %v5204 = vadd.f32 %v5178, %v5182
        %v5205 = vrot.slane %v5204, 4
        %v5206 = vadd.f32 %v5204, %v5205
        %v5207 = vrot.slane %v5206, 2
        %v5208 = vadd.f32 %v5206, %v5207
        %v5209 = vrot.slane %v5208, 1
        %v5210 = vadd.f32 %v5208, %v5209
        %v5215 = vcombine.low %v5189, %v5196
        %v5216 = vcombine.low %v5203, %v5210
        %v5218 = vunpack.c.l.s4 1966171168
        %v5219 = vunpack.c.0.s8 %v5218
        %v5220 = vlaneseq
        %v5221 = vshrl.u32 %v5220, 7
        %v5222 = vsub.s32 %v5219, %v5221
        %v5223 = vrot.slane %v5215, %v5222
        %v5225 = vunpack.c.l.s4 1966171168
        %v5226 = vunpack.c.0.s8 %v5225
        %v5227 = vlaneseq
        %v5228 = vshrl.u32 %v5227, 7
        %v5229 = vsub.s32 %v5226, %v5228
        %v5230 = vrot.slane %v5216, %v5229
        %v5231 = vcombine.low %v5223, %v5230
        %v5233 = vunpack.c.l.s4 1966171168
        %v5234 = vunpack.c.0.s8 %v5233
        %v5235 = vlaneseq
        %v5236 = vshrl.u32 %v5235, 7
        %v5237 = vsub.s32 %v5234, %v5236
        %v5238 = vrot.slane %v5231, %v5237
        %5240 = vst.msk [vmem:[%s2569] ss:$8 sm:$0xf] %vm2493, %v5238
        %5241 = vst.msk [vmem:[%s2569] ss:$8 sm:$0x0] %vm2493, %v5238
        %v5242 = vld [vmem:[%s1104] sm:$0xff]
        %v5243 = vld [vmem:[%s1104 + $0x8] sm:$0xff]
        %v5244 = vld [vmem:[%s1104 + $0x10] sm:$0xff]
        %v5245 = vld [vmem:[%s1104 + $0x18] sm:$0xff]
        %v5246 = vld [vmem:[%s1104 + $0x20] sm:$0xff]
        %v5247 = vld [vmem:[%s1104 + $0x28] sm:$0xff]
        %v5248 = vld [vmem:[%s1104 + $0x30] sm:$0xff]
        %v5249 = vld [vmem:[%s1104 + $0x38] sm:$0xff]
        %v5250 = vmul.f32 %v5084, %v5242
        %v5251 = vmul.f32 %v5085, %v5243
        %v5252 = vmul.f32 %v5086, %v5244
        %v5253 = vmul.f32 %v5087, %v5245
        %v5254 = vmul.f32 %v5088, %v5246
        %v5255 = vmul.f32 %v5089, %v5247
        %v5256 = vmul.f32 %v5090, %v5248
        %v5257 = vmul.f32 %v5091, %v5249
        %v5258 = vadd.f32 %v5250, %v5254
        %v5259 = vrot.slane %v5258, 4
        %v5260 = vadd.f32 %v5258, %v5259
        %v5261 = vrot.slane %v5260, 2
        %v5262 = vadd.f32 %v5260, %v5261
        %v5263 = vrot.slane %v5262, 1
        %v5264 = vadd.f32 %v5262, %v5263
        %v5265 = vadd.f32 %v5251, %v5255
        %v5266 = vrot.slane %v5265, 4
        %v5267 = vadd.f32 %v5265, %v5266
        %v5268 = vrot.slane %v5267, 2
        %v5269 = vadd.f32 %v5267, %v5268
        %v5270 = vrot.slane %v5269, 1
        %v5271 = vadd.f32 %v5269, %v5270
        %v5272 = vadd.f32 %v5252, %v5256
        %v5273 = vrot.slane %v5272, 4
        %v5274 = vadd.f32 %v5272, %v5273
        %v5275 = vrot.slane %v5274, 2
        %v5276 = vadd.f32 %v5274, %v5275
        %v5277 = vrot.slane %v5276, 1
        %v5278 = vadd.f32 %v5276, %v5277
        %v5279 = vadd.f32 %v5253, %v5257
        %v5280 = vrot.slane %v5279, 4
        %v5281 = vadd.f32 %v5279, %v5280
        %v5282 = vrot.slane %v5281, 2
        %v5283 = vadd.f32 %v5281, %v5282
        %v5284 = vrot.slane %v5283, 1
        %v5285 = vadd.f32 %v5283, %v5284
        %v5290 = vcombine.low %v5264, %v5271
        %v5291 = vcombine.low %v5278, %v5285
        %v5293 = vunpack.c.l.s4 1966171168
        %v5294 = vunpack.c.0.s8 %v5293
        %v5295 = vlaneseq
        %v5296 = vshrl.u32 %v5295, 7
        %v5297 = vsub.s32 %v5294, %v5296
        %v5298 = vrot.slane %v5290, %v5297
        %v5300 = vunpack.c.l.s4 1966171168
        %v5301 = vunpack.c.0.s8 %v5300
        %v5302 = vlaneseq
        %v5303 = vshrl.u32 %v5302, 7
        %v5304 = vsub.s32 %v5301, %v5303
        %v5305 = vrot.slane %v5291, %v5304
        %v5306 = vcombine.low %v5298, %v5305
        %v5308 = vunpack.c.l.s4 1966171168
        %v5309 = vunpack.c.0.s8 %v5308
        %v5310 = vlaneseq
        %v5311 = vshrl.u32 %v5310, 7
        %v5312 = vsub.s32 %v5309, %v5311
        %v5313 = vrot.slane %v5306, %v5312
        %5315 = vst.msk [vmem:[%s2645] ss:$8 sm:$0xf] %vm2493, %v5313
        %5316 = vst.msk [vmem:[%s2645] ss:$8 sm:$0x0] %vm2493, %v5313
        %v5317 = vld [vmem:[%s1347] sm:$0xff]
        %v5318 = vld [vmem:[%s1347 + $0x8] sm:$0xff]
        %v5319 = vld [vmem:[%s1347 + $0x10] sm:$0xff]
        %v5320 = vld [vmem:[%s1347 + $0x18] sm:$0xff]
        %v5321 = vld [vmem:[%s1347 + $0x20] sm:$0xff]
        %v5322 = vld [vmem:[%s1347 + $0x28] sm:$0xff]
        %v5323 = vld [vmem:[%s1347 + $0x30] sm:$0xff]
        %v5324 = vld [vmem:[%s1347 + $0x38] sm:$0xff]
        %v5325 = vmul.f32 %v5084, %v5317
        %v5326 = vmul.f32 %v5085, %v5318
        %v5327 = vmul.f32 %v5086, %v5319
        %v5328 = vmul.f32 %v5087, %v5320
        %v5329 = vmul.f32 %v5088, %v5321
        %v5330 = vmul.f32 %v5089, %v5322
        %v5331 = vmul.f32 %v5090, %v5323
        %v5332 = vmul.f32 %v5091, %v5324
        %v5333 = vadd.f32 %v5325, %v5329
        %v5334 = vrot.slane %v5333, 4
        %v5335 = vadd.f32 %v5333, %v5334
        %v5336 = vrot.slane %v5335, 2
        %v5337 = vadd.f32 %v5335, %v5336
        %v5338 = vrot.slane %v5337, 1
        %v5339 = vadd.f32 %v5337, %v5338
        %v5340 = vadd.f32 %v5326, %v5330
        %v5341 = vrot.slane %v5340, 4
        %v5342 = vadd.f32 %v5340, %v5341
        %v5343 = vrot.slane %v5342, 2
        %v5344 = vadd.f32 %v5342, %v5343
        %v5345 = vrot.slane %v5344, 1
        %v5346 = vadd.f32 %v5344, %v5345
        %v5347 = vadd.f32 %v5327, %v5331
        %v5348 = vrot.slane %v5347, 4
        %v5349 = vadd.f32 %v5347, %v5348
        %v5350 = vrot.slane %v5349, 2
        %v5351 = vadd.f32 %v5349, %v5350
        %v5352 = vrot.slane %v5351, 1
        %v5353 = vadd.f32 %v5351, %v5352
        %v5354 = vadd.f32 %v5328, %v5332
        %v5355 = vrot.slane %v5354, 4
        %v5356 = vadd.f32 %v5354, %v5355
        %v5357 = vrot.slane %v5356, 2
        %v5358 = vadd.f32 %v5356, %v5357
        %v5359 = vrot.slane %v5358, 1
        %v5360 = vadd.f32 %v5358, %v5359
        %v5365 = vcombine.low %v5339, %v5346
        %v5366 = vcombine.low %v5353, %v5360
        %v5368 = vunpack.c.l.s4 1966171168
        %v5369 = vunpack.c.0.s8 %v5368
        %v5370 = vlaneseq
        %v5371 = vshrl.u32 %v5370, 7
        %v5372 = vsub.s32 %v5369, %v5371
        %v5373 = vrot.slane %v5365, %v5372
        %v5375 = vunpack.c.l.s4 1966171168
        %v5376 = vunpack.c.0.s8 %v5375
        %v5377 = vlaneseq
        %v5378 = vshrl.u32 %v5377, 7
        %v5379 = vsub.s32 %v5376, %v5378
        %v5380 = vrot.slane %v5366, %v5379
        %v5381 = vcombine.low %v5373, %v5380
        %v5383 = vunpack.c.l.s4 1966171168
        %v5384 = vunpack.c.0.s8 %v5383
        %v5385 = vlaneseq
        %v5386 = vshrl.u32 %v5385, 7
        %v5387 = vsub.s32 %v5384, %v5386
        %v5388 = vrot.slane %v5381, %v5387
        %5390 = vst.msk [vmem:[%s2721] ss:$8 sm:$0xf] %vm2493, %v5388
        %5391 = vst.msk [vmem:[%s2721] ss:$8 sm:$0x0] %vm2493, %v5388
        %v5392 = vld [vmem:[%s1590] sm:$0xff]
        %v5393 = vld [vmem:[%s1590 + $0x8] sm:$0xff]
        %v5394 = vld [vmem:[%s1590 + $0x10] sm:$0xff]
        %v5395 = vld [vmem:[%s1590 + $0x18] sm:$0xff]
        %v5396 = vld [vmem:[%s1590 + $0x20] sm:$0xff]
        %v5397 = vld [vmem:[%s1590 + $0x28] sm:$0xff]
        %v5398 = vld [vmem:[%s1590 + $0x30] sm:$0xff]
        %v5399 = vld [vmem:[%s1590 + $0x38] sm:$0xff]
        %v5400 = vmul.f32 %v5084, %v5392
        %v5401 = vmul.f32 %v5085, %v5393
        %v5402 = vmul.f32 %v5086, %v5394
        %v5403 = vmul.f32 %v5087, %v5395
        %v5404 = vmul.f32 %v5088, %v5396
        %v5405 = vmul.f32 %v5089, %v5397
        %v5406 = vmul.f32 %v5090, %v5398
        %v5407 = vmul.f32 %v5091, %v5399
        %v5408 = vadd.f32 %v5400, %v5404
        %v5409 = vrot.slane %v5408, 4
        %v5410 = vadd.f32 %v5408, %v5409
        %v5411 = vrot.slane %v5410, 2
        %v5412 = vadd.f32 %v5410, %v5411
        %v5413 = vrot.slane %v5412, 1
        %v5414 = vadd.f32 %v5412, %v5413
        %v5415 = vadd.f32 %v5401, %v5405
        %v5416 = vrot.slane %v5415, 4
        %v5417 = vadd.f32 %v5415, %v5416
        %v5418 = vrot.slane %v5417, 2
        %v5419 = vadd.f32 %v5417, %v5418
        %v5420 = vrot.slane %v5419, 1
        %v5421 = vadd.f32 %v5419, %v5420
        %v5422 = vadd.f32 %v5402, %v5406
        %v5423 = vrot.slane %v5422, 4
        %v5424 = vadd.f32 %v5422, %v5423
        %v5425 = vrot.slane %v5424, 2
        %v5426 = vadd.f32 %v5424, %v5425
        %v5427 = vrot.slane %v5426, 1
        %v5428 = vadd.f32 %v5426, %v5427
        %v5429 = vadd.f32 %v5403, %v5407
        %v5430 = vrot.slane %v5429, 4
        %v5431 = vadd.f32 %v5429, %v5430
        %v5432 = vrot.slane %v5431, 2
        %v5433 = vadd.f32 %v5431, %v5432
        %v5434 = vrot.slane %v5433, 1
        %v5435 = vadd.f32 %v5433, %v5434
        %v5440 = vcombine.low %v5414, %v5421
        %v5441 = vcombine.low %v5428, %v5435
        %v5443 = vunpack.c.l.s4 1966171168
        %v5444 = vunpack.c.0.s8 %v5443
        %v5445 = vlaneseq
        %v5446 = vshrl.u32 %v5445, 7
        %v5447 = vsub.s32 %v5444, %v5446
        %v5448 = vrot.slane %v5440, %v5447
        %v5450 = vunpack.c.l.s4 1966171168
        %v5451 = vunpack.c.0.s8 %v5450
        %v5452 = vlaneseq
        %v5453 = vshrl.u32 %v5452, 7
        %v5454 = vsub.s32 %v5451, %v5453
        %v5455 = vrot.slane %v5441, %v5454
        %v5456 = vcombine.low %v5448, %v5455
        %v5458 = vunpack.c.l.s4 1966171168
        %v5459 = vunpack.c.0.s8 %v5458
        %v5460 = vlaneseq
        %v5461 = vshrl.u32 %v5460, 7
        %v5462 = vsub.s32 %v5459, %v5461
        %v5463 = vrot.slane %v5456, %v5462
        %5465 = vst.msk [vmem:[%s2797] ss:$8 sm:$0xf] %vm2493, %v5463
        %5466 = vst.msk [vmem:[%s2797] ss:$8 sm:$0x0] %vm2493, %v5463
        %v5467 = vld [vmem:[%s1833] sm:$0xff]
        %v5468 = vld [vmem:[%s1833 + $0x8] sm:$0xff]
        %v5469 = vld [vmem:[%s1833 + $0x10] sm:$0xff]
        %v5470 = vld [vmem:[%s1833 + $0x18] sm:$0xff]
        %v5471 = vld [vmem:[%s1833 + $0x20] sm:$0xff]
        %v5472 = vld [vmem:[%s1833 + $0x28] sm:$0xff]
        %v5473 = vld [vmem:[%s1833 + $0x30] sm:$0xff]
        %v5474 = vld [vmem:[%s1833 + $0x38] sm:$0xff]
        %v5475 = vmul.f32 %v5084, %v5467
        %v5476 = vmul.f32 %v5085, %v5468
        %v5477 = vmul.f32 %v5086, %v5469
        %v5478 = vmul.f32 %v5087, %v5470
        %v5479 = vmul.f32 %v5088, %v5471
        %v5480 = vmul.f32 %v5089, %v5472
        %v5481 = vmul.f32 %v5090, %v5473
        %v5482 = vmul.f32 %v5091, %v5474
        %v5483 = vadd.f32 %v5475, %v5479
        %v5484 = vrot.slane %v5483, 4
        %v5485 = vadd.f32 %v5483, %v5484
        %v5486 = vrot.slane %v5485, 2
        %v5487 = vadd.f32 %v5485, %v5486
        %v5488 = vrot.slane %v5487, 1
        %v5489 = vadd.f32 %v5487, %v5488
        %v5490 = vadd.f32 %v5476, %v5480
        %v5491 = vrot.slane %v5490, 4
        %v5492 = vadd.f32 %v5490, %v5491
        %v5493 = vrot.slane %v5492, 2
        %v5494 = vadd.f32 %v5492, %v5493
        %v5495 = vrot.slane %v5494, 1
        %v5496 = vadd.f32 %v5494, %v5495
        %v5497 = vadd.f32 %v5477, %v5481
        %v5498 = vrot.slane %v5497, 4
        %v5499 = vadd.f32 %v5497, %v5498
        %v5500 = vrot.slane %v5499, 2
        %v5501 = vadd.f32 %v5499, %v5500
        %v5502 = vrot.slane %v5501, 1
        %v5503 = vadd.f32 %v5501, %v5502
        %v5504 = vadd.f32 %v5478, %v5482
        %v5505 = vrot.slane %v5504, 4
        %v5506 = vadd.f32 %v5504, %v5505
        %v5507 = vrot.slane %v5506, 2
        %v5508 = vadd.f32 %v5506, %v5507
        %v5509 = vrot.slane %v5508, 1
        %v5510 = vadd.f32 %v5508, %v5509
        %v5515 = vcombine.low %v5489, %v5496
        %v5516 = vcombine.low %v5503, %v5510
        %v5518 = vunpack.c.l.s4 1966171168
        %v5519 = vunpack.c.0.s8 %v5518
        %v5520 = vlaneseq
        %v5521 = vshrl.u32 %v5520, 7
        %v5522 = vsub.s32 %v5519, %v5521
        %v5523 = vrot.slane %v5515, %v5522
        %v5525 = vunpack.c.l.s4 1966171168
        %v5526 = vunpack.c.0.s8 %v5525
        %v5527 = vlaneseq
        %v5528 = vshrl.u32 %v5527, 7
        %v5529 = vsub.s32 %v5526, %v5528
        %v5530 = vrot.slane %v5516, %v5529
        %v5531 = vcombine.low %v5523, %v5530
        %v5533 = vunpack.c.l.s4 1966171168
        %v5534 = vunpack.c.0.s8 %v5533
        %v5535 = vlaneseq
        %v5536 = vshrl.u32 %v5535, 7
        %v5537 = vsub.s32 %v5534, %v5536
        %v5538 = vrot.slane %v5531, %v5537
        %5540 = vst.msk [vmem:[%s2873] ss:$8 sm:$0xf] %vm2493, %v5538
        %5541 = vst.msk [vmem:[%s2873] ss:$8 sm:$0x0] %vm2493, %v5538
        %v5542 = vld [vmem:[%s2076] sm:$0xff]
        %v5543 = vld [vmem:[%s2076 + $0x8] sm:$0xff]
        %v5544 = vld [vmem:[%s2076 + $0x10] sm:$0xff]
        %v5545 = vld [vmem:[%s2076 + $0x18] sm:$0xff]
        %v5546 = vld [vmem:[%s2076 + $0x20] sm:$0xff]
        %v5547 = vld [vmem:[%s2076 + $0x28] sm:$0xff]
        %v5548 = vld [vmem:[%s2076 + $0x30] sm:$0xff]
        %v5549 = vld [vmem:[%s2076 + $0x38] sm:$0xff]
        %v5550 = vmul.f32 %v5084, %v5542
        %v5551 = vmul.f32 %v5085, %v5543
        %v5552 = vmul.f32 %v5086, %v5544
        %v5553 = vmul.f32 %v5087, %v5545
        %v5554 = vmul.f32 %v5088, %v5546
        %v5555 = vmul.f32 %v5089, %v5547
        %v5556 = vmul.f32 %v5090, %v5548
        %v5557 = vmul.f32 %v5091, %v5549
        %v5558 = vadd.f32 %v5550, %v5554
        %v5559 = vrot.slane %v5558, 4
        %v5560 = vadd.f32 %v5558, %v5559
        %v5561 = vrot.slane %v5560, 2
        %v5562 = vadd.f32 %v5560, %v5561
        %v5563 = vrot.slane %v5562, 1
        %v5564 = vadd.f32 %v5562, %v5563
        %v5565 = vadd.f32 %v5551, %v5555
        %v5566 = vrot.slane %v5565, 4
        %v5567 = vadd.f32 %v5565, %v5566
        %v5568 = vrot.slane %v5567, 2
        %v5569 = vadd.f32 %v5567, %v5568
        %v5570 = vrot.slane %v5569, 1
        %v5571 = vadd.f32 %v5569, %v5570
        %v5572 = vadd.f32 %v5552, %v5556
        %v5573 = vrot.slane %v5572, 4
        %v5574 = vadd.f32 %v5572, %v5573
        %v5575 = vrot.slane %v5574, 2
        %v5576 = vadd.f32 %v5574, %v5575
        %v5577 = vrot.slane %v5576, 1
        %v5578 = vadd.f32 %v5576, %v5577
        %v5579 = vadd.f32 %v5553, %v5557
        %v5580 = vrot.slane %v5579, 4
        %v5581 = vadd.f32 %v5579, %v5580
        %v5582 = vrot.slane %v5581, 2
        %v5583 = vadd.f32 %v5581, %v5582
        %v5584 = vrot.slane %v5583, 1
        %v5585 = vadd.f32 %v5583, %v5584
        %v5590 = vcombine.low %v5564, %v5571
        %v5591 = vcombine.low %v5578, %v5585
        %v5593 = vunpack.c.l.s4 1966171168
        %v5594 = vunpack.c.0.s8 %v5593
        %v5595 = vlaneseq
        %v5596 = vshrl.u32 %v5595, 7
        %v5597 = vsub.s32 %v5594, %v5596
        %v5598 = vrot.slane %v5590, %v5597
        %v5600 = vunpack.c.l.s4 1966171168
        %v5601 = vunpack.c.0.s8 %v5600
        %v5602 = vlaneseq
        %v5603 = vshrl.u32 %v5602, 7
        %v5604 = vsub.s32 %v5601, %v5603
        %v5605 = vrot.slane %v5591, %v5604
        %v5606 = vcombine.low %v5598, %v5605
        %v5608 = vunpack.c.l.s4 1966171168
        %v5609 = vunpack.c.0.s8 %v5608
        %v5610 = vlaneseq
        %v5611 = vshrl.u32 %v5610, 7
        %v5612 = vsub.s32 %v5609, %v5611
        %v5613 = vrot.slane %v5606, %v5612
        %5615 = vst.msk [vmem:[%s2949] ss:$8 sm:$0xf] %vm2493, %v5613
        %5616 = vst.msk [vmem:[%s2949] ss:$8 sm:$0x0] %vm2493, %v5613
        %v5617 = vld [vmem:[%s2319] sm:$0xff]
        %v5618 = vld [vmem:[%s2319 + $0x8] sm:$0xff]
        %v5619 = vld [vmem:[%s2319 + $0x10] sm:$0xff]
        %v5620 = vld [vmem:[%s2319 + $0x18] sm:$0xff]
        %v5621 = vld [vmem:[%s2319 + $0x20] sm:$0xff]
        %v5622 = vld [vmem:[%s2319 + $0x28] sm:$0xff]
        %v5623 = vld [vmem:[%s2319 + $0x30] sm:$0xff]
        %v5624 = vld [vmem:[%s2319 + $0x38] sm:$0xff]
        %v5625 = vmul.f32 %v5084, %v5617
        %v5626 = vmul.f32 %v5085, %v5618
        %v5627 = vmul.f32 %v5086, %v5619
        %v5628 = vmul.f32 %v5087, %v5620
        %v5629 = vmul.f32 %v5088, %v5621
        %v5630 = vmul.f32 %v5089, %v5622
        %v5631 = vmul.f32 %v5090, %v5623
        %v5632 = vmul.f32 %v5091, %v5624
        %v5633 = vadd.f32 %v5625, %v5629
        %v5634 = vrot.slane %v5633, 4
        %v5635 = vadd.f32 %v5633, %v5634
        %v5636 = vrot.slane %v5635, 2
        %v5637 = vadd.f32 %v5635, %v5636
        %v5638 = vrot.slane %v5637, 1
        %v5639 = vadd.f32 %v5637, %v5638
        %v5640 = vadd.f32 %v5626, %v5630
        %v5641 = vrot.slane %v5640, 4
        %v5642 = vadd.f32 %v5640, %v5641
        %v5643 = vrot.slane %v5642, 2
        %v5644 = vadd.f32 %v5642, %v5643
        %v5645 = vrot.slane %v5644, 1
        %v5646 = vadd.f32 %v5644, %v5645
        %v5647 = vadd.f32 %v5627, %v5631
        %v5648 = vrot.slane %v5647, 4
        %v5649 = vadd.f32 %v5647, %v5648
        %v5650 = vrot.slane %v5649, 2
        %v5651 = vadd.f32 %v5649, %v5650
        %v5652 = vrot.slane %v5651, 1
        %v5653 = vadd.f32 %v5651, %v5652
        %v5654 = vadd.f32 %v5628, %v5632
        %v5655 = vrot.slane %v5654, 4
        %v5656 = vadd.f32 %v5654, %v5655
        %v5657 = vrot.slane %v5656, 2
        %v5658 = vadd.f32 %v5656, %v5657
        %v5659 = vrot.slane %v5658, 1
        %v5660 = vadd.f32 %v5658, %v5659
        %v5665 = vcombine.low %v5639, %v5646
        %v5666 = vcombine.low %v5653, %v5660
        %v5668 = vunpack.c.l.s4 1966171168
        %v5669 = vunpack.c.0.s8 %v5668
        %v5670 = vlaneseq
        %v5671 = vshrl.u32 %v5670, 7
        %v5672 = vsub.s32 %v5669, %v5671
        %v5673 = vrot.slane %v5665, %v5672
        %v5675 = vunpack.c.l.s4 1966171168
        %v5676 = vunpack.c.0.s8 %v5675
        %v5677 = vlaneseq
        %v5678 = vshrl.u32 %v5677, 7
        %v5679 = vsub.s32 %v5676, %v5678
        %v5680 = vrot.slane %v5666, %v5679
        %v5681 = vcombine.low %v5673, %v5680
        %v5683 = vunpack.c.l.s4 1966171168
        %v5684 = vunpack.c.0.s8 %v5683
        %v5685 = vlaneseq
        %v5686 = vshrl.u32 %v5685, 7
        %v5687 = vsub.s32 %v5684, %v5686
        %v5688 = vrot.slane %v5681, %v5687
        %5690 = vst.msk [vmem:[%s3025] ss:$8 sm:$0xf] %vm2493, %v5688
        %5691 = vst.msk [vmem:[%s3025] ss:$8 sm:$0x0] %vm2493, %v5688
        %v5692 = vld [vmem:[#allocation5] sm:$0xff]
        %v5693 = vld [vmem:[#allocation5 + $0x8] sm:$0xff]
        %v5694 = vld [vmem:[#allocation5 + $0x10] sm:$0xff]
        %v5695 = vld [vmem:[#allocation5 + $0x18] sm:$0xff]
        %v5696 = vmul.f32 %v5692, %v429
        %v5697 = vmul.f32 %v5693, %v430
        %v5698 = vmul.f32 %v5694, %v431
        %v5699 = vmul.f32 %v5695, %v432
        %v5700 = vmul.f32 %v5696, 1.442695
        %v5701 = vpow.pop %v5700
        %v5702 = vmul.f32 %v5697, 1.442695
        %v5703 = vpow.pop %v5702
        %v5704 = vmul.f32 %v5698, 1.442695
        %v5705 = vpow.pop %v5704
        %v5706 = vmul.f32 %v5699, 1.442695
        %v5707 = vpow.pop %v5706
        %v5708 = vrot.slane %v5701, 4
        %v5709 = vadd.f32 %v5701, %v5708
        %v5710 = vrot.slane %v5709, 2
        %v5711 = vadd.f32 %v5709, %v5710
        %v5712 = vrot.slane %v5711, 1
        %v5713 = vadd.f32 %v5711, %v5712
        %v5714 = vrot.slane %v5703, 4
        %v5715 = vadd.f32 %v5703, %v5714
        %v5716 = vrot.slane %v5715, 2
        %v5717 = vadd.f32 %v5715, %v5716
        %v5718 = vrot.slane %v5717, 1
        %v5719 = vadd.f32 %v5717, %v5718
        %v5720 = vrot.slane %v5705, 4
        %v5721 = vadd.f32 %v5705, %v5720
        %v5722 = vrot.slane %v5721, 2
        %v5723 = vadd.f32 %v5721, %v5722
        %v5724 = vrot.slane %v5723, 1
        %v5725 = vadd.f32 %v5723, %v5724
        %v5726 = vrot.slane %v5707, 4
        %v5727 = vadd.f32 %v5707, %v5726
        %v5728 = vrot.slane %v5727, 2
        %v5729 = vadd.f32 %v5727, %v5728
        %v5730 = vrot.slane %v5729, 1
        %v5731 = vadd.f32 %v5729, %v5730
        %s5732 = sld [smem:[#allocation16 + $0x4]]
        %v5733 = vrcp.pop %v5713
        %v5734 = vrcp.pop %v5719
        %v5735 = vrcp.pop %v5725
        %v5736 = vrcp.pop %v5731
        %v5737 = vstv %s5732
        %v5738 = vmul.f32 %v5737, %v5733
        %v5739 = vmul.f32 %v5737, %v5734
        %v5740 = vmul.f32 %v5737, %v5735
        %v5741 = vmul.f32 %v5737, %v5736
        %v5742 = vmul.f32 %v5738, %v5701
        %v5743 = vmul.f32 %v5739, %v5703
        %v5744 = vmul.f32 %v5740, %v5705
        %v5745 = vmul.f32 %v5741, %v5707
        %v5746 = vadd.f32 %v5080, %v5742
        %v5747 = vadd.f32 %v5081, %v5743
        %v5748 = vadd.f32 %v5082, %v5744
        %v5749 = vadd.f32 %v5083, %v5745
        %v5750 = vld [vmem:[%s1752] sm:$0xff]
        %v5751 = vld [vmem:[%s1752 + $0x8] sm:$0xff]
        %v5752 = vld [vmem:[%s1752 + $0x10] sm:$0xff]
        %v5753 = vld [vmem:[%s1752 + $0x18] sm:$0xff]
        %v5754 = vld [vmem:[%s1752 + $0x20] sm:$0xff]
        %v5755 = vld [vmem:[%s1752 + $0x28] sm:$0xff]
        %v5756 = vld [vmem:[%s1752 + $0x30] sm:$0xff]
        %v5757 = vld [vmem:[%s1752 + $0x38] sm:$0xff]
        %v5758 = vld [vmem:[#allocation3] sm:$0xff]
        %v5759 = vld [vmem:[#allocation3 + $0x8] sm:$0xff]
        %v5760 = vld [vmem:[#allocation3 + $0x10] sm:$0xff]
        %v5761 = vld [vmem:[#allocation3 + $0x18] sm:$0xff]
        %v5762 = vld [vmem:[#allocation3 + $0x20] sm:$0xff]
        %v5763 = vld [vmem:[#allocation3 + $0x28] sm:$0xff]
        %v5764 = vld [vmem:[#allocation3 + $0x30] sm:$0xff]
        %v5765 = vld [vmem:[#allocation3 + $0x38] sm:$0xff]
        %v5766 = vmul.f32 %v5750, %v5758
        %v5767 = vmul.f32 %v5751, %v5759
        %v5768 = vmul.f32 %v5752, %v5760
        %v5769 = vmul.f32 %v5753, %v5761
        %v5770 = vmul.f32 %v5754, %v5762
        %v5771 = vmul.f32 %v5755, %v5763
        %v5772 = vmul.f32 %v5756, %v5764
        %v5773 = vmul.f32 %v5757, %v5765
        %v5774 = vadd.f32 %v5766, %v5770
        %v5775 = vrot.slane %v5774, 4
        %v5776 = vadd.f32 %v5774, %v5775
        %v5777 = vrot.slane %v5776, 2
        %v5778 = vadd.f32 %v5776, %v5777
        %v5779 = vrot.slane %v5778, 1
        %v5780 = vadd.f32 %v5778, %v5779
        %v5781 = vadd.f32 %v5767, %v5771
        %v5782 = vrot.slane %v5781, 4
        %v5783 = vadd.f32 %v5781, %v5782
        %v5784 = vrot.slane %v5783, 2
        %v5785 = vadd.f32 %v5783, %v5784
        %v5786 = vrot.slane %v5785, 1
        %v5787 = vadd.f32 %v5785, %v5786
        %v5788 = vadd.f32 %v5768, %v5772
        %v5789 = vrot.slane %v5788, 4
        %v5790 = vadd.f32 %v5788, %v5789
        %v5791 = vrot.slane %v5790, 2
        %v5792 = vadd.f32 %v5790, %v5791
        %v5793 = vrot.slane %v5792, 1
        %v5794 = vadd.f32 %v5792, %v5793
        %v5795 = vadd.f32 %v5769, %v5773
        %v5796 = vrot.slane %v5795, 4
        %v5797 = vadd.f32 %v5795, %v5796
        %v5798 = vrot.slane %v5797, 2
        %v5799 = vadd.f32 %v5797, %v5798
        %v5800 = vrot.slane %v5799, 1
        %v5801 = vadd.f32 %v5799, %v5800
        %v5806 = vcombine.low %v5780, %v5787
        %v5807 = vcombine.low %v5794, %v5801
        %v5809 = vunpack.c.l.s4 1966171168
        %v5810 = vunpack.c.0.s8 %v5809
        %v5811 = vlaneseq
        %v5812 = vshrl.u32 %v5811, 7
        %v5813 = vsub.s32 %v5810, %v5812
        %v5814 = vrot.slane %v5806, %v5813
        %v5816 = vunpack.c.l.s4 1966171168
        %v5817 = vunpack.c.0.s8 %v5816
        %v5818 = vlaneseq
        %v5819 = vshrl.u32 %v5818, 7
        %v5820 = vsub.s32 %v5817, %v5819
        %v5821 = vrot.slane %v5807, %v5820
        %v5822 = vcombine.low %v5814, %v5821
        %v5824 = vunpack.c.l.s4 1966171168
        %v5825 = vunpack.c.0.s8 %v5824
        %v5826 = vlaneseq
        %v5827 = vshrl.u32 %v5826, 7
        %v5828 = vsub.s32 %v5825, %v5827
        %v5829 = vrot.slane %v5822, %v5828
        %5831 = vst.msk [vmem:[#allocation5] ss:$8 sm:$0xf] %vm2493, %v5829
        %5832 = vst.msk [vmem:[#allocation5] ss:$8 sm:$0x0] %vm2493, %v5829
        %v5833 = vld [vmem:[%s861] sm:$0xff]
        %v5834 = vld [vmem:[%s861 + $0x8] sm:$0xff]
        %v5835 = vld [vmem:[%s861 + $0x10] sm:$0xff]
        %v5836 = vld [vmem:[%s861 + $0x18] sm:$0xff]
        %v5837 = vld [vmem:[%s861 + $0x20] sm:$0xff]
        %v5838 = vld [vmem:[%s861 + $0x28] sm:$0xff]
        %v5839 = vld [vmem:[%s861 + $0x30] sm:$0xff]
        %v5840 = vld [vmem:[%s861 + $0x38] sm:$0xff]
        %v5841 = vmul.f32 %v5750, %v5833
        %v5842 = vmul.f32 %v5751, %v5834
        %v5843 = vmul.f32 %v5752, %v5835
        %v5844 = vmul.f32 %v5753, %v5836
        %v5845 = vmul.f32 %v5754, %v5837
        %v5846 = vmul.f32 %v5755, %v5838
        %v5847 = vmul.f32 %v5756, %v5839
        %v5848 = vmul.f32 %v5757, %v5840
        %v5849 = vadd.f32 %v5841, %v5845
        %v5850 = vrot.slane %v5849, 4
        %v5851 = vadd.f32 %v5849, %v5850
        %v5852 = vrot.slane %v5851, 2
        %v5853 = vadd.f32 %v5851, %v5852
        %v5854 = vrot.slane %v5853, 1
        %v5855 = vadd.f32 %v5853, %v5854
        %v5856 = vadd.f32 %v5842, %v5846
        %v5857 = vrot.slane %v5856, 4
        %v5858 = vadd.f32 %v5856, %v5857
        %v5859 = vrot.slane %v5858, 2
        %v5860 = vadd.f32 %v5858, %v5859
        %v5861 = vrot.slane %v5860, 1
        %v5862 = vadd.f32 %v5860, %v5861
        %v5863 = vadd.f32 %v5843, %v5847
        %v5864 = vrot.slane %v5863, 4
        %v5865 = vadd.f32 %v5863, %v5864
        %v5866 = vrot.slane %v5865, 2
        %v5867 = vadd.f32 %v5865, %v5866
        %v5868 = vrot.slane %v5867, 1
        %v5869 = vadd.f32 %v5867, %v5868
        %v5870 = vadd.f32 %v5844, %v5848
        %v5871 = vrot.slane %v5870, 4
        %v5872 = vadd.f32 %v5870, %v5871
        %v5873 = vrot.slane %v5872, 2
        %v5874 = vadd.f32 %v5872, %v5873
        %v5875 = vrot.slane %v5874, 1
        %v5876 = vadd.f32 %v5874, %v5875
        %v5881 = vcombine.low %v5855, %v5862
        %v5882 = vcombine.low %v5869, %v5876
        %v5884 = vunpack.c.l.s4 1966171168
        %v5885 = vunpack.c.0.s8 %v5884
        %v5886 = vlaneseq
        %v5887 = vshrl.u32 %v5886, 7
        %v5888 = vsub.s32 %v5885, %v5887
        %v5889 = vrot.slane %v5881, %v5888
        %v5891 = vunpack.c.l.s4 1966171168
        %v5892 = vunpack.c.0.s8 %v5891
        %v5893 = vlaneseq
        %v5894 = vshrl.u32 %v5893, 7
        %v5895 = vsub.s32 %v5892, %v5894
        %v5896 = vrot.slane %v5882, %v5895
        %v5897 = vcombine.low %v5889, %v5896
        %v5899 = vunpack.c.l.s4 1966171168
        %v5900 = vunpack.c.0.s8 %v5899
        %v5901 = vlaneseq
        %v5902 = vshrl.u32 %v5901, 7
        %v5903 = vsub.s32 %v5900, %v5902
        %v5904 = vrot.slane %v5897, %v5903
        %5906 = vst.msk [vmem:[%s2569] ss:$8 sm:$0xf] %vm2493, %v5904
        %5907 = vst.msk [vmem:[%s2569] ss:$8 sm:$0x0] %vm2493, %v5904
        %v5908 = vld [vmem:[%s1104] sm:$0xff]
        %v5909 = vld [vmem:[%s1104 + $0x8] sm:$0xff]
        %v5910 = vld [vmem:[%s1104 + $0x10] sm:$0xff]
        %v5911 = vld [vmem:[%s1104 + $0x18] sm:$0xff]
        %v5912 = vld [vmem:[%s1104 + $0x20] sm:$0xff]
        %v5913 = vld [vmem:[%s1104 + $0x28] sm:$0xff]
        %v5914 = vld [vmem:[%s1104 + $0x30] sm:$0xff]
        %v5915 = vld [vmem:[%s1104 + $0x38] sm:$0xff]
        %v5916 = vmul.f32 %v5750, %v5908
        %v5917 = vmul.f32 %v5751, %v5909
        %v5918 = vmul.f32 %v5752, %v5910
        %v5919 = vmul.f32 %v5753, %v5911
        %v5920 = vmul.f32 %v5754, %v5912
        %v5921 = vmul.f32 %v5755, %v5913
        %v5922 = vmul.f32 %v5756, %v5914
        %v5923 = vmul.f32 %v5757, %v5915
        %v5924 = vadd.f32 %v5916, %v5920
        %v5925 = vrot.slane %v5924, 4
        %v5926 = vadd.f32 %v5924, %v5925
        %v5927 = vrot.slane %v5926, 2
        %v5928 = vadd.f32 %v5926, %v5927
        %v5929 = vrot.slane %v5928, 1
        %v5930 = vadd.f32 %v5928, %v5929
        %v5931 = vadd.f32 %v5917, %v5921
        %v5932 = vrot.slane %v5931, 4
        %v5933 = vadd.f32 %v5931, %v5932
        %v5934 = vrot.slane %v5933, 2
        %v5935 = vadd.f32 %v5933, %v5934
        %v5936 = vrot.slane %v5935, 1
        %v5937 = vadd.f32 %v5935, %v5936
        %v5938 = vadd.f32 %v5918, %v5922
        %v5939 = vrot.slane %v5938, 4
        %v5940 = vadd.f32 %v5938, %v5939
        %v5941 = vrot.slane %v5940, 2
        %v5942 = vadd.f32 %v5940, %v5941
        %v5943 = vrot.slane %v5942, 1
        %v5944 = vadd.f32 %v5942, %v5943
        %v5945 = vadd.f32 %v5919, %v5923
        %v5946 = vrot.slane %v5945, 4
        %v5947 = vadd.f32 %v5945, %v5946
        %v5948 = vrot.slane %v5947, 2
        %v5949 = vadd.f32 %v5947, %v5948
        %v5950 = vrot.slane %v5949, 1
        %v5951 = vadd.f32 %v5949, %v5950
        %v5956 = vcombine.low %v5930, %v5937
        %v5957 = vcombine.low %v5944, %v5951
        %v5959 = vunpack.c.l.s4 1966171168
        %v5960 = vunpack.c.0.s8 %v5959
        %v5961 = vlaneseq
        %v5962 = vshrl.u32 %v5961, 7
        %v5963 = vsub.s32 %v5960, %v5962
        %v5964 = vrot.slane %v5956, %v5963
        %v5966 = vunpack.c.l.s4 1966171168
        %v5967 = vunpack.c.0.s8 %v5966
        %v5968 = vlaneseq
        %v5969 = vshrl.u32 %v5968, 7
        %v5970 = vsub.s32 %v5967, %v5969
        %v5971 = vrot.slane %v5957, %v5970
        %v5972 = vcombine.low %v5964, %v5971
        %v5974 = vunpack.c.l.s4 1966171168
        %v5975 = vunpack.c.0.s8 %v5974
        %v5976 = vlaneseq
        %v5977 = vshrl.u32 %v5976, 7
        %v5978 = vsub.s32 %v5975, %v5977
        %v5979 = vrot.slane %v5972, %v5978
        %5981 = vst.msk [vmem:[%s2645] ss:$8 sm:$0xf] %vm2493, %v5979
        %5982 = vst.msk [vmem:[%s2645] ss:$8 sm:$0x0] %vm2493, %v5979
        %v5983 = vld [vmem:[%s1347] sm:$0xff]
        %v5984 = vld [vmem:[%s1347 + $0x8] sm:$0xff]
        %v5985 = vld [vmem:[%s1347 + $0x10] sm:$0xff]
        %v5986 = vld [vmem:[%s1347 + $0x18] sm:$0xff]
        %v5987 = vld [vmem:[%s1347 + $0x20] sm:$0xff]
        %v5988 = vld [vmem:[%s1347 + $0x28] sm:$0xff]
        %v5989 = vld [vmem:[%s1347 + $0x30] sm:$0xff]
        %v5990 = vld [vmem:[%s1347 + $0x38] sm:$0xff]
        %v5991 = vmul.f32 %v5750, %v5983
        %v5992 = vmul.f32 %v5751, %v5984
        %v5993 = vmul.f32 %v5752, %v5985
        %v5994 = vmul.f32 %v5753, %v5986
        %v5995 = vmul.f32 %v5754, %v5987
        %v5996 = vmul.f32 %v5755, %v5988
        %v5997 = vmul.f32 %v5756, %v5989
        %v5998 = vmul.f32 %v5757, %v5990
        %v5999 = vadd.f32 %v5991, %v5995
        %v6000 = vrot.slane %v5999, 4
        %v6001 = vadd.f32 %v5999, %v6000
        %v6002 = vrot.slane %v6001, 2
        %v6003 = vadd.f32 %v6001, %v6002
        %v6004 = vrot.slane %v6003, 1
        %v6005 = vadd.f32 %v6003, %v6004
        %v6006 = vadd.f32 %v5992, %v5996
        %v6007 = vrot.slane %v6006, 4
        %v6008 = vadd.f32 %v6006, %v6007
        %v6009 = vrot.slane %v6008, 2
        %v6010 = vadd.f32 %v6008, %v6009
        %v6011 = vrot.slane %v6010, 1
        %v6012 = vadd.f32 %v6010, %v6011
        %v6013 = vadd.f32 %v5993, %v5997
        %v6014 = vrot.slane %v6013, 4
        %v6015 = vadd.f32 %v6013, %v6014
        %v6016 = vrot.slane %v6015, 2
        %v6017 = vadd.f32 %v6015, %v6016
        %v6018 = vrot.slane %v6017, 1
        %v6019 = vadd.f32 %v6017, %v6018
        %v6020 = vadd.f32 %v5994, %v5998
        %v6021 = vrot.slane %v6020, 4
        %v6022 = vadd.f32 %v6020, %v6021
        %v6023 = vrot.slane %v6022, 2
        %v6024 = vadd.f32 %v6022, %v6023
        %v6025 = vrot.slane %v6024, 1
        %v6026 = vadd.f32 %v6024, %v6025
        %v6031 = vcombine.low %v6005, %v6012
        %v6032 = vcombine.low %v6019, %v6026
        %v6034 = vunpack.c.l.s4 1966171168
        %v6035 = vunpack.c.0.s8 %v6034
        %v6036 = vlaneseq
        %v6037 = vshrl.u32 %v6036, 7
        %v6038 = vsub.s32 %v6035, %v6037
        %v6039 = vrot.slane %v6031, %v6038
        %v6041 = vunpack.c.l.s4 1966171168
        %v6042 = vunpack.c.0.s8 %v6041
        %v6043 = vlaneseq
        %v6044 = vshrl.u32 %v6043, 7
        %v6045 = vsub.s32 %v6042, %v6044
        %v6046 = vrot.slane %v6032, %v6045
        %v6047 = vcombine.low %v6039, %v6046
        %v6049 = vunpack.c.l.s4 1966171168
        %v6050 = vunpack.c.0.s8 %v6049
        %v6051 = vlaneseq
        %v6052 = vshrl.u32 %v6051, 7
        %v6053 = vsub.s32 %v6050, %v6052
        %v6054 = vrot.slane %v6047, %v6053
        %6056 = vst.msk [vmem:[%s2721] ss:$8 sm:$0xf] %vm2493, %v6054
        %6057 = vst.msk [vmem:[%s2721] ss:$8 sm:$0x0] %vm2493, %v6054
        %v6058 = vld [vmem:[%s1590] sm:$0xff]
        %v6059 = vld [vmem:[%s1590 + $0x8] sm:$0xff]
        %v6060 = vld [vmem:[%s1590 + $0x10] sm:$0xff]
        %v6061 = vld [vmem:[%s1590 + $0x18] sm:$0xff]
        %v6062 = vld [vmem:[%s1590 + $0x20] sm:$0xff]
        %v6063 = vld [vmem:[%s1590 + $0x28] sm:$0xff]
        %v6064 = vld [vmem:[%s1590 + $0x30] sm:$0xff]
        %v6065 = vld [vmem:[%s1590 + $0x38] sm:$0xff]
        %v6066 = vmul.f32 %v5750, %v6058
        %v6067 = vmul.f32 %v5751, %v6059
        %v6068 = vmul.f32 %v5752, %v6060
        %v6069 = vmul.f32 %v5753, %v6061
        %v6070 = vmul.f32 %v5754, %v6062
        %v6071 = vmul.f32 %v5755, %v6063
        %v6072 = vmul.f32 %v5756, %v6064
        %v6073 = vmul.f32 %v5757, %v6065
        %v6074 = vadd.f32 %v6066, %v6070
        %v6075 = vrot.slane %v6074, 4
        %v6076 = vadd.f32 %v6074, %v6075
        %v6077 = vrot.slane %v6076, 2
        %v6078 = vadd.f32 %v6076, %v6077
        %v6079 = vrot.slane %v6078, 1
        %v6080 = vadd.f32 %v6078, %v6079
        %v6081 = vadd.f32 %v6067, %v6071
        %v6082 = vrot.slane %v6081, 4
        %v6083 = vadd.f32 %v6081, %v6082
        %v6084 = vrot.slane %v6083, 2
        %v6085 = vadd.f32 %v6083, %v6084
        %v6086 = vrot.slane %v6085, 1
        %v6087 = vadd.f32 %v6085, %v6086
        %v6088 = vadd.f32 %v6068, %v6072
        %v6089 = vrot.slane %v6088, 4
        %v6090 = vadd.f32 %v6088, %v6089
        %v6091 = vrot.slane %v6090, 2
        %v6092 = vadd.f32 %v6090, %v6091
        %v6093 = vrot.slane %v6092, 1
        %v6094 = vadd.f32 %v6092, %v6093
        %v6095 = vadd.f32 %v6069, %v6073
        %v6096 = vrot.slane %v6095, 4
        %v6097 = vadd.f32 %v6095, %v6096
        %v6098 = vrot.slane %v6097, 2
        %v6099 = vadd.f32 %v6097, %v6098
        %v6100 = vrot.slane %v6099, 1
        %v6101 = vadd.f32 %v6099, %v6100
        %v6106 = vcombine.low %v6080, %v6087
        %v6107 = vcombine.low %v6094, %v6101
        %v6109 = vunpack.c.l.s4 1966171168
        %v6110 = vunpack.c.0.s8 %v6109
        %v6111 = vlaneseq
        %v6112 = vshrl.u32 %v6111, 7
        %v6113 = vsub.s32 %v6110, %v6112
        %v6114 = vrot.slane %v6106, %v6113
        %v6116 = vunpack.c.l.s4 1966171168
        %v6117 = vunpack.c.0.s8 %v6116
        %v6118 = vlaneseq
        %v6119 = vshrl.u32 %v6118, 7
        %v6120 = vsub.s32 %v6117, %v6119
        %v6121 = vrot.slane %v6107, %v6120
        %v6122 = vcombine.low %v6114, %v6121
        %v6124 = vunpack.c.l.s4 1966171168
        %v6125 = vunpack.c.0.s8 %v6124
        %v6126 = vlaneseq
        %v6127 = vshrl.u32 %v6126, 7
        %v6128 = vsub.s32 %v6125, %v6127
        %v6129 = vrot.slane %v6122, %v6128
        %6131 = vst.msk [vmem:[%s2797] ss:$8 sm:$0xf] %vm2493, %v6129
        %6132 = vst.msk [vmem:[%s2797] ss:$8 sm:$0x0] %vm2493, %v6129
        %v6133 = vld [vmem:[%s1833] sm:$0xff]
        %v6134 = vld [vmem:[%s1833 + $0x8] sm:$0xff]
        %v6135 = vld [vmem:[%s1833 + $0x10] sm:$0xff]
        %v6136 = vld [vmem:[%s1833 + $0x18] sm:$0xff]
        %v6137 = vld [vmem:[%s1833 + $0x20] sm:$0xff]
        %v6138 = vld [vmem:[%s1833 + $0x28] sm:$0xff]
        %v6139 = vld [vmem:[%s1833 + $0x30] sm:$0xff]
        %v6140 = vld [vmem:[%s1833 + $0x38] sm:$0xff]
        %v6141 = vmul.f32 %v5750, %v6133
        %v6142 = vmul.f32 %v5751, %v6134
        %v6143 = vmul.f32 %v5752, %v6135
        %v6144 = vmul.f32 %v5753, %v6136
        %v6145 = vmul.f32 %v5754, %v6137
        %v6146 = vmul.f32 %v5755, %v6138
        %v6147 = vmul.f32 %v5756, %v6139
        %v6148 = vmul.f32 %v5757, %v6140
        %v6149 = vadd.f32 %v6141, %v6145
        %v6150 = vrot.slane %v6149, 4
        %v6151 = vadd.f32 %v6149, %v6150
        %v6152 = vrot.slane %v6151, 2
        %v6153 = vadd.f32 %v6151, %v6152
        %v6154 = vrot.slane %v6153, 1
        %v6155 = vadd.f32 %v6153, %v6154
        %v6156 = vadd.f32 %v6142, %v6146
        %v6157 = vrot.slane %v6156, 4
        %v6158 = vadd.f32 %v6156, %v6157
        %v6159 = vrot.slane %v6158, 2
        %v6160 = vadd.f32 %v6158, %v6159
        %v6161 = vrot.slane %v6160, 1
        %v6162 = vadd.f32 %v6160, %v6161
        %v6163 = vadd.f32 %v6143, %v6147
        %v6164 = vrot.slane %v6163, 4
        %v6165 = vadd.f32 %v6163, %v6164
        %v6166 = vrot.slane %v6165, 2
        %v6167 = vadd.f32 %v6165, %v6166
        %v6168 = vrot.slane %v6167, 1
        %v6169 = vadd.f32 %v6167, %v6168
        %v6170 = vadd.f32 %v6144, %v6148
        %v6171 = vrot.slane %v6170, 4
        %v6172 = vadd.f32 %v6170, %v6171
        %v6173 = vrot.slane %v6172, 2
        %v6174 = vadd.f32 %v6172, %v6173
        %v6175 = vrot.slane %v6174, 1
        %v6176 = vadd.f32 %v6174, %v6175
        %v6181 = vcombine.low %v6155, %v6162
        %v6182 = vcombine.low %v6169, %v6176
        %v6184 = vunpack.c.l.s4 1966171168
        %v6185 = vunpack.c.0.s8 %v6184
        %v6186 = vlaneseq
        %v6187 = vshrl.u32 %v6186, 7
        %v6188 = vsub.s32 %v6185, %v6187
        %v6189 = vrot.slane %v6181, %v6188
        %v6191 = vunpack.c.l.s4 1966171168
        %v6192 = vunpack.c.0.s8 %v6191
        %v6193 = vlaneseq
        %v6194 = vshrl.u32 %v6193, 7
        %v6195 = vsub.s32 %v6192, %v6194
        %v6196 = vrot.slane %v6182, %v6195
        %v6197 = vcombine.low %v6189, %v6196
        %v6199 = vunpack.c.l.s4 1966171168
        %v6200 = vunpack.c.0.s8 %v6199
        %v6201 = vlaneseq
        %v6202 = vshrl.u32 %v6201, 7
        %v6203 = vsub.s32 %v6200, %v6202
        %v6204 = vrot.slane %v6197, %v6203
        %6206 = vst.msk [vmem:[%s2873] ss:$8 sm:$0xf] %vm2493, %v6204
        %6207 = vst.msk [vmem:[%s2873] ss:$8 sm:$0x0] %vm2493, %v6204
        %v6208 = vld [vmem:[%s2076] sm:$0xff]
        %v6209 = vld [vmem:[%s2076 + $0x8] sm:$0xff]
        %v6210 = vld [vmem:[%s2076 + $0x10] sm:$0xff]
        %v6211 = vld [vmem:[%s2076 + $0x18] sm:$0xff]
        %v6212 = vld [vmem:[%s2076 + $0x20] sm:$0xff]
        %v6213 = vld [vmem:[%s2076 + $0x28] sm:$0xff]
        %v6214 = vld [vmem:[%s2076 + $0x30] sm:$0xff]
        %v6215 = vld [vmem:[%s2076 + $0x38] sm:$0xff]
        %v6216 = vmul.f32 %v5750, %v6208
        %v6217 = vmul.f32 %v5751, %v6209
        %v6218 = vmul.f32 %v5752, %v6210
        %v6219 = vmul.f32 %v5753, %v6211
        %v6220 = vmul.f32 %v5754, %v6212
        %v6221 = vmul.f32 %v5755, %v6213
        %v6222 = vmul.f32 %v5756, %v6214
        %v6223 = vmul.f32 %v5757, %v6215
        %v6224 = vadd.f32 %v6216, %v6220
        %v6225 = vrot.slane %v6224, 4
        %v6226 = vadd.f32 %v6224, %v6225
        %v6227 = vrot.slane %v6226, 2
        %v6228 = vadd.f32 %v6226, %v6227
        %v6229 = vrot.slane %v6228, 1
        %v6230 = vadd.f32 %v6228, %v6229
        %v6231 = vadd.f32 %v6217, %v6221
        %v6232 = vrot.slane %v6231, 4
        %v6233 = vadd.f32 %v6231, %v6232
        %v6234 = vrot.slane %v6233, 2
        %v6235 = vadd.f32 %v6233, %v6234
        %v6236 = vrot.slane %v6235, 1
        %v6237 = vadd.f32 %v6235, %v6236
        %v6238 = vadd.f32 %v6218, %v6222
        %v6239 = vrot.slane %v6238, 4
        %v6240 = vadd.f32 %v6238, %v6239
        %v6241 = vrot.slane %v6240, 2
        %v6242 = vadd.f32 %v6240, %v6241
        %v6243 = vrot.slane %v6242, 1
        %v6244 = vadd.f32 %v6242, %v6243
        %v6245 = vadd.f32 %v6219, %v6223
        %v6246 = vrot.slane %v6245, 4
        %v6247 = vadd.f32 %v6245, %v6246
        %v6248 = vrot.slane %v6247, 2
        %v6249 = vadd.f32 %v6247, %v6248
        %v6250 = vrot.slane %v6249, 1
        %v6251 = vadd.f32 %v6249, %v6250
        %v6256 = vcombine.low %v6230, %v6237
        %v6257 = vcombine.low %v6244, %v6251
        %v6259 = vunpack.c.l.s4 1966171168
        %v6260 = vunpack.c.0.s8 %v6259
        %v6261 = vlaneseq
        %v6262 = vshrl.u32 %v6261, 7
        %v6263 = vsub.s32 %v6260, %v6262
        %v6264 = vrot.slane %v6256, %v6263
        %v6266 = vunpack.c.l.s4 1966171168
        %v6267 = vunpack.c.0.s8 %v6266
        %v6268 = vlaneseq
        %v6269 = vshrl.u32 %v6268, 7
        %v6270 = vsub.s32 %v6267, %v6269
        %v6271 = vrot.slane %v6257, %v6270
        %v6272 = vcombine.low %v6264, %v6271
        %v6274 = vunpack.c.l.s4 1966171168
        %v6275 = vunpack.c.0.s8 %v6274
        %v6276 = vlaneseq
        %v6277 = vshrl.u32 %v6276, 7
        %v6278 = vsub.s32 %v6275, %v6277
        %v6279 = vrot.slane %v6272, %v6278
        %6281 = vst.msk [vmem:[%s2949] ss:$8 sm:$0xf] %vm2493, %v6279
        %6282 = vst.msk [vmem:[%s2949] ss:$8 sm:$0x0] %vm2493, %v6279
        %v6283 = vld [vmem:[%s2319] sm:$0xff]
        %v6284 = vld [vmem:[%s2319 + $0x8] sm:$0xff]
        %v6285 = vld [vmem:[%s2319 + $0x10] sm:$0xff]
        %v6286 = vld [vmem:[%s2319 + $0x18] sm:$0xff]
        %v6287 = vld [vmem:[%s2319 + $0x20] sm:$0xff]
        %v6288 = vld [vmem:[%s2319 + $0x28] sm:$0xff]
        %v6289 = vld [vmem:[%s2319 + $0x30] sm:$0xff]
        %v6290 = vld [vmem:[%s2319 + $0x38] sm:$0xff]
        %v6291 = vmul.f32 %v5750, %v6283
        %v6292 = vmul.f32 %v5751, %v6284
        %v6293 = vmul.f32 %v5752, %v6285
        %v6294 = vmul.f32 %v5753, %v6286
        %v6295 = vmul.f32 %v5754, %v6287
        %v6296 = vmul.f32 %v5755, %v6288
        %v6297 = vmul.f32 %v5756, %v6289
        %v6298 = vmul.f32 %v5757, %v6290
        %v6299 = vadd.f32 %v6291, %v6295
        %v6300 = vrot.slane %v6299, 4
        %v6301 = vadd.f32 %v6299, %v6300
        %v6302 = vrot.slane %v6301, 2
        %v6303 = vadd.f32 %v6301, %v6302
        %v6304 = vrot.slane %v6303, 1
        %v6305 = vadd.f32 %v6303, %v6304
        %v6306 = vadd.f32 %v6292, %v6296
        %v6307 = vrot.slane %v6306, 4
        %v6308 = vadd.f32 %v6306, %v6307
        %v6309 = vrot.slane %v6308, 2
        %v6310 = vadd.f32 %v6308, %v6309
        %v6311 = vrot.slane %v6310, 1
        %v6312 = vadd.f32 %v6310, %v6311
        %v6313 = vadd.f32 %v6293, %v6297
        %v6314 = vrot.slane %v6313, 4
        %v6315 = vadd.f32 %v6313, %v6314
        %v6316 = vrot.slane %v6315, 2
        %v6317 = vadd.f32 %v6315, %v6316
        %v6318 = vrot.slane %v6317, 1
        %v6319 = vadd.f32 %v6317, %v6318
        %v6320 = vadd.f32 %v6294, %v6298
        %v6321 = vrot.slane %v6320, 4
        %v6322 = vadd.f32 %v6320, %v6321
        %v6323 = vrot.slane %v6322, 2
        %v6324 = vadd.f32 %v6322, %v6323
        %v6325 = vrot.slane %v6324, 1
        %v6326 = vadd.f32 %v6324, %v6325
        %v6331 = vcombine.low %v6305, %v6312
        %v6332 = vcombine.low %v6319, %v6326
        %v6334 = vunpack.c.l.s4 1966171168
        %v6335 = vunpack.c.0.s8 %v6334
        %v6336 = vlaneseq
        %v6337 = vshrl.u32 %v6336, 7
        %v6338 = vsub.s32 %v6335, %v6337
        %v6339 = vrot.slane %v6331, %v6338
        %v6341 = vunpack.c.l.s4 1966171168
        %v6342 = vunpack.c.0.s8 %v6341
        %v6343 = vlaneseq
        %v6344 = vshrl.u32 %v6343, 7
        %v6345 = vsub.s32 %v6342, %v6344
        %v6346 = vrot.slane %v6332, %v6345
        %v6347 = vcombine.low %v6339, %v6346
        %v6349 = vunpack.c.l.s4 1966171168
        %v6350 = vunpack.c.0.s8 %v6349
        %v6351 = vlaneseq
        %v6352 = vshrl.u32 %v6351, 7
        %v6353 = vsub.s32 %v6350, %v6352
        %v6354 = vrot.slane %v6347, %v6353
        %6356 = vst.msk [vmem:[%s3025] ss:$8 sm:$0xf] %vm2493, %v6354
        %6357 = vst.msk [vmem:[%s3025] ss:$8 sm:$0x0] %vm2493, %v6354
        %v6358 = vld [vmem:[#allocation5] sm:$0xff]
        %v6359 = vld [vmem:[#allocation5 + $0x8] sm:$0xff]
        %v6360 = vld [vmem:[#allocation5 + $0x10] sm:$0xff]
        %v6361 = vld [vmem:[#allocation5 + $0x18] sm:$0xff]
        %v6362 = vmul.f32 %v6358, %v429
        %v6363 = vmul.f32 %v6359, %v430
        %v6364 = vmul.f32 %v6360, %v431
        %v6365 = vmul.f32 %v6361, %v432
        %v6366 = vmul.f32 %v6362, 1.442695
        %v6367 = vpow.pop %v6366
        %v6368 = vmul.f32 %v6363, 1.442695
        %v6369 = vpow.pop %v6368
        %v6370 = vmul.f32 %v6364, 1.442695
        %v6371 = vpow.pop %v6370
        %v6372 = vmul.f32 %v6365, 1.442695
        %v6373 = vpow.pop %v6372
        %v6374 = vrot.slane %v6367, 4
        %v6375 = vadd.f32 %v6367, %v6374
        %v6376 = vrot.slane %v6375, 2
        %v6377 = vadd.f32 %v6375, %v6376
        %v6378 = vrot.slane %v6377, 1
        %v6379 = vadd.f32 %v6377, %v6378
        %v6380 = vrot.slane %v6369, 4
        %v6381 = vadd.f32 %v6369, %v6380
        %v6382 = vrot.slane %v6381, 2
        %v6383 = vadd.f32 %v6381, %v6382
        %v6384 = vrot.slane %v6383, 1
        %v6385 = vadd.f32 %v6383, %v6384
        %v6386 = vrot.slane %v6371, 4
        %v6387 = vadd.f32 %v6371, %v6386
        %v6388 = vrot.slane %v6387, 2
        %v6389 = vadd.f32 %v6387, %v6388
        %v6390 = vrot.slane %v6389, 1
        %v6391 = vadd.f32 %v6389, %v6390
        %v6392 = vrot.slane %v6373, 4
        %v6393 = vadd.f32 %v6373, %v6392
        %v6394 = vrot.slane %v6393, 2
        %v6395 = vadd.f32 %v6393, %v6394
        %v6396 = vrot.slane %v6395, 1
        %v6397 = vadd.f32 %v6395, %v6396
        %s6398 = sld [smem:[#allocation16 + $0x5]]
        %v6399 = vrcp.pop %v6379
        %v6400 = vrcp.pop %v6385
        %v6401 = vrcp.pop %v6391
        %v6402 = vrcp.pop %v6397
        %v6403 = vstv %s6398
        %v6404 = vmul.f32 %v6403, %v6399
        %v6405 = vmul.f32 %v6403, %v6400
        %v6406 = vmul.f32 %v6403, %v6401
        %v6407 = vmul.f32 %v6403, %v6402
        %v6408 = vmul.f32 %v6404, %v6367
        %v6409 = vmul.f32 %v6405, %v6369
        %v6410 = vmul.f32 %v6406, %v6371
        %v6411 = vmul.f32 %v6407, %v6373
        %v6412 = vadd.f32 %v5746, %v6408
        %v6413 = vadd.f32 %v5747, %v6409
        %v6414 = vadd.f32 %v5748, %v6410
        %v6415 = vadd.f32 %v5749, %v6411
        %v6416 = vld [vmem:[%s1995] sm:$0xff]
        %v6417 = vld [vmem:[%s1995 + $0x8] sm:$0xff]
        %v6418 = vld [vmem:[%s1995 + $0x10] sm:$0xff]
        %v6419 = vld [vmem:[%s1995 + $0x18] sm:$0xff]
        %v6420 = vld [vmem:[%s1995 + $0x20] sm:$0xff]
        %v6421 = vld [vmem:[%s1995 + $0x28] sm:$0xff]
        %v6422 = vld [vmem:[%s1995 + $0x30] sm:$0xff]
        %v6423 = vld [vmem:[%s1995 + $0x38] sm:$0xff]
        %v6424 = vld [vmem:[#allocation3] sm:$0xff]
        %v6425 = vld [vmem:[#allocation3 + $0x8] sm:$0xff]
        %v6426 = vld [vmem:[#allocation3 + $0x10] sm:$0xff]
        %v6427 = vld [vmem:[#allocation3 + $0x18] sm:$0xff]
        %v6428 = vld [vmem:[#allocation3 + $0x20] sm:$0xff]
        %v6429 = vld [vmem:[#allocation3 + $0x28] sm:$0xff]
        %v6430 = vld [vmem:[#allocation3 + $0x30] sm:$0xff]
        %v6431 = vld [vmem:[#allocation3 + $0x38] sm:$0xff]
        %v6432 = vmul.f32 %v6416, %v6424
        %v6433 = vmul.f32 %v6417, %v6425
        %v6434 = vmul.f32 %v6418, %v6426
        %v6435 = vmul.f32 %v6419, %v6427
        %v6436 = vmul.f32 %v6420, %v6428
        %v6437 = vmul.f32 %v6421, %v6429
        %v6438 = vmul.f32 %v6422, %v6430
        %v6439 = vmul.f32 %v6423, %v6431
        %v6440 = vadd.f32 %v6432, %v6436
        %v6441 = vrot.slane %v6440, 4
        %v6442 = vadd.f32 %v6440, %v6441
        %v6443 = vrot.slane %v6442, 2
        %v6444 = vadd.f32 %v6442, %v6443
        %v6445 = vrot.slane %v6444, 1
        %v6446 = vadd.f32 %v6444, %v6445
        %v6447 = vadd.f32 %v6433, %v6437
        %v6448 = vrot.slane %v6447, 4
        %v6449 = vadd.f32 %v6447, %v6448
        %v6450 = vrot.slane %v6449, 2
        %v6451 = vadd.f32 %v6449, %v6450
        %v6452 = vrot.slane %v6451, 1
        %v6453 = vadd.f32 %v6451, %v6452
        %v6454 = vadd.f32 %v6434, %v6438
        %v6455 = vrot.slane %v6454, 4
        %v6456 = vadd.f32 %v6454, %v6455
        %v6457 = vrot.slane %v6456, 2
        %v6458 = vadd.f32 %v6456, %v6457
        %v6459 = vrot.slane %v6458, 1
        %v6460 = vadd.f32 %v6458, %v6459
        %v6461 = vadd.f32 %v6435, %v6439
        %v6462 = vrot.slane %v6461, 4
        %v6463 = vadd.f32 %v6461, %v6462
        %v6464 = vrot.slane %v6463, 2
        %v6465 = vadd.f32 %v6463, %v6464
        %v6466 = vrot.slane %v6465, 1
        %v6467 = vadd.f32 %v6465, %v6466
        %v6472 = vcombine.low %v6446, %v6453
        %v6473 = vcombine.low %v6460, %v6467
        %v6475 = vunpack.c.l.s4 1966171168
        %v6476 = vunpack.c.0.s8 %v6475
        %v6477 = vlaneseq
        %v6478 = vshrl.u32 %v6477, 7
        %v6479 = vsub.s32 %v6476, %v6478
        %v6480 = vrot.slane %v6472, %v6479
        %v6482 = vunpack.c.l.s4 1966171168
        %v6483 = vunpack.c.0.s8 %v6482
        %v6484 = vlaneseq
        %v6485 = vshrl.u32 %v6484, 7
        %v6486 = vsub.s32 %v6483, %v6485
        %v6487 = vrot.slane %v6473, %v6486
        %v6488 = vcombine.low %v6480, %v6487
        %v6490 = vunpack.c.l.s4 1966171168
        %v6491 = vunpack.c.0.s8 %v6490
        %v6492 = vlaneseq
        %v6493 = vshrl.u32 %v6492, 7
        %v6494 = vsub.s32 %v6491, %v6493
        %v6495 = vrot.slane %v6488, %v6494
        %6497 = vst.msk [vmem:[#allocation5] ss:$8 sm:$0xf] %vm2493, %v6495
        %6498 = vst.msk [vmem:[#allocation5] ss:$8 sm:$0x0] %vm2493, %v6495
        %v6499 = vld [vmem:[%s861] sm:$0xff]
        %v6500 = vld [vmem:[%s861 + $0x8] sm:$0xff]
        %v6501 = vld [vmem:[%s861 + $0x10] sm:$0xff]
        %v6502 = vld [vmem:[%s861 + $0x18] sm:$0xff]
        %v6503 = vld [vmem:[%s861 + $0x20] sm:$0xff]
        %v6504 = vld [vmem:[%s861 + $0x28] sm:$0xff]
        %v6505 = vld [vmem:[%s861 + $0x30] sm:$0xff]
        %v6506 = vld [vmem:[%s861 + $0x38] sm:$0xff]
        %v6507 = vmul.f32 %v6416, %v6499
        %v6508 = vmul.f32 %v6417, %v6500
        %v6509 = vmul.f32 %v6418, %v6501
        %v6510 = vmul.f32 %v6419, %v6502
        %v6511 = vmul.f32 %v6420, %v6503
        %v6512 = vmul.f32 %v6421, %v6504
        %v6513 = vmul.f32 %v6422, %v6505
        %v6514 = vmul.f32 %v6423, %v6506
        %v6515 = vadd.f32 %v6507, %v6511
        %v6516 = vrot.slane %v6515, 4
        %v6517 = vadd.f32 %v6515, %v6516
        %v6518 = vrot.slane %v6517, 2
        %v6519 = vadd.f32 %v6517, %v6518
        %v6520 = vrot.slane %v6519, 1
        %v6521 = vadd.f32 %v6519, %v6520
        %v6522 = vadd.f32 %v6508, %v6512
        %v6523 = vrot.slane %v6522, 4
        %v6524 = vadd.f32 %v6522, %v6523
        %v6525 = vrot.slane %v6524, 2
        %v6526 = vadd.f32 %v6524, %v6525
        %v6527 = vrot.slane %v6526, 1
        %v6528 = vadd.f32 %v6526, %v6527
        %v6529 = vadd.f32 %v6509, %v6513
        %v6530 = vrot.slane %v6529, 4
        %v6531 = vadd.f32 %v6529, %v6530
        %v6532 = vrot.slane %v6531, 2
        %v6533 = vadd.f32 %v6531, %v6532
        %v6534 = vrot.slane %v6533, 1
        %v6535 = vadd.f32 %v6533, %v6534
        %v6536 = vadd.f32 %v6510, %v6514
        %v6537 = vrot.slane %v6536, 4
        %v6538 = vadd.f32 %v6536, %v6537
        %v6539 = vrot.slane %v6538, 2
        %v6540 = vadd.f32 %v6538, %v6539
        %v6541 = vrot.slane %v6540, 1
        %v6542 = vadd.f32 %v6540, %v6541
        %v6547 = vcombine.low %v6521, %v6528
        %v6548 = vcombine.low %v6535, %v6542
        %v6550 = vunpack.c.l.s4 1966171168
        %v6551 = vunpack.c.0.s8 %v6550
        %v6552 = vlaneseq
        %v6553 = vshrl.u32 %v6552, 7
        %v6554 = vsub.s32 %v6551, %v6553
        %v6555 = vrot.slane %v6547, %v6554
        %v6557 = vunpack.c.l.s4 1966171168
        %v6558 = vunpack.c.0.s8 %v6557
        %v6559 = vlaneseq
        %v6560 = vshrl.u32 %v6559, 7
        %v6561 = vsub.s32 %v6558, %v6560
        %v6562 = vrot.slane %v6548, %v6561
        %v6563 = vcombine.low %v6555, %v6562
        %v6565 = vunpack.c.l.s4 1966171168
        %v6566 = vunpack.c.0.s8 %v6565
        %v6567 = vlaneseq
        %v6568 = vshrl.u32 %v6567, 7
        %v6569 = vsub.s32 %v6566, %v6568
        %v6570 = vrot.slane %v6563, %v6569
        %6572 = vst.msk [vmem:[%s2569] ss:$8 sm:$0xf] %vm2493, %v6570
        %6573 = vst.msk [vmem:[%s2569] ss:$8 sm:$0x0] %vm2493, %v6570
        %v6574 = vld [vmem:[%s1104] sm:$0xff]
        %v6575 = vld [vmem:[%s1104 + $0x8] sm:$0xff]
        %v6576 = vld [vmem:[%s1104 + $0x10] sm:$0xff]
        %v6577 = vld [vmem:[%s1104 + $0x18] sm:$0xff]
        %v6578 = vld [vmem:[%s1104 + $0x20] sm:$0xff]
        %v6579 = vld [vmem:[%s1104 + $0x28] sm:$0xff]
        %v6580 = vld [vmem:[%s1104 + $0x30] sm:$0xff]
        %v6581 = vld [vmem:[%s1104 + $0x38] sm:$0xff]
        %v6582 = vmul.f32 %v6416, %v6574
        %v6583 = vmul.f32 %v6417, %v6575
        %v6584 = vmul.f32 %v6418, %v6576
        %v6585 = vmul.f32 %v6419, %v6577
        %v6586 = vmul.f32 %v6420, %v6578
        %v6587 = vmul.f32 %v6421, %v6579
        %v6588 = vmul.f32 %v6422, %v6580
        %v6589 = vmul.f32 %v6423, %v6581
        %v6590 = vadd.f32 %v6582, %v6586
        %v6591 = vrot.slane %v6590, 4
        %v6592 = vadd.f32 %v6590, %v6591
        %v6593 = vrot.slane %v6592, 2
        %v6594 = vadd.f32 %v6592, %v6593
        %v6595 = vrot.slane %v6594, 1
        %v6596 = vadd.f32 %v6594, %v6595
        %v6597 = vadd.f32 %v6583, %v6587
        %v6598 = vrot.slane %v6597, 4
        %v6599 = vadd.f32 %v6597, %v6598
        %v6600 = vrot.slane %v6599, 2
        %v6601 = vadd.f32 %v6599, %v6600
        %v6602 = vrot.slane %v6601, 1
        %v6603 = vadd.f32 %v6601, %v6602
        %v6604 = vadd.f32 %v6584, %v6588
        %v6605 = vrot.slane %v6604, 4
        %v6606 = vadd.f32 %v6604, %v6605
        %v6607 = vrot.slane %v6606, 2
        %v6608 = vadd.f32 %v6606, %v6607
        %v6609 = vrot.slane %v6608, 1
        %v6610 = vadd.f32 %v6608, %v6609
        %v6611 = vadd.f32 %v6585, %v6589
        %v6612 = vrot.slane %v6611, 4
        %v6613 = vadd.f32 %v6611, %v6612
        %v6614 = vrot.slane %v6613, 2
        %v6615 = vadd.f32 %v6613, %v6614
        %v6616 = vrot.slane %v6615, 1
        %v6617 = vadd.f32 %v6615, %v6616
        %v6622 = vcombine.low %v6596, %v6603
        %v6623 = vcombine.low %v6610, %v6617
        %v6625 = vunpack.c.l.s4 1966171168
        %v6626 = vunpack.c.0.s8 %v6625
        %v6627 = vlaneseq
        %v6628 = vshrl.u32 %v6627, 7
        %v6629 = vsub.s32 %v6626, %v6628
        %v6630 = vrot.slane %v6622, %v6629
        %v6632 = vunpack.c.l.s4 1966171168
        %v6633 = vunpack.c.0.s8 %v6632
        %v6634 = vlaneseq
        %v6635 = vshrl.u32 %v6634, 7
        %v6636 = vsub.s32 %v6633, %v6635
        %v6637 = vrot.slane %v6623, %v6636
        %v6638 = vcombine.low %v6630, %v6637
        %v6640 = vunpack.c.l.s4 1966171168
        %v6641 = vunpack.c.0.s8 %v6640
        %v6642 = vlaneseq
        %v6643 = vshrl.u32 %v6642, 7
        %v6644 = vsub.s32 %v6641, %v6643
        %v6645 = vrot.slane %v6638, %v6644
        %6647 = vst.msk [vmem:[%s2645] ss:$8 sm:$0xf] %vm2493, %v6645
        %6648 = vst.msk [vmem:[%s2645] ss:$8 sm:$0x0] %vm2493, %v6645
        %v6649 = vld [vmem:[%s1347] sm:$0xff]
        %v6650 = vld [vmem:[%s1347 + $0x8] sm:$0xff]
        %v6651 = vld [vmem:[%s1347 + $0x10] sm:$0xff]
        %v6652 = vld [vmem:[%s1347 + $0x18] sm:$0xff]
        %v6653 = vld [vmem:[%s1347 + $0x20] sm:$0xff]
        %v6654 = vld [vmem:[%s1347 + $0x28] sm:$0xff]
        %v6655 = vld [vmem:[%s1347 + $0x30] sm:$0xff]
        %v6656 = vld [vmem:[%s1347 + $0x38] sm:$0xff]
        %v6657 = vmul.f32 %v6416, %v6649
        %v6658 = vmul.f32 %v6417, %v6650
        %v6659 = vmul.f32 %v6418, %v6651
        %v6660 = vmul.f32 %v6419, %v6652
        %v6661 = vmul.f32 %v6420, %v6653
        %v6662 = vmul.f32 %v6421, %v6654
        %v6663 = vmul.f32 %v6422, %v6655
        %v6664 = vmul.f32 %v6423, %v6656
        %v6665 = vadd.f32 %v6657, %v6661
        %v6666 = vrot.slane %v6665, 4
        %v6667 = vadd.f32 %v6665, %v6666
        %v6668 = vrot.slane %v6667, 2
        %v6669 = vadd.f32 %v6667, %v6668
        %v6670 = vrot.slane %v6669, 1
        %v6671 = vadd.f32 %v6669, %v6670
        %v6672 = vadd.f32 %v6658, %v6662
        %v6673 = vrot.slane %v6672, 4
        %v6674 = vadd.f32 %v6672, %v6673
        %v6675 = vrot.slane %v6674, 2
        %v6676 = vadd.f32 %v6674, %v6675
        %v6677 = vrot.slane %v6676, 1
        %v6678 = vadd.f32 %v6676, %v6677
        %v6679 = vadd.f32 %v6659, %v6663
        %v6680 = vrot.slane %v6679, 4
        %v6681 = vadd.f32 %v6679, %v6680
        %v6682 = vrot.slane %v6681, 2
        %v6683 = vadd.f32 %v6681, %v6682
        %v6684 = vrot.slane %v6683, 1
        %v6685 = vadd.f32 %v6683, %v6684
        %v6686 = vadd.f32 %v6660, %v6664
        %v6687 = vrot.slane %v6686, 4
        %v6688 = vadd.f32 %v6686, %v6687
        %v6689 = vrot.slane %v6688, 2
        %v6690 = vadd.f32 %v6688, %v6689
        %v6691 = vrot.slane %v6690, 1
        %v6692 = vadd.f32 %v6690, %v6691
        %v6697 = vcombine.low %v6671, %v6678
        %v6698 = vcombine.low %v6685, %v6692
        %v6700 = vunpack.c.l.s4 1966171168
        %v6701 = vunpack.c.0.s8 %v6700
        %v6702 = vlaneseq
        %v6703 = vshrl.u32 %v6702, 7
        %v6704 = vsub.s32 %v6701, %v6703
        %v6705 = vrot.slane %v6697, %v6704
        %v6707 = vunpack.c.l.s4 1966171168
        %v6708 = vunpack.c.0.s8 %v6707
        %v6709 = vlaneseq
        %v6710 = vshrl.u32 %v6709, 7
        %v6711 = vsub.s32 %v6708, %v6710
        %v6712 = vrot.slane %v6698, %v6711
        %v6713 = vcombine.low %v6705, %v6712
        %v6715 = vunpack.c.l.s4 1966171168
        %v6716 = vunpack.c.0.s8 %v6715
        %v6717 = vlaneseq
        %v6718 = vshrl.u32 %v6717, 7
        %v6719 = vsub.s32 %v6716, %v6718
        %v6720 = vrot.slane %v6713, %v6719
        %6722 = vst.msk [vmem:[%s2721] ss:$8 sm:$0xf] %vm2493, %v6720
        %6723 = vst.msk [vmem:[%s2721] ss:$8 sm:$0x0] %vm2493, %v6720
        %v6724 = vld [vmem:[%s1590] sm:$0xff]
        %v6725 = vld [vmem:[%s1590 + $0x8] sm:$0xff]
        %v6726 = vld [vmem:[%s1590 + $0x10] sm:$0xff]
        %v6727 = vld [vmem:[%s1590 + $0x18] sm:$0xff]
        %v6728 = vld [vmem:[%s1590 + $0x20] sm:$0xff]
        %v6729 = vld [vmem:[%s1590 + $0x28] sm:$0xff]
        %v6730 = vld [vmem:[%s1590 + $0x30] sm:$0xff]
        %v6731 = vld [vmem:[%s1590 + $0x38] sm:$0xff]
        %v6732 = vmul.f32 %v6416, %v6724
        %v6733 = vmul.f32 %v6417, %v6725
        %v6734 = vmul.f32 %v6418, %v6726
        %v6735 = vmul.f32 %v6419, %v6727
        %v6736 = vmul.f32 %v6420, %v6728
        %v6737 = vmul.f32 %v6421, %v6729
        %v6738 = vmul.f32 %v6422, %v6730
        %v6739 = vmul.f32 %v6423, %v6731
        %v6740 = vadd.f32 %v6732, %v6736
        %v6741 = vrot.slane %v6740, 4
        %v6742 = vadd.f32 %v6740, %v6741
        %v6743 = vrot.slane %v6742, 2
        %v6744 = vadd.f32 %v6742, %v6743
        %v6745 = vrot.slane %v6744, 1
        %v6746 = vadd.f32 %v6744, %v6745
        %v6747 = vadd.f32 %v6733, %v6737
        %v6748 = vrot.slane %v6747, 4
        %v6749 = vadd.f32 %v6747, %v6748
        %v6750 = vrot.slane %v6749, 2
        %v6751 = vadd.f32 %v6749, %v6750
        %v6752 = vrot.slane %v6751, 1
        %v6753 = vadd.f32 %v6751, %v6752
        %v6754 = vadd.f32 %v6734, %v6738
        %v6755 = vrot.slane %v6754, 4
        %v6756 = vadd.f32 %v6754, %v6755
        %v6757 = vrot.slane %v6756, 2
        %v6758 = vadd.f32 %v6756, %v6757
        %v6759 = vrot.slane %v6758, 1
        %v6760 = vadd.f32 %v6758, %v6759
        %v6761 = vadd.f32 %v6735, %v6739
        %v6762 = vrot.slane %v6761, 4
        %v6763 = vadd.f32 %v6761, %v6762
        %v6764 = vrot.slane %v6763, 2
        %v6765 = vadd.f32 %v6763, %v6764
        %v6766 = vrot.slane %v6765, 1
        %v6767 = vadd.f32 %v6765, %v6766
        %v6772 = vcombine.low %v6746, %v6753
        %v6773 = vcombine.low %v6760, %v6767
        %v6775 = vunpack.c.l.s4 1966171168
        %v6776 = vunpack.c.0.s8 %v6775
        %v6777 = vlaneseq
        %v6778 = vshrl.u32 %v6777, 7
        %v6779 = vsub.s32 %v6776, %v6778
        %v6780 = vrot.slane %v6772, %v6779
        %v6782 = vunpack.c.l.s4 1966171168
        %v6783 = vunpack.c.0.s8 %v6782
        %v6784 = vlaneseq
        %v6785 = vshrl.u32 %v6784, 7
        %v6786 = vsub.s32 %v6783, %v6785
        %v6787 = vrot.slane %v6773, %v6786
        %v6788 = vcombine.low %v6780, %v6787
        %v6790 = vunpack.c.l.s4 1966171168
        %v6791 = vunpack.c.0.s8 %v6790
        %v6792 = vlaneseq
        %v6793 = vshrl.u32 %v6792, 7
        %v6794 = vsub.s32 %v6791, %v6793
        %v6795 = vrot.slane %v6788, %v6794
        %6797 = vst.msk [vmem:[%s2797] ss:$8 sm:$0xf] %vm2493, %v6795
        %6798 = vst.msk [vmem:[%s2797] ss:$8 sm:$0x0] %vm2493, %v6795
        %v6799 = vld [vmem:[%s1833] sm:$0xff]
        %v6800 = vld [vmem:[%s1833 + $0x8] sm:$0xff]
        %v6801 = vld [vmem:[%s1833 + $0x10] sm:$0xff]
        %v6802 = vld [vmem:[%s1833 + $0x18] sm:$0xff]
        %v6803 = vld [vmem:[%s1833 + $0x20] sm:$0xff]
        %v6804 = vld [vmem:[%s1833 + $0x28] sm:$0xff]
        %v6805 = vld [vmem:[%s1833 + $0x30] sm:$0xff]
        %v6806 = vld [vmem:[%s1833 + $0x38] sm:$0xff]
        %v6807 = vmul.f32 %v6416, %v6799
        %v6808 = vmul.f32 %v6417, %v6800
        %v6809 = vmul.f32 %v6418, %v6801
        %v6810 = vmul.f32 %v6419, %v6802
        %v6811 = vmul.f32 %v6420, %v6803
        %v6812 = vmul.f32 %v6421, %v6804
        %v6813 = vmul.f32 %v6422, %v6805
        %v6814 = vmul.f32 %v6423, %v6806
        %v6815 = vadd.f32 %v6807, %v6811
        %v6816 = vrot.slane %v6815, 4
        %v6817 = vadd.f32 %v6815, %v6816
        %v6818 = vrot.slane %v6817, 2
        %v6819 = vadd.f32 %v6817, %v6818
        %v6820 = vrot.slane %v6819, 1
        %v6821 = vadd.f32 %v6819, %v6820
        %v6822 = vadd.f32 %v6808, %v6812
        %v6823 = vrot.slane %v6822, 4
        %v6824 = vadd.f32 %v6822, %v6823
        %v6825 = vrot.slane %v6824, 2
        %v6826 = vadd.f32 %v6824, %v6825
        %v6827 = vrot.slane %v6826, 1
        %v6828 = vadd.f32 %v6826, %v6827
        %v6829 = vadd.f32 %v6809, %v6813
        %v6830 = vrot.slane %v6829, 4
        %v6831 = vadd.f32 %v6829, %v6830
        %v6832 = vrot.slane %v6831, 2
        %v6833 = vadd.f32 %v6831, %v6832
        %v6834 = vrot.slane %v6833, 1
        %v6835 = vadd.f32 %v6833, %v6834
        %v6836 = vadd.f32 %v6810, %v6814
        %v6837 = vrot.slane %v6836, 4
        %v6838 = vadd.f32 %v6836, %v6837
        %v6839 = vrot.slane %v6838, 2
        %v6840 = vadd.f32 %v6838, %v6839
        %v6841 = vrot.slane %v6840, 1
        %v6842 = vadd.f32 %v6840, %v6841
        %v6847 = vcombine.low %v6821, %v6828
        %v6848 = vcombine.low %v6835, %v6842
        %v6850 = vunpack.c.l.s4 1966171168
        %v6851 = vunpack.c.0.s8 %v6850
        %v6852 = vlaneseq
        %v6853 = vshrl.u32 %v6852, 7
        %v6854 = vsub.s32 %v6851, %v6853
        %v6855 = vrot.slane %v6847, %v6854
        %v6857 = vunpack.c.l.s4 1966171168
        %v6858 = vunpack.c.0.s8 %v6857
        %v6859 = vlaneseq
        %v6860 = vshrl.u32 %v6859, 7
        %v6861 = vsub.s32 %v6858, %v6860
        %v6862 = vrot.slane %v6848, %v6861
        %v6863 = vcombine.low %v6855, %v6862
        %v6865 = vunpack.c.l.s4 1966171168
        %v6866 = vunpack.c.0.s8 %v6865
        %v6867 = vlaneseq
        %v6868 = vshrl.u32 %v6867, 7
        %v6869 = vsub.s32 %v6866, %v6868
        %v6870 = vrot.slane %v6863, %v6869
        %6872 = vst.msk [vmem:[%s2873] ss:$8 sm:$0xf] %vm2493, %v6870
        %6873 = vst.msk [vmem:[%s2873] ss:$8 sm:$0x0] %vm2493, %v6870
        %v6874 = vld [vmem:[%s2076] sm:$0xff]
        %v6875 = vld [vmem:[%s2076 + $0x8] sm:$0xff]
        %v6876 = vld [vmem:[%s2076 + $0x10] sm:$0xff]
        %v6877 = vld [vmem:[%s2076 + $0x18] sm:$0xff]
        %v6878 = vld [vmem:[%s2076 + $0x20] sm:$0xff]
        %v6879 = vld [vmem:[%s2076 + $0x28] sm:$0xff]
        %v6880 = vld [vmem:[%s2076 + $0x30] sm:$0xff]
        %v6881 = vld [vmem:[%s2076 + $0x38] sm:$0xff]
        %v6882 = vmul.f32 %v6416, %v6874
        %v6883 = vmul.f32 %v6417, %v6875
        %v6884 = vmul.f32 %v6418, %v6876
        %v6885 = vmul.f32 %v6419, %v6877
        %v6886 = vmul.f32 %v6420, %v6878
        %v6887 = vmul.f32 %v6421, %v6879
        %v6888 = vmul.f32 %v6422, %v6880
        %v6889 = vmul.f32 %v6423, %v6881
        %v6890 = vadd.f32 %v6882, %v6886
        %v6891 = vrot.slane %v6890, 4
        %v6892 = vadd.f32 %v6890, %v6891
        %v6893 = vrot.slane %v6892, 2
        %v6894 = vadd.f32 %v6892, %v6893
        %v6895 = vrot.slane %v6894, 1
        %v6896 = vadd.f32 %v6894, %v6895
        %v6897 = vadd.f32 %v6883, %v6887
        %v6898 = vrot.slane %v6897, 4
        %v6899 = vadd.f32 %v6897, %v6898
        %v6900 = vrot.slane %v6899, 2
        %v6901 = vadd.f32 %v6899, %v6900
        %v6902 = vrot.slane %v6901, 1
        %v6903 = vadd.f32 %v6901, %v6902
        %v6904 = vadd.f32 %v6884, %v6888
        %v6905 = vrot.slane %v6904, 4
        %v6906 = vadd.f32 %v6904, %v6905
        %v6907 = vrot.slane %v6906, 2
        %v6908 = vadd.f32 %v6906, %v6907
        %v6909 = vrot.slane %v6908, 1
        %v6910 = vadd.f32 %v6908, %v6909
        %v6911 = vadd.f32 %v6885, %v6889
        %v6912 = vrot.slane %v6911, 4
        %v6913 = vadd.f32 %v6911, %v6912
        %v6914 = vrot.slane %v6913, 2
        %v6915 = vadd.f32 %v6913, %v6914
        %v6916 = vrot.slane %v6915, 1
        %v6917 = vadd.f32 %v6915, %v6916
        %v6922 = vcombine.low %v6896, %v6903
        %v6923 = vcombine.low %v6910, %v6917
        %v6925 = vunpack.c.l.s4 1966171168
        %v6926 = vunpack.c.0.s8 %v6925
        %v6927 = vlaneseq
        %v6928 = vshrl.u32 %v6927, 7
        %v6929 = vsub.s32 %v6926, %v6928
        %v6930 = vrot.slane %v6922, %v6929
        %v6932 = vunpack.c.l.s4 1966171168
        %v6933 = vunpack.c.0.s8 %v6932
        %v6934 = vlaneseq
        %v6935 = vshrl.u32 %v6934, 7
        %v6936 = vsub.s32 %v6933, %v6935
        %v6937 = vrot.slane %v6923, %v6936
        %v6938 = vcombine.low %v6930, %v6937
        %v6940 = vunpack.c.l.s4 1966171168
        %v6941 = vunpack.c.0.s8 %v6940
        %v6942 = vlaneseq
        %v6943 = vshrl.u32 %v6942, 7
        %v6944 = vsub.s32 %v6941, %v6943
        %v6945 = vrot.slane %v6938, %v6944
        %6947 = vst.msk [vmem:[%s2949] ss:$8 sm:$0xf] %vm2493, %v6945
        %6948 = vst.msk [vmem:[%s2949] ss:$8 sm:$0x0] %vm2493, %v6945
        %v6949 = vld [vmem:[%s2319] sm:$0xff]
        %v6950 = vld [vmem:[%s2319 + $0x8] sm:$0xff]
        %v6951 = vld [vmem:[%s2319 + $0x10] sm:$0xff]
        %v6952 = vld [vmem:[%s2319 + $0x18] sm:$0xff]
        %v6953 = vld [vmem:[%s2319 + $0x20] sm:$0xff]
        %v6954 = vld [vmem:[%s2319 + $0x28] sm:$0xff]
        %v6955 = vld [vmem:[%s2319 + $0x30] sm:$0xff]
        %v6956 = vld [vmem:[%s2319 + $0x38] sm:$0xff]
        %v6957 = vmul.f32 %v6416, %v6949
        %v6958 = vmul.f32 %v6417, %v6950
        %v6959 = vmul.f32 %v6418, %v6951
        %v6960 = vmul.f32 %v6419, %v6952
        %v6961 = vmul.f32 %v6420, %v6953
        %v6962 = vmul.f32 %v6421, %v6954
        %v6963 = vmul.f32 %v6422, %v6955
        %v6964 = vmul.f32 %v6423, %v6956
        %v6965 = vadd.f32 %v6957, %v6961
        %v6966 = vrot.slane %v6965, 4
        %v6967 = vadd.f32 %v6965, %v6966
        %v6968 = vrot.slane %v6967, 2
        %v6969 = vadd.f32 %v6967, %v6968
        %v6970 = vrot.slane %v6969, 1
        %v6971 = vadd.f32 %v6969, %v6970
        %v6972 = vadd.f32 %v6958, %v6962
        %v6973 = vrot.slane %v6972, 4
        %v6974 = vadd.f32 %v6972, %v6973
        %v6975 = vrot.slane %v6974, 2
        %v6976 = vadd.f32 %v6974, %v6975
        %v6977 = vrot.slane %v6976, 1
        %v6978 = vadd.f32 %v6976, %v6977
        %v6979 = vadd.f32 %v6959, %v6963
        %v6980 = vrot.slane %v6979, 4
        %v6981 = vadd.f32 %v6979, %v6980
        %v6982 = vrot.slane %v6981, 2
        %v6983 = vadd.f32 %v6981, %v6982
        %v6984 = vrot.slane %v6983, 1
        %v6985 = vadd.f32 %v6983, %v6984
        %v6986 = vadd.f32 %v6960, %v6964
        %v6987 = vrot.slane %v6986, 4
        %v6988 = vadd.f32 %v6986, %v6987
        %v6989 = vrot.slane %v6988, 2
        %v6990 = vadd.f32 %v6988, %v6989
        %v6991 = vrot.slane %v6990, 1
        %v6992 = vadd.f32 %v6990, %v6991
        %v6997 = vcombine.low %v6971, %v6978
        %v6998 = vcombine.low %v6985, %v6992
        %v7000 = vunpack.c.l.s4 1966171168
        %v7001 = vunpack.c.0.s8 %v7000
        %v7002 = vlaneseq
        %v7003 = vshrl.u32 %v7002, 7
        %v7004 = vsub.s32 %v7001, %v7003
        %v7005 = vrot.slane %v6997, %v7004
        %v7007 = vunpack.c.l.s4 1966171168
        %v7008 = vunpack.c.0.s8 %v7007
        %v7009 = vlaneseq
        %v7010 = vshrl.u32 %v7009, 7
        %v7011 = vsub.s32 %v7008, %v7010
        %v7012 = vrot.slane %v6998, %v7011
        %v7013 = vcombine.low %v7005, %v7012
        %v7015 = vunpack.c.l.s4 1966171168
        %v7016 = vunpack.c.0.s8 %v7015
        %v7017 = vlaneseq
        %v7018 = vshrl.u32 %v7017, 7
        %v7019 = vsub.s32 %v7016, %v7018
        %v7020 = vrot.slane %v7013, %v7019
        %7022 = vst.msk [vmem:[%s3025] ss:$8 sm:$0xf] %vm2493, %v7020
        %7023 = vst.msk [vmem:[%s3025] ss:$8 sm:$0x0] %vm2493, %v7020
        %v7024 = vld [vmem:[#allocation5] sm:$0xff]
        %v7025 = vld [vmem:[#allocation5 + $0x8] sm:$0xff]
        %v7026 = vld [vmem:[#allocation5 + $0x10] sm:$0xff]
        %v7027 = vld [vmem:[#allocation5 + $0x18] sm:$0xff]
        %v7028 = vmul.f32 %v7024, %v429
        %v7029 = vmul.f32 %v7025, %v430
        %v7030 = vmul.f32 %v7026, %v431
        %v7031 = vmul.f32 %v7027, %v432
        %v7032 = vmul.f32 %v7028, 1.442695
        %v7033 = vpow.pop %v7032
        %v7034 = vmul.f32 %v7029, 1.442695
        %v7035 = vpow.pop %v7034
        %v7036 = vmul.f32 %v7030, 1.442695
        %v7037 = vpow.pop %v7036
        %v7038 = vmul.f32 %v7031, 1.442695
        %v7039 = vpow.pop %v7038
        %v7040 = vrot.slane %v7033, 4
        %v7041 = vadd.f32 %v7033, %v7040
        %v7042 = vrot.slane %v7041, 2
        %v7043 = vadd.f32 %v7041, %v7042
        %v7044 = vrot.slane %v7043, 1
        %v7045 = vadd.f32 %v7043, %v7044
        %v7046 = vrot.slane %v7035, 4
        %v7047 = vadd.f32 %v7035, %v7046
        %v7048 = vrot.slane %v7047, 2
        %v7049 = vadd.f32 %v7047, %v7048
        %v7050 = vrot.slane %v7049, 1
        %v7051 = vadd.f32 %v7049, %v7050
        %v7052 = vrot.slane %v7037, 4
        %v7053 = vadd.f32 %v7037, %v7052
        %v7054 = vrot.slane %v7053, 2
        %v7055 = vadd.f32 %v7053, %v7054
        %v7056 = vrot.slane %v7055, 1
        %v7057 = vadd.f32 %v7055, %v7056
        %v7058 = vrot.slane %v7039, 4
        %v7059 = vadd.f32 %v7039, %v7058
        %v7060 = vrot.slane %v7059, 2
        %v7061 = vadd.f32 %v7059, %v7060
        %v7062 = vrot.slane %v7061, 1
        %v7063 = vadd.f32 %v7061, %v7062
        %s7064 = sld [smem:[#allocation16 + $0x6]]
        %v7065 = vrcp.pop %v7045
        %v7066 = vrcp.pop %v7051
        %v7067 = vrcp.pop %v7057
        %v7068 = vrcp.pop %v7063
        %v7069 = vstv %s7064
        %v7070 = vmul.f32 %v7069, %v7065
        %v7071 = vmul.f32 %v7069, %v7066
        %v7072 = vmul.f32 %v7069, %v7067
        %v7073 = vmul.f32 %v7069, %v7068
        %v7074 = vmul.f32 %v7070, %v7033
        %v7075 = vmul.f32 %v7071, %v7035
        %v7076 = vmul.f32 %v7072, %v7037
        %v7077 = vmul.f32 %v7073, %v7039
        %v7078 = vadd.f32 %v6412, %v7074
        %v7079 = vadd.f32 %v6413, %v7075
        %v7080 = vadd.f32 %v6414, %v7076
        %v7081 = vadd.f32 %v6415, %v7077
        %v7082 = vld [vmem:[%s2238] sm:$0xff]
        %v7083 = vld [vmem:[%s2238 + $0x8] sm:$0xff]
        %v7084 = vld [vmem:[%s2238 + $0x10] sm:$0xff]
        %v7085 = vld [vmem:[%s2238 + $0x18] sm:$0xff]
        %v7086 = vld [vmem:[%s2238 + $0x20] sm:$0xff]
        %v7087 = vld [vmem:[%s2238 + $0x28] sm:$0xff]
        %v7088 = vld [vmem:[%s2238 + $0x30] sm:$0xff]
        %v7089 = vld [vmem:[%s2238 + $0x38] sm:$0xff]
        %v7090 = vld [vmem:[#allocation3] sm:$0xff]
        %v7091 = vld [vmem:[#allocation3 + $0x8] sm:$0xff]
        %v7092 = vld [vmem:[#allocation3 + $0x10] sm:$0xff]
        %v7093 = vld [vmem:[#allocation3 + $0x18] sm:$0xff]
        %v7094 = vld [vmem:[#allocation3 + $0x20] sm:$0xff]
        %v7095 = vld [vmem:[#allocation3 + $0x28] sm:$0xff]
        %v7096 = vld [vmem:[#allocation3 + $0x30] sm:$0xff]
        %v7097 = vld [vmem:[#allocation3 + $0x38] sm:$0xff]
        %v7098 = vmul.f32 %v7082, %v7090
        %v7099 = vmul.f32 %v7083, %v7091
        %v7100 = vmul.f32 %v7084, %v7092
        %v7101 = vmul.f32 %v7085, %v7093
        %v7102 = vmul.f32 %v7086, %v7094
        %v7103 = vmul.f32 %v7087, %v7095
        %v7104 = vmul.f32 %v7088, %v7096
        %v7105 = vmul.f32 %v7089, %v7097
        %v7106 = vadd.f32 %v7098, %v7102
        %v7107 = vrot.slane %v7106, 4
        %v7108 = vadd.f32 %v7106, %v7107
        %v7109 = vrot.slane %v7108, 2
        %v7110 = vadd.f32 %v7108, %v7109
        %v7111 = vrot.slane %v7110, 1
        %v7112 = vadd.f32 %v7110, %v7111
        %v7113 = vadd.f32 %v7099, %v7103
        %v7114 = vrot.slane %v7113, 4
        %v7115 = vadd.f32 %v7113, %v7114
        %v7116 = vrot.slane %v7115, 2
        %v7117 = vadd.f32 %v7115, %v7116
        %v7118 = vrot.slane %v7117, 1
        %v7119 = vadd.f32 %v7117, %v7118
        %v7120 = vadd.f32 %v7100, %v7104
        %v7121 = vrot.slane %v7120, 4
        %v7122 = vadd.f32 %v7120, %v7121
        %v7123 = vrot.slane %v7122, 2
        %v7124 = vadd.f32 %v7122, %v7123
        %v7125 = vrot.slane %v7124, 1
        %v7126 = vadd.f32 %v7124, %v7125
        %v7127 = vadd.f32 %v7101, %v7105
        %v7128 = vrot.slane %v7127, 4
        %v7129 = vadd.f32 %v7127, %v7128
        %v7130 = vrot.slane %v7129, 2
        %v7131 = vadd.f32 %v7129, %v7130
        %v7132 = vrot.slane %v7131, 1
        %v7133 = vadd.f32 %v7131, %v7132
        %v7138 = vcombine.low %v7112, %v7119
        %v7139 = vcombine.low %v7126, %v7133
        %v7141 = vunpack.c.l.s4 1966171168
        %v7142 = vunpack.c.0.s8 %v7141
        %v7143 = vlaneseq
        %v7144 = vshrl.u32 %v7143, 7
        %v7145 = vsub.s32 %v7142, %v7144
        %v7146 = vrot.slane %v7138, %v7145
        %v7148 = vunpack.c.l.s4 1966171168
        %v7149 = vunpack.c.0.s8 %v7148
        %v7150 = vlaneseq
        %v7151 = vshrl.u32 %v7150, 7
        %v7152 = vsub.s32 %v7149, %v7151
        %v7153 = vrot.slane %v7139, %v7152
        %v7154 = vcombine.low %v7146, %v7153
        %v7156 = vunpack.c.l.s4 1966171168
        %v7157 = vunpack.c.0.s8 %v7156
        %v7158 = vlaneseq
        %v7159 = vshrl.u32 %v7158, 7
        %v7160 = vsub.s32 %v7157, %v7159
        %v7161 = vrot.slane %v7154, %v7160
        %7163 = vst.msk [vmem:[#allocation5] ss:$8 sm:$0xf] %vm2493, %v7161
        %7164 = vst.msk [vmem:[#allocation5] ss:$8 sm:$0x0] %vm2493, %v7161
        %v7165 = vld [vmem:[%s861] sm:$0xff]
        %v7166 = vld [vmem:[%s861 + $0x8] sm:$0xff]
        %v7167 = vld [vmem:[%s861 + $0x10] sm:$0xff]
        %v7168 = vld [vmem:[%s861 + $0x18] sm:$0xff]
        %v7169 = vld [vmem:[%s861 + $0x20] sm:$0xff]
        %v7170 = vld [vmem:[%s861 + $0x28] sm:$0xff]
        %v7171 = vld [vmem:[%s861 + $0x30] sm:$0xff]
        %v7172 = vld [vmem:[%s861 + $0x38] sm:$0xff]
        %v7173 = vmul.f32 %v7082, %v7165
        %v7174 = vmul.f32 %v7083, %v7166
        %v7175 = vmul.f32 %v7084, %v7167
        %v7176 = vmul.f32 %v7085, %v7168
        %v7177 = vmul.f32 %v7086, %v7169
        %v7178 = vmul.f32 %v7087, %v7170
        %v7179 = vmul.f32 %v7088, %v7171
        %v7180 = vmul.f32 %v7089, %v7172
        %v7181 = vadd.f32 %v7173, %v7177
        %v7182 = vrot.slane %v7181, 4
        %v7183 = vadd.f32 %v7181, %v7182
        %v7184 = vrot.slane %v7183, 2
        %v7185 = vadd.f32 %v7183, %v7184
        %v7186 = vrot.slane %v7185, 1
        %v7187 = vadd.f32 %v7185, %v7186
        %v7188 = vadd.f32 %v7174, %v7178
        %v7189 = vrot.slane %v7188, 4
        %v7190 = vadd.f32 %v7188, %v7189
        %v7191 = vrot.slane %v7190, 2
        %v7192 = vadd.f32 %v7190, %v7191
        %v7193 = vrot.slane %v7192, 1
        %v7194 = vadd.f32 %v7192, %v7193
        %v7195 = vadd.f32 %v7175, %v7179
        %v7196 = vrot.slane %v7195, 4
        %v7197 = vadd.f32 %v7195, %v7196
        %v7198 = vrot.slane %v7197, 2
        %v7199 = vadd.f32 %v7197, %v7198
        %v7200 = vrot.slane %v7199, 1
        %v7201 = vadd.f32 %v7199, %v7200
        %v7202 = vadd.f32 %v7176, %v7180
        %v7203 = vrot.slane %v7202, 4
        %v7204 = vadd.f32 %v7202, %v7203
        %v7205 = vrot.slane %v7204, 2
        %v7206 = vadd.f32 %v7204, %v7205
        %v7207 = vrot.slane %v7206, 1
        %v7208 = vadd.f32 %v7206, %v7207
        %v7213 = vcombine.low %v7187, %v7194
        %v7214 = vcombine.low %v7201, %v7208
        %v7216 = vunpack.c.l.s4 1966171168
        %v7217 = vunpack.c.0.s8 %v7216
        %v7218 = vlaneseq
        %v7219 = vshrl.u32 %v7218, 7
        %v7220 = vsub.s32 %v7217, %v7219
        %v7221 = vrot.slane %v7213, %v7220
        %v7223 = vunpack.c.l.s4 1966171168
        %v7224 = vunpack.c.0.s8 %v7223
        %v7225 = vlaneseq
        %v7226 = vshrl.u32 %v7225, 7
        %v7227 = vsub.s32 %v7224, %v7226
        %v7228 = vrot.slane %v7214, %v7227
        %v7229 = vcombine.low %v7221, %v7228
        %v7231 = vunpack.c.l.s4 1966171168
        %v7232 = vunpack.c.0.s8 %v7231
        %v7233 = vlaneseq
        %v7234 = vshrl.u32 %v7233, 7
        %v7235 = vsub.s32 %v7232, %v7234
        %v7236 = vrot.slane %v7229, %v7235
        %7238 = vst.msk [vmem:[%s2569] ss:$8 sm:$0xf] %vm2493, %v7236
        %7239 = vst.msk [vmem:[%s2569] ss:$8 sm:$0x0] %vm2493, %v7236
        %v7240 = vld [vmem:[%s1104] sm:$0xff]
        %v7241 = vld [vmem:[%s1104 + $0x8] sm:$0xff]
        %v7242 = vld [vmem:[%s1104 + $0x10] sm:$0xff]
        %v7243 = vld [vmem:[%s1104 + $0x18] sm:$0xff]
        %v7244 = vld [vmem:[%s1104 + $0x20] sm:$0xff]
        %v7245 = vld [vmem:[%s1104 + $0x28] sm:$0xff]
        %v7246 = vld [vmem:[%s1104 + $0x30] sm:$0xff]
        %v7247 = vld [vmem:[%s1104 + $0x38] sm:$0xff]
        %v7248 = vmul.f32 %v7082, %v7240
        %v7249 = vmul.f32 %v7083, %v7241
        %v7250 = vmul.f32 %v7084, %v7242
        %v7251 = vmul.f32 %v7085, %v7243
        %v7252 = vmul.f32 %v7086, %v7244
        %v7253 = vmul.f32 %v7087, %v7245
        %v7254 = vmul.f32 %v7088, %v7246
        %v7255 = vmul.f32 %v7089, %v7247
        %v7256 = vadd.f32 %v7248, %v7252
        %v7257 = vrot.slane %v7256, 4
        %v7258 = vadd.f32 %v7256, %v7257
        %v7259 = vrot.slane %v7258, 2
        %v7260 = vadd.f32 %v7258, %v7259
        %v7261 = vrot.slane %v7260, 1
        %v7262 = vadd.f32 %v7260, %v7261
        %v7263 = vadd.f32 %v7249, %v7253
        %v7264 = vrot.slane %v7263, 4
        %v7265 = vadd.f32 %v7263, %v7264
        %v7266 = vrot.slane %v7265, 2
        %v7267 = vadd.f32 %v7265, %v7266
        %v7268 = vrot.slane %v7267, 1
        %v7269 = vadd.f32 %v7267, %v7268
        %v7270 = vadd.f32 %v7250, %v7254
        %v7271 = vrot.slane %v7270, 4
        %v7272 = vadd.f32 %v7270, %v7271
        %v7273 = vrot.slane %v7272, 2
        %v7274 = vadd.f32 %v7272, %v7273
        %v7275 = vrot.slane %v7274, 1
        %v7276 = vadd.f32 %v7274, %v7275
        %v7277 = vadd.f32 %v7251, %v7255
        %v7278 = vrot.slane %v7277, 4
        %v7279 = vadd.f32 %v7277, %v7278
        %v7280 = vrot.slane %v7279, 2
        %v7281 = vadd.f32 %v7279, %v7280
        %v7282 = vrot.slane %v7281, 1
        %v7283 = vadd.f32 %v7281, %v7282
        %v7288 = vcombine.low %v7262, %v7269
        %v7289 = vcombine.low %v7276, %v7283
        %v7291 = vunpack.c.l.s4 1966171168
        %v7292 = vunpack.c.0.s8 %v7291
        %v7293 = vlaneseq
        %v7294 = vshrl.u32 %v7293, 7
        %v7295 = vsub.s32 %v7292, %v7294
        %v7296 = vrot.slane %v7288, %v7295
        %v7298 = vunpack.c.l.s4 1966171168
        %v7299 = vunpack.c.0.s8 %v7298
        %v7300 = vlaneseq
        %v7301 = vshrl.u32 %v7300, 7
        %v7302 = vsub.s32 %v7299, %v7301
        %v7303 = vrot.slane %v7289, %v7302
        %v7304 = vcombine.low %v7296, %v7303
        %v7306 = vunpack.c.l.s4 1966171168
        %v7307 = vunpack.c.0.s8 %v7306
        %v7308 = vlaneseq
        %v7309 = vshrl.u32 %v7308, 7
        %v7310 = vsub.s32 %v7307, %v7309
        %v7311 = vrot.slane %v7304, %v7310
        %7313 = vst.msk [vmem:[%s2645] ss:$8 sm:$0xf] %vm2493, %v7311
        %7314 = vst.msk [vmem:[%s2645] ss:$8 sm:$0x0] %vm2493, %v7311
        %v7315 = vld [vmem:[%s1347] sm:$0xff]
        %v7316 = vld [vmem:[%s1347 + $0x8] sm:$0xff]
        %v7317 = vld [vmem:[%s1347 + $0x10] sm:$0xff]
        %v7318 = vld [vmem:[%s1347 + $0x18] sm:$0xff]
        %v7319 = vld [vmem:[%s1347 + $0x20] sm:$0xff]
        %v7320 = vld [vmem:[%s1347 + $0x28] sm:$0xff]
        %v7321 = vld [vmem:[%s1347 + $0x30] sm:$0xff]
        %v7322 = vld [vmem:[%s1347 + $0x38] sm:$0xff]
        %v7323 = vmul.f32 %v7082, %v7315
        %v7324 = vmul.f32 %v7083, %v7316
        %v7325 = vmul.f32 %v7084, %v7317
        %v7326 = vmul.f32 %v7085, %v7318
        %v7327 = vmul.f32 %v7086, %v7319
        %v7328 = vmul.f32 %v7087, %v7320
        %v7329 = vmul.f32 %v7088, %v7321
        %v7330 = vmul.f32 %v7089, %v7322
        %v7331 = vadd.f32 %v7323, %v7327
        %v7332 = vrot.slane %v7331, 4
        %v7333 = vadd.f32 %v7331, %v7332
        %v7334 = vrot.slane %v7333, 2
        %v7335 = vadd.f32 %v7333, %v7334
        %v7336 = vrot.slane %v7335, 1
        %v7337 = vadd.f32 %v7335, %v7336
        %v7338 = vadd.f32 %v7324, %v7328
        %v7339 = vrot.slane %v7338, 4
        %v7340 = vadd.f32 %v7338, %v7339
        %v7341 = vrot.slane %v7340, 2
        %v7342 = vadd.f32 %v7340, %v7341
        %v7343 = vrot.slane %v7342, 1
        %v7344 = vadd.f32 %v7342, %v7343
        %v7345 = vadd.f32 %v7325, %v7329
        %v7346 = vrot.slane %v7345, 4
        %v7347 = vadd.f32 %v7345, %v7346
        %v7348 = vrot.slane %v7347, 2
        %v7349 = vadd.f32 %v7347, %v7348
        %v7350 = vrot.slane %v7349, 1
        %v7351 = vadd.f32 %v7349, %v7350
        %v7352 = vadd.f32 %v7326, %v7330
        %v7353 = vrot.slane %v7352, 4
        %v7354 = vadd.f32 %v7352, %v7353
        %v7355 = vrot.slane %v7354, 2
        %v7356 = vadd.f32 %v7354, %v7355
        %v7357 = vrot.slane %v7356, 1
        %v7358 = vadd.f32 %v7356, %v7357
        %v7363 = vcombine.low %v7337, %v7344
        %v7364 = vcombine.low %v7351, %v7358
        %v7366 = vunpack.c.l.s4 1966171168
        %v7367 = vunpack.c.0.s8 %v7366
        %v7368 = vlaneseq
        %v7369 = vshrl.u32 %v7368, 7
        %v7370 = vsub.s32 %v7367, %v7369
        %v7371 = vrot.slane %v7363, %v7370
        %v7373 = vunpack.c.l.s4 1966171168
        %v7374 = vunpack.c.0.s8 %v7373
        %v7375 = vlaneseq
        %v7376 = vshrl.u32 %v7375, 7
        %v7377 = vsub.s32 %v7374, %v7376
        %v7378 = vrot.slane %v7364, %v7377
        %v7379 = vcombine.low %v7371, %v7378
        %v7381 = vunpack.c.l.s4 1966171168
        %v7382 = vunpack.c.0.s8 %v7381
        %v7383 = vlaneseq
        %v7384 = vshrl.u32 %v7383, 7
        %v7385 = vsub.s32 %v7382, %v7384
        %v7386 = vrot.slane %v7379, %v7385
        %7388 = vst.msk [vmem:[%s2721] ss:$8 sm:$0xf] %vm2493, %v7386
        %7389 = vst.msk [vmem:[%s2721] ss:$8 sm:$0x0] %vm2493, %v7386
        %v7390 = vld [vmem:[%s1590] sm:$0xff]
        %v7391 = vld [vmem:[%s1590 + $0x8] sm:$0xff]
        %v7392 = vld [vmem:[%s1590 + $0x10] sm:$0xff]
        %v7393 = vld [vmem:[%s1590 + $0x18] sm:$0xff]
        %v7394 = vld [vmem:[%s1590 + $0x20] sm:$0xff]
        %v7395 = vld [vmem:[%s1590 + $0x28] sm:$0xff]
        %v7396 = vld [vmem:[%s1590 + $0x30] sm:$0xff]
        %v7397 = vld [vmem:[%s1590 + $0x38] sm:$0xff]
        %v7398 = vmul.f32 %v7082, %v7390
        %v7399 = vmul.f32 %v7083, %v7391
        %v7400 = vmul.f32 %v7084, %v7392
        %v7401 = vmul.f32 %v7085, %v7393
        %v7402 = vmul.f32 %v7086, %v7394
        %v7403 = vmul.f32 %v7087, %v7395
        %v7404 = vmul.f32 %v7088, %v7396
        %v7405 = vmul.f32 %v7089, %v7397
        %v7406 = vadd.f32 %v7398, %v7402
        %v7407 = vrot.slane %v7406, 4
        %v7408 = vadd.f32 %v7406, %v7407
        %v7409 = vrot.slane %v7408, 2
        %v7410 = vadd.f32 %v7408, %v7409
        %v7411 = vrot.slane %v7410, 1
        %v7412 = vadd.f32 %v7410, %v7411
        %v7413 = vadd.f32 %v7399, %v7403
        %v7414 = vrot.slane %v7413, 4
        %v7415 = vadd.f32 %v7413, %v7414
        %v7416 = vrot.slane %v7415, 2
        %v7417 = vadd.f32 %v7415, %v7416
        %v7418 = vrot.slane %v7417, 1
        %v7419 = vadd.f32 %v7417, %v7418
        %v7420 = vadd.f32 %v7400, %v7404
        %v7421 = vrot.slane %v7420, 4
        %v7422 = vadd.f32 %v7420, %v7421
        %v7423 = vrot.slane %v7422, 2
        %v7424 = vadd.f32 %v7422, %v7423
        %v7425 = vrot.slane %v7424, 1
        %v7426 = vadd.f32 %v7424, %v7425
        %v7427 = vadd.f32 %v7401, %v7405
        %v7428 = vrot.slane %v7427, 4
        %v7429 = vadd.f32 %v7427, %v7428
        %v7430 = vrot.slane %v7429, 2
        %v7431 = vadd.f32 %v7429, %v7430
        %v7432 = vrot.slane %v7431, 1
        %v7433 = vadd.f32 %v7431, %v7432
        %v7438 = vcombine.low %v7412, %v7419
        %v7439 = vcombine.low %v7426, %v7433
        %v7441 = vunpack.c.l.s4 1966171168
        %v7442 = vunpack.c.0.s8 %v7441
        %v7443 = vlaneseq
        %v7444 = vshrl.u32 %v7443, 7
        %v7445 = vsub.s32 %v7442, %v7444
        %v7446 = vrot.slane %v7438, %v7445
        %v7448 = vunpack.c.l.s4 1966171168
        %v7449 = vunpack.c.0.s8 %v7448
        %v7450 = vlaneseq
        %v7451 = vshrl.u32 %v7450, 7
        %v7452 = vsub.s32 %v7449, %v7451
        %v7453 = vrot.slane %v7439, %v7452
        %v7454 = vcombine.low %v7446, %v7453
        %v7456 = vunpack.c.l.s4 1966171168
        %v7457 = vunpack.c.0.s8 %v7456
        %v7458 = vlaneseq
        %v7459 = vshrl.u32 %v7458, 7
        %v7460 = vsub.s32 %v7457, %v7459
        %v7461 = vrot.slane %v7454, %v7460
        %7463 = vst.msk [vmem:[%s2797] ss:$8 sm:$0xf] %vm2493, %v7461
        %7464 = vst.msk [vmem:[%s2797] ss:$8 sm:$0x0] %vm2493, %v7461
        %v7465 = vld [vmem:[%s1833] sm:$0xff]
        %v7466 = vld [vmem:[%s1833 + $0x8] sm:$0xff]
        %v7467 = vld [vmem:[%s1833 + $0x10] sm:$0xff]
        %v7468 = vld [vmem:[%s1833 + $0x18] sm:$0xff]
        %v7469 = vld [vmem:[%s1833 + $0x20] sm:$0xff]
        %v7470 = vld [vmem:[%s1833 + $0x28] sm:$0xff]
        %v7471 = vld [vmem:[%s1833 + $0x30] sm:$0xff]
        %v7472 = vld [vmem:[%s1833 + $0x38] sm:$0xff]
        %v7473 = vmul.f32 %v7082, %v7465
        %v7474 = vmul.f32 %v7083, %v7466
        %v7475 = vmul.f32 %v7084, %v7467
        %v7476 = vmul.f32 %v7085, %v7468
        %v7477 = vmul.f32 %v7086, %v7469
        %v7478 = vmul.f32 %v7087, %v7470
        %v7479 = vmul.f32 %v7088, %v7471
        %v7480 = vmul.f32 %v7089, %v7472
        %v7481 = vadd.f32 %v7473, %v7477
        %v7482 = vrot.slane %v7481, 4
        %v7483 = vadd.f32 %v7481, %v7482
        %v7484 = vrot.slane %v7483, 2
        %v7485 = vadd.f32 %v7483, %v7484
        %v7486 = vrot.slane %v7485, 1
        %v7487 = vadd.f32 %v7485, %v7486
        %v7488 = vadd.f32 %v7474, %v7478
        %v7489 = vrot.slane %v7488, 4
        %v7490 = vadd.f32 %v7488, %v7489
        %v7491 = vrot.slane %v7490, 2
        %v7492 = vadd.f32 %v7490, %v7491
        %v7493 = vrot.slane %v7492, 1
        %v7494 = vadd.f32 %v7492, %v7493
        %v7495 = vadd.f32 %v7475, %v7479
        %v7496 = vrot.slane %v7495, 4
        %v7497 = vadd.f32 %v7495, %v7496
        %v7498 = vrot.slane %v7497, 2
        %v7499 = vadd.f32 %v7497, %v7498
        %v7500 = vrot.slane %v7499, 1
        %v7501 = vadd.f32 %v7499, %v7500
        %v7502 = vadd.f32 %v7476, %v7480
        %v7503 = vrot.slane %v7502, 4
        %v7504 = vadd.f32 %v7502, %v7503
        %v7505 = vrot.slane %v7504, 2
        %v7506 = vadd.f32 %v7504, %v7505
        %v7507 = vrot.slane %v7506, 1
        %v7508 = vadd.f32 %v7506, %v7507
        %v7513 = vcombine.low %v7487, %v7494
        %v7514 = vcombine.low %v7501, %v7508
        %v7516 = vunpack.c.l.s4 1966171168
        %v7517 = vunpack.c.0.s8 %v7516
        %v7518 = vlaneseq
        %v7519 = vshrl.u32 %v7518, 7
        %v7520 = vsub.s32 %v7517, %v7519
        %v7521 = vrot.slane %v7513, %v7520
        %v7523 = vunpack.c.l.s4 1966171168
        %v7524 = vunpack.c.0.s8 %v7523
        %v7525 = vlaneseq
        %v7526 = vshrl.u32 %v7525, 7
        %v7527 = vsub.s32 %v7524, %v7526
        %v7528 = vrot.slane %v7514, %v7527
        %v7529 = vcombine.low %v7521, %v7528
        %v7531 = vunpack.c.l.s4 1966171168
        %v7532 = vunpack.c.0.s8 %v7531
        %v7533 = vlaneseq
        %v7534 = vshrl.u32 %v7533, 7
        %v7535 = vsub.s32 %v7532, %v7534
        %v7536 = vrot.slane %v7529, %v7535
        %7538 = vst.msk [vmem:[%s2873] ss:$8 sm:$0xf] %vm2493, %v7536
        %7539 = vst.msk [vmem:[%s2873] ss:$8 sm:$0x0] %vm2493, %v7536
        %v7540 = vld [vmem:[%s2076] sm:$0xff]
        %v7541 = vld [vmem:[%s2076 + $0x8] sm:$0xff]
        %v7542 = vld [vmem:[%s2076 + $0x10] sm:$0xff]
        %v7543 = vld [vmem:[%s2076 + $0x18] sm:$0xff]
        %v7544 = vld [vmem:[%s2076 + $0x20] sm:$0xff]
        %v7545 = vld [vmem:[%s2076 + $0x28] sm:$0xff]
        %v7546 = vld [vmem:[%s2076 + $0x30] sm:$0xff]
        %v7547 = vld [vmem:[%s2076 + $0x38] sm:$0xff]
        %v7548 = vmul.f32 %v7082, %v7540
        %v7549 = vmul.f32 %v7083, %v7541
        %v7550 = vmul.f32 %v7084, %v7542
        %v7551 = vmul.f32 %v7085, %v7543
        %v7552 = vmul.f32 %v7086, %v7544
        %v7553 = vmul.f32 %v7087, %v7545
        %v7554 = vmul.f32 %v7088, %v7546
        %v7555 = vmul.f32 %v7089, %v7547
        %v7556 = vadd.f32 %v7548, %v7552
        %v7557 = vrot.slane %v7556, 4
        %v7558 = vadd.f32 %v7556, %v7557
        %v7559 = vrot.slane %v7558, 2
        %v7560 = vadd.f32 %v7558, %v7559
        %v7561 = vrot.slane %v7560, 1
        %v7562 = vadd.f32 %v7560, %v7561
        %v7563 = vadd.f32 %v7549, %v7553
        %v7564 = vrot.slane %v7563, 4
        %v7565 = vadd.f32 %v7563, %v7564
        %v7566 = vrot.slane %v7565, 2
        %v7567 = vadd.f32 %v7565, %v7566
        %v7568 = vrot.slane %v7567, 1
        %v7569 = vadd.f32 %v7567, %v7568
        %v7570 = vadd.f32 %v7550, %v7554
        %v7571 = vrot.slane %v7570, 4
        %v7572 = vadd.f32 %v7570, %v7571
        %v7573 = vrot.slane %v7572, 2
        %v7574 = vadd.f32 %v7572, %v7573
        %v7575 = vrot.slane %v7574, 1
        %v7576 = vadd.f32 %v7574, %v7575
        %v7577 = vadd.f32 %v7551, %v7555
        %v7578 = vrot.slane %v7577, 4
        %v7579 = vadd.f32 %v7577, %v7578
        %v7580 = vrot.slane %v7579, 2
        %v7581 = vadd.f32 %v7579, %v7580
        %v7582 = vrot.slane %v7581, 1
        %v7583 = vadd.f32 %v7581, %v7582
        %v7588 = vcombine.low %v7562, %v7569
        %v7589 = vcombine.low %v7576, %v7583
        %v7591 = vunpack.c.l.s4 1966171168
        %v7592 = vunpack.c.0.s8 %v7591
        %v7593 = vlaneseq
        %v7594 = vshrl.u32 %v7593, 7
        %v7595 = vsub.s32 %v7592, %v7594
        %v7596 = vrot.slane %v7588, %v7595
        %v7598 = vunpack.c.l.s4 1966171168
        %v7599 = vunpack.c.0.s8 %v7598
        %v7600 = vlaneseq
        %v7601 = vshrl.u32 %v7600, 7
        %v7602 = vsub.s32 %v7599, %v7601
        %v7603 = vrot.slane %v7589, %v7602
        %v7604 = vcombine.low %v7596, %v7603
        %v7606 = vunpack.c.l.s4 1966171168
        %v7607 = vunpack.c.0.s8 %v7606
        %v7608 = vlaneseq
        %v7609 = vshrl.u32 %v7608, 7
        %v7610 = vsub.s32 %v7607, %v7609
        %v7611 = vrot.slane %v7604, %v7610
        %7613 = vst.msk [vmem:[%s2949] ss:$8 sm:$0xf] %vm2493, %v7611
        %7614 = vst.msk [vmem:[%s2949] ss:$8 sm:$0x0] %vm2493, %v7611
        %v7615 = vld [vmem:[%s2319] sm:$0xff]
        %v7616 = vld [vmem:[%s2319 + $0x8] sm:$0xff]
        %v7617 = vld [vmem:[%s2319 + $0x10] sm:$0xff]
        %v7618 = vld [vmem:[%s2319 + $0x18] sm:$0xff]
        %v7619 = vld [vmem:[%s2319 + $0x20] sm:$0xff]
        %v7620 = vld [vmem:[%s2319 + $0x28] sm:$0xff]
        %v7621 = vld [vmem:[%s2319 + $0x30] sm:$0xff]
        %v7622 = vld [vmem:[%s2319 + $0x38] sm:$0xff]
        %v7623 = vmul.f32 %v7082, %v7615
        %v7624 = vmul.f32 %v7083, %v7616
        %v7625 = vmul.f32 %v7084, %v7617
        %v7626 = vmul.f32 %v7085, %v7618
        %v7627 = vmul.f32 %v7086, %v7619
        %v7628 = vmul.f32 %v7087, %v7620
        %v7629 = vmul.f32 %v7088, %v7621
        %v7630 = vmul.f32 %v7089, %v7622
        %v7631 = vadd.f32 %v7623, %v7627
        %v7632 = vrot.slane %v7631, 4
        %v7633 = vadd.f32 %v7631, %v7632
        %v7634 = vrot.slane %v7633, 2
        %v7635 = vadd.f32 %v7633, %v7634
        %v7636 = vrot.slane %v7635, 1
        %v7637 = vadd.f32 %v7635, %v7636
        %v7638 = vadd.f32 %v7624, %v7628
        %v7639 = vrot.slane %v7638, 4
        %v7640 = vadd.f32 %v7638, %v7639
        %v7641 = vrot.slane %v7640, 2
        %v7642 = vadd.f32 %v7640, %v7641
        %v7643 = vrot.slane %v7642, 1
        %v7644 = vadd.f32 %v7642, %v7643
        %v7645 = vadd.f32 %v7625, %v7629
        %v7646 = vrot.slane %v7645, 4
        %v7647 = vadd.f32 %v7645, %v7646
        %v7648 = vrot.slane %v7647, 2
        %v7649 = vadd.f32 %v7647, %v7648
        %v7650 = vrot.slane %v7649, 1
        %v7651 = vadd.f32 %v7649, %v7650
        %v7652 = vadd.f32 %v7626, %v7630
        %v7653 = vrot.slane %v7652, 4
        %v7654 = vadd.f32 %v7652, %v7653
        %v7655 = vrot.slane %v7654, 2
        %v7656 = vadd.f32 %v7654, %v7655
        %v7657 = vrot.slane %v7656, 1
        %v7658 = vadd.f32 %v7656, %v7657
        %v7663 = vcombine.low %v7637, %v7644
        %v7664 = vcombine.low %v7651, %v7658
        %v7666 = vunpack.c.l.s4 1966171168
        %v7667 = vunpack.c.0.s8 %v7666
        %v7668 = vlaneseq
        %v7669 = vshrl.u32 %v7668, 7
        %v7670 = vsub.s32 %v7667, %v7669
        %v7671 = vrot.slane %v7663, %v7670
        %v7673 = vunpack.c.l.s4 1966171168
        %v7674 = vunpack.c.0.s8 %v7673
        %v7675 = vlaneseq
        %v7676 = vshrl.u32 %v7675, 7
        %v7677 = vsub.s32 %v7674, %v7676
        %v7678 = vrot.slane %v7664, %v7677
        %v7679 = vcombine.low %v7671, %v7678
        %v7681 = vunpack.c.l.s4 1966171168
        %v7682 = vunpack.c.0.s8 %v7681
        %v7683 = vlaneseq
        %v7684 = vshrl.u32 %v7683, 7
        %v7685 = vsub.s32 %v7682, %v7684
        %v7686 = vrot.slane %v7679, %v7685
        %7688 = vst.msk [vmem:[%s3025] ss:$8 sm:$0xf] %vm2493, %v7686
        %7689 = vst.msk [vmem:[%s3025] ss:$8 sm:$0x0] %vm2493, %v7686
        %v7690 = vld [vmem:[#allocation5] sm:$0xff]
        %v7691 = vld [vmem:[#allocation5 + $0x8] sm:$0xff]
        %v7692 = vld [vmem:[#allocation5 + $0x10] sm:$0xff]
        %v7693 = vld [vmem:[#allocation5 + $0x18] sm:$0xff]
        %v7694 = vmul.f32 %v7690, %v429
        %v7695 = vmul.f32 %v7691, %v430
        %v7696 = vmul.f32 %v7692, %v431
        %v7697 = vmul.f32 %v7693, %v432
        %v7698 = vmul.f32 %v7694, 1.442695
        %v7699 = vpow.pop %v7698
        %v7700 = vmul.f32 %v7695, 1.442695
        %v7701 = vpow.pop %v7700
        %v7702 = vmul.f32 %v7696, 1.442695
        %v7703 = vpow.pop %v7702
        %v7704 = vmul.f32 %v7697, 1.442695
        %v7705 = vpow.pop %v7704
        %v7706 = vrot.slane %v7699, 4
        %v7707 = vadd.f32 %v7699, %v7706
        %v7708 = vrot.slane %v7707, 2
        %v7709 = vadd.f32 %v7707, %v7708
        %v7710 = vrot.slane %v7709, 1
        %v7711 = vadd.f32 %v7709, %v7710
        %v7712 = vrot.slane %v7701, 4
        %v7713 = vadd.f32 %v7701, %v7712
        %v7714 = vrot.slane %v7713, 2
        %v7715 = vadd.f32 %v7713, %v7714
        %v7716 = vrot.slane %v7715, 1
        %v7717 = vadd.f32 %v7715, %v7716
        %v7718 = vrot.slane %v7703, 4
        %v7719 = vadd.f32 %v7703, %v7718
        %v7720 = vrot.slane %v7719, 2
        %v7721 = vadd.f32 %v7719, %v7720
        %v7722 = vrot.slane %v7721, 1
        %v7723 = vadd.f32 %v7721, %v7722
        %v7724 = vrot.slane %v7705, 4
        %v7725 = vadd.f32 %v7705, %v7724
        %v7726 = vrot.slane %v7725, 2
        %v7727 = vadd.f32 %v7725, %v7726
        %v7728 = vrot.slane %v7727, 1
        %v7729 = vadd.f32 %v7727, %v7728
        %s7730 = sld [smem:[#allocation16 + $0x7]]
        %v7731 = vrcp.pop %v7711
        %v7732 = vrcp.pop %v7717
        %v7733 = vrcp.pop %v7723
        %v7734 = vrcp.pop %v7729
        %v7735 = vstv %s7730
        %v7736 = vmul.f32 %v7735, %v7731
        %v7737 = vmul.f32 %v7735, %v7732
        %v7738 = vmul.f32 %v7735, %v7733
        %v7739 = vmul.f32 %v7735, %v7734
        %v7740 = vmul.f32 %v7736, %v7699
        %v7741 = vmul.f32 %v7737, %v7701
        %v7742 = vmul.f32 %v7738, %v7703
        %v7743 = vmul.f32 %v7739, %v7705
        %v7744 = vadd.f32 %v7078, %v7740
        %v7745 = vadd.f32 %v7079, %v7741
        %v7746 = vadd.f32 %v7080, %v7742
        %v7747 = vadd.f32 %v7081, %v7743
        %v7748 = vld [vmem:[#allocation4] sm:$0xff]
        %v7749 = vld [vmem:[#allocation4 + $0x8] sm:$0xff]
        %v7750 = vld [vmem:[#allocation4 + $0x10] sm:$0xff]
        %v7751 = vld [vmem:[#allocation4 + $0x18] sm:$0xff]
        %v7752 = vld [vmem:[#allocation4 + $0x20] sm:$0xff]
        %v7753 = vld [vmem:[#allocation4 + $0x28] sm:$0xff]
        %v7754 = vld [vmem:[#allocation4 + $0x30] sm:$0xff]
        %v7755 = vld [vmem:[#allocation4 + $0x38] sm:$0xff]
        %v7756 = vlaneseq
        %v7757 = vshrl.u32 %v7756, 7
        %v7758 = vsub.s32 0, %v7757
        %v7759 = vrot.slane %v7744, %v7758
        %v7760 = vlaneseq
        %v7761 = vshrl.u32 %v7760, 7
        %v7762 = vsub.s32 0, %v7761
        %v7763 = vrot.slane %v7745, %v7762
        %v7764 = vlaneseq
        %v7765 = vshrl.u32 %v7764, 7
        %v7766 = vsub.s32 0, %v7765
        %v7767 = vrot.slane %v7746, %v7766
        %v7768 = vlaneseq
        %v7769 = vshrl.u32 %v7768, 7
        %v7770 = vsub.s32 0, %v7769
        %v7771 = vrot.slane %v7747, %v7770
        %v7772 = vmul.f32 %v7759, %v7748
        %v7773 = vmul.f32 %v7763, %v7749
        %v7774 = vmul.f32 %v7767, %v7750
        %v7775 = vmul.f32 %v7771, %v7751
        %v7776 = vmul.f32 %v7759, %v7752
        %v7777 = vmul.f32 %v7763, %v7753
        %v7778 = vmul.f32 %v7767, %v7754
        %v7779 = vmul.f32 %v7771, %v7755
        %v7780 = vld [vmem:[%s942] sm:$0xff]
        %v7781 = vld [vmem:[%s942 + $0x8] sm:$0xff]
        %v7782 = vld [vmem:[%s942 + $0x10] sm:$0xff]
        %v7783 = vld [vmem:[%s942 + $0x18] sm:$0xff]
        %v7784 = vld [vmem:[%s942 + $0x20] sm:$0xff]
        %v7785 = vld [vmem:[%s942 + $0x28] sm:$0xff]
        %v7786 = vld [vmem:[%s942 + $0x30] sm:$0xff]
        %v7787 = vld [vmem:[%s942 + $0x38] sm:$0xff]
        %v7788 = vlaneseq
        %v7789 = vshrl.u32 %v7788, 7
        %v7790 = vsub.s32 1, %v7789
        %v7791 = vrot.slane %v7744, %v7790
        %v7792 = vlaneseq
        %v7793 = vshrl.u32 %v7792, 7
        %v7794 = vsub.s32 1, %v7793
        %v7795 = vrot.slane %v7745, %v7794
        %v7796 = vlaneseq
        %v7797 = vshrl.u32 %v7796, 7
        %v7798 = vsub.s32 1, %v7797
        %v7799 = vrot.slane %v7746, %v7798
        %v7800 = vlaneseq
        %v7801 = vshrl.u32 %v7800, 7
        %v7802 = vsub.s32 1, %v7801
        %v7803 = vrot.slane %v7747, %v7802
        %v7804 = vmul.f32 %v7791, %v7780
        %v7805 = vmul.f32 %v7795, %v7781
        %v7806 = vmul.f32 %v7799, %v7782
        %v7807 = vmul.f32 %v7803, %v7783
        %v7808 = vmul.f32 %v7791, %v7784
        %v7809 = vmul.f32 %v7795, %v7785
        %v7810 = vmul.f32 %v7799, %v7786
        %v7811 = vmul.f32 %v7803, %v7787
        %v7812 = vadd.f32 %v7772, %v7804
        %v7813 = vadd.f32 %v7773, %v7805
        %v7814 = vadd.f32 %v7774, %v7806
        %v7815 = vadd.f32 %v7775, %v7807
        %v7816 = vadd.f32 %v7776, %v7808
        %v7817 = vadd.f32 %v7777, %v7809
        %v7818 = vadd.f32 %v7778, %v7810
        %v7819 = vadd.f32 %v7779, %v7811
        %v7820 = vld [vmem:[%s1185] sm:$0xff]
        %v7821 = vld [vmem:[%s1185 + $0x8] sm:$0xff]
        %v7822 = vld [vmem:[%s1185 + $0x10] sm:$0xff]
        %v7823 = vld [vmem:[%s1185 + $0x18] sm:$0xff]
        %v7824 = vld [vmem:[%s1185 + $0x20] sm:$0xff]
        %v7825 = vld [vmem:[%s1185 + $0x28] sm:$0xff]
        %v7826 = vld [vmem:[%s1185 + $0x30] sm:$0xff]
        %v7827 = vld [vmem:[%s1185 + $0x38] sm:$0xff]
        %v7828 = vlaneseq
        %v7829 = vshrl.u32 %v7828, 7
        %v7830 = vsub.s32 2, %v7829
        %v7831 = vrot.slane %v7744, %v7830
        %v7832 = vlaneseq
        %v7833 = vshrl.u32 %v7832, 7
        %v7834 = vsub.s32 2, %v7833
        %v7835 = vrot.slane %v7745, %v7834
        %v7836 = vlaneseq
        %v7837 = vshrl.u32 %v7836, 7
        %v7838 = vsub.s32 2, %v7837
        %v7839 = vrot.slane %v7746, %v7838
        %v7840 = vlaneseq
        %v7841 = vshrl.u32 %v7840, 7
        %v7842 = vsub.s32 2, %v7841
        %v7843 = vrot.slane %v7747, %v7842
        %v7844 = vmul.f32 %v7831, %v7820
        %v7845 = vmul.f32 %v7835, %v7821
        %v7846 = vmul.f32 %v7839, %v7822
        %v7847 = vmul.f32 %v7843, %v7823
        %v7848 = vmul.f32 %v7831, %v7824
        %v7849 = vmul.f32 %v7835, %v7825
        %v7850 = vmul.f32 %v7839, %v7826
        %v7851 = vmul.f32 %v7843, %v7827
        %v7852 = vadd.f32 %v7812, %v7844
        %v7853 = vadd.f32 %v7813, %v7845
        %v7854 = vadd.f32 %v7814, %v7846
        %v7855 = vadd.f32 %v7815, %v7847
        %v7856 = vadd.f32 %v7816, %v7848
        %v7857 = vadd.f32 %v7817, %v7849
        %v7858 = vadd.f32 %v7818, %v7850
        %v7859 = vadd.f32 %v7819, %v7851
        %v7860 = vld [vmem:[%s1428] sm:$0xff]
        %v7861 = vld [vmem:[%s1428 + $0x8] sm:$0xff]
        %v7862 = vld [vmem:[%s1428 + $0x10] sm:$0xff]
        %v7863 = vld [vmem:[%s1428 + $0x18] sm:$0xff]
        %v7864 = vld [vmem:[%s1428 + $0x20] sm:$0xff]
        %v7865 = vld [vmem:[%s1428 + $0x28] sm:$0xff]
        %v7866 = vld [vmem:[%s1428 + $0x30] sm:$0xff]
        %v7867 = vld [vmem:[%s1428 + $0x38] sm:$0xff]
        %v7868 = vlaneseq
        %v7869 = vshrl.u32 %v7868, 7
        %v7870 = vsub.s32 3, %v7869
        %v7871 = vrot.slane %v7744, %v7870
        %v7872 = vlaneseq
        %v7873 = vshrl.u32 %v7872, 7
        %v7874 = vsub.s32 3, %v7873
        %v7875 = vrot.slane %v7745, %v7874
        %v7876 = vlaneseq
        %v7877 = vshrl.u32 %v7876, 7
        %v7878 = vsub.s32 3, %v7877
        %v7879 = vrot.slane %v7746, %v7878
        %v7880 = vlaneseq
        %v7881 = vshrl.u32 %v7880, 7
        %v7882 = vsub.s32 3, %v7881
        %v7883 = vrot.slane %v7747, %v7882
        %v7884 = vmul.f32 %v7871, %v7860
        %v7885 = vmul.f32 %v7875, %v7861
        %v7886 = vmul.f32 %v7879, %v7862
        %v7887 = vmul.f32 %v7883, %v7863
        %v7888 = vmul.f32 %v7871, %v7864
        %v7889 = vmul.f32 %v7875, %v7865
        %v7890 = vmul.f32 %v7879, %v7866
        %v7891 = vmul.f32 %v7883, %v7867
        %v7892 = vadd.f32 %v7852, %v7884
        %v7893 = vadd.f32 %v7853, %v7885
        %v7894 = vadd.f32 %v7854, %v7886
        %v7895 = vadd.f32 %v7855, %v7887
        %v7896 = vadd.f32 %v7856, %v7888
        %v7897 = vadd.f32 %v7857, %v7889
        %v7898 = vadd.f32 %v7858, %v7890
        %v7899 = vadd.f32 %v7859, %v7891
        %v7900 = vld [vmem:[%s1671] sm:$0xff]
        %v7901 = vld [vmem:[%s1671 + $0x8] sm:$0xff]
        %v7902 = vld [vmem:[%s1671 + $0x10] sm:$0xff]
        %v7903 = vld [vmem:[%s1671 + $0x18] sm:$0xff]
        %v7904 = vld [vmem:[%s1671 + $0x20] sm:$0xff]
        %v7905 = vld [vmem:[%s1671 + $0x28] sm:$0xff]
        %v7906 = vld [vmem:[%s1671 + $0x30] sm:$0xff]
        %v7907 = vld [vmem:[%s1671 + $0x38] sm:$0xff]
        %v7908 = vlaneseq
        %v7909 = vshrl.u32 %v7908, 7
        %v7910 = vsub.s32 4, %v7909
        %v7911 = vrot.slane %v7744, %v7910
        %v7912 = vlaneseq
        %v7913 = vshrl.u32 %v7912, 7
        %v7914 = vsub.s32 4, %v7913
        %v7915 = vrot.slane %v7745, %v7914
        %v7916 = vlaneseq
        %v7917 = vshrl.u32 %v7916, 7
        %v7918 = vsub.s32 4, %v7917
        %v7919 = vrot.slane %v7746, %v7918
        %v7920 = vlaneseq
        %v7921 = vshrl.u32 %v7920, 7
        %v7922 = vsub.s32 4, %v7921
        %v7923 = vrot.slane %v7747, %v7922
        %v7924 = vmul.f32 %v7911, %v7900
        %v7925 = vmul.f32 %v7915, %v7901
        %v7926 = vmul.f32 %v7919, %v7902
        %v7927 = vmul.f32 %v7923, %v7903
        %v7928 = vmul.f32 %v7911, %v7904
        %v7929 = vmul.f32 %v7915, %v7905
        %v7930 = vmul.f32 %v7919, %v7906
        %v7931 = vmul.f32 %v7923, %v7907
        %v7932 = vadd.f32 %v7892, %v7924
        %v7933 = vadd.f32 %v7893, %v7925
        %v7934 = vadd.f32 %v7894, %v7926
        %v7935 = vadd.f32 %v7895, %v7927
        %v7936 = vadd.f32 %v7896, %v7928
        %v7937 = vadd.f32 %v7897, %v7929
        %v7938 = vadd.f32 %v7898, %v7930
        %v7939 = vadd.f32 %v7899, %v7931
        %v7940 = vld [vmem:[%s1914] sm:$0xff]
        %v7941 = vld [vmem:[%s1914 + $0x8] sm:$0xff]
        %v7942 = vld [vmem:[%s1914 + $0x10] sm:$0xff]
        %v7943 = vld [vmem:[%s1914 + $0x18] sm:$0xff]
        %v7944 = vld [vmem:[%s1914 + $0x20] sm:$0xff]
        %v7945 = vld [vmem:[%s1914 + $0x28] sm:$0xff]
        %v7946 = vld [vmem:[%s1914 + $0x30] sm:$0xff]
        %v7947 = vld [vmem:[%s1914 + $0x38] sm:$0xff]
        %v7948 = vlaneseq
        %v7949 = vshrl.u32 %v7948, 7
        %v7950 = vsub.s32 5, %v7949
        %v7951 = vrot.slane %v7744, %v7950
        %v7952 = vlaneseq
        %v7953 = vshrl.u32 %v7952, 7
        %v7954 = vsub.s32 5, %v7953
        %v7955 = vrot.slane %v7745, %v7954
        %v7956 = vlaneseq
        %v7957 = vshrl.u32 %v7956, 7
        %v7958 = vsub.s32 5, %v7957
        %v7959 = vrot.slane %v7746, %v7958
        %v7960 = vlaneseq
        %v7961 = vshrl.u32 %v7960, 7
        %v7962 = vsub.s32 5, %v7961
        %v7963 = vrot.slane %v7747, %v7962
        %v7964 = vmul.f32 %v7951, %v7940
        %v7965 = vmul.f32 %v7955, %v7941
        %v7966 = vmul.f32 %v7959, %v7942
        %v7967 = vmul.f32 %v7963, %v7943
        %v7968 = vmul.f32 %v7951, %v7944
        %v7969 = vmul.f32 %v7955, %v7945
        %v7970 = vmul.f32 %v7959, %v7946
        %v7971 = vmul.f32 %v7963, %v7947
        %v7972 = vadd.f32 %v7932, %v7964
        %v7973 = vadd.f32 %v7933, %v7965
        %v7974 = vadd.f32 %v7934, %v7966
        %v7975 = vadd.f32 %v7935, %v7967
        %v7976 = vadd.f32 %v7936, %v7968
        %v7977 = vadd.f32 %v7937, %v7969
        %v7978 = vadd.f32 %v7938, %v7970
        %v7979 = vadd.f32 %v7939, %v7971
        %v7980 = vld [vmem:[%s2157] sm:$0xff]
        %v7981 = vld [vmem:[%s2157 + $0x8] sm:$0xff]
        %v7982 = vld [vmem:[%s2157 + $0x10] sm:$0xff]
        %v7983 = vld [vmem:[%s2157 + $0x18] sm:$0xff]
        %v7984 = vld [vmem:[%s2157 + $0x20] sm:$0xff]
        %v7985 = vld [vmem:[%s2157 + $0x28] sm:$0xff]
        %v7986 = vld [vmem:[%s2157 + $0x30] sm:$0xff]
        %v7987 = vld [vmem:[%s2157 + $0x38] sm:$0xff]
        %v7988 = vlaneseq
        %v7989 = vshrl.u32 %v7988, 7
        %v7990 = vsub.s32 6, %v7989
        %v7991 = vrot.slane %v7744, %v7990
        %v7992 = vlaneseq
        %v7993 = vshrl.u32 %v7992, 7
        %v7994 = vsub.s32 6, %v7993
        %v7995 = vrot.slane %v7745, %v7994
        %v7996 = vlaneseq
        %v7997 = vshrl.u32 %v7996, 7
        %v7998 = vsub.s32 6, %v7997
        %v7999 = vrot.slane %v7746, %v7998
        %v8000 = vlaneseq
        %v8001 = vshrl.u32 %v8000, 7
        %v8002 = vsub.s32 6, %v8001
        %v8003 = vrot.slane %v7747, %v8002
        %v8004 = vmul.f32 %v7991, %v7980
        %v8005 = vmul.f32 %v7995, %v7981
        %v8006 = vmul.f32 %v7999, %v7982
        %v8007 = vmul.f32 %v8003, %v7983
        %v8008 = vmul.f32 %v7991, %v7984
        %v8009 = vmul.f32 %v7995, %v7985
        %v8010 = vmul.f32 %v7999, %v7986
        %v8011 = vmul.f32 %v8003, %v7987
        %v8012 = vadd.f32 %v7972, %v8004
        %v8013 = vadd.f32 %v7973, %v8005
        %v8014 = vadd.f32 %v7974, %v8006
        %v8015 = vadd.f32 %v7975, %v8007
        %v8016 = vadd.f32 %v7976, %v8008
        %v8017 = vadd.f32 %v7977, %v8009
        %v8018 = vadd.f32 %v7978, %v8010
        %v8019 = vadd.f32 %v7979, %v8011
        %v8020 = vld [vmem:[%s2400] sm:$0xff]
        %v8021 = vld [vmem:[%s2400 + $0x8] sm:$0xff]
        %v8022 = vld [vmem:[%s2400 + $0x10] sm:$0xff]
        %v8023 = vld [vmem:[%s2400 + $0x18] sm:$0xff]
        %v8024 = vld [vmem:[%s2400 + $0x20] sm:$0xff]
        %v8025 = vld [vmem:[%s2400 + $0x28] sm:$0xff]
        %v8026 = vld [vmem:[%s2400 + $0x30] sm:$0xff]
        %v8027 = vld [vmem:[%s2400 + $0x38] sm:$0xff]
        %v8028 = vlaneseq
        %v8029 = vshrl.u32 %v8028, 7
        %v8030 = vsub.s32 7, %v8029
        %v8031 = vrot.slane %v7744, %v8030
        %v8032 = vlaneseq
        %v8033 = vshrl.u32 %v8032, 7
        %v8034 = vsub.s32 7, %v8033
        %v8035 = vrot.slane %v7745, %v8034
        %v8036 = vlaneseq
        %v8037 = vshrl.u32 %v8036, 7
        %v8038 = vsub.s32 7, %v8037
        %v8039 = vrot.slane %v7746, %v8038
        %v8040 = vlaneseq
        %v8041 = vshrl.u32 %v8040, 7
        %v8042 = vsub.s32 7, %v8041
        %v8043 = vrot.slane %v7747, %v8042
        %v8044 = vmul.f32 %v8031, %v8020
        %v8045 = vmul.f32 %v8035, %v8021
        %v8046 = vmul.f32 %v8039, %v8022
        %v8047 = vmul.f32 %v8043, %v8023
        %v8048 = vmul.f32 %v8031, %v8024
        %v8049 = vmul.f32 %v8035, %v8025
        %v8050 = vmul.f32 %v8039, %v8026
        %v8051 = vmul.f32 %v8043, %v8027
        %v8052 = vadd.f32 %v8012, %v8044
        %v8053 = vadd.f32 %v8013, %v8045
        %v8054 = vadd.f32 %v8014, %v8046
        %v8055 = vadd.f32 %v8015, %v8047
        %v8056 = vadd.f32 %v8016, %v8048
        %v8057 = vadd.f32 %v8017, %v8049
        %v8058 = vadd.f32 %v8018, %v8050
        %v8059 = vadd.f32 %v8019, %v8051
        %v8060 = vtanh.pop %v8052
        %v8061 = vtanh.pop %v8053
        %v8062 = vtanh.pop %v8054
        %v8063 = vtanh.pop %v8055
        %v8064 = vtanh.pop %v8056
        %v8065 = vtanh.pop %v8057
        %v8066 = vtanh.pop %v8058
        %v8067 = vtanh.pop %v8059
        %v8068 = vmul.f32 %v8060, %v8060
        %v8069 = vmul.f32 %v8061, %v8061
        %v8070 = vmul.f32 %v8062, %v8062
        %v8071 = vmul.f32 %v8063, %v8063
        %v8072 = vmul.f32 %v8064, %v8064
        %v8073 = vmul.f32 %v8065, %v8065
        %v8074 = vmul.f32 %v8066, %v8066
        %v8075 = vmul.f32 %v8067, %v8067
        %v8076 = vadd.f32 %v8068, %v8072
        %v8077 = vrot.slane %v8076, 4
        %v8078 = vadd.f32 %v8076, %v8077
        %v8079 = vrot.slane %v8078, 2
        %v8080 = vadd.f32 %v8078, %v8079
        %v8081 = vrot.slane %v8080, 1
        %v8082 = vadd.f32 %v8080, %v8081
        %v8083 = vadd.f32 %v8069, %v8073
        %v8084 = vrot.slane %v8083, 4
        %v8085 = vadd.f32 %v8083, %v8084
        %v8086 = vrot.slane %v8085, 2
        %v8087 = vadd.f32 %v8085, %v8086
        %v8088 = vrot.slane %v8087, 1
        %v8089 = vadd.f32 %v8087, %v8088
        %v8090 = vadd.f32 %v8070, %v8074
        %v8091 = vrot.slane %v8090, 4
        %v8092 = vadd.f32 %v8090, %v8091
        %v8093 = vrot.slane %v8092, 2
        %v8094 = vadd.f32 %v8092, %v8093
        %v8095 = vrot.slane %v8094, 1
        %v8096 = vadd.f32 %v8094, %v8095
        %v8097 = vadd.f32 %v8071, %v8075
        %v8098 = vrot.slane %v8097, 4
        %v8099 = vadd.f32 %v8097, %v8098
        %v8100 = vrot.slane %v8099, 2
        %v8101 = vadd.f32 %v8099, %v8100
        %v8102 = vrot.slane %v8101, 1
        %v8103 = vadd.f32 %v8101, %v8102
        %v8104 = vlaneseq
        %v8105 = vshrl.u32 %v8104, 7
        %v8106 = vadd.s32 %v8105, 8
        %v8107 = vlaneseq
        %v8108 = vand.u32 %v8107, 127
        %v8109 = vadd.s32 %v8108, 128
        %v8110 = vadd.s32 %v8108, 256
        %v8111 = vadd.s32 %v8108, 384
        %v8112 = vand.u32 %v8108, 15
        %v8113 = vand.u32 %v8109, 15
        %v8114 = vand.u32 %v8110, 15
        %v8115 = vand.u32 %v8111, 15
        %vm8116 = vcmp.eq.s32.totalorder %v8105, %v8112
        %vm8117 = vcmp.eq.s32.totalorder %v8105, %v8113
        %vm8118 = vcmp.eq.s32.totalorder %v8105, %v8114
        %vm8119 = vcmp.eq.s32.totalorder %v8105, %v8115
        %vm8120 = vcmp.eq.s32.totalorder %v8106, %v8112
        %vm8121 = vcmp.eq.s32.totalorder %v8106, %v8113
        %vm8122 = vcmp.eq.s32.totalorder %v8106, %v8114
        %vm8123 = vcmp.eq.s32.totalorder %v8106, %v8115
        %v8124 = vsub.f32 0.0, %v8068
        %v8125 = vsub.f32 0.0, %v8069
        %v8126 = vsub.f32 0.0, %v8070
        %v8127 = vsub.f32 0.0, %v8071
        %v8128 = vsub.f32 0.0, %v8072
        %v8129 = vsub.f32 0.0, %v8073
        %v8130 = vsub.f32 0.0, %v8074
        %v8131 = vsub.f32 0.0, %v8075
        %v8132 = vsel %vm8116, %v8082, %v8124
        %v8133 = vsel %vm8117, %v8089, %v8125
        %v8134 = vsel %vm8118, %v8096, %v8126
        %v8135 = vsel %vm8119, %v8103, %v8127
        %v8136 = vsel %vm8120, %v8082, %v8128
        %v8137 = vsel %vm8121, %v8089, %v8129
        %v8138 = vsel %vm8122, %v8096, %v8130
        %v8139 = vsel %vm8123, %v8103, %v8131
        %8140 = vst [vmem:[%s361] sm:$0xff] %v8132
        %8141 = vst [vmem:[%s361 + $0x8] sm:$0xff] %v8133
        %8142 = vst [vmem:[%s361 + $0x10] sm:$0xff] %v8134
        %8143 = vst [vmem:[%s361 + $0x18] sm:$0xff] %v8135
        %8144 = vst [vmem:[%s361 + $0x20] sm:$0xff] %v8136
        %8145 = vst [vmem:[%s361 + $0x28] sm:$0xff] %v8137
        %8146 = vst [vmem:[%s361 + $0x30] sm:$0xff] %v8138
        %8147 = vst [vmem:[%s361 + $0x38] sm:$0xff] %v8139
        %s8148 = sand.u32 %s173, 1
        %s8149 = scalar_lea.sflag [#allocation8], %s8148
        %s8150 = sand.u32 %s173, 1
        %s8151 = smul.addr %s8150, 64
        %s8152 = scalar_lea.vmem [#allocation18], %s8151
        // Predicated region
        $region69: #{tpu_custom_call.1} parent=43 // pred_check
          %p8153 = pneg %p183
        $region70: #{tpu_custom_call.1} parent=43 // pred_check_branch
          %8155 = sbr.rel (%p8153) target = $region72
        $region71: #{tpu_custom_call.1} parent=43 // pred_region
          %s8156 = smul.u32 4, %s29
          %s8158 = ssub.s32 1024, 1024
          %8159 = vsyncadd %s8149, %s8158
          %s8160 = smul.addr %s8156, 128
          %s8161 = scalar_lea.hbm %s6, %s8160
          %s8162 = sshll.u32 %s8152, 4
          %s8163 = int_to_ptr.vmem [resolvable:$true] %s8162
          %8168 = dma.vmem_to_hbm [thread:$0]  %s8163, 1024, %s8161, %s8149, 512, 1024, 32
        $region72: #{tpu_custom_call.1} parent=43 // pred_fallthru
          _
      $region44: #{tpu_custom_call.1} parent=5 // pred_fallthru
        _
      %p8169 = scmp.le.s32.totalorder 2, %s24
      // Predicated region
      $region73: #{tpu_custom_call.1} parent=5 // pred_check
        %p8170 = pneg %p8169
      $region74: #{tpu_custom_call.1} parent=5 // pred_check_branch
        %8172 = sbr.rel (%p8170) target = $region76
      $region75: #{tpu_custom_call.1} parent=5 // pred_region
        %s8173 = ssub.s32 %s24, 2
        // Predicated region
        $region77: #{tpu_custom_call.1} parent=75 // pred_check
          %p8174 = pneg %p189
        $region78: #{tpu_custom_call.1} parent=75 // pred_check_branch
          %8176 = sbr.rel (%p8174) target = $region80
        $region79: #{tpu_custom_call.1} parent=75 // pred_region
          %s8177 = sand.u32 %s174, 1
          %s8178 = scalar_lea.sflag [#allocation8], %s8177
          %s8179 = sand.u32 %s174, 1
          %s8180 = smul.addr %s8179, 64
          %s8181 = scalar_lea.vmem [#allocation18], %s8180
          %8182 = dma.done %s8178, 1024
        $region80: #{tpu_custom_call.1} parent=75 // pred_fallthru
          _
      $region76: #{tpu_custom_call.1} parent=5 // pred_fallthru
        _
    $region6: #{tpu_custom_call.1} parent=1 // loop_footer
      %s28 = sadd.s32 1, %s24
    $region7: #{tpu_custom_call.1} parent=1 // loop_footer_branch
      %23 = sbr.rel target = $region3
    $region8: #{tpu_custom_call.1} parent=1 // loop_exit
      _
    %8183 = vsyncpa [#allocation7], 1
    %s8184 = scalar_lea.sflag [#allocation7], 1
    %8185 = vsyncpa %s8184, 1
    %8186 = vsyncpa [#allocation11], 1
    %s8187 = scalar_lea.sflag [#allocation11], 1
    %8188 = vsyncpa %s8187, 1
    %8189 = vsyncpa [#allocation8], 1
    %s8190 = scalar_lea.sflag [#allocation8], 1
    %8191 = vsyncpa %s8190, 1
    %8192 = vsyncpa [#allocation9], 1
    %s8193 = scalar_lea.sflag [#allocation9], 1
    %8194 = vsyncpa %s8193, 1
    %8195 = vsyncpa [#allocation14], 1
    %8196 = vsyncpa [#allocation17], 1

</llo_original>
